<compile_context>
chip_gen: v5e
topology: v5e:2x2
jax: 0.10.0
libtpu: 0.0.40
codegen_flags: <defaults>
</compile_context>

<pallas_src>
import numpy as np
import jax
import jax.numpy as jnp
from jax import lax
from jax.experimental import pallas as pl
from jax.experimental.pallas import tpu as pltpu

T = 8          # sequence length
B = 8          # batch (fills an 8-row sublane tile)
INPUT_DIM = 32 # original: input_dim
H_ENC = 128    # original: 800
H_LAT = 32     # original: 50


# ------------------------------ kernel helpers --------------------------------
def _lstm_cell(h, c, gates, H):
    """gates: (B, 4H) f32 pre-activations, gate order i|f|g|o (PyTorch).

    Also used for a merged dual head: with interleaved gate layout
    i_a|i_b|f_a|f_b|g_a|g_b|o_a|o_b and H -> 2*H_head, it computes both heads
    at once, carrying [h_a|h_b] / [c_a|c_b].
    """
    sif = jax.nn.sigmoid(gates[:, : 2 * H])          # i and f in one EUP slab
    g = jnp.tanh(gates[:, 2 * H: 3 * H])
    o = jax.nn.sigmoid(gates[:, 3 * H:])
    c_new = sif[:, H:] * c + sif[:, :H] * g
    h_new = o * jnp.tanh(c_new)
    return h_new, c_new


# --------------------------- fused whole-model kernel --------------------------
def make_seqvae_kernel(Tn, Bn, Din, He, Hl):
    def kernel(x_ref, eps_ref,
               w1_ih, w1_hh, b1,
               w2_ih, w2_hh, b2,
               w3_ih, w3_hh, b3,
               w4_ih, w4_hh, b4,
               out_ref,
               gx_enc, gx2, gx4, h_mid, z_scr, ml_scr):
        f32 = jnp.float32

        # ---------------- stage 1: h1 = relu(fc1(x)) ----------------
        # Input projection hoisted out of the recurrence: one wide matmul.
        x2d = x_ref[...].reshape(Tn * Bn, Din).astype(jnp.bfloat16)
        gx_enc[...] = jnp.dot(x2d, w1_ih[...], preferred_element_type=f32) + b1[...]

        def enc1_body(t, carry):
            h, c = carry
            row = pl.multiple_of(t * Bn, Bn)
            gates = gx_enc[pl.ds(row, Bn), :] + jnp.dot(
                h.astype(jnp.bfloat16), w1_hh[...], preferred_element_type=f32)
            h, c = _lstm_cell(h, c, gates, He)
            h_mid[pl.ds(row, Bn), :] = jnp.maximum(h, 0.0).astype(jnp.bfloat16)
            return (h, c)

        h0e = jnp.zeros((Bn, He), f32)
        # T=8: full unroll is cheap and gives the LLO scheduler visibility.
        lax.fori_loop(0, Tn, enc1_body, (h0e, h0e), unroll=True)

        # ------ stage 2: merged fc21|fc22 dual head + reparameterize ------
        gx2[...] = jnp.dot(h_mid[...], w2_ih[...], preferred_element_type=f32) + b2[...]

        def head2_body(t, carry):
            hab, cab = carry
            row = pl.multiple_of(t * Bn, Bn)
            gates = gx2[pl.ds(row, Bn), :] + jnp.dot(
                hab.astype(jnp.bfloat16), w2_hh[...], preferred_element_type=f32)
            hab, cab = _lstm_cell(hab, cab, gates, 2 * Hl)   # hab = [mu | logvar]
            ml_scr[pl.ds(row, Bn), :] = hab
            # z = mu + eps * exp(0.5 * logvar)  (training-mode semantics)
            z = hab[:, :Hl] + eps_ref[t] * jnp.exp(0.5 * hab[:, Hl:])
            z_scr[pl.ds(row, Bn), :] = z.astype(jnp.bfloat16)
            return (hab, cab)

        h02 = jnp.zeros((Bn, 2 * Hl), f32)
        lax.fori_loop(0, Tn, head2_body, (h02, h02), unroll=True)

        # ---- stage 3: h3 = relu(fc3(z)); reuses gx_enc / h_mid scratch ----
        gx_enc[...] = jnp.dot(z_scr[...], w3_ih[...], preferred_element_type=f32) + b3[...]

        def enc3_body(t, carry):
            h, c = carry
            row = pl.multiple_of(t * Bn, Bn)
            gates = gx_enc[pl.ds(row, Bn), :] + jnp.dot(
                h.astype(jnp.bfloat16), w3_hh[...], preferred_element_type=f32)
            h, c = _lstm_cell(h, c, gates, He)
            h_mid[pl.ds(row, Bn), :] = jnp.maximum(h, 0.0).astype(jnp.bfloat16)
            return (h, c)

        lax.fori_loop(0, Tn, enc3_body, (h0e, h0e), unroll=True)

        # -- stage 4: merged fc41|fc42 dual head; lane-dense packed output --
        gx4[...] = jnp.dot(h_mid[...], w4_ih[...], preferred_element_type=f32) + b4[...]

        def head4_body(t, carry):
            hab, cab = carry
            row = pl.multiple_of(t * Bn, Bn)
            gates = gx4[pl.ds(row, Bn), :] + jnp.dot(
                hab.astype(jnp.bfloat16), w4_hh[...], preferred_element_type=f32)
            hab, cab = _lstm_cell(hab, cab, gates, 2 * Din)  # [mu_th | logvar_th]
            # One dense (B, 2*Din + 2*Hl) = (8, 128) store per timestep:
            # [mu_theta | logvar_theta | mu | logvar]
            out_ref[t] = jnp.concatenate([hab, ml_scr[pl.ds(row, Bn), :]], axis=-1)
            return (hab, cab)

        h04 = jnp.zeros((Bn, 2 * Din), f32)
        lax.fori_loop(0, Tn, head4_body, (h04, h04), unroll=True)

    return kernel


# ----------------------------------- params ------------------------------------
def init_lstm_params(key, d_in, h):
    # PyTorch nn.LSTM init: U(-1/sqrt(h), 1/sqrt(h)); fused gate order i|f|g|o.
    k = 1.0 / np.sqrt(h)
    k1, k2, k3, k4 = jax.random.split(key, 4)
    w_ih = jax.random.uniform(k1, (d_in, 4 * h), jnp.float32, -k, k)
    w_hh = jax.random.uniform(k2, (h, 4 * h), jnp.float32, -k, k)
    b_ih = jax.random.uniform(k3, (1, 4 * h), jnp.float32, -k, k)
    b_hh = jax.random.uniform(k4, (1, 4 * h), jnp.float32, -k, k)
    return {"w_ih": w_ih.astype(jnp.bfloat16),   # bf16 MXU operands
            "w_hh": w_hh.astype(jnp.bfloat16),
            "b": b_ih + b_hh}                    # f32 bias (pre-summed)


def init_params(key):
    ks = jax.random.split(key, 6)
    return {
        "fc1":  init_lstm_params(ks[0], INPUT_DIM, H_ENC),
        "fc21": init_lstm_params(ks[1], H_ENC, H_LAT),
        "fc22": init_lstm_params(ks[2], H_ENC, H_LAT),
        "fc3":  init_lstm_params(ks[3], H_LAT, H_ENC),
        "fc41": init_lstm_params(ks[4], H_ENC, INPUT_DIM),
        "fc42": init_lstm_params(ks[5], H_ENC, INPUT_DIM),
    }


def _merge_dual_head(pa, pb):
    """Merge two LSTM heads (same d_in, same H) into one fused head.

    Gate layout along the 8H output axis: i_a|i_b | f_a|f_b | g_a|g_b | o_a|o_b
    so one _lstm_cell of width 2H computes both heads.  Recurrent weights are
    block-diagonal, keeping the two recurrences exactly independent.
    """
    H = pa["w_hh"].shape[0]

    def interleave(wa, wb):
        r = wa.shape[0]
        m = jnp.zeros((r, 4, 2, H), wa.dtype)
        m = m.at[:, :, 0, :].set(wa.reshape(r, 4, H))
        m = m.at[:, :, 1, :].set(wb.reshape(r, 4, H))
        return m.reshape(r, 8 * H)

    w_ih = interleave(pa["w_ih"], pb["w_ih"])
    whh = jnp.zeros((2 * H, 4, 2, H), pa["w_hh"].dtype)
    whh = whh.at[:H, :, 0, :].set(pa["w_hh"].reshape(H, 4, H))
    whh = whh.at[H:, :, 1, :].set(pb["w_hh"].reshape(H, 4, H))
    b = interleave(pa["b"], pb["b"])
    return {"w_ih": w_ih, "w_hh": whh.reshape(2 * H, 8 * H), "b": b}


def build_kernel_params(p):
    return {
        "fc1": p["fc1"],
        "fc2122": _merge_dual_head(p["fc21"], p["fc22"]),
        "fc3": p["fc3"],
        "fc4142": _merge_dual_head(p["fc41"], p["fc42"]),
    }


# ------------------------------- full forward -----------------------------------
def seqvae_forward(x, eps, kp):
    Tn, Bn, Din = x.shape
    Hl = eps.shape[-1]
    He = kp["fc1"]["w_hh"].shape[0]
    packed = pl.pallas_call(
        make_seqvae_kernel(Tn, Bn, Din, He, Hl),
        out_shape=jax.ShapeDtypeStruct((Tn, Bn, 2 * Din + 2 * Hl), jnp.float32),
        scratch_shapes=[
            pltpu.VMEM((Tn * Bn, 4 * He), jnp.float32),   # fc1 / fc3 gates (reused)
            pltpu.VMEM((Tn * Bn, 8 * Hl), jnp.float32),   # merged fc21|fc22 gates
            pltpu.VMEM((Tn * Bn, 8 * Din), jnp.float32),  # merged fc41|fc42 gates
            pltpu.VMEM((Tn * Bn, He), jnp.bfloat16),      # h1 / h3 (reused)
            pltpu.VMEM((Tn * Bn, Hl), jnp.bfloat16),      # z
            pltpu.VMEM((Tn * Bn, 2 * Hl), jnp.float32),   # [mu | logvar]
        ],
    )(x, eps,
      kp["fc1"]["w_ih"], kp["fc1"]["w_hh"], kp["fc1"]["b"],
      kp["fc2122"]["w_ih"], kp["fc2122"]["w_hh"], kp["fc2122"]["b"],
      kp["fc3"]["w_ih"], kp["fc3"]["w_hh"], kp["fc3"]["b"],
      kp["fc4142"]["w_ih"], kp["fc4142"]["w_hh"], kp["fc4142"]["b"])
    mu_theta = packed[..., :Din]
    logvar_theta = packed[..., Din:2 * Din]
    mu = packed[..., 2 * Din:2 * Din + Hl]
    logvar = packed[..., 2 * Din + Hl:]
    return mu_theta, logvar_theta, mu, logvar


# ------------------------ plain-JAX reference (checking) -------------------------
def ref_lstm(x, p, apply_relu=False):
    w_ih, w_hh, b = p["w_ih"], p["w_hh"], p["b"]
    H = w_hh.shape[0]
    Tn, Bn, Din = x.shape
    gx = (jnp.dot(x.reshape(Tn * Bn, Din).astype(jnp.bfloat16), w_ih,
                  preferred_element_type=jnp.float32) + b).reshape(Tn, Bn, 4 * H)

    def step(carry, g_t):
        h, c = carry
        gates = g_t + jnp.dot(h.astype(jnp.bfloat16), w_hh,
                              preferred_element_type=jnp.float32)
        i = jax.nn.sigmoid(gates[:, :H])
        f = jax.nn.sigmoid(gates[:, H:2 * H])
        g = jnp.tanh(gates[:, 2 * H:3 * H])
        o = jax.nn.sigmoid(gates[:, 3 * H:])
        c = f * c + i * g
        h = o * jnp.tanh(c)
        return (h, c), h

    init = (jnp.zeros((Bn, H), jnp.float32), jnp.zeros((Bn, H), jnp.float32))
    _, ys = lax.scan(step, init, gx)
    return jnp.maximum(ys, 0.0) if apply_relu else ys


def ref_forward(x, params, eps):
    h1 = ref_lstm(x, params["fc1"], apply_relu=True)
    mu = ref_lstm(h1, params["fc21"])
    logvar = ref_lstm(h1, params["fc22"])
    z = mu + eps * jnp.exp(0.5 * logvar)
    h3 = ref_lstm(z, params["fc3"], apply_relu=True)
    return ref_lstm(h3, params["fc41"]), ref_lstm(h3, params["fc42"]), mu, logvar


# ------------------------------------ main ---------------------------------------
if __name__ == "__main__":
    key = jax.random.PRNGKey(0)
    k_x, k_p, k_eps = jax.random.split(key, 3)

    x = jax.random.normal(k_x, (T, B, INPUT_DIM), jnp.float32)
    params = init_params(k_p)
    eps = jax.random.normal(k_eps, (T, B, H_LAT), jnp.float32)
    kparams = build_kernel_params(params)

    outs = jax.jit(seqvae_forward)(x, eps, kparams)
    outs = jax.block_until_ready(outs)

    refs = ref_forward(x, params, eps)
    for got, want in zip(outs, refs):
        np.testing.assert_allclose(np.asarray(got), np.asarray(want),
                                   rtol=1e-2, atol=1e-2)

    print("KERNEL_OK")
</pallas_src>

<mosaic_0001>
module attributes {stable_mosaic.version = 11 : i64} {
  func.func @kernel(%arg0: memref<8x8x32xf32, #tpu.memory_space<vmem>>, %arg1: memref<8x8x32xf32, #tpu.memory_space<vmem>>, %arg2: memref<32x512xbf16, #tpu.memory_space<vmem>>, %arg3: memref<128x512xbf16, #tpu.memory_space<vmem>>, %arg4: memref<1x512xf32, #tpu.memory_space<vmem>>, %arg5: memref<128x256xbf16, #tpu.memory_space<vmem>>, %arg6: memref<64x256xbf16, #tpu.memory_space<vmem>>, %arg7: memref<1x256xf32, #tpu.memory_space<vmem>>, %arg8: memref<32x512xbf16, #tpu.memory_space<vmem>>, %arg9: memref<128x512xbf16, #tpu.memory_space<vmem>>, %arg10: memref<1x512xf32, #tpu.memory_space<vmem>>, %arg11: memref<128x256xbf16, #tpu.memory_space<vmem>>, %arg12: memref<64x256xbf16, #tpu.memory_space<vmem>>, %arg13: memref<1x256xf32, #tpu.memory_space<vmem>>, %arg14: memref<8x8x128xf32, #tpu.memory_space<vmem>>, %arg15: memref<64x512xf32, #tpu.memory_space<vmem>>, %arg16: memref<64x256xf32, #tpu.memory_space<vmem>>, %arg17: memref<64x256xf32, #tpu.memory_space<vmem>>, %arg18: memref<64x128xbf16, #tpu.memory_space<vmem>>, %arg19: memref<64x32xbf16, #tpu.memory_space<vmem>>, %arg20: memref<64x64xf32, #tpu.memory_space<vmem>>) attributes {dimension_semantics = [], scalar_prefetch = 0 : i64, scratch_operands = 6 : i64, tpu.core_type = #tpu.core_type<tc>} {
    %c0 = arith.constant 0 : index
    %c0_0 = arith.constant 0 : index
    %c0_1 = arith.constant 0 : index
    %0 = vector.load %arg0[%c0, %c0_0, %c0_1] : memref<8x8x32xf32, #tpu.memory_space<vmem>>, vector<8x8x32xf32>
    %1 = vector.shape_cast %0 : vector<8x8x32xf32> to vector<64x32xf32>
    %2 = arith.truncf %1 : vector<64x32xf32> to vector<64x32xbf16>
    %c0_2 = arith.constant 0 : index
    %c0_3 = arith.constant 0 : index
    %3 = vector.load %arg2[%c0_2, %c0_3] : memref<32x512xbf16, #tpu.memory_space<vmem>>, vector<32x512xbf16>
    %cst = arith.constant dense<0.000000e+00> : vector<64x512xf32>
    %4 = tpu.matmul %2, %3, %cst {dimension_numbers = #tpu.dot_dimension_numbers<[1], [0], [0], [1], [0, 0, 1, 1], [], []>} : vector<64x32xbf16>, vector<32x512xbf16>, vector<64x512xf32> -> vector<64x512xf32>
    %c0_4 = arith.constant 0 : index
    %c0_5 = arith.constant 0 : index
    %5 = vector.load %arg4[%c0_4, %c0_5] : memref<1x512xf32, #tpu.memory_space<vmem>>, vector<1x512xf32>
    %6 = vector.broadcast %5 : vector<1x512xf32> to vector<64x512xf32>
    %7 = arith.addf %4, %6 : vector<64x512xf32>
    %c0_6 = arith.constant 0 : index
    %c0_7 = arith.constant 0 : index
    %8 = vector.load %arg15[%c0_6, %c0_7] : memref<64x512xf32, #tpu.memory_space<vmem>>, vector<64x512xf32>
    tpu.vector_store %arg15[%c0_6, %c0_7], %7 {strides = array<i32>} : memref<64x512xf32, #tpu.memory_space<vmem>>, vector<64x512xf32>,
    %cst_8 = arith.constant 0.000000e+00 : f32
    %9 = vector.broadcast %cst_8 : f32 to vector<8x128xf32>
    %c0_i32 = arith.constant 0 : i32
    %c8_i32 = arith.constant 8 : i32
    %10 = arith.muli %c0_i32, %c8_i32 : i32
    %11 = tpu.assume_multiple %10, 8 : i32
    %12 = arith.index_cast %11 : i32 to index
    %c0_9 = arith.constant 0 : index
    %13 = vector.load %arg15[%12, %c0_9] : memref<64x512xf32, #tpu.memory_space<vmem>>, vector<8x512xf32>
    %14 = arith.truncf %9 : vector<8x128xf32> to vector<8x128xbf16>
    %c0_10 = arith.constant 0 : index
    %c0_11 = arith.constant 0 : index
    %15 = vector.load %arg3[%c0_10, %c0_11] : memref<128x512xbf16, #tpu.memory_space<vmem>>, vector<128x512xbf16>
    %cst_12 = arith.constant dense<0.000000e+00> : vector<8x512xf32>
    %16 = tpu.matmul %14, %15, %cst_12 {dimension_numbers = #tpu.dot_dimension_numbers<[1], [0], [0], [1], [0, 0, 1, 1], [], []>} : vector<8x128xbf16>, vector<128x512xbf16>, vector<8x512xf32> -> vector<8x512xf32>
    %17 = arith.addf %13, %16 : vector<8x512xf32>
    %18 = vector.extract_strided_slice %17 {offsets = [0, 0], sizes = [8, 256], strides = [1, 1]} : vector<8x512xf32> to vector<8x256xf32>
    %19 = arith.negf %18 : vector<8x256xf32>
    %20 = math.exp %19 : vector<8x256xf32>
    %cst_13 = arith.constant 1.000000e+00 : f32
    %21 = vector.broadcast %cst_13 : f32 to vector<8x256xf32>
    %22 = arith.addf %21, %20 : vector<8x256xf32>
    %23 = arith.divf %21, %22 : vector<8x256xf32>
    %24 = vector.extract_strided_slice %17 {offsets = [0, 256], sizes = [8, 128], strides = [1, 1]} : vector<8x512xf32> to vector<8x128xf32>
    %25 = math.tanh %24 : vector<8x128xf32>
    %26 = vector.extract_strided_slice %17 {offsets = [0, 384], sizes = [8, 128], strides = [1, 1]} : vector<8x512xf32> to vector<8x128xf32>
    %27 = arith.negf %26 : vector<8x128xf32>
    %28 = math.exp %27 : vector<8x128xf32>
    %cst_14 = arith.constant 1.000000e+00 : f32
    %29 = vector.broadcast %cst_14 : f32 to vector<8x128xf32>
    %30 = arith.addf %29, %28 : vector<8x128xf32>
    %31 = arith.divf %29, %30 : vector<8x128xf32>
    %32 = vector.extract_strided_slice %23 {offsets = [0, 128], sizes = [8, 128], strides = [1, 1]} : vector<8x256xf32> to vector<8x128xf32>
    %33 = arith.mulf %32, %9 : vector<8x128xf32>
    %34 = vector.extract_strided_slice %23 {offsets = [0, 0], sizes = [8, 128], strides = [1, 1]} : vector<8x256xf32> to vector<8x128xf32>
    %35 = arith.mulf %34, %25 : vector<8x128xf32>
    %36 = arith.addf %33, %35 : vector<8x128xf32>
    %37 = math.tanh %36 : vector<8x128xf32>
    %38 = arith.mulf %31, %37 : vector<8x128xf32>
    %cst_15 = arith.constant 0.000000e+00 : f32
    %39 = vector.broadcast %cst_15 : f32 to vector<8x128xf32>
    %40 = arith.maximumf %38, %39 : vector<8x128xf32>
    %41 = arith.truncf %40 : vector<8x128xf32> to vector<8x128xbf16>
    %42 = arith.index_cast %11 : i32 to index
    %c0_16 = arith.constant 0 : index
    %43 = vector.load %arg18[%42, %c0_16] : memref<64x128xbf16, #tpu.memory_space<vmem>>, vector<8x128xbf16>
    tpu.vector_store %arg18[%42, %c0_16], %41 {strides = array<i32>} : memref<64x128xbf16, #tpu.memory_space<vmem>>, vector<8x128xbf16>,
    %c1_i32 = arith.constant 1 : i32
    %c8_i32_17 = arith.constant 8 : i32
    %44 = arith.muli %c1_i32, %c8_i32_17 : i32
    %45 = tpu.assume_multiple %44, 8 : i32
    %46 = arith.index_cast %45 : i32 to index
    %c0_18 = arith.constant 0 : index
    %47 = vector.load %arg15[%46, %c0_18] : memref<64x512xf32, #tpu.memory_space<vmem>>, vector<8x512xf32>
    %48 = arith.truncf %38 : vector<8x128xf32> to vector<8x128xbf16>
    %c0_19 = arith.constant 0 : index
    %c0_20 = arith.constant 0 : index
    %49 = vector.load %arg3[%c0_19, %c0_20] : memref<128x512xbf16, #tpu.memory_space<vmem>>, vector<128x512xbf16>
    %cst_21 = arith.constant dense<0.000000e+00> : vector<8x512xf32>
    %50 = tpu.matmul %48, %49, %cst_21 {dimension_numbers = #tpu.dot_dimension_numbers<[1], [0], [0], [1], [0, 0, 1, 1], [], []>} : vector<8x128xbf16>, vector<128x512xbf16>, vector<8x512xf32> -> vector<8x512xf32>
    %51 = arith.addf %47, %50 : vector<8x512xf32>
    %52 = vector.extract_strided_slice %51 {offsets = [0, 0], sizes = [8, 256], strides = [1, 1]} : vector<8x512xf32> to vector<8x256xf32>
    %53 = arith.negf %52 : vector<8x256xf32>
    %54 = math.exp %53 : vector<8x256xf32>
    %cst_22 = arith.constant 1.000000e+00 : f32
    %55 = vector.broadcast %cst_22 : f32 to vector<8x256xf32>
    %56 = arith.addf %55, %54 : vector<8x256xf32>
    %57 = arith.divf %55, %56 : vector<8x256xf32>
    %58 = vector.extract_strided_slice %51 {offsets = [0, 256], sizes = [8, 128], strides = [1, 1]} : vector<8x512xf32> to vector<8x128xf32>
    %59 = math.tanh %58 : vector<8x128xf32>
    %60 = vector.extract_strided_slice %51 {offsets = [0, 384], sizes = [8, 128], strides = [1, 1]} : vector<8x512xf32> to vector<8x128xf32>
    %61 = arith.negf %60 : vector<8x128xf32>
    %62 = math.exp %61 : vector<8x128xf32>
    %cst_23 = arith.constant 1.000000e+00 : f32
    %63 = vector.broadcast %cst_23 : f32 to vector<8x128xf32>
    %64 = arith.addf %63, %62 : vector<8x128xf32>
    %65 = arith.divf %63, %64 : vector<8x128xf32>
    %66 = vector.extract_strided_slice %57 {offsets = [0, 128], sizes = [8, 128], strides = [1, 1]} : vector<8x256xf32> to vector<8x128xf32>
    %67 = arith.mulf %66, %36 : vector<8x128xf32>
    %68 = vector.extract_strided_slice %57 {offsets = [0, 0], sizes = [8, 128], strides = [1, 1]} : vector<8x256xf32> to vector<8x128xf32>
    %69 = arith.mulf %68, %59 : vector<8x128xf32>
    %70 = arith.addf %67, %69 : vector<8x128xf32>
    %71 = math.tanh %70 : vector<8x128xf32>
    %72 = arith.mulf %65, %71 : vector<8x128xf32>
    %cst_24 = arith.constant 0.000000e+00 : f32
    %73 = vector.broadcast %cst_24 : f32 to vector<8x128xf32>
    %74 = arith.maximumf %72, %73 : vector<8x128xf32>
    %75 = arith.truncf %74 : vector<8x128xf32> to vector<8x128xbf16>
    %76 = arith.index_cast %45 : i32 to index
    %c0_25 = arith.constant 0 : index
    %77 = vector.load %arg18[%76, %c0_25] : memref<64x128xbf16, #tpu.memory_space<vmem>>, vector<8x128xbf16>
    tpu.vector_store %arg18[%76, %c0_25], %75 {strides = array<i32>} : memref<64x128xbf16, #tpu.memory_space<vmem>>, vector<8x128xbf16>,
    %c2_i32 = arith.constant 2 : i32
    %c8_i32_26 = arith.constant 8 : i32
    %78 = arith.muli %c2_i32, %c8_i32_26 : i32
    %79 = tpu.assume_multiple %78, 8 : i32
    %80 = arith.index_cast %79 : i32 to index
    %c0_27 = arith.constant 0 : index
    %81 = vector.load %arg15[%80, %c0_27] : memref<64x512xf32, #tpu.memory_space<vmem>>, vector<8x512xf32>
    %82 = arith.truncf %72 : vector<8x128xf32> to vector<8x128xbf16>
    %c0_28 = arith.constant 0 : index
    %c0_29 = arith.constant 0 : index
    %83 = vector.load %arg3[%c0_28, %c0_29] : memref<128x512xbf16, #tpu.memory_space<vmem>>, vector<128x512xbf16>
    %cst_30 = arith.constant dense<0.000000e+00> : vector<8x512xf32>
    %84 = tpu.matmul %82, %83, %cst_30 {dimension_numbers = #tpu.dot_dimension_numbers<[1], [0], [0], [1], [0, 0, 1, 1], [], []>} : vector<8x128xbf16>, vector<128x512xbf16>, vector<8x512xf32> -> vector<8x512xf32>
    %85 = arith.addf %81, %84 : vector<8x512xf32>
    %86 = vector.extract_strided_slice %85 {offsets = [0, 0], sizes = [8, 256], strides = [1, 1]} : vector<8x512xf32> to vector<8x256xf32>
    %87 = arith.negf %86 : vector<8x256xf32>
    %88 = math.exp %87 : vector<8x256xf32>
    %cst_31 = arith.constant 1.000000e+00 : f32
    %89 = vector.broadcast %cst_31 : f32 to vector<8x256xf32>
    %90 = arith.addf %89, %88 : vector<8x256xf32>
    %91 = arith.divf %89, %90 : vector<8x256xf32>
    %92 = vector.extract_strided_slice %85 {offsets = [0, 256], sizes = [8, 128], strides = [1, 1]} : vector<8x512xf32> to vector<8x128xf32>
    %93 = math.tanh %92 : vector<8x128xf32>
    %94 = vector.extract_strided_slice %85 {offsets = [0, 384], sizes = [8, 128], strides = [1, 1]} : vector<8x512xf32> to vector<8x128xf32>
    %95 = arith.negf %94 : vector<8x128xf32>
    %96 = math.exp %95 : vector<8x128xf32>
    %cst_32 = arith.constant 1.000000e+00 : f32
    %97 = vector.broadcast %cst_32 : f32 to vector<8x128xf32>
    %98 = arith.addf %97, %96 : vector<8x128xf32>
    %99 = arith.divf %97, %98 : vector<8x128xf32>
    %100 = vector.extract_strided_slice %91 {offsets = [0, 128], sizes = [8, 128], strides = [1, 1]} : vector<8x256xf32> to vector<8x128xf32>
    %101 = arith.mulf %100, %70 : vector<8x128xf32>
    %102 = vector.extract_strided_slice %91 {offsets = [0, 0], sizes = [8, 128], strides = [1, 1]} : vector<8x256xf32> to vector<8x128xf32>
    %103 = arith.mulf %102, %93 : vector<8x128xf32>
    %104 = arith.addf %101, %103 : vector<8x128xf32>
    %105 = math.tanh %104 : vector<8x128xf32>
    %106 = arith.mulf %99, %105 : vector<8x128xf32>
    %cst_33 = arith.constant 0.000000e+00 : f32
    %107 = vector.broadcast %cst_33 : f32 to vector<8x128xf32>
    %108 = arith.maximumf %106, %107 : vector<8x128xf32>
    %109 = arith.truncf %108 : vector<8x128xf32> to vector<8x128xbf16>
    %110 = arith.index_cast %79 : i32 to index
    %c0_34 = arith.constant 0 : index
    %111 = vector.load %arg18[%110, %c0_34] : memref<64x128xbf16, #tpu.memory_space<vmem>>, vector<8x128xbf16>
    tpu.vector_store %arg18[%110, %c0_34], %109 {strides = array<i32>} : memref<64x128xbf16, #tpu.memory_space<vmem>>, vector<8x128xbf16>,
    %c3_i32 = arith.constant 3 : i32
    %c8_i32_35 = arith.constant 8 : i32
    %112 = arith.muli %c3_i32, %c8_i32_35 : i32
    %113 = tpu.assume_multiple %112, 8 : i32
    %114 = arith.index_cast %113 : i32 to index
    %c0_36 = arith.constant 0 : index
    %115 = vector.load %arg15[%114, %c0_36] : memref<64x512xf32, #tpu.memory_space<vmem>>, vector<8x512xf32>
    %116 = arith.truncf %106 : vector<8x128xf32> to vector<8x128xbf16>
    %c0_37 = arith.constant 0 : index
    %c0_38 = arith.constant 0 : index
    %117 = vector.load %arg3[%c0_37, %c0_38] : memref<128x512xbf16, #tpu.memory_space<vmem>>, vector<128x512xbf16>
    %cst_39 = arith.constant dense<0.000000e+00> : vector<8x512xf32>
    %118 = tpu.matmul %116, %117, %cst_39 {dimension_numbers = #tpu.dot_dimension_numbers<[1], [0], [0], [1], [0, 0, 1, 1], [], []>} : vector<8x128xbf16>, vector<128x512xbf16>, vector<8x512xf32> -> vector<8x512xf32>
    %119 = arith.addf %115, %118 : vector<8x512xf32>
    %120 = vector.extract_strided_slice %119 {offsets = [0, 0], sizes = [8, 256], strides = [1, 1]} : vector<8x512xf32> to vector<8x256xf32>
    %121 = arith.negf %120 : vector<8x256xf32>
    %122 = math.exp %121 : vector<8x256xf32>
    %cst_40 = arith.constant 1.000000e+00 : f32
    %123 = vector.broadcast %cst_40 : f32 to vector<8x256xf32>
    %124 = arith.addf %123, %122 : vector<8x256xf32>
    %125 = arith.divf %123, %124 : vector<8x256xf32>
    %126 = vector.extract_strided_slice %119 {offsets = [0, 256], sizes = [8, 128], strides = [1, 1]} : vector<8x512xf32> to vector<8x128xf32>
    %127 = math.tanh %126 : vector<8x128xf32>
    %128 = vector.extract_strided_slice %119 {offsets = [0, 384], sizes = [8, 128], strides = [1, 1]} : vector<8x512xf32> to vector<8x128xf32>
    %129 = arith.negf %128 : vector<8x128xf32>
    %130 = math.exp %129 : vector<8x128xf32>
    %cst_41 = arith.constant 1.000000e+00 : f32
    %131 = vector.broadcast %cst_41 : f32 to vector<8x128xf32>
    %132 = arith.addf %131, %130 : vector<8x128xf32>
    %133 = arith.divf %131, %132 : vector<8x128xf32>
    %134 = vector.extract_strided_slice %125 {offsets = [0, 128], sizes = [8, 128], strides = [1, 1]} : vector<8x256xf32> to vector<8x128xf32>
    %135 = arith.mulf %134, %104 : vector<8x128xf32>
    %136 = vector.extract_strided_slice %125 {offsets = [0, 0], sizes = [8, 128], strides = [1, 1]} : vector<8x256xf32> to vector<8x128xf32>
    %137 = arith.mulf %136, %127 : vector<8x128xf32>
    %138 = arith.addf %135, %137 : vector<8x128xf32>
    %139 = math.tanh %138 : vector<8x128xf32>
    %140 = arith.mulf %133, %139 : vector<8x128xf32>
    %cst_42 = arith.constant 0.000000e+00 : f32
    %141 = vector.broadcast %cst_42 : f32 to vector<8x128xf32>
    %142 = arith.maximumf %140, %141 : vector<8x128xf32>
    %143 = arith.truncf %142 : vector<8x128xf32> to vector<8x128xbf16>
    %144 = arith.index_cast %113 : i32 to index
    %c0_43 = arith.constant 0 : index
    %145 = vector.load %arg18[%144, %c0_43] : memref<64x128xbf16, #tpu.memory_space<vmem>>, vector<8x128xbf16>
    tpu.vector_store %arg18[%144, %c0_43], %143 {strides = array<i32>} : memref<64x128xbf16, #tpu.memory_space<vmem>>, vector<8x128xbf16>,
    %c4_i32 = arith.constant 4 : i32
    %c8_i32_44 = arith.constant 8 : i32
    %146 = arith.muli %c4_i32, %c8_i32_44 : i32
    %147 = tpu.assume_multiple %146, 8 : i32
    %148 = arith.index_cast %147 : i32 to index
    %c0_45 = arith.constant 0 : index
    %149 = vector.load %arg15[%148, %c0_45] : memref<64x512xf32, #tpu.memory_space<vmem>>, vector<8x512xf32>
    %150 = arith.truncf %140 : vector<8x128xf32> to vector<8x128xbf16>
    %c0_46 = arith.constant 0 : index
    %c0_47 = arith.constant 0 : index
    %151 = vector.load %arg3[%c0_46, %c0_47] : memref<128x512xbf16, #tpu.memory_space<vmem>>, vector<128x512xbf16>
    %cst_48 = arith.constant dense<0.000000e+00> : vector<8x512xf32>
    %152 = tpu.matmul %150, %151, %cst_48 {dimension_numbers = #tpu.dot_dimension_numbers<[1], [0], [0], [1], [0, 0, 1, 1], [], []>} : vector<8x128xbf16>, vector<128x512xbf16>, vector<8x512xf32> -> vector<8x512xf32>
    %153 = arith.addf %149, %152 : vector<8x512xf32>
    %154 = vector.extract_strided_slice %153 {offsets = [0, 0], sizes = [8, 256], strides = [1, 1]} : vector<8x512xf32> to vector<8x256xf32>
    %155 = arith.negf %154 : vector<8x256xf32>
    %156 = math.exp %155 : vector<8x256xf32>
    %cst_49 = arith.constant 1.000000e+00 : f32
    %157 = vector.broadcast %cst_49 : f32 to vector<8x256xf32>
    %158 = arith.addf %157, %156 : vector<8x256xf32>
    %159 = arith.divf %157, %158 : vector<8x256xf32>
    %160 = vector.extract_strided_slice %153 {offsets = [0, 256], sizes = [8, 128], strides = [1, 1]} : vector<8x512xf32> to vector<8x128xf32>
    %161 = math.tanh %160 : vector<8x128xf32>
    %162 = vector.extract_strided_slice %153 {offsets = [0, 384], sizes = [8, 128], strides = [1, 1]} : vector<8x512xf32> to vector<8x128xf32>
    %163 = arith.negf %162 : vector<8x128xf32>
    %164 = math.exp %163 : vector<8x128xf32>
    %cst_50 = arith.constant 1.000000e+00 : f32
    %165 = vector.broadcast %cst_50 : f32 to vector<8x128xf32>
    %166 = arith.addf %165, %164 : vector<8x128xf32>
    %167 = arith.divf %165, %166 : vector<8x128xf32>
    %168 = vector.extract_strided_slice %159 {offsets = [0, 128], sizes = [8, 128], strides = [1, 1]} : vector<8x256xf32> to vector<8x128xf32>
    %169 = arith.mulf %168, %138 : vector<8x128xf32>
    %170 = vector.extract_strided_slice %159 {offsets = [0, 0], sizes = [8, 128], strides = [1, 1]} : vector<8x256xf32> to vector<8x128xf32>
    %171 = arith.mulf %170, %161 : vector<8x128xf32>
    %172 = arith.addf %169, %171 : vector<8x128xf32>
    %173 = math.tanh %172 : vector<8x128xf32>
    %174 = arith.mulf %167, %173 : vector<8x128xf32>
    %cst_51 = arith.constant 0.000000e+00 : f32
    %175 = vector.broadcast %cst_51 : f32 to vector<8x128xf32>
    %176 = arith.maximumf %174, %175 : vector<8x128xf32>
    %177 = arith.truncf %176 : vector<8x128xf32> to vector<8x128xbf16>
    %178 = arith.index_cast %147 : i32 to index
    %c0_52 = arith.constant 0 : index
    %179 = vector.load %arg18[%178, %c0_52] : memref<64x128xbf16, #tpu.memory_space<vmem>>, vector<8x128xbf16>
    tpu.vector_store %arg18[%178, %c0_52], %177 {strides = array<i32>} : memref<64x128xbf16, #tpu.memory_space<vmem>>, vector<8x128xbf16>,
    %c5_i32 = arith.constant 5 : i32
    %c8_i32_53 = arith.constant 8 : i32
    %180 = arith.muli %c5_i32, %c8_i32_53 : i32
    %181 = tpu.assume_multiple %180, 8 : i32
    %182 = arith.index_cast %181 : i32 to index
    %c0_54 = arith.constant 0 : index
    %183 = vector.load %arg15[%182, %c0_54] : memref<64x512xf32, #tpu.memory_space<vmem>>, vector<8x512xf32>
    %184 = arith.truncf %174 : vector<8x128xf32> to vector<8x128xbf16>
    %c0_55 = arith.constant 0 : index
    %c0_56 = arith.constant 0 : index
    %185 = vector.load %arg3[%c0_55, %c0_56] : memref<128x512xbf16, #tpu.memory_space<vmem>>, vector<128x512xbf16>
    %cst_57 = arith.constant dense<0.000000e+00> : vector<8x512xf32>
    %186 = tpu.matmul %184, %185, %cst_57 {dimension_numbers = #tpu.dot_dimension_numbers<[1], [0], [0], [1], [0, 0, 1, 1], [], []>} : vector<8x128xbf16>, vector<128x512xbf16>, vector<8x512xf32> -> vector<8x512xf32>
    %187 = arith.addf %183, %186 : vector<8x512xf32>
    %188 = vector.extract_strided_slice %187 {offsets = [0, 0], sizes = [8, 256], strides = [1, 1]} : vector<8x512xf32> to vector<8x256xf32>
    %189 = arith.negf %188 : vector<8x256xf32>
    %190 = math.exp %189 : vector<8x256xf32>
    %cst_58 = arith.constant 1.000000e+00 : f32
    %191 = vector.broadcast %cst_58 : f32 to vector<8x256xf32>
    %192 = arith.addf %191, %190 : vector<8x256xf32>
    %193 = arith.divf %191, %192 : vector<8x256xf32>
    %194 = vector.extract_strided_slice %187 {offsets = [0, 256], sizes = [8, 128], strides = [1, 1]} : vector<8x512xf32> to vector<8x128xf32>
    %195 = math.tanh %194 : vector<8x128xf32>
    %196 = vector.extract_strided_slice %187 {offsets = [0, 384], sizes = [8, 128], strides = [1, 1]} : vector<8x512xf32> to vector<8x128xf32>
    %197 = arith.negf %196 : vector<8x128xf32>
    %198 = math.exp %197 : vector<8x128xf32>
    %cst_59 = arith.constant 1.000000e+00 : f32
    %199 = vector.broadcast %cst_59 : f32 to vector<8x128xf32>
    %200 = arith.addf %199, %198 : vector<8x128xf32>
    %201 = arith.divf %199, %200 : vector<8x128xf32>
    %202 = vector.extract_strided_slice %193 {offsets = [0, 128], sizes = [8, 128], strides = [1, 1]} : vector<8x256xf32> to vector<8x128xf32>
    %203 = arith.mulf %202, %172 : vector<8x128xf32>
    %204 = vector.extract_strided_slice %193 {offsets = [0, 0], sizes = [8, 128], strides = [1, 1]} : vector<8x256xf32> to vector<8x128xf32>
    %205 = arith.mulf %204, %195 : vector<8x128xf32>
    %206 = arith.addf %203, %205 : vector<8x128xf32>
    %207 = math.tanh %206 : vector<8x128xf32>
    %208 = arith.mulf %201, %207 : vector<8x128xf32>
    %cst_60 = arith.constant 0.000000e+00 : f32
    %209 = vector.broadcast %cst_60 : f32 to vector<8x128xf32>
    %210 = arith.maximumf %208, %209 : vector<8x128xf32>
    %211 = arith.truncf %210 : vector<8x128xf32> to vector<8x128xbf16>
    %212 = arith.index_cast %181 : i32 to index
    %c0_61 = arith.constant 0 : index
    %213 = vector.load %arg18[%212, %c0_61] : memref<64x128xbf16, #tpu.memory_space<vmem>>, vector<8x128xbf16>
    tpu.vector_store %arg18[%212, %c0_61], %211 {strides = array<i32>} : memref<64x128xbf16, #tpu.memory_space<vmem>>, vector<8x128xbf16>,
    %c6_i32 = arith.constant 6 : i32
    %c8_i32_62 = arith.constant 8 : i32
    %214 = arith.muli %c6_i32, %c8_i32_62 : i32
    %215 = tpu.assume_multiple %214, 8 : i32
    %216 = arith.index_cast %215 : i32 to index
    %c0_63 = arith.constant 0 : index
    %217 = vector.load %arg15[%216, %c0_63] : memref<64x512xf32, #tpu.memory_space<vmem>>, vector<8x512xf32>
    %218 = arith.truncf %208 : vector<8x128xf32> to vector<8x128xbf16>
    %c0_64 = arith.constant 0 : index
    %c0_65 = arith.constant 0 : index
    %219 = vector.load %arg3[%c0_64, %c0_65] : memref<128x512xbf16, #tpu.memory_space<vmem>>, vector<128x512xbf16>
    %cst_66 = arith.constant dense<0.000000e+00> : vector<8x512xf32>
    %220 = tpu.matmul %218, %219, %cst_66 {dimension_numbers = #tpu.dot_dimension_numbers<[1], [0], [0], [1], [0, 0, 1, 1], [], []>} : vector<8x128xbf16>, vector<128x512xbf16>, vector<8x512xf32> -> vector<8x512xf32>
    %221 = arith.addf %217, %220 : vector<8x512xf32>
    %222 = vector.extract_strided_slice %221 {offsets = [0, 0], sizes = [8, 256], strides = [1, 1]} : vector<8x512xf32> to vector<8x256xf32>
    %223 = arith.negf %222 : vector<8x256xf32>
    %224 = math.exp %223 : vector<8x256xf32>
    %cst_67 = arith.constant 1.000000e+00 : f32
    %225 = vector.broadcast %cst_67 : f32 to vector<8x256xf32>
    %226 = arith.addf %225, %224 : vector<8x256xf32>
    %227 = arith.divf %225, %226 : vector<8x256xf32>
    %228 = vector.extract_strided_slice %221 {offsets = [0, 256], sizes = [8, 128], strides = [1, 1]} : vector<8x512xf32> to vector<8x128xf32>
    %229 = math.tanh %228 : vector<8x128xf32>
    %230 = vector.extract_strided_slice %221 {offsets = [0, 384], sizes = [8, 128], strides = [1, 1]} : vector<8x512xf32> to vector<8x128xf32>
    %231 = arith.negf %230 : vector<8x128xf32>
    %232 = math.exp %231 : vector<8x128xf32>
    %cst_68 = arith.constant 1.000000e+00 : f32
    %233 = vector.broadcast %cst_68 : f32 to vector<8x128xf32>
    %234 = arith.addf %233, %232 : vector<8x128xf32>
    %235 = arith.divf %233, %234 : vector<8x128xf32>
    %236 = vector.extract_strided_slice %227 {offsets = [0, 128], sizes = [8, 128], strides = [1, 1]} : vector<8x256xf32> to vector<8x128xf32>
    %237 = arith.mulf %236, %206 : vector<8x128xf32>
    %238 = vector.extract_strided_slice %227 {offsets = [0, 0], sizes = [8, 128], strides = [1, 1]} : vector<8x256xf32> to vector<8x128xf32>
    %239 = arith.mulf %238, %229 : vector<8x128xf32>
    %240 = arith.addf %237, %239 : vector<8x128xf32>
    %241 = math.tanh %240 : vector<8x128xf32>
    %242 = arith.mulf %235, %241 : vector<8x128xf32>
    %cst_69 = arith.constant 0.000000e+00 : f32
    %243 = vector.broadcast %cst_69 : f32 to vector<8x128xf32>
    %244 = arith.maximumf %242, %243 : vector<8x128xf32>
    %245 = arith.truncf %244 : vector<8x128xf32> to vector<8x128xbf16>
    %246 = arith.index_cast %215 : i32 to index
    %c0_70 = arith.constant 0 : index
    %247 = vector.load %arg18[%246, %c0_70] : memref<64x128xbf16, #tpu.memory_space<vmem>>, vector<8x128xbf16>
    tpu.vector_store %arg18[%246, %c0_70], %245 {strides = array<i32>} : memref<64x128xbf16, #tpu.memory_space<vmem>>, vector<8x128xbf16>,
    %c7_i32 = arith.constant 7 : i32
    %c8_i32_71 = arith.constant 8 : i32
    %248 = arith.muli %c7_i32, %c8_i32_71 : i32
    %249 = tpu.assume_multiple %248, 8 : i32
    %250 = arith.index_cast %249 : i32 to index
    %c0_72 = arith.constant 0 : index
    %251 = vector.load %arg15[%250, %c0_72] : memref<64x512xf32, #tpu.memory_space<vmem>>, vector<8x512xf32>
    %252 = arith.truncf %242 : vector<8x128xf32> to vector<8x128xbf16>
    %c0_73 = arith.constant 0 : index
    %c0_74 = arith.constant 0 : index
    %253 = vector.load %arg3[%c0_73, %c0_74] : memref<128x512xbf16, #tpu.memory_space<vmem>>, vector<128x512xbf16>
    %cst_75 = arith.constant dense<0.000000e+00> : vector<8x512xf32>
    %254 = tpu.matmul %252, %253, %cst_75 {dimension_numbers = #tpu.dot_dimension_numbers<[1], [0], [0], [1], [0, 0, 1, 1], [], []>} : vector<8x128xbf16>, vector<128x512xbf16>, vector<8x512xf32> -> vector<8x512xf32>
    %255 = arith.addf %251, %254 : vector<8x512xf32>
    %256 = vector.extract_strided_slice %255 {offsets = [0, 0], sizes = [8, 256], strides = [1, 1]} : vector<8x512xf32> to vector<8x256xf32>
    %257 = arith.negf %256 : vector<8x256xf32>
    %258 = math.exp %257 : vector<8x256xf32>
    %cst_76 = arith.constant 1.000000e+00 : f32
    %259 = vector.broadcast %cst_76 : f32 to vector<8x256xf32>
    %260 = arith.addf %259, %258 : vector<8x256xf32>
    %261 = arith.divf %259, %260 : vector<8x256xf32>
    %262 = vector.extract_strided_slice %255 {offsets = [0, 256], sizes = [8, 128], strides = [1, 1]} : vector<8x512xf32> to vector<8x128xf32>
    %263 = math.tanh %262 : vector<8x128xf32>
    %264 = vector.extract_strided_slice %255 {offsets = [0, 384], sizes = [8, 128], strides = [1, 1]} : vector<8x512xf32> to vector<8x128xf32>
    %265 = arith.negf %264 : vector<8x128xf32>
    %266 = math.exp %265 : vector<8x128xf32>
    %cst_77 = arith.constant 1.000000e+00 : f32
    %267 = vector.broadcast %cst_77 : f32 to vector<8x128xf32>
    %268 = arith.addf %267, %266 : vector<8x128xf32>
    %269 = arith.divf %267, %268 : vector<8x128xf32>
    %270 = vector.extract_strided_slice %261 {offsets = [0, 128], sizes = [8, 128], strides = [1, 1]} : vector<8x256xf32> to vector<8x128xf32>
    %271 = arith.mulf %270, %240 : vector<8x128xf32>
    %272 = vector.extract_strided_slice %261 {offsets = [0, 0], sizes = [8, 128], strides = [1, 1]} : vector<8x256xf32> to vector<8x128xf32>
    %273 = arith.mulf %272, %263 : vector<8x128xf32>
    %274 = arith.addf %271, %273 : vector<8x128xf32>
    %275 = math.tanh %274 : vector<8x128xf32>
    %276 = arith.mulf %269, %275 : vector<8x128xf32>
    %cst_78 = arith.constant 0.000000e+00 : f32
    %277 = vector.broadcast %cst_78 : f32 to vector<8x128xf32>
    %278 = arith.maximumf %276, %277 : vector<8x128xf32>
    %279 = arith.truncf %278 : vector<8x128xf32> to vector<8x128xbf16>
    %280 = arith.index_cast %249 : i32 to index
    %c0_79 = arith.constant 0 : index
    %281 = vector.load %arg18[%280, %c0_79] : memref<64x128xbf16, #tpu.memory_space<vmem>>, vector<8x128xbf16>
    tpu.vector_store %arg18[%280, %c0_79], %279 {strides = array<i32>} : memref<64x128xbf16, #tpu.memory_space<vmem>>, vector<8x128xbf16>,
    %c8_i32_80 = arith.constant 8 : i32
    %c0_81 = arith.constant 0 : index
    %c0_82 = arith.constant 0 : index
    %282 = vector.load %arg18[%c0_81, %c0_82] : memref<64x128xbf16, #tpu.memory_space<vmem>>, vector<64x128xbf16>
    %c0_83 = arith.constant 0 : index
    %c0_84 = arith.constant 0 : index
    %283 = vector.load %arg5[%c0_83, %c0_84] : memref<128x256xbf16, #tpu.memory_space<vmem>>, vector<128x256xbf16>
    %cst_85 = arith.constant dense<0.000000e+00> : vector<64x256xf32>
    %284 = tpu.matmul %282, %283, %cst_85 {dimension_numbers = #tpu.dot_dimension_numbers<[1], [0], [0], [1], [0, 0, 1, 1], [], []>} : vector<64x128xbf16>, vector<128x256xbf16>, vector<64x256xf32> -> vector<64x256xf32>
    %c0_86 = arith.constant 0 : index
    %c0_87 = arith.constant 0 : index
    %285 = vector.load %arg7[%c0_86, %c0_87] : memref<1x256xf32, #tpu.memory_space<vmem>>, vector<1x256xf32>
    %286 = vector.broadcast %285 : vector<1x256xf32> to vector<64x256xf32>
    %287 = arith.addf %284, %286 : vector<64x256xf32>
    %c0_88 = arith.constant 0 : index
    %c0_89 = arith.constant 0 : index
    %288 = vector.load %arg16[%c0_88, %c0_89] : memref<64x256xf32, #tpu.memory_space<vmem>>, vector<64x256xf32>
    tpu.vector_store %arg16[%c0_88, %c0_89], %287 {strides = array<i32>} : memref<64x256xf32, #tpu.memory_space<vmem>>, vector<64x256xf32>,
    %cst_90 = arith.constant 0.000000e+00 : f32
    %289 = vector.broadcast %cst_90 : f32 to vector<8x64xf32>
    %c0_i32_91 = arith.constant 0 : i32
    %c8_i32_92 = arith.constant 8 : i32
    %290 = arith.muli %c0_i32_91, %c8_i32_92 : i32
    %291 = tpu.assume_multiple %290, 8 : i32
    %292 = arith.index_cast %291 : i32 to index
    %c0_93 = arith.constant 0 : index
    %293 = vector.load %arg16[%292, %c0_93] : memref<64x256xf32, #tpu.memory_space<vmem>>, vector<8x256xf32>
    %294 = arith.truncf %289 : vector<8x64xf32> to vector<8x64xbf16>
    %c0_94 = arith.constant 0 : index
    %c0_95 = arith.constant 0 : index
    %295 = vector.load %arg6[%c0_94, %c0_95] : memref<64x256xbf16, #tpu.memory_space<vmem>>, vector<64x256xbf16>
    %cst_96 = arith.constant dense<0.000000e+00> : vector<8x256xf32>
    %296 = tpu.matmul %294, %295, %cst_96 {dimension_numbers = #tpu.dot_dimension_numbers<[1], [0], [0], [1], [0, 0, 1, 1], [], []>} : vector<8x64xbf16>, vector<64x256xbf16>, vector<8x256xf32> -> vector<8x256xf32>
    %297 = arith.addf %293, %296 : vector<8x256xf32>
    %298 = vector.extract_strided_slice %297 {offsets = [0, 0], sizes = [8, 128], strides = [1, 1]} : vector<8x256xf32> to vector<8x128xf32>
    %299 = arith.negf %298 : vector<8x128xf32>
    %300 = math.exp %299 : vector<8x128xf32>
    %cst_97 = arith.constant 1.000000e+00 : f32
    %301 = vector.broadcast %cst_97 : f32 to vector<8x128xf32>
    %302 = arith.addf %301, %300 : vector<8x128xf32>
    %303 = arith.divf %301, %302 : vector<8x128xf32>
    %304 = vector.extract_strided_slice %297 {offsets = [0, 128], sizes = [8, 64], strides = [1, 1]} : vector<8x256xf32> to vector<8x64xf32>
    %305 = math.tanh %304 : vector<8x64xf32>
    %306 = vector.extract_strided_slice %297 {offsets = [0, 192], sizes = [8, 64], strides = [1, 1]} : vector<8x256xf32> to vector<8x64xf32>
    %307 = arith.negf %306 : vector<8x64xf32>
    %308 = math.exp %307 : vector<8x64xf32>
    %cst_98 = arith.constant 1.000000e+00 : f32
    %309 = vector.broadcast %cst_98 : f32 to vector<8x64xf32>
    %310 = arith.addf %309, %308 : vector<8x64xf32>
    %311 = arith.divf %309, %310 : vector<8x64xf32>
    %312 = vector.extract_strided_slice %303 {offsets = [0, 64], sizes = [8, 64], strides = [1, 1]} : vector<8x128xf32> to vector<8x64xf32>
    %313 = arith.mulf %312, %289 : vector<8x64xf32>
    %314 = vector.extract_strided_slice %303 {offsets = [0, 0], sizes = [8, 64], strides = [1, 1]} : vector<8x128xf32> to vector<8x64xf32>
    %315 = arith.mulf %314, %305 : vector<8x64xf32>
    %316 = arith.addf %313, %315 : vector<8x64xf32>
    %317 = math.tanh %316 : vector<8x64xf32>
    %318 = arith.mulf %311, %317 : vector<8x64xf32>
    %319 = arith.index_cast %291 : i32 to index
    %c0_99 = arith.constant 0 : index
    %320 = vector.load %arg20[%319, %c0_99] : memref<64x64xf32, #tpu.memory_space<vmem>>, vector<8x64xf32>
    tpu.vector_store %arg20[%319, %c0_99], %318 {strides = array<i32>} : memref<64x64xf32, #tpu.memory_space<vmem>>, vector<8x64xf32>,
    %321 = vector.extract_strided_slice %318 {offsets = [0, 0], sizes = [8, 32], strides = [1, 1]} : vector<8x64xf32> to vector<8x32xf32>
    %322 = arith.index_cast %c0_i32_91 : i32 to index
    %c0_100 = arith.constant 0 : index
    %c0_101 = arith.constant 0 : index
    %323 = vector.load %arg1[%322, %c0_100, %c0_101] : memref<8x8x32xf32, #tpu.memory_space<vmem>>, vector<1x8x32xf32>
    %324 = vector.shape_cast %323 : vector<1x8x32xf32> to vector<8x32xf32>
    %325 = vector.extract_strided_slice %318 {offsets = [0, 32], sizes = [8, 32], strides = [1, 1]} : vector<8x64xf32> to vector<8x32xf32>
    %cst_102 = arith.constant 5.000000e-01 : f32
    %326 = vector.broadcast %cst_102 : f32 to vector<8x32xf32>
    %327 = arith.mulf %326, %325 : vector<8x32xf32>
    %328 = math.exp %327 : vector<8x32xf32>
    %329 = arith.mulf %324, %328 : vector<8x32xf32>
    %330 = arith.addf %321, %329 : vector<8x32xf32>
    %331 = arith.truncf %330 : vector<8x32xf32> to vector<8x32xbf16>
    %332 = arith.index_cast %291 : i32 to index
    %c0_103 = arith.constant 0 : index
    %333 = vector.load %arg19[%332, %c0_103] : memref<64x32xbf16, #tpu.memory_space<vmem>>, vector<8x32xbf16>
    tpu.vector_store %arg19[%332, %c0_103], %331 {strides = array<i32>} : memref<64x32xbf16, #tpu.memory_space<vmem>>, vector<8x32xbf16>,
    %c1_i32_104 = arith.constant 1 : i32
    %c8_i32_105 = arith.constant 8 : i32
    %334 = arith.muli %c1_i32_104, %c8_i32_105 : i32
    %335 = tpu.assume_multiple %334, 8 : i32
    %336 = arith.index_cast %335 : i32 to index
    %c0_106 = arith.constant 0 : index
    %337 = vector.load %arg16[%336, %c0_106] : memref<64x256xf32, #tpu.memory_space<vmem>>, vector<8x256xf32>
    %338 = arith.truncf %318 : vector<8x64xf32> to vector<8x64xbf16>
    %c0_107 = arith.constant 0 : index
    %c0_108 = arith.constant 0 : index
    %339 = vector.load %arg6[%c0_107, %c0_108] : memref<64x256xbf16, #tpu.memory_space<vmem>>, vector<64x256xbf16>
    %cst_109 = arith.constant dense<0.000000e+00> : vector<8x256xf32>
    %340 = tpu.matmul %338, %339, %cst_109 {dimension_numbers = #tpu.dot_dimension_numbers<[1], [0], [0], [1], [0, 0, 1, 1], [], []>} : vector<8x64xbf16>, vector<64x256xbf16>, vector<8x256xf32> -> vector<8x256xf32>
    %341 = arith.addf %337, %340 : vector<8x256xf32>
    %342 = vector.extract_strided_slice %341 {offsets = [0, 0], sizes = [8, 128], strides = [1, 1]} : vector<8x256xf32> to vector<8x128xf32>
    %343 = arith.negf %342 : vector<8x128xf32>
    %344 = math.exp %343 : vector<8x128xf32>
    %cst_110 = arith.constant 1.000000e+00 : f32
    %345 = vector.broadcast %cst_110 : f32 to vector<8x128xf32>
    %346 = arith.addf %345, %344 : vector<8x128xf32>
    %347 = arith.divf %345, %346 : vector<8x128xf32>
    %348 = vector.extract_strided_slice %341 {offsets = [0, 128], sizes = [8, 64], strides = [1, 1]} : vector<8x256xf32> to vector<8x64xf32>
    %349 = math.tanh %348 : vector<8x64xf32>
    %350 = vector.extract_strided_slice %341 {offsets = [0, 192], sizes = [8, 64], strides = [1, 1]} : vector<8x256xf32> to vector<8x64xf32>
    %351 = arith.negf %350 : vector<8x64xf32>
    %352 = math.exp %351 : vector<8x64xf32>
    %cst_111 = arith.constant 1.000000e+00 : f32
    %353 = vector.broadcast %cst_111 : f32 to vector<8x64xf32>
    %354 = arith.addf %353, %352 : vector<8x64xf32>
    %355 = arith.divf %353, %354 : vector<8x64xf32>
    %356 = vector.extract_strided_slice %347 {offsets = [0, 64], sizes = [8, 64], strides = [1, 1]} : vector<8x128xf32> to vector<8x64xf32>
    %357 = arith.mulf %356, %316 : vector<8x64xf32>
    %358 = vector.extract_strided_slice %347 {offsets = [0, 0], sizes = [8, 64], strides = [1, 1]} : vector<8x128xf32> to vector<8x64xf32>
    %359 = arith.mulf %358, %349 : vector<8x64xf32>
    %360 = arith.addf %357, %359 : vector<8x64xf32>
    %361 = math.tanh %360 : vector<8x64xf32>
    %362 = arith.mulf %355, %361 : vector<8x64xf32>
    %363 = arith.index_cast %335 : i32 to index
    %c0_112 = arith.constant 0 : index
    %364 = vector.load %arg20[%363, %c0_112] : memref<64x64xf32, #tpu.memory_space<vmem>>, vector<8x64xf32>
    tpu.vector_store %arg20[%363, %c0_112], %362 {strides = array<i32>} : memref<64x64xf32, #tpu.memory_space<vmem>>, vector<8x64xf32>,
    %365 = vector.extract_strided_slice %362 {offsets = [0, 0], sizes = [8, 32], strides = [1, 1]} : vector<8x64xf32> to vector<8x32xf32>
    %366 = arith.index_cast %c1_i32_104 : i32 to index
    %c0_113 = arith.constant 0 : index
    %c0_114 = arith.constant 0 : index
    %367 = vector.load %arg1[%366, %c0_113, %c0_114] : memref<8x8x32xf32, #tpu.memory_space<vmem>>, vector<1x8x32xf32>
    %368 = vector.shape_cast %367 : vector<1x8x32xf32> to vector<8x32xf32>
    %369 = vector.extract_strided_slice %362 {offsets = [0, 32], sizes = [8, 32], strides = [1, 1]} : vector<8x64xf32> to vector<8x32xf32>
    %cst_115 = arith.constant 5.000000e-01 : f32
    %370 = vector.broadcast %cst_115 : f32 to vector<8x32xf32>
    %371 = arith.mulf %370, %369 : vector<8x32xf32>
    %372 = math.exp %371 : vector<8x32xf32>
    %373 = arith.mulf %368, %372 : vector<8x32xf32>
    %374 = arith.addf %365, %373 : vector<8x32xf32>
    %375 = arith.truncf %374 : vector<8x32xf32> to vector<8x32xbf16>
    %376 = arith.index_cast %335 : i32 to index
    %c0_116 = arith.constant 0 : index
    %377 = vector.load %arg19[%376, %c0_116] : memref<64x32xbf16, #tpu.memory_space<vmem>>, vector<8x32xbf16>
    tpu.vector_store %arg19[%376, %c0_116], %375 {strides = array<i32>} : memref<64x32xbf16, #tpu.memory_space<vmem>>, vector<8x32xbf16>,
    %c2_i32_117 = arith.constant 2 : i32
    %c8_i32_118 = arith.constant 8 : i32
    %378 = arith.muli %c2_i32_117, %c8_i32_118 : i32
    %379 = tpu.assume_multiple %378, 8 : i32
    %380 = arith.index_cast %379 : i32 to index
    %c0_119 = arith.constant 0 : index
    %381 = vector.load %arg16[%380, %c0_119] : memref<64x256xf32, #tpu.memory_space<vmem>>, vector<8x256xf32>
    %382 = arith.truncf %362 : vector<8x64xf32> to vector<8x64xbf16>
    %c0_120 = arith.constant 0 : index
    %c0_121 = arith.constant 0 : index
    %383 = vector.load %arg6[%c0_120, %c0_121] : memref<64x256xbf16, #tpu.memory_space<vmem>>, vector<64x256xbf16>
    %cst_122 = arith.constant dense<0.000000e+00> : vector<8x256xf32>
    %384 = tpu.matmul %382, %383, %cst_122 {dimension_numbers = #tpu.dot_dimension_numbers<[1], [0], [0], [1], [0, 0, 1, 1], [], []>} : vector<8x64xbf16>, vector<64x256xbf16>, vector<8x256xf32> -> vector<8x256xf32>
    %385 = arith.addf %381, %384 : vector<8x256xf32>
    %386 = vector.extract_strided_slice %385 {offsets = [0, 0], sizes = [8, 128], strides = [1, 1]} : vector<8x256xf32> to vector<8x128xf32>
    %387 = arith.negf %386 : vector<8x128xf32>
    %388 = math.exp %387 : vector<8x128xf32>
    %cst_123 = arith.constant 1.000000e+00 : f32
    %389 = vector.broadcast %cst_123 : f32 to vector<8x128xf32>
    %390 = arith.addf %389, %388 : vector<8x128xf32>
    %391 = arith.divf %389, %390 : vector<8x128xf32>
    %392 = vector.extract_strided_slice %385 {offsets = [0, 128], sizes = [8, 64], strides = [1, 1]} : vector<8x256xf32> to vector<8x64xf32>
    %393 = math.tanh %392 : vector<8x64xf32>
    %394 = vector.extract_strided_slice %385 {offsets = [0, 192], sizes = [8, 64], strides = [1, 1]} : vector<8x256xf32> to vector<8x64xf32>
    %395 = arith.negf %394 : vector<8x64xf32>
    %396 = math.exp %395 : vector<8x64xf32>
    %cst_124 = arith.constant 1.000000e+00 : f32
    %397 = vector.broadcast %cst_124 : f32 to vector<8x64xf32>
    %398 = arith.addf %397, %396 : vector<8x64xf32>
    %399 = arith.divf %397, %398 : vector<8x64xf32>
    %400 = vector.extract_strided_slice %391 {offsets = [0, 64], sizes = [8, 64], strides = [1, 1]} : vector<8x128xf32> to vector<8x64xf32>
    %401 = arith.mulf %400, %360 : vector<8x64xf32>
    %402 = vector.extract_strided_slice %391 {offsets = [0, 0], sizes = [8, 64], strides = [1, 1]} : vector<8x128xf32> to vector<8x64xf32>
    %403 = arith.mulf %402, %393 : vector<8x64xf32>
    %404 = arith.addf %401, %403 : vector<8x64xf32>
    %405 = math.tanh %404 : vector<8x64xf32>
    %406 = arith.mulf %399, %405 : vector<8x64xf32>
    %407 = arith.index_cast %379 : i32 to index
    %c0_125 = arith.constant 0 : index
    %408 = vector.load %arg20[%407, %c0_125] : memref<64x64xf32, #tpu.memory_space<vmem>>, vector<8x64xf32>
    tpu.vector_store %arg20[%407, %c0_125], %406 {strides = array<i32>} : memref<64x64xf32, #tpu.memory_space<vmem>>, vector<8x64xf32>,
    %409 = vector.extract_strided_slice %406 {offsets = [0, 0], sizes = [8, 32], strides = [1, 1]} : vector<8x64xf32> to vector<8x32xf32>
    %410 = arith.index_cast %c2_i32_117 : i32 to index
    %c0_126 = arith.constant 0 : index
    %c0_127 = arith.constant 0 : index
    %411 = vector.load %arg1[%410, %c0_126, %c0_127] : memref<8x8x32xf32, #tpu.memory_space<vmem>>, vector<1x8x32xf32>
    %412 = vector.shape_cast %411 : vector<1x8x32xf32> to vector<8x32xf32>
    %413 = vector.extract_strided_slice %406 {offsets = [0, 32], sizes = [8, 32], strides = [1, 1]} : vector<8x64xf32> to vector<8x32xf32>
    %cst_128 = arith.constant 5.000000e-01 : f32
    %414 = vector.broadcast %cst_128 : f32 to vector<8x32xf32>
    %415 = arith.mulf %414, %413 : vector<8x32xf32>
    %416 = math.exp %415 : vector<8x32xf32>
    %417 = arith.mulf %412, %416 : vector<8x32xf32>
    %418 = arith.addf %409, %417 : vector<8x32xf32>
    %419 = arith.truncf %418 : vector<8x32xf32> to vector<8x32xbf16>
    %420 = arith.index_cast %379 : i32 to index
    %c0_129 = arith.constant 0 : index
    %421 = vector.load %arg19[%420, %c0_129] : memref<64x32xbf16, #tpu.memory_space<vmem>>, vector<8x32xbf16>
    tpu.vector_store %arg19[%420, %c0_129], %419 {strides = array<i32>} : memref<64x32xbf16, #tpu.memory_space<vmem>>, vector<8x32xbf16>,
    %c3_i32_130 = arith.constant 3 : i32
    %c8_i32_131 = arith.constant 8 : i32
    %422 = arith.muli %c3_i32_130, %c8_i32_131 : i32
    %423 = tpu.assume_multiple %422, 8 : i32
    %424 = arith.index_cast %423 : i32 to index
    %c0_132 = arith.constant 0 : index
    %425 = vector.load %arg16[%424, %c0_132] : memref<64x256xf32, #tpu.memory_space<vmem>>, vector<8x256xf32>
    %426 = arith.truncf %406 : vector<8x64xf32> to vector<8x64xbf16>
    %c0_133 = arith.constant 0 : index
    %c0_134 = arith.constant 0 : index
    %427 = vector.load %arg6[%c0_133, %c0_134] : memref<64x256xbf16, #tpu.memory_space<vmem>>, vector<64x256xbf16>
    %cst_135 = arith.constant dense<0.000000e+00> : vector<8x256xf32>
    %428 = tpu.matmul %426, %427, %cst_135 {dimension_numbers = #tpu.dot_dimension_numbers<[1], [0], [0], [1], [0, 0, 1, 1], [], []>} : vector<8x64xbf16>, vector<64x256xbf16>, vector<8x256xf32> -> vector<8x256xf32>
    %429 = arith.addf %425, %428 : vector<8x256xf32>
    %430 = vector.extract_strided_slice %429 {offsets = [0, 0], sizes = [8, 128], strides = [1, 1]} : vector<8x256xf32> to vector<8x128xf32>
    %431 = arith.negf %430 : vector<8x128xf32>
    %432 = math.exp %431 : vector<8x128xf32>
    %cst_136 = arith.constant 1.000000e+00 : f32
    %433 = vector.broadcast %cst_136 : f32 to vector<8x128xf32>
    %434 = arith.addf %433, %432 : vector<8x128xf32>
    %435 = arith.divf %433, %434 : vector<8x128xf32>
    %436 = vector.extract_strided_slice %429 {offsets = [0, 128], sizes = [8, 64], strides = [1, 1]} : vector<8x256xf32> to vector<8x64xf32>
    %437 = math.tanh %436 : vector<8x64xf32>
    %438 = vector.extract_strided_slice %429 {offsets = [0, 192], sizes = [8, 64], strides = [1, 1]} : vector<8x256xf32> to vector<8x64xf32>
    %439 = arith.negf %438 : vector<8x64xf32>
    %440 = math.exp %439 : vector<8x64xf32>
    %cst_137 = arith.constant 1.000000e+00 : f32
    %441 = vector.broadcast %cst_137 : f32 to vector<8x64xf32>
    %442 = arith.addf %441, %440 : vector<8x64xf32>
    %443 = arith.divf %441, %442 : vector<8x64xf32>
    %444 = vector.extract_strided_slice %435 {offsets = [0, 64], sizes = [8, 64], strides = [1, 1]} : vector<8x128xf32> to vector<8x64xf32>
    %445 = arith.mulf %444, %404 : vector<8x64xf32>
    %446 = vector.extract_strided_slice %435 {offsets = [0, 0], sizes = [8, 64], strides = [1, 1]} : vector<8x128xf32> to vector<8x64xf32>
    %447 = arith.mulf %446, %437 : vector<8x64xf32>
    %448 = arith.addf %445, %447 : vector<8x64xf32>
    %449 = math.tanh %448 : vector<8x64xf32>
    %450 = arith.mulf %443, %449 : vector<8x64xf32>
    %451 = arith.index_cast %423 : i32 to index
    %c0_138 = arith.constant 0 : index
    %452 = vector.load %arg20[%451, %c0_138] : memref<64x64xf32, #tpu.memory_space<vmem>>, vector<8x64xf32>
    tpu.vector_store %arg20[%451, %c0_138], %450 {strides = array<i32>} : memref<64x64xf32, #tpu.memory_space<vmem>>, vector<8x64xf32>,
    %453 = vector.extract_strided_slice %450 {offsets = [0, 0], sizes = [8, 32], strides = [1, 1]} : vector<8x64xf32> to vector<8x32xf32>
    %454 = arith.index_cast %c3_i32_130 : i32 to index
    %c0_139 = arith.constant 0 : index
    %c0_140 = arith.constant 0 : index
    %455 = vector.load %arg1[%454, %c0_139, %c0_140] : memref<8x8x32xf32, #tpu.memory_space<vmem>>, vector<1x8x32xf32>
    %456 = vector.shape_cast %455 : vector<1x8x32xf32> to vector<8x32xf32>
    %457 = vector.extract_strided_slice %450 {offsets = [0, 32], sizes = [8, 32], strides = [1, 1]} : vector<8x64xf32> to vector<8x32xf32>
    %cst_141 = arith.constant 5.000000e-01 : f32
    %458 = vector.broadcast %cst_141 : f32 to vector<8x32xf32>
    %459 = arith.mulf %458, %457 : vector<8x32xf32>
    %460 = math.exp %459 : vector<8x32xf32>
    %461 = arith.mulf %456, %460 : vector<8x32xf32>
    %462 = arith.addf %453, %461 : vector<8x32xf32>
    %463 = arith.truncf %462 : vector<8x32xf32> to vector<8x32xbf16>
    %464 = arith.index_cast %423 : i32 to index
    %c0_142 = arith.constant 0 : index
    %465 = vector.load %arg19[%464, %c0_142] : memref<64x32xbf16, #tpu.memory_space<vmem>>, vector<8x32xbf16>
    tpu.vector_store %arg19[%464, %c0_142], %463 {strides = array<i32>} : memref<64x32xbf16, #tpu.memory_space<vmem>>, vector<8x32xbf16>,
    %c4_i32_143 = arith.constant 4 : i32
    %c8_i32_144 = arith.constant 8 : i32
    %466 = arith.muli %c4_i32_143, %c8_i32_144 : i32
    %467 = tpu.assume_multiple %466, 8 : i32
    %468 = arith.index_cast %467 : i32 to index
    %c0_145 = arith.constant 0 : index
    %469 = vector.load %arg16[%468, %c0_145] : memref<64x256xf32, #tpu.memory_space<vmem>>, vector<8x256xf32>
    %470 = arith.truncf %450 : vector<8x64xf32> to vector<8x64xbf16>
    %c0_146 = arith.constant 0 : index
    %c0_147 = arith.constant 0 : index
    %471 = vector.load %arg6[%c0_146, %c0_147] : memref<64x256xbf16, #tpu.memory_space<vmem>>, vector<64x256xbf16>
    %cst_148 = arith.constant dense<0.000000e+00> : vector<8x256xf32>
    %472 = tpu.matmul %470, %471, %cst_148 {dimension_numbers = #tpu.dot_dimension_numbers<[1], [0], [0], [1], [0, 0, 1, 1], [], []>} : vector<8x64xbf16>, vector<64x256xbf16>, vector<8x256xf32> -> vector<8x256xf32>
    %473 = arith.addf %469, %472 : vector<8x256xf32>
    %474 = vector.extract_strided_slice %473 {offsets = [0, 0], sizes = [8, 128], strides = [1, 1]} : vector<8x256xf32> to vector<8x128xf32>
    %475 = arith.negf %474 : vector<8x128xf32>
    %476 = math.exp %475 : vector<8x128xf32>
    %cst_149 = arith.constant 1.000000e+00 : f32
    %477 = vector.broadcast %cst_149 : f32 to vector<8x128xf32>
    %478 = arith.addf %477, %476 : vector<8x128xf32>
    %479 = arith.divf %477, %478 : vector<8x128xf32>
    %480 = vector.extract_strided_slice %473 {offsets = [0, 128], sizes = [8, 64], strides = [1, 1]} : vector<8x256xf32> to vector<8x64xf32>
    %481 = math.tanh %480 : vector<8x64xf32>
    %482 = vector.extract_strided_slice %473 {offsets = [0, 192], sizes = [8, 64], strides = [1, 1]} : vector<8x256xf32> to vector<8x64xf32>
    %483 = arith.negf %482 : vector<8x64xf32>
    %484 = math.exp %483 : vector<8x64xf32>
    %cst_150 = arith.constant 1.000000e+00 : f32
    %485 = vector.broadcast %cst_150 : f32 to vector<8x64xf32>
    %486 = arith.addf %485, %484 : vector<8x64xf32>
    %487 = arith.divf %485, %486 : vector<8x64xf32>
    %488 = vector.extract_strided_slice %479 {offsets = [0, 64], sizes = [8, 64], strides = [1, 1]} : vector<8x128xf32> to vector<8x64xf32>
    %489 = arith.mulf %488, %448 : vector<8x64xf32>
    %490 = vector.extract_strided_slice %479 {offsets = [0, 0], sizes = [8, 64], strides = [1, 1]} : vector<8x128xf32> to vector<8x64xf32>
    %491 = arith.mulf %490, %481 : vector<8x64xf32>
    %492 = arith.addf %489, %491 : vector<8x64xf32>
    %493 = math.tanh %492 : vector<8x64xf32>
    %494 = arith.mulf %487, %493 : vector<8x64xf32>
    %495 = arith.index_cast %467 : i32 to index
    %c0_151 = arith.constant 0 : index
    %496 = vector.load %arg20[%495, %c0_151] : memref<64x64xf32, #tpu.memory_space<vmem>>, vector<8x64xf32>
    tpu.vector_store %arg20[%495, %c0_151], %494 {strides = array<i32>} : memref<64x64xf32, #tpu.memory_space<vmem>>, vector<8x64xf32>,
    %497 = vector.extract_strided_slice %494 {offsets = [0, 0], sizes = [8, 32], strides = [1, 1]} : vector<8x64xf32> to vector<8x32xf32>
    %498 = arith.index_cast %c4_i32_143 : i32 to index
    %c0_152 = arith.constant 0 : index
    %c0_153 = arith.constant 0 : index
    %499 = vector.load %arg1[%498, %c0_152, %c0_153] : memref<8x8x32xf32, #tpu.memory_space<vmem>>, vector<1x8x32xf32>
    %500 = vector.shape_cast %499 : vector<1x8x32xf32> to vector<8x32xf32>
    %501 = vector.extract_strided_slice %494 {offsets = [0, 32], sizes = [8, 32], strides = [1, 1]} : vector<8x64xf32> to vector<8x32xf32>
    %cst_154 = arith.constant 5.000000e-01 : f32
    %502 = vector.broadcast %cst_154 : f32 to vector<8x32xf32>
    %503 = arith.mulf %502, %501 : vector<8x32xf32>
    %504 = math.exp %503 : vector<8x32xf32>
    %505 = arith.mulf %500, %504 : vector<8x32xf32>
    %506 = arith.addf %497, %505 : vector<8x32xf32>
    %507 = arith.truncf %506 : vector<8x32xf32> to vector<8x32xbf16>
    %508 = arith.index_cast %467 : i32 to index
    %c0_155 = arith.constant 0 : index
    %509 = vector.load %arg19[%508, %c0_155] : memref<64x32xbf16, #tpu.memory_space<vmem>>, vector<8x32xbf16>
    tpu.vector_store %arg19[%508, %c0_155], %507 {strides = array<i32>} : memref<64x32xbf16, #tpu.memory_space<vmem>>, vector<8x32xbf16>,
    %c5_i32_156 = arith.constant 5 : i32
    %c8_i32_157 = arith.constant 8 : i32
    %510 = arith.muli %c5_i32_156, %c8_i32_157 : i32
    %511 = tpu.assume_multiple %510, 8 : i32
    %512 = arith.index_cast %511 : i32 to index
    %c0_158 = arith.constant 0 : index
    %513 = vector.load %arg16[%512, %c0_158] : memref<64x256xf32, #tpu.memory_space<vmem>>, vector<8x256xf32>
    %514 = arith.truncf %494 : vector<8x64xf32> to vector<8x64xbf16>
    %c0_159 = arith.constant 0 : index
    %c0_160 = arith.constant 0 : index
    %515 = vector.load %arg6[%c0_159, %c0_160] : memref<64x256xbf16, #tpu.memory_space<vmem>>, vector<64x256xbf16>
    %cst_161 = arith.constant dense<0.000000e+00> : vector<8x256xf32>
    %516 = tpu.matmul %514, %515, %cst_161 {dimension_numbers = #tpu.dot_dimension_numbers<[1], [0], [0], [1], [0, 0, 1, 1], [], []>} : vector<8x64xbf16>, vector<64x256xbf16>, vector<8x256xf32> -> vector<8x256xf32>
    %517 = arith.addf %513, %516 : vector<8x256xf32>
    %518 = vector.extract_strided_slice %517 {offsets = [0, 0], sizes = [8, 128], strides = [1, 1]} : vector<8x256xf32> to vector<8x128xf32>
    %519 = arith.negf %518 : vector<8x128xf32>
    %520 = math.exp %519 : vector<8x128xf32>
    %cst_162 = arith.constant 1.000000e+00 : f32
    %521 = vector.broadcast %cst_162 : f32 to vector<8x128xf32>
    %522 = arith.addf %521, %520 : vector<8x128xf32>
    %523 = arith.divf %521, %522 : vector<8x128xf32>
    %524 = vector.extract_strided_slice %517 {offsets = [0, 128], sizes = [8, 64], strides = [1, 1]} : vector<8x256xf32> to vector<8x64xf32>
    %525 = math.tanh %524 : vector<8x64xf32>
    %526 = vector.extract_strided_slice %517 {offsets = [0, 192], sizes = [8, 64], strides = [1, 1]} : vector<8x256xf32> to vector<8x64xf32>
    %527 = arith.negf %526 : vector<8x64xf32>
    %528 = math.exp %527 : vector<8x64xf32>
    %cst_163 = arith.constant 1.000000e+00 : f32
    %529 = vector.broadcast %cst_163 : f32 to vector<8x64xf32>
    %530 = arith.addf %529, %528 : vector<8x64xf32>
    %531 = arith.divf %529, %530 : vector<8x64xf32>
    %532 = vector.extract_strided_slice %523 {offsets = [0, 64], sizes = [8, 64], strides = [1, 1]} : vector<8x128xf32> to vector<8x64xf32>
    %533 = arith.mulf %532, %492 : vector<8x64xf32>
    %534 = vector.extract_strided_slice %523 {offsets = [0, 0], sizes = [8, 64], strides = [1, 1]} : vector<8x128xf32> to vector<8x64xf32>
    %535 = arith.mulf %534, %525 : vector<8x64xf32>
    %536 = arith.addf %533, %535 : vector<8x64xf32>
    %537 = math.tanh %536 : vector<8x64xf32>
    %538 = arith.mulf %531, %537 : vector<8x64xf32>
    %539 = arith.index_cast %511 : i32 to index
    %c0_164 = arith.constant 0 : index
    %540 = vector.load %arg20[%539, %c0_164] : memref<64x64xf32, #tpu.memory_space<vmem>>, vector<8x64xf32>
    tpu.vector_store %arg20[%539, %c0_164], %538 {strides = array<i32>} : memref<64x64xf32, #tpu.memory_space<vmem>>, vector<8x64xf32>,
    %541 = vector.extract_strided_slice %538 {offsets = [0, 0], sizes = [8, 32], strides = [1, 1]} : vector<8x64xf32> to vector<8x32xf32>
    %542 = arith.index_cast %c5_i32_156 : i32 to index
    %c0_165 = arith.constant 0 : index
    %c0_166 = arith.constant 0 : index
    %543 = vector.load %arg1[%542, %c0_165, %c0_166] : memref<8x8x32xf32, #tpu.memory_space<vmem>>, vector<1x8x32xf32>
    %544 = vector.shape_cast %543 : vector<1x8x32xf32> to vector<8x32xf32>
    %545 = vector.extract_strided_slice %538 {offsets = [0, 32], sizes = [8, 32], strides = [1, 1]} : vector<8x64xf32> to vector<8x32xf32>
    %cst_167 = arith.constant 5.000000e-01 : f32
    %546 = vector.broadcast %cst_167 : f32 to vector<8x32xf32>
    %547 = arith.mulf %546, %545 : vector<8x32xf32>
    %548 = math.exp %547 : vector<8x32xf32>
    %549 = arith.mulf %544, %548 : vector<8x32xf32>
    %550 = arith.addf %541, %549 : vector<8x32xf32>
    %551 = arith.truncf %550 : vector<8x32xf32> to vector<8x32xbf16>
    %552 = arith.index_cast %511 : i32 to index
    %c0_168 = arith.constant 0 : index
    %553 = vector.load %arg19[%552, %c0_168] : memref<64x32xbf16, #tpu.memory_space<vmem>>, vector<8x32xbf16>
    tpu.vector_store %arg19[%552, %c0_168], %551 {strides = array<i32>} : memref<64x32xbf16, #tpu.memory_space<vmem>>, vector<8x32xbf16>,
    %c6_i32_169 = arith.constant 6 : i32
    %c8_i32_170 = arith.constant 8 : i32
    %554 = arith.muli %c6_i32_169, %c8_i32_170 : i32
    %555 = tpu.assume_multiple %554, 8 : i32
    %556 = arith.index_cast %555 : i32 to index
    %c0_171 = arith.constant 0 : index
    %557 = vector.load %arg16[%556, %c0_171] : memref<64x256xf32, #tpu.memory_space<vmem>>, vector<8x256xf32>
    %558 = arith.truncf %538 : vector<8x64xf32> to vector<8x64xbf16>
    %c0_172 = arith.constant 0 : index
    %c0_173 = arith.constant 0 : index
    %559 = vector.load %arg6[%c0_172, %c0_173] : memref<64x256xbf16, #tpu.memory_space<vmem>>, vector<64x256xbf16>
    %cst_174 = arith.constant dense<0.000000e+00> : vector<8x256xf32>
    %560 = tpu.matmul %558, %559, %cst_174 {dimension_numbers = #tpu.dot_dimension_numbers<[1], [0], [0], [1], [0, 0, 1, 1], [], []>} : vector<8x64xbf16>, vector<64x256xbf16>, vector<8x256xf32> -> vector<8x256xf32>
    %561 = arith.addf %557, %560 : vector<8x256xf32>
    %562 = vector.extract_strided_slice %561 {offsets = [0, 0], sizes = [8, 128], strides = [1, 1]} : vector<8x256xf32> to vector<8x128xf32>
    %563 = arith.negf %562 : vector<8x128xf32>
    %564 = math.exp %563 : vector<8x128xf32>
    %cst_175 = arith.constant 1.000000e+00 : f32
    %565 = vector.broadcast %cst_175 : f32 to vector<8x128xf32>
    %566 = arith.addf %565, %564 : vector<8x128xf32>
    %567 = arith.divf %565, %566 : vector<8x128xf32>
    %568 = vector.extract_strided_slice %561 {offsets = [0, 128], sizes = [8, 64], strides = [1, 1]} : vector<8x256xf32> to vector<8x64xf32>
    %569 = math.tanh %568 : vector<8x64xf32>
    %570 = vector.extract_strided_slice %561 {offsets = [0, 192], sizes = [8, 64], strides = [1, 1]} : vector<8x256xf32> to vector<8x64xf32>
    %571 = arith.negf %570 : vector<8x64xf32>
    %572 = math.exp %571 : vector<8x64xf32>
    %cst_176 = arith.constant 1.000000e+00 : f32
    %573 = vector.broadcast %cst_176 : f32 to vector<8x64xf32>
    %574 = arith.addf %573, %572 : vector<8x64xf32>
    %575 = arith.divf %573, %574 : vector<8x64xf32>
    %576 = vector.extract_strided_slice %567 {offsets = [0, 64], sizes = [8, 64], strides = [1, 1]} : vector<8x128xf32> to vector<8x64xf32>
    %577 = arith.mulf %576, %536 : vector<8x64xf32>
    %578 = vector.extract_strided_slice %567 {offsets = [0, 0], sizes = [8, 64], strides = [1, 1]} : vector<8x128xf32> to vector<8x64xf32>
    %579 = arith.mulf %578, %569 : vector<8x64xf32>
    %580 = arith.addf %577, %579 : vector<8x64xf32>
    %581 = math.tanh %580 : vector<8x64xf32>
    %582 = arith.mulf %575, %581 : vector<8x64xf32>
    %583 = arith.index_cast %555 : i32 to index
    %c0_177 = arith.constant 0 : index
    %584 = vector.load %arg20[%583, %c0_177] : memref<64x64xf32, #tpu.memory_space<vmem>>, vector<8x64xf32>
    tpu.vector_store %arg20[%583, %c0_177], %582 {strides = array<i32>} : memref<64x64xf32, #tpu.memory_space<vmem>>, vector<8x64xf32>,
    %585 = vector.extract_strided_slice %582 {offsets = [0, 0], sizes = [8, 32], strides = [1, 1]} : vector<8x64xf32> to vector<8x32xf32>
    %586 = arith.index_cast %c6_i32_169 : i32 to index
    %c0_178 = arith.constant 0 : index
    %c0_179 = arith.constant 0 : index
    %587 = vector.load %arg1[%586, %c0_178, %c0_179] : memref<8x8x32xf32, #tpu.memory_space<vmem>>, vector<1x8x32xf32>
    %588 = vector.shape_cast %587 : vector<1x8x32xf32> to vector<8x32xf32>
    %589 = vector.extract_strided_slice %582 {offsets = [0, 32], sizes = [8, 32], strides = [1, 1]} : vector<8x64xf32> to vector<8x32xf32>
    %cst_180 = arith.constant 5.000000e-01 : f32
    %590 = vector.broadcast %cst_180 : f32 to vector<8x32xf32>
    %591 = arith.mulf %590, %589 : vector<8x32xf32>
    %592 = math.exp %591 : vector<8x32xf32>
    %593 = arith.mulf %588, %592 : vector<8x32xf32>
    %594 = arith.addf %585, %593 : vector<8x32xf32>
    %595 = arith.truncf %594 : vector<8x32xf32> to vector<8x32xbf16>
    %596 = arith.index_cast %555 : i32 to index
    %c0_181 = arith.constant 0 : index
    %597 = vector.load %arg19[%596, %c0_181] : memref<64x32xbf16, #tpu.memory_space<vmem>>, vector<8x32xbf16>
    tpu.vector_store %arg19[%596, %c0_181], %595 {strides = array<i32>} : memref<64x32xbf16, #tpu.memory_space<vmem>>, vector<8x32xbf16>,
    %c7_i32_182 = arith.constant 7 : i32
    %c8_i32_183 = arith.constant 8 : i32
    %598 = arith.muli %c7_i32_182, %c8_i32_183 : i32
    %599 = tpu.assume_multiple %598, 8 : i32
    %600 = arith.index_cast %599 : i32 to index
    %c0_184 = arith.constant 0 : index
    %601 = vector.load %arg16[%600, %c0_184] : memref<64x256xf32, #tpu.memory_space<vmem>>, vector<8x256xf32>
    %602 = arith.truncf %582 : vector<8x64xf32> to vector<8x64xbf16>
    %c0_185 = arith.constant 0 : index
    %c0_186 = arith.constant 0 : index
    %603 = vector.load %arg6[%c0_185, %c0_186] : memref<64x256xbf16, #tpu.memory_space<vmem>>, vector<64x256xbf16>
    %cst_187 = arith.constant dense<0.000000e+00> : vector<8x256xf32>
    %604 = tpu.matmul %602, %603, %cst_187 {dimension_numbers = #tpu.dot_dimension_numbers<[1], [0], [0], [1], [0, 0, 1, 1], [], []>} : vector<8x64xbf16>, vector<64x256xbf16>, vector<8x256xf32> -> vector<8x256xf32>
    %605 = arith.addf %601, %604 : vector<8x256xf32>
    %606 = vector.extract_strided_slice %605 {offsets = [0, 0], sizes = [8, 128], strides = [1, 1]} : vector<8x256xf32> to vector<8x128xf32>
    %607 = arith.negf %606 : vector<8x128xf32>
    %608 = math.exp %607 : vector<8x128xf32>
    %cst_188 = arith.constant 1.000000e+00 : f32
    %609 = vector.broadcast %cst_188 : f32 to vector<8x128xf32>
    %610 = arith.addf %609, %608 : vector<8x128xf32>
    %611 = arith.divf %609, %610 : vector<8x128xf32>
    %612 = vector.extract_strided_slice %605 {offsets = [0, 128], sizes = [8, 64], strides = [1, 1]} : vector<8x256xf32> to vector<8x64xf32>
    %613 = math.tanh %612 : vector<8x64xf32>
    %614 = vector.extract_strided_slice %605 {offsets = [0, 192], sizes = [8, 64], strides = [1, 1]} : vector<8x256xf32> to vector<8x64xf32>
    %615 = arith.negf %614 : vector<8x64xf32>
    %616 = math.exp %615 : vector<8x64xf32>
    %cst_189 = arith.constant 1.000000e+00 : f32
    %617 = vector.broadcast %cst_189 : f32 to vector<8x64xf32>
    %618 = arith.addf %617, %616 : vector<8x64xf32>
    %619 = arith.divf %617, %618 : vector<8x64xf32>
    %620 = vector.extract_strided_slice %611 {offsets = [0, 64], sizes = [8, 64], strides = [1, 1]} : vector<8x128xf32> to vector<8x64xf32>
    %621 = arith.mulf %620, %580 : vector<8x64xf32>
    %622 = vector.extract_strided_slice %611 {offsets = [0, 0], sizes = [8, 64], strides = [1, 1]} : vector<8x128xf32> to vector<8x64xf32>
    %623 = arith.mulf %622, %613 : vector<8x64xf32>
    %624 = arith.addf %621, %623 : vector<8x64xf32>
    %625 = math.tanh %624 : vector<8x64xf32>
    %626 = arith.mulf %619, %625 : vector<8x64xf32>
    %627 = arith.index_cast %599 : i32 to index
    %c0_190 = arith.constant 0 : index
    %628 = vector.load %arg20[%627, %c0_190] : memref<64x64xf32, #tpu.memory_space<vmem>>, vector<8x64xf32>
    tpu.vector_store %arg20[%627, %c0_190], %626 {strides = array<i32>} : memref<64x64xf32, #tpu.memory_space<vmem>>, vector<8x64xf32>,
    %629 = vector.extract_strided_slice %626 {offsets = [0, 0], sizes = [8, 32], strides = [1, 1]} : vector<8x64xf32> to vector<8x32xf32>
    %630 = arith.index_cast %c7_i32_182 : i32 to index
    %c0_191 = arith.constant 0 : index
    %c0_192 = arith.constant 0 : index
    %631 = vector.load %arg1[%630, %c0_191, %c0_192] : memref<8x8x32xf32, #tpu.memory_space<vmem>>, vector<1x8x32xf32>
    %632 = vector.shape_cast %631 : vector<1x8x32xf32> to vector<8x32xf32>
    %633 = vector.extract_strided_slice %626 {offsets = [0, 32], sizes = [8, 32], strides = [1, 1]} : vector<8x64xf32> to vector<8x32xf32>
    %cst_193 = arith.constant 5.000000e-01 : f32
    %634 = vector.broadcast %cst_193 : f32 to vector<8x32xf32>
    %635 = arith.mulf %634, %633 : vector<8x32xf32>
    %636 = math.exp %635 : vector<8x32xf32>
    %637 = arith.mulf %632, %636 : vector<8x32xf32>
    %638 = arith.addf %629, %637 : vector<8x32xf32>
    %639 = arith.truncf %638 : vector<8x32xf32> to vector<8x32xbf16>
    %640 = arith.index_cast %599 : i32 to index
    %c0_194 = arith.constant 0 : index
    %641 = vector.load %arg19[%640, %c0_194] : memref<64x32xbf16, #tpu.memory_space<vmem>>, vector<8x32xbf16>
    tpu.vector_store %arg19[%640, %c0_194], %639 {strides = array<i32>} : memref<64x32xbf16, #tpu.memory_space<vmem>>, vector<8x32xbf16>,
    %c8_i32_195 = arith.constant 8 : i32
    %c0_196 = arith.constant 0 : index
    %c0_197 = arith.constant 0 : index
    %642 = vector.load %arg19[%c0_196, %c0_197] : memref<64x32xbf16, #tpu.memory_space<vmem>>, vector<64x32xbf16>
    %c0_198 = arith.constant 0 : index
    %c0_199 = arith.constant 0 : index
    %643 = vector.load %arg8[%c0_198, %c0_199] : memref<32x512xbf16, #tpu.memory_space<vmem>>, vector<32x512xbf16>
    %cst_200 = arith.constant dense<0.000000e+00> : vector<64x512xf32>
    %644 = tpu.matmul %642, %643, %cst_200 {dimension_numbers = #tpu.dot_dimension_numbers<[1], [0], [0], [1], [0, 0, 1, 1], [], []>} : vector<64x32xbf16>, vector<32x512xbf16>, vector<64x512xf32> -> vector<64x512xf32>
    %c0_201 = arith.constant 0 : index
    %c0_202 = arith.constant 0 : index
    %645 = vector.load %arg10[%c0_201, %c0_202] : memref<1x512xf32, #tpu.memory_space<vmem>>, vector<1x512xf32>
    %646 = vector.broadcast %645 : vector<1x512xf32> to vector<64x512xf32>
    %647 = arith.addf %644, %646 : vector<64x512xf32>
    %c0_203 = arith.constant 0 : index
    %c0_204 = arith.constant 0 : index
    %648 = vector.load %arg15[%c0_203, %c0_204] : memref<64x512xf32, #tpu.memory_space<vmem>>, vector<64x512xf32>
    tpu.vector_store %arg15[%c0_203, %c0_204], %647 {strides = array<i32>} : memref<64x512xf32, #tpu.memory_space<vmem>>, vector<64x512xf32>,
    %c0_i32_205 = arith.constant 0 : i32
    %c8_i32_206 = arith.constant 8 : i32
    %649 = arith.muli %c0_i32_205, %c8_i32_206 : i32
    %650 = tpu.assume_multiple %649, 8 : i32
    %651 = arith.index_cast %650 : i32 to index
    %c0_207 = arith.constant 0 : index
    %652 = vector.load %arg15[%651, %c0_207] : memref<64x512xf32, #tpu.memory_space<vmem>>, vector<8x512xf32>
    %653 = arith.truncf %9 : vector<8x128xf32> to vector<8x128xbf16>
    %c0_208 = arith.constant 0 : index
    %c0_209 = arith.constant 0 : index
    %654 = vector.load %arg9[%c0_208, %c0_209] : memref<128x512xbf16, #tpu.memory_space<vmem>>, vector<128x512xbf16>
    %cst_210 = arith.constant dense<0.000000e+00> : vector<8x512xf32>
    %655 = tpu.matmul %653, %654, %cst_210 {dimension_numbers = #tpu.dot_dimension_numbers<[1], [0], [0], [1], [0, 0, 1, 1], [], []>} : vector<8x128xbf16>, vector<128x512xbf16>, vector<8x512xf32> -> vector<8x512xf32>
    %656 = arith.addf %652, %655 : vector<8x512xf32>
    %657 = vector.extract_strided_slice %656 {offsets = [0, 0], sizes = [8, 256], strides = [1, 1]} : vector<8x512xf32> to vector<8x256xf32>
    %658 = arith.negf %657 : vector<8x256xf32>
    %659 = math.exp %658 : vector<8x256xf32>
    %cst_211 = arith.constant 1.000000e+00 : f32
    %660 = vector.broadcast %cst_211 : f32 to vector<8x256xf32>
    %661 = arith.addf %660, %659 : vector<8x256xf32>
    %662 = arith.divf %660, %661 : vector<8x256xf32>
    %663 = vector.extract_strided_slice %656 {offsets = [0, 256], sizes = [8, 128], strides = [1, 1]} : vector<8x512xf32> to vector<8x128xf32>
    %664 = math.tanh %663 : vector<8x128xf32>
    %665 = vector.extract_strided_slice %656 {offsets = [0, 384], sizes = [8, 128], strides = [1, 1]} : vector<8x512xf32> to vector<8x128xf32>
    %666 = arith.negf %665 : vector<8x128xf32>
    %667 = math.exp %666 : vector<8x128xf32>
    %cst_212 = arith.constant 1.000000e+00 : f32
    %668 = vector.broadcast %cst_212 : f32 to vector<8x128xf32>
    %669 = arith.addf %668, %667 : vector<8x128xf32>
    %670 = arith.divf %668, %669 : vector<8x128xf32>
    %671 = vector.extract_strided_slice %662 {offsets = [0, 128], sizes = [8, 128], strides = [1, 1]} : vector<8x256xf32> to vector<8x128xf32>
    %672 = arith.mulf %671, %9 : vector<8x128xf32>
    %673 = vector.extract_strided_slice %662 {offsets = [0, 0], sizes = [8, 128], strides = [1, 1]} : vector<8x256xf32> to vector<8x128xf32>
    %674 = arith.mulf %673, %664 : vector<8x128xf32>
    %675 = arith.addf %672, %674 : vector<8x128xf32>
    %676 = math.tanh %675 : vector<8x128xf32>
    %677 = arith.mulf %670, %676 : vector<8x128xf32>
    %cst_213 = arith.constant 0.000000e+00 : f32
    %678 = vector.broadcast %cst_213 : f32 to vector<8x128xf32>
    %679 = arith.maximumf %677, %678 : vector<8x128xf32>
    %680 = arith.truncf %679 : vector<8x128xf32> to vector<8x128xbf16>
    %681 = arith.index_cast %650 : i32 to index
    %c0_214 = arith.constant 0 : index
    %682 = vector.load %arg18[%681, %c0_214] : memref<64x128xbf16, #tpu.memory_space<vmem>>, vector<8x128xbf16>
    tpu.vector_store %arg18[%681, %c0_214], %680 {strides = array<i32>} : memref<64x128xbf16, #tpu.memory_space<vmem>>, vector<8x128xbf16>,
    %c1_i32_215 = arith.constant 1 : i32
    %c8_i32_216 = arith.constant 8 : i32
    %683 = arith.muli %c1_i32_215, %c8_i32_216 : i32
    %684 = tpu.assume_multiple %683, 8 : i32
    %685 = arith.index_cast %684 : i32 to index
    %c0_217 = arith.constant 0 : index
    %686 = vector.load %arg15[%685, %c0_217] : memref<64x512xf32, #tpu.memory_space<vmem>>, vector<8x512xf32>
    %687 = arith.truncf %677 : vector<8x128xf32> to vector<8x128xbf16>
    %c0_218 = arith.constant 0 : index
    %c0_219 = arith.constant 0 : index
    %688 = vector.load %arg9[%c0_218, %c0_219] : memref<128x512xbf16, #tpu.memory_space<vmem>>, vector<128x512xbf16>
    %cst_220 = arith.constant dense<0.000000e+00> : vector<8x512xf32>
    %689 = tpu.matmul %687, %688, %cst_220 {dimension_numbers = #tpu.dot_dimension_numbers<[1], [0], [0], [1], [0, 0, 1, 1], [], []>} : vector<8x128xbf16>, vector<128x512xbf16>, vector<8x512xf32> -> vector<8x512xf32>
    %690 = arith.addf %686, %689 : vector<8x512xf32>
    %691 = vector.extract_strided_slice %690 {offsets = [0, 0], sizes = [8, 256], strides = [1, 1]} : vector<8x512xf32> to vector<8x256xf32>
    %692 = arith.negf %691 : vector<8x256xf32>
    %693 = math.exp %692 : vector<8x256xf32>
    %cst_221 = arith.constant 1.000000e+00 : f32
    %694 = vector.broadcast %cst_221 : f32 to vector<8x256xf32>
    %695 = arith.addf %694, %693 : vector<8x256xf32>
    %696 = arith.divf %694, %695 : vector<8x256xf32>
    %697 = vector.extract_strided_slice %690 {offsets = [0, 256], sizes = [8, 128], strides = [1, 1]} : vector<8x512xf32> to vector<8x128xf32>
    %698 = math.tanh %697 : vector<8x128xf32>
    %699 = vector.extract_strided_slice %690 {offsets = [0, 384], sizes = [8, 128], strides = [1, 1]} : vector<8x512xf32> to vector<8x128xf32>
    %700 = arith.negf %699 : vector<8x128xf32>
    %701 = math.exp %700 : vector<8x128xf32>
    %cst_222 = arith.constant 1.000000e+00 : f32
    %702 = vector.broadcast %cst_222 : f32 to vector<8x128xf32>
    %703 = arith.addf %702, %701 : vector<8x128xf32>
    %704 = arith.divf %702, %703 : vector<8x128xf32>
    %705 = vector.extract_strided_slice %696 {offsets = [0, 128], sizes = [8, 128], strides = [1, 1]} : vector<8x256xf32> to vector<8x128xf32>
    %706 = arith.mulf %705, %675 : vector<8x128xf32>
    %707 = vector.extract_strided_slice %696 {offsets = [0, 0], sizes = [8, 128], strides = [1, 1]} : vector<8x256xf32> to vector<8x128xf32>
    %708 = arith.mulf %707, %698 : vector<8x128xf32>
    %709 = arith.addf %706, %708 : vector<8x128xf32>
    %710 = math.tanh %709 : vector<8x128xf32>
    %711 = arith.mulf %704, %710 : vector<8x128xf32>
    %cst_223 = arith.constant 0.000000e+00 : f32
    %712 = vector.broadcast %cst_223 : f32 to vector<8x128xf32>
    %713 = arith.maximumf %711, %712 : vector<8x128xf32>
    %714 = arith.truncf %713 : vector<8x128xf32> to vector<8x128xbf16>
    %715 = arith.index_cast %684 : i32 to index
    %c0_224 = arith.constant 0 : index
    %716 = vector.load %arg18[%715, %c0_224] : memref<64x128xbf16, #tpu.memory_space<vmem>>, vector<8x128xbf16>
    tpu.vector_store %arg18[%715, %c0_224], %714 {strides = array<i32>} : memref<64x128xbf16, #tpu.memory_space<vmem>>, vector<8x128xbf16>,
    %c2_i32_225 = arith.constant 2 : i32
    %c8_i32_226 = arith.constant 8 : i32
    %717 = arith.muli %c2_i32_225, %c8_i32_226 : i32
    %718 = tpu.assume_multiple %717, 8 : i32
    %719 = arith.index_cast %718 : i32 to index
    %c0_227 = arith.constant 0 : index
    %720 = vector.load %arg15[%719, %c0_227] : memref<64x512xf32, #tpu.memory_space<vmem>>, vector<8x512xf32>
    %721 = arith.truncf %711 : vector<8x128xf32> to vector<8x128xbf16>
    %c0_228 = arith.constant 0 : index
    %c0_229 = arith.constant 0 : index
    %722 = vector.load %arg9[%c0_228, %c0_229] : memref<128x512xbf16, #tpu.memory_space<vmem>>, vector<128x512xbf16>
    %cst_230 = arith.constant dense<0.000000e+00> : vector<8x512xf32>
    %723 = tpu.matmul %721, %722, %cst_230 {dimension_numbers = #tpu.dot_dimension_numbers<[1], [0], [0], [1], [0, 0, 1, 1], [], []>} : vector<8x128xbf16>, vector<128x512xbf16>, vector<8x512xf32> -> vector<8x512xf32>
    %724 = arith.addf %720, %723 : vector<8x512xf32>
    %725 = vector.extract_strided_slice %724 {offsets = [0, 0], sizes = [8, 256], strides = [1, 1]} : vector<8x512xf32> to vector<8x256xf32>
    %726 = arith.negf %725 : vector<8x256xf32>
    %727 = math.exp %726 : vector<8x256xf32>
    %cst_231 = arith.constant 1.000000e+00 : f32
    %728 = vector.broadcast %cst_231 : f32 to vector<8x256xf32>
    %729 = arith.addf %728, %727 : vector<8x256xf32>
    %730 = arith.divf %728, %729 : vector<8x256xf32>
    %731 = vector.extract_strided_slice %724 {offsets = [0, 256], sizes = [8, 128], strides = [1, 1]} : vector<8x512xf32> to vector<8x128xf32>
    %732 = math.tanh %731 : vector<8x128xf32>
    %733 = vector.extract_strided_slice %724 {offsets = [0, 384], sizes = [8, 128], strides = [1, 1]} : vector<8x512xf32> to vector<8x128xf32>
    %734 = arith.negf %733 : vector<8x128xf32>
    %735 = math.exp %734 : vector<8x128xf32>
    %cst_232 = arith.constant 1.000000e+00 : f32
    %736 = vector.broadcast %cst_232 : f32 to vector<8x128xf32>
    %737 = arith.addf %736, %735 : vector<8x128xf32>
    %738 = arith.divf %736, %737 : vector<8x128xf32>
    %739 = vector.extract_strided_slice %730 {offsets = [0, 128], sizes = [8, 128], strides = [1, 1]} : vector<8x256xf32> to vector<8x128xf32>
    %740 = arith.mulf %739, %709 : vector<8x128xf32>
    %741 = vector.extract_strided_slice %730 {offsets = [0, 0], sizes = [8, 128], strides = [1, 1]} : vector<8x256xf32> to vector<8x128xf32>
    %742 = arith.mulf %741, %732 : vector<8x128xf32>
    %743 = arith.addf %740, %742 : vector<8x128xf32>
    %744 = math.tanh %743 : vector<8x128xf32>
    %745 = arith.mulf %738, %744 : vector<8x128xf32>
    %cst_233 = arith.constant 0.000000e+00 : f32
    %746 = vector.broadcast %cst_233 : f32 to vector<8x128xf32>
    %747 = arith.maximumf %745, %746 : vector<8x128xf32>
    %748 = arith.truncf %747 : vector<8x128xf32> to vector<8x128xbf16>
    %749 = arith.index_cast %718 : i32 to index
    %c0_234 = arith.constant 0 : index
    %750 = vector.load %arg18[%749, %c0_234] : memref<64x128xbf16, #tpu.memory_space<vmem>>, vector<8x128xbf16>
    tpu.vector_store %arg18[%749, %c0_234], %748 {strides = array<i32>} : memref<64x128xbf16, #tpu.memory_space<vmem>>, vector<8x128xbf16>,
    %c3_i32_235 = arith.constant 3 : i32
    %c8_i32_236 = arith.constant 8 : i32
    %751 = arith.muli %c3_i32_235, %c8_i32_236 : i32
    %752 = tpu.assume_multiple %751, 8 : i32
    %753 = arith.index_cast %752 : i32 to index
    %c0_237 = arith.constant 0 : index
    %754 = vector.load %arg15[%753, %c0_237] : memref<64x512xf32, #tpu.memory_space<vmem>>, vector<8x512xf32>
    %755 = arith.truncf %745 : vector<8x128xf32> to vector<8x128xbf16>
    %c0_238 = arith.constant 0 : index
    %c0_239 = arith.constant 0 : index
    %756 = vector.load %arg9[%c0_238, %c0_239] : memref<128x512xbf16, #tpu.memory_space<vmem>>, vector<128x512xbf16>
    %cst_240 = arith.constant dense<0.000000e+00> : vector<8x512xf32>
    %757 = tpu.matmul %755, %756, %cst_240 {dimension_numbers = #tpu.dot_dimension_numbers<[1], [0], [0], [1], [0, 0, 1, 1], [], []>} : vector<8x128xbf16>, vector<128x512xbf16>, vector<8x512xf32> -> vector<8x512xf32>
    %758 = arith.addf %754, %757 : vector<8x512xf32>
    %759 = vector.extract_strided_slice %758 {offsets = [0, 0], sizes = [8, 256], strides = [1, 1]} : vector<8x512xf32> to vector<8x256xf32>
    %760 = arith.negf %759 : vector<8x256xf32>
    %761 = math.exp %760 : vector<8x256xf32>
    %cst_241 = arith.constant 1.000000e+00 : f32
    %762 = vector.broadcast %cst_241 : f32 to vector<8x256xf32>
    %763 = arith.addf %762, %761 : vector<8x256xf32>
    %764 = arith.divf %762, %763 : vector<8x256xf32>
    %765 = vector.extract_strided_slice %758 {offsets = [0, 256], sizes = [8, 128], strides = [1, 1]} : vector<8x512xf32> to vector<8x128xf32>
    %766 = math.tanh %765 : vector<8x128xf32>
    %767 = vector.extract_strided_slice %758 {offsets = [0, 384], sizes = [8, 128], strides = [1, 1]} : vector<8x512xf32> to vector<8x128xf32>
    %768 = arith.negf %767 : vector<8x128xf32>
    %769 = math.exp %768 : vector<8x128xf32>
    %cst_242 = arith.constant 1.000000e+00 : f32
    %770 = vector.broadcast %cst_242 : f32 to vector<8x128xf32>
    %771 = arith.addf %770, %769 : vector<8x128xf32>
    %772 = arith.divf %770, %771 : vector<8x128xf32>
    %773 = vector.extract_strided_slice %764 {offsets = [0, 128], sizes = [8, 128], strides = [1, 1]} : vector<8x256xf32> to vector<8x128xf32>
    %774 = arith.mulf %773, %743 : vector<8x128xf32>
    %775 = vector.extract_strided_slice %764 {offsets = [0, 0], sizes = [8, 128], strides = [1, 1]} : vector<8x256xf32> to vector<8x128xf32>
    %776 = arith.mulf %775, %766 : vector<8x128xf32>
    %777 = arith.addf %774, %776 : vector<8x128xf32>
    %778 = math.tanh %777 : vector<8x128xf32>
    %779 = arith.mulf %772, %778 : vector<8x128xf32>
    %cst_243 = arith.constant 0.000000e+00 : f32
    %780 = vector.broadcast %cst_243 : f32 to vector<8x128xf32>
    %781 = arith.maximumf %779, %780 : vector<8x128xf32>
    %782 = arith.truncf %781 : vector<8x128xf32> to vector<8x128xbf16>
    %783 = arith.index_cast %752 : i32 to index
    %c0_244 = arith.constant 0 : index
    %784 = vector.load %arg18[%783, %c0_244] : memref<64x128xbf16, #tpu.memory_space<vmem>>, vector<8x128xbf16>
    tpu.vector_store %arg18[%783, %c0_244], %782 {strides = array<i32>} : memref<64x128xbf16, #tpu.memory_space<vmem>>, vector<8x128xbf16>,
    %c4_i32_245 = arith.constant 4 : i32
    %c8_i32_246 = arith.constant 8 : i32
    %785 = arith.muli %c4_i32_245, %c8_i32_246 : i32
    %786 = tpu.assume_multiple %785, 8 : i32
    %787 = arith.index_cast %786 : i32 to index
    %c0_247 = arith.constant 0 : index
    %788 = vector.load %arg15[%787, %c0_247] : memref<64x512xf32, #tpu.memory_space<vmem>>, vector<8x512xf32>
    %789 = arith.truncf %779 : vector<8x128xf32> to vector<8x128xbf16>
    %c0_248 = arith.constant 0 : index
    %c0_249 = arith.constant 0 : index
    %790 = vector.load %arg9[%c0_248, %c0_249] : memref<128x512xbf16, #tpu.memory_space<vmem>>, vector<128x512xbf16>
    %cst_250 = arith.constant dense<0.000000e+00> : vector<8x512xf32>
    %791 = tpu.matmul %789, %790, %cst_250 {dimension_numbers = #tpu.dot_dimension_numbers<[1], [0], [0], [1], [0, 0, 1, 1], [], []>} : vector<8x128xbf16>, vector<128x512xbf16>, vector<8x512xf32> -> vector<8x512xf32>
    %792 = arith.addf %788, %791 : vector<8x512xf32>
    %793 = vector.extract_strided_slice %792 {offsets = [0, 0], sizes = [8, 256], strides = [1, 1]} : vector<8x512xf32> to vector<8x256xf32>
    %794 = arith.negf %793 : vector<8x256xf32>
    %795 = math.exp %794 : vector<8x256xf32>
    %cst_251 = arith.constant 1.000000e+00 : f32
    %796 = vector.broadcast %cst_251 : f32 to vector<8x256xf32>
    %797 = arith.addf %796, %795 : vector<8x256xf32>
    %798 = arith.divf %796, %797 : vector<8x256xf32>
    %799 = vector.extract_strided_slice %792 {offsets = [0, 256], sizes = [8, 128], strides = [1, 1]} : vector<8x512xf32> to vector<8x128xf32>
    %800 = math.tanh %799 : vector<8x128xf32>
    %801 = vector.extract_strided_slice %792 {offsets = [0, 384], sizes = [8, 128], strides = [1, 1]} : vector<8x512xf32> to vector<8x128xf32>
    %802 = arith.negf %801 : vector<8x128xf32>
    %803 = math.exp %802 : vector<8x128xf32>
    %cst_252 = arith.constant 1.000000e+00 : f32
    %804 = vector.broadcast %cst_252 : f32 to vector<8x128xf32>
    %805 = arith.addf %804, %803 : vector<8x128xf32>
    %806 = arith.divf %804, %805 : vector<8x128xf32>
    %807 = vector.extract_strided_slice %798 {offsets = [0, 128], sizes = [8, 128], strides = [1, 1]} : vector<8x256xf32> to vector<8x128xf32>
    %808 = arith.mulf %807, %777 : vector<8x128xf32>
    %809 = vector.extract_strided_slice %798 {offsets = [0, 0], sizes = [8, 128], strides = [1, 1]} : vector<8x256xf32> to vector<8x128xf32>
    %810 = arith.mulf %809, %800 : vector<8x128xf32>
    %811 = arith.addf %808, %810 : vector<8x128xf32>
    %812 = math.tanh %811 : vector<8x128xf32>
    %813 = arith.mulf %806, %812 : vector<8x128xf32>
    %cst_253 = arith.constant 0.000000e+00 : f32
    %814 = vector.broadcast %cst_253 : f32 to vector<8x128xf32>
    %815 = arith.maximumf %813, %814 : vector<8x128xf32>
    %816 = arith.truncf %815 : vector<8x128xf32> to vector<8x128xbf16>
    %817 = arith.index_cast %786 : i32 to index
    %c0_254 = arith.constant 0 : index
    %818 = vector.load %arg18[%817, %c0_254] : memref<64x128xbf16, #tpu.memory_space<vmem>>, vector<8x128xbf16>
    tpu.vector_store %arg18[%817, %c0_254], %816 {strides = array<i32>} : memref<64x128xbf16, #tpu.memory_space<vmem>>, vector<8x128xbf16>,
    %c5_i32_255 = arith.constant 5 : i32
    %c8_i32_256 = arith.constant 8 : i32
    %819 = arith.muli %c5_i32_255, %c8_i32_256 : i32
    %820 = tpu.assume_multiple %819, 8 : i32
    %821 = arith.index_cast %820 : i32 to index
    %c0_257 = arith.constant 0 : index
    %822 = vector.load %arg15[%821, %c0_257] : memref<64x512xf32, #tpu.memory_space<vmem>>, vector<8x512xf32>
    %823 = arith.truncf %813 : vector<8x128xf32> to vector<8x128xbf16>
    %c0_258 = arith.constant 0 : index
    %c0_259 = arith.constant 0 : index
    %824 = vector.load %arg9[%c0_258, %c0_259] : memref<128x512xbf16, #tpu.memory_space<vmem>>, vector<128x512xbf16>
    %cst_260 = arith.constant dense<0.000000e+00> : vector<8x512xf32>
    %825 = tpu.matmul %823, %824, %cst_260 {dimension_numbers = #tpu.dot_dimension_numbers<[1], [0], [0], [1], [0, 0, 1, 1], [], []>} : vector<8x128xbf16>, vector<128x512xbf16>, vector<8x512xf32> -> vector<8x512xf32>
    %826 = arith.addf %822, %825 : vector<8x512xf32>
    %827 = vector.extract_strided_slice %826 {offsets = [0, 0], sizes = [8, 256], strides = [1, 1]} : vector<8x512xf32> to vector<8x256xf32>
    %828 = arith.negf %827 : vector<8x256xf32>
    %829 = math.exp %828 : vector<8x256xf32>
    %cst_261 = arith.constant 1.000000e+00 : f32
    %830 = vector.broadcast %cst_261 : f32 to vector<8x256xf32>
    %831 = arith.addf %830, %829 : vector<8x256xf32>
    %832 = arith.divf %830, %831 : vector<8x256xf32>
    %833 = vector.extract_strided_slice %826 {offsets = [0, 256], sizes = [8, 128], strides = [1, 1]} : vector<8x512xf32> to vector<8x128xf32>
    %834 = math.tanh %833 : vector<8x128xf32>
    %835 = vector.extract_strided_slice %826 {offsets = [0, 384], sizes = [8, 128], strides = [1, 1]} : vector<8x512xf32> to vector<8x128xf32>
    %836 = arith.negf %835 : vector<8x128xf32>
    %837 = math.exp %836 : vector<8x128xf32>
    %cst_262 = arith.constant 1.000000e+00 : f32
    %838 = vector.broadcast %cst_262 : f32 to vector<8x128xf32>
    %839 = arith.addf %838, %837 : vector<8x128xf32>
    %840 = arith.divf %838, %839 : vector<8x128xf32>
    %841 = vector.extract_strided_slice %832 {offsets = [0, 128], sizes = [8, 128], strides = [1, 1]} : vector<8x256xf32> to vector<8x128xf32>
    %842 = arith.mulf %841, %811 : vector<8x128xf32>
    %843 = vector.extract_strided_slice %832 {offsets = [0, 0], sizes = [8, 128], strides = [1, 1]} : vector<8x256xf32> to vector<8x128xf32>
    %844 = arith.mulf %843, %834 : vector<8x128xf32>
    %845 = arith.addf %842, %844 : vector<8x128xf32>
    %846 = math.tanh %845 : vector<8x128xf32>
    %847 = arith.mulf %840, %846 : vector<8x128xf32>
    %cst_263 = arith.constant 0.000000e+00 : f32
    %848 = vector.broadcast %cst_263 : f32 to vector<8x128xf32>
    %849 = arith.maximumf %847, %848 : vector<8x128xf32>
    %850 = arith.truncf %849 : vector<8x128xf32> to vector<8x128xbf16>
    %851 = arith.index_cast %820 : i32 to index
    %c0_264 = arith.constant 0 : index
    %852 = vector.load %arg18[%851, %c0_264] : memref<64x128xbf16, #tpu.memory_space<vmem>>, vector<8x128xbf16>
    tpu.vector_store %arg18[%851, %c0_264], %850 {strides = array<i32>} : memref<64x128xbf16, #tpu.memory_space<vmem>>, vector<8x128xbf16>,
    %c6_i32_265 = arith.constant 6 : i32
    %c8_i32_266 = arith.constant 8 : i32
    %853 = arith.muli %c6_i32_265, %c8_i32_266 : i32
    %854 = tpu.assume_multiple %853, 8 : i32
    %855 = arith.index_cast %854 : i32 to index
    %c0_267 = arith.constant 0 : index
    %856 = vector.load %arg15[%855, %c0_267] : memref<64x512xf32, #tpu.memory_space<vmem>>, vector<8x512xf32>
    %857 = arith.truncf %847 : vector<8x128xf32> to vector<8x128xbf16>
    %c0_268 = arith.constant 0 : index
    %c0_269 = arith.constant 0 : index
    %858 = vector.load %arg9[%c0_268, %c0_269] : memref<128x512xbf16, #tpu.memory_space<vmem>>, vector<128x512xbf16>
    %cst_270 = arith.constant dense<0.000000e+00> : vector<8x512xf32>
    %859 = tpu.matmul %857, %858, %cst_270 {dimension_numbers = #tpu.dot_dimension_numbers<[1], [0], [0], [1], [0, 0, 1, 1], [], []>} : vector<8x128xbf16>, vector<128x512xbf16>, vector<8x512xf32> -> vector<8x512xf32>
    %860 = arith.addf %856, %859 : vector<8x512xf32>
    %861 = vector.extract_strided_slice %860 {offsets = [0, 0], sizes = [8, 256], strides = [1, 1]} : vector<8x512xf32> to vector<8x256xf32>
    %862 = arith.negf %861 : vector<8x256xf32>
    %863 = math.exp %862 : vector<8x256xf32>
    %cst_271 = arith.constant 1.000000e+00 : f32
    %864 = vector.broadcast %cst_271 : f32 to vector<8x256xf32>
    %865 = arith.addf %864, %863 : vector<8x256xf32>
    %866 = arith.divf %864, %865 : vector<8x256xf32>
    %867 = vector.extract_strided_slice %860 {offsets = [0, 256], sizes = [8, 128], strides = [1, 1]} : vector<8x512xf32> to vector<8x128xf32>
    %868 = math.tanh %867 : vector<8x128xf32>
    %869 = vector.extract_strided_slice %860 {offsets = [0, 384], sizes = [8, 128], strides = [1, 1]} : vector<8x512xf32> to vector<8x128xf32>
    %870 = arith.negf %869 : vector<8x128xf32>
    %871 = math.exp %870 : vector<8x128xf32>
    %cst_272 = arith.constant 1.000000e+00 : f32
    %872 = vector.broadcast %cst_272 : f32 to vector<8x128xf32>
    %873 = arith.addf %872, %871 : vector<8x128xf32>
    %874 = arith.divf %872, %873 : vector<8x128xf32>
    %875 = vector.extract_strided_slice %866 {offsets = [0, 128], sizes = [8, 128], strides = [1, 1]} : vector<8x256xf32> to vector<8x128xf32>
    %876 = arith.mulf %875, %845 : vector<8x128xf32>
    %877 = vector.extract_strided_slice %866 {offsets = [0, 0], sizes = [8, 128], strides = [1, 1]} : vector<8x256xf32> to vector<8x128xf32>
    %878 = arith.mulf %877, %868 : vector<8x128xf32>
    %879 = arith.addf %876, %878 : vector<8x128xf32>
    %880 = math.tanh %879 : vector<8x128xf32>
    %881 = arith.mulf %874, %880 : vector<8x128xf32>
    %cst_273 = arith.constant 0.000000e+00 : f32
    %882 = vector.broadcast %cst_273 : f32 to vector<8x128xf32>
    %883 = arith.maximumf %881, %882 : vector<8x128xf32>
    %884 = arith.truncf %883 : vector<8x128xf32> to vector<8x128xbf16>
    %885 = arith.index_cast %854 : i32 to index
    %c0_274 = arith.constant 0 : index
    %886 = vector.load %arg18[%885, %c0_274] : memref<64x128xbf16, #tpu.memory_space<vmem>>, vector<8x128xbf16>
    tpu.vector_store %arg18[%885, %c0_274], %884 {strides = array<i32>} : memref<64x128xbf16, #tpu.memory_space<vmem>>, vector<8x128xbf16>,
    %c7_i32_275 = arith.constant 7 : i32
    %c8_i32_276 = arith.constant 8 : i32
    %887 = arith.muli %c7_i32_275, %c8_i32_276 : i32
    %888 = tpu.assume_multiple %887, 8 : i32
    %889 = arith.index_cast %888 : i32 to index
    %c0_277 = arith.constant 0 : index
    %890 = vector.load %arg15[%889, %c0_277] : memref<64x512xf32, #tpu.memory_space<vmem>>, vector<8x512xf32>
    %891 = arith.truncf %881 : vector<8x128xf32> to vector<8x128xbf16>
    %c0_278 = arith.constant 0 : index
    %c0_279 = arith.constant 0 : index
    %892 = vector.load %arg9[%c0_278, %c0_279] : memref<128x512xbf16, #tpu.memory_space<vmem>>, vector<128x512xbf16>
    %cst_280 = arith.constant dense<0.000000e+00> : vector<8x512xf32>
    %893 = tpu.matmul %891, %892, %cst_280 {dimension_numbers = #tpu.dot_dimension_numbers<[1], [0], [0], [1], [0, 0, 1, 1], [], []>} : vector<8x128xbf16>, vector<128x512xbf16>, vector<8x512xf32> -> vector<8x512xf32>
    %894 = arith.addf %890, %893 : vector<8x512xf32>
    %895 = vector.extract_strided_slice %894 {offsets = [0, 0], sizes = [8, 256], strides = [1, 1]} : vector<8x512xf32> to vector<8x256xf32>
    %896 = arith.negf %895 : vector<8x256xf32>
    %897 = math.exp %896 : vector<8x256xf32>
    %cst_281 = arith.constant 1.000000e+00 : f32
    %898 = vector.broadcast %cst_281 : f32 to vector<8x256xf32>
    %899 = arith.addf %898, %897 : vector<8x256xf32>
    %900 = arith.divf %898, %899 : vector<8x256xf32>
    %901 = vector.extract_strided_slice %894 {offsets = [0, 256], sizes = [8, 128], strides = [1, 1]} : vector<8x512xf32> to vector<8x128xf32>
    %902 = math.tanh %901 : vector<8x128xf32>
    %903 = vector.extract_strided_slice %894 {offsets = [0, 384], sizes = [8, 128], strides = [1, 1]} : vector<8x512xf32> to vector<8x128xf32>
    %904 = arith.negf %903 : vector<8x128xf32>
    %905 = math.exp %904 : vector<8x128xf32>
    %cst_282 = arith.constant 1.000000e+00 : f32
    %906 = vector.broadcast %cst_282 : f32 to vector<8x128xf32>
    %907 = arith.addf %906, %905 : vector<8x128xf32>
    %908 = arith.divf %906, %907 : vector<8x128xf32>
    %909 = vector.extract_strided_slice %900 {offsets = [0, 128], sizes = [8, 128], strides = [1, 1]} : vector<8x256xf32> to vector<8x128xf32>
    %910 = arith.mulf %909, %879 : vector<8x128xf32>
    %911 = vector.extract_strided_slice %900 {offsets = [0, 0], sizes = [8, 128], strides = [1, 1]} : vector<8x256xf32> to vector<8x128xf32>
    %912 = arith.mulf %911, %902 : vector<8x128xf32>
    %913 = arith.addf %910, %912 : vector<8x128xf32>
    %914 = math.tanh %913 : vector<8x128xf32>
    %915 = arith.mulf %908, %914 : vector<8x128xf32>
    %cst_283 = arith.constant 0.000000e+00 : f32
    %916 = vector.broadcast %cst_283 : f32 to vector<8x128xf32>
    %917 = arith.maximumf %915, %916 : vector<8x128xf32>
    %918 = arith.truncf %917 : vector<8x128xf32> to vector<8x128xbf16>
    %919 = arith.index_cast %888 : i32 to index
    %c0_284 = arith.constant 0 : index
    %920 = vector.load %arg18[%919, %c0_284] : memref<64x128xbf16, #tpu.memory_space<vmem>>, vector<8x128xbf16>
    tpu.vector_store %arg18[%919, %c0_284], %918 {strides = array<i32>} : memref<64x128xbf16, #tpu.memory_space<vmem>>, vector<8x128xbf16>,
    %c8_i32_285 = arith.constant 8 : i32
    %c0_286 = arith.constant 0 : index
    %c0_287 = arith.constant 0 : index
    %921 = vector.load %arg18[%c0_286, %c0_287] : memref<64x128xbf16, #tpu.memory_space<vmem>>, vector<64x128xbf16>
    %c0_288 = arith.constant 0 : index
    %c0_289 = arith.constant 0 : index
    %922 = vector.load %arg11[%c0_288, %c0_289] : memref<128x256xbf16, #tpu.memory_space<vmem>>, vector<128x256xbf16>
    %cst_290 = arith.constant dense<0.000000e+00> : vector<64x256xf32>
    %923 = tpu.matmul %921, %922, %cst_290 {dimension_numbers = #tpu.dot_dimension_numbers<[1], [0], [0], [1], [0, 0, 1, 1], [], []>} : vector<64x128xbf16>, vector<128x256xbf16>, vector<64x256xf32> -> vector<64x256xf32>
    %c0_291 = arith.constant 0 : index
    %c0_292 = arith.constant 0 : index
    %924 = vector.load %arg13[%c0_291, %c0_292] : memref<1x256xf32, #tpu.memory_space<vmem>>, vector<1x256xf32>
    %925 = vector.broadcast %924 : vector<1x256xf32> to vector<64x256xf32>
    %926 = arith.addf %923, %925 : vector<64x256xf32>
    %c0_293 = arith.constant 0 : index
    %c0_294 = arith.constant 0 : index
    %927 = vector.load %arg17[%c0_293, %c0_294] : memref<64x256xf32, #tpu.memory_space<vmem>>, vector<64x256xf32>
    tpu.vector_store %arg17[%c0_293, %c0_294], %926 {strides = array<i32>} : memref<64x256xf32, #tpu.memory_space<vmem>>, vector<64x256xf32>,
    %cst_295 = arith.constant 0.000000e+00 : f32
    %928 = vector.broadcast %cst_295 : f32 to vector<8x64xf32>
    %c0_i32_296 = arith.constant 0 : i32
    %c8_i32_297 = arith.constant 8 : i32
    %929 = arith.muli %c0_i32_296, %c8_i32_297 : i32
    %930 = tpu.assume_multiple %929, 8 : i32
    %931 = arith.index_cast %930 : i32 to index
    %c0_298 = arith.constant 0 : index
    %932 = vector.load %arg17[%931, %c0_298] : memref<64x256xf32, #tpu.memory_space<vmem>>, vector<8x256xf32>
    %933 = arith.truncf %928 : vector<8x64xf32> to vector<8x64xbf16>
    %c0_299 = arith.constant 0 : index
    %c0_300 = arith.constant 0 : index
    %934 = vector.load %arg12[%c0_299, %c0_300] : memref<64x256xbf16, #tpu.memory_space<vmem>>, vector<64x256xbf16>
    %cst_301 = arith.constant dense<0.000000e+00> : vector<8x256xf32>
    %935 = tpu.matmul %933, %934, %cst_301 {dimension_numbers = #tpu.dot_dimension_numbers<[1], [0], [0], [1], [0, 0, 1, 1], [], []>} : vector<8x64xbf16>, vector<64x256xbf16>, vector<8x256xf32> -> vector<8x256xf32>
    %936 = arith.addf %932, %935 : vector<8x256xf32>
    %937 = vector.extract_strided_slice %936 {offsets = [0, 0], sizes = [8, 128], strides = [1, 1]} : vector<8x256xf32> to vector<8x128xf32>
    %938 = arith.negf %937 : vector<8x128xf32>
    %939 = math.exp %938 : vector<8x128xf32>
    %cst_302 = arith.constant 1.000000e+00 : f32
    %940 = vector.broadcast %cst_302 : f32 to vector<8x128xf32>
    %941 = arith.addf %940, %939 : vector<8x128xf32>
    %942 = arith.divf %940, %941 : vector<8x128xf32>
    %943 = vector.extract_strided_slice %936 {offsets = [0, 128], sizes = [8, 64], strides = [1, 1]} : vector<8x256xf32> to vector<8x64xf32>
    %944 = math.tanh %943 : vector<8x64xf32>
    %945 = vector.extract_strided_slice %936 {offsets = [0, 192], sizes = [8, 64], strides = [1, 1]} : vector<8x256xf32> to vector<8x64xf32>
    %946 = arith.negf %945 : vector<8x64xf32>
    %947 = math.exp %946 : vector<8x64xf32>
    %cst_303 = arith.constant 1.000000e+00 : f32
    %948 = vector.broadcast %cst_303 : f32 to vector<8x64xf32>
    %949 = arith.addf %948, %947 : vector<8x64xf32>
    %950 = arith.divf %948, %949 : vector<8x64xf32>
    %951 = vector.extract_strided_slice %942 {offsets = [0, 64], sizes = [8, 64], strides = [1, 1]} : vector<8x128xf32> to vector<8x64xf32>
    %952 = arith.mulf %951, %928 : vector<8x64xf32>
    %953 = vector.extract_strided_slice %942 {offsets = [0, 0], sizes = [8, 64], strides = [1, 1]} : vector<8x128xf32> to vector<8x64xf32>
    %954 = arith.mulf %953, %944 : vector<8x64xf32>
    %955 = arith.addf %952, %954 : vector<8x64xf32>
    %956 = math.tanh %955 : vector<8x64xf32>
    %957 = arith.mulf %950, %956 : vector<8x64xf32>
    %958 = arith.index_cast %930 : i32 to index
    %c0_304 = arith.constant 0 : index
    %959 = vector.load %arg20[%958, %c0_304] : memref<64x64xf32, #tpu.memory_space<vmem>>, vector<8x64xf32>
    %960 = tpu.concatenate %957, %959 in 1 : vector<8x64xf32>, vector<8x64xf32> -> vector<8x128xf32>
    %961 = arith.index_cast %c0_i32_296 : i32 to index
    %c0_305 = arith.constant 0 : index
    %c0_306 = arith.constant 0 : index
    %962 = vector.load %arg14[%961, %c0_305, %c0_306] : memref<8x8x128xf32, #tpu.memory_space<vmem>>, vector<1x8x128xf32>
    %963 = vector.shape_cast %962 : vector<1x8x128xf32> to vector<8x128xf32>
    %964 = vector.shape_cast %960 : vector<8x128xf32> to vector<1x8x128xf32>
    tpu.vector_store %arg14[%961, %c0_305, %c0_306], %964 {strides = array<i32>} : memref<8x8x128xf32, #tpu.memory_space<vmem>>, vector<1x8x128xf32>,
    %c1_i32_307 = arith.constant 1 : i32
    %c8_i32_308 = arith.constant 8 : i32
    %965 = arith.muli %c1_i32_307, %c8_i32_308 : i32
    %966 = tpu.assume_multiple %965, 8 : i32
    %967 = arith.index_cast %966 : i32 to index
    %c0_309 = arith.constant 0 : index
    %968 = vector.load %arg17[%967, %c0_309] : memref<64x256xf32, #tpu.memory_space<vmem>>, vector<8x256xf32>
    %969 = arith.truncf %957 : vector<8x64xf32> to vector<8x64xbf16>
    %c0_310 = arith.constant 0 : index
    %c0_311 = arith.constant 0 : index
    %970 = vector.load %arg12[%c0_310, %c0_311] : memref<64x256xbf16, #tpu.memory_space<vmem>>, vector<64x256xbf16>
    %cst_312 = arith.constant dense<0.000000e+00> : vector<8x256xf32>
    %971 = tpu.matmul %969, %970, %cst_312 {dimension_numbers = #tpu.dot_dimension_numbers<[1], [0], [0], [1], [0, 0, 1, 1], [], []>} : vector<8x64xbf16>, vector<64x256xbf16>, vector<8x256xf32> -> vector<8x256xf32>
    %972 = arith.addf %968, %971 : vector<8x256xf32>
    %973 = vector.extract_strided_slice %972 {offsets = [0, 0], sizes = [8, 128], strides = [1, 1]} : vector<8x256xf32> to vector<8x128xf32>
    %974 = arith.negf %973 : vector<8x128xf32>
    %975 = math.exp %974 : vector<8x128xf32>
    %cst_313 = arith.constant 1.000000e+00 : f32
    %976 = vector.broadcast %cst_313 : f32 to vector<8x128xf32>
    %977 = arith.addf %976, %975 : vector<8x128xf32>
    %978 = arith.divf %976, %977 : vector<8x128xf32>
    %979 = vector.extract_strided_slice %972 {offsets = [0, 128], sizes = [8, 64], strides = [1, 1]} : vector<8x256xf32> to vector<8x64xf32>
    %980 = math.tanh %979 : vector<8x64xf32>
    %981 = vector.extract_strided_slice %972 {offsets = [0, 192], sizes = [8, 64], strides = [1, 1]} : vector<8x256xf32> to vector<8x64xf32>
    %982 = arith.negf %981 : vector<8x64xf32>
    %983 = math.exp %982 : vector<8x64xf32>
    %cst_314 = arith.constant 1.000000e+00 : f32
    %984 = vector.broadcast %cst_314 : f32 to vector<8x64xf32>
    %985 = arith.addf %984, %983 : vector<8x64xf32>
    %986 = arith.divf %984, %985 : vector<8x64xf32>
    %987 = vector.extract_strided_slice %978 {offsets = [0, 64], sizes = [8, 64], strides = [1, 1]} : vector<8x128xf32> to vector<8x64xf32>
    %988 = arith.mulf %987, %955 : vector<8x64xf32>
    %989 = vector.extract_strided_slice %978 {offsets = [0, 0], sizes = [8, 64], strides = [1, 1]} : vector<8x128xf32> to vector<8x64xf32>
    %990 = arith.mulf %989, %980 : vector<8x64xf32>
    %991 = arith.addf %988, %990 : vector<8x64xf32>
    %992 = math.tanh %991 : vector<8x64xf32>
    %993 = arith.mulf %986, %992 : vector<8x64xf32>
    %994 = arith.index_cast %966 : i32 to index
    %c0_315 = arith.constant 0 : index
    %995 = vector.load %arg20[%994, %c0_315] : memref<64x64xf32, #tpu.memory_space<vmem>>, vector<8x64xf32>
    %996 = tpu.concatenate %993, %995 in 1 : vector<8x64xf32>, vector<8x64xf32> -> vector<8x128xf32>
    %997 = arith.index_cast %c1_i32_307 : i32 to index
    %c0_316 = arith.constant 0 : index
    %c0_317 = arith.constant 0 : index
    %998 = vector.load %arg14[%997, %c0_316, %c0_317] : memref<8x8x128xf32, #tpu.memory_space<vmem>>, vector<1x8x128xf32>
    %999 = vector.shape_cast %998 : vector<1x8x128xf32> to vector<8x128xf32>
    %1000 = vector.shape_cast %996 : vector<8x128xf32> to vector<1x8x128xf32>
    tpu.vector_store %arg14[%997, %c0_316, %c0_317], %1000 {strides = array<i32>} : memref<8x8x128xf32, #tpu.memory_space<vmem>>, vector<1x8x128xf32>,
    %c2_i32_318 = arith.constant 2 : i32
    %c8_i32_319 = arith.constant 8 : i32
    %1001 = arith.muli %c2_i32_318, %c8_i32_319 : i32
    %1002 = tpu.assume_multiple %1001, 8 : i32
    %1003 = arith.index_cast %1002 : i32 to index
    %c0_320 = arith.constant 0 : index
    %1004 = vector.load %arg17[%1003, %c0_320] : memref<64x256xf32, #tpu.memory_space<vmem>>, vector<8x256xf32>
    %1005 = arith.truncf %993 : vector<8x64xf32> to vector<8x64xbf16>
    %c0_321 = arith.constant 0 : index
    %c0_322 = arith.constant 0 : index
    %1006 = vector.load %arg12[%c0_321, %c0_322] : memref<64x256xbf16, #tpu.memory_space<vmem>>, vector<64x256xbf16>
    %cst_323 = arith.constant dense<0.000000e+00> : vector<8x256xf32>
    %1007 = tpu.matmul %1005, %1006, %cst_323 {dimension_numbers = #tpu.dot_dimension_numbers<[1], [0], [0], [1], [0, 0, 1, 1], [], []>} : vector<8x64xbf16>, vector<64x256xbf16>, vector<8x256xf32> -> vector<8x256xf32>
    %1008 = arith.addf %1004, %1007 : vector<8x256xf32>
    %1009 = vector.extract_strided_slice %1008 {offsets = [0, 0], sizes = [8, 128], strides = [1, 1]} : vector<8x256xf32> to vector<8x128xf32>
    %1010 = arith.negf %1009 : vector<8x128xf32>
    %1011 = math.exp %1010 : vector<8x128xf32>
    %cst_324 = arith.constant 1.000000e+00 : f32
    %1012 = vector.broadcast %cst_324 : f32 to vector<8x128xf32>
    %1013 = arith.addf %1012, %1011 : vector<8x128xf32>
    %1014 = arith.divf %1012, %1013 : vector<8x128xf32>
    %1015 = vector.extract_strided_slice %1008 {offsets = [0, 128], sizes = [8, 64], strides = [1, 1]} : vector<8x256xf32> to vector<8x64xf32>
    %1016 = math.tanh %1015 : vector<8x64xf32>
    %1017 = vector.extract_strided_slice %1008 {offsets = [0, 192], sizes = [8, 64], strides = [1, 1]} : vector<8x256xf32> to vector<8x64xf32>
    %1018 = arith.negf %1017 : vector<8x64xf32>
    %1019 = math.exp %1018 : vector<8x64xf32>
    %cst_325 = arith.constant 1.000000e+00 : f32
    %1020 = vector.broadcast %cst_325 : f32 to vector<8x64xf32>
    %1021 = arith.addf %1020, %1019 : vector<8x64xf32>
    %1022 = arith.divf %1020, %1021 : vector<8x64xf32>
    %1023 = vector.extract_strided_slice %1014 {offsets = [0, 64], sizes = [8, 64], strides = [1, 1]} : vector<8x128xf32> to vector<8x64xf32>
    %1024 = arith.mulf %1023, %991 : vector<8x64xf32>
    %1025 = vector.extract_strided_slice %1014 {offsets = [0, 0], sizes = [8, 64], strides = [1, 1]} : vector<8x128xf32> to vector<8x64xf32>
    %1026 = arith.mulf %1025, %1016 : vector<8x64xf32>
    %1027 = arith.addf %1024, %1026 : vector<8x64xf32>
    %1028 = math.tanh %1027 : vector<8x64xf32>
    %1029 = arith.mulf %1022, %1028 : vector<8x64xf32>
    %1030 = arith.index_cast %1002 : i32 to index
    %c0_326 = arith.constant 0 : index
    %1031 = vector.load %arg20[%1030, %c0_326] : memref<64x64xf32, #tpu.memory_space<vmem>>, vector<8x64xf32>
    %1032 = tpu.concatenate %1029, %1031 in 1 : vector<8x64xf32>, vector<8x64xf32> -> vector<8x128xf32>
    %1033 = arith.index_cast %c2_i32_318 : i32 to index
    %c0_327 = arith.constant 0 : index
    %c0_328 = arith.constant 0 : index
    %1034 = vector.load %arg14[%1033, %c0_327, %c0_328] : memref<8x8x128xf32, #tpu.memory_space<vmem>>, vector<1x8x128xf32>
    %1035 = vector.shape_cast %1034 : vector<1x8x128xf32> to vector<8x128xf32>
    %1036 = vector.shape_cast %1032 : vector<8x128xf32> to vector<1x8x128xf32>
    tpu.vector_store %arg14[%1033, %c0_327, %c0_328], %1036 {strides = array<i32>} : memref<8x8x128xf32, #tpu.memory_space<vmem>>, vector<1x8x128xf32>,
    %c3_i32_329 = arith.constant 3 : i32
    %c8_i32_330 = arith.constant 8 : i32
    %1037 = arith.muli %c3_i32_329, %c8_i32_330 : i32
    %1038 = tpu.assume_multiple %1037, 8 : i32
    %1039 = arith.index_cast %1038 : i32 to index
    %c0_331 = arith.constant 0 : index
    %1040 = vector.load %arg17[%1039, %c0_331] : memref<64x256xf32, #tpu.memory_space<vmem>>, vector<8x256xf32>
    %1041 = arith.truncf %1029 : vector<8x64xf32> to vector<8x64xbf16>
    %c0_332 = arith.constant 0 : index
    %c0_333 = arith.constant 0 : index
    %1042 = vector.load %arg12[%c0_332, %c0_333] : memref<64x256xbf16, #tpu.memory_space<vmem>>, vector<64x256xbf16>
    %cst_334 = arith.constant dense<0.000000e+00> : vector<8x256xf32>
    %1043 = tpu.matmul %1041, %1042, %cst_334 {dimension_numbers = #tpu.dot_dimension_numbers<[1], [0], [0], [1], [0, 0, 1, 1], [], []>} : vector<8x64xbf16>, vector<64x256xbf16>, vector<8x256xf32> -> vector<8x256xf32>
    %1044 = arith.addf %1040, %1043 : vector<8x256xf32>
    %1045 = vector.extract_strided_slice %1044 {offsets = [0, 0], sizes = [8, 128], strides = [1, 1]} : vector<8x256xf32> to vector<8x128xf32>
    %1046 = arith.negf %1045 : vector<8x128xf32>
    %1047 = math.exp %1046 : vector<8x128xf32>
    %cst_335 = arith.constant 1.000000e+00 : f32
    %1048 = vector.broadcast %cst_335 : f32 to vector<8x128xf32>
    %1049 = arith.addf %1048, %1047 : vector<8x128xf32>
    %1050 = arith.divf %1048, %1049 : vector<8x128xf32>
    %1051 = vector.extract_strided_slice %1044 {offsets = [0, 128], sizes = [8, 64], strides = [1, 1]} : vector<8x256xf32> to vector<8x64xf32>
    %1052 = math.tanh %1051 : vector<8x64xf32>
    %1053 = vector.extract_strided_slice %1044 {offsets = [0, 192], sizes = [8, 64], strides = [1, 1]} : vector<8x256xf32> to vector<8x64xf32>
    %1054 = arith.negf %1053 : vector<8x64xf32>
    %1055 = math.exp %1054 : vector<8x64xf32>
    %cst_336 = arith.constant 1.000000e+00 : f32
    %1056 = vector.broadcast %cst_336 : f32 to vector<8x64xf32>
    %1057 = arith.addf %1056, %1055 : vector<8x64xf32>
    %1058 = arith.divf %1056, %1057 : vector<8x64xf32>
    %1059 = vector.extract_strided_slice %1050 {offsets = [0, 64], sizes = [8, 64], strides = [1, 1]} : vector<8x128xf32> to vector<8x64xf32>
    %1060 = arith.mulf %1059, %1027 : vector<8x64xf32>
    %1061 = vector.extract_strided_slice %1050 {offsets = [0, 0], sizes = [8, 64], strides = [1, 1]} : vector<8x128xf32> to vector<8x64xf32>
    %1062 = arith.mulf %1061, %1052 : vector<8x64xf32>
    %1063 = arith.addf %1060, %1062 : vector<8x64xf32>
    %1064 = math.tanh %1063 : vector<8x64xf32>
    %1065 = arith.mulf %1058, %1064 : vector<8x64xf32>
    %1066 = arith.index_cast %1038 : i32 to index
    %c0_337 = arith.constant 0 : index
    %1067 = vector.load %arg20[%1066, %c0_337] : memref<64x64xf32, #tpu.memory_space<vmem>>, vector<8x64xf32>
    %1068 = tpu.concatenate %1065, %1067 in 1 : vector<8x64xf32>, vector<8x64xf32> -> vector<8x128xf32>
    %1069 = arith.index_cast %c3_i32_329 : i32 to index
    %c0_338 = arith.constant 0 : index
    %c0_339 = arith.constant 0 : index
    %1070 = vector.load %arg14[%1069, %c0_338, %c0_339] : memref<8x8x128xf32, #tpu.memory_space<vmem>>, vector<1x8x128xf32>
    %1071 = vector.shape_cast %1070 : vector<1x8x128xf32> to vector<8x128xf32>
    %1072 = vector.shape_cast %1068 : vector<8x128xf32> to vector<1x8x128xf32>
    tpu.vector_store %arg14[%1069, %c0_338, %c0_339], %1072 {strides = array<i32>} : memref<8x8x128xf32, #tpu.memory_space<vmem>>, vector<1x8x128xf32>,
    %c4_i32_340 = arith.constant 4 : i32
    %c8_i32_341 = arith.constant 8 : i32
    %1073 = arith.muli %c4_i32_340, %c8_i32_341 : i32
    %1074 = tpu.assume_multiple %1073, 8 : i32
    %1075 = arith.index_cast %1074 : i32 to index
    %c0_342 = arith.constant 0 : index
    %1076 = vector.load %arg17[%1075, %c0_342] : memref<64x256xf32, #tpu.memory_space<vmem>>, vector<8x256xf32>
    %1077 = arith.truncf %1065 : vector<8x64xf32> to vector<8x64xbf16>
    %c0_343 = arith.constant 0 : index
    %c0_344 = arith.constant 0 : index
    %1078 = vector.load %arg12[%c0_343, %c0_344] : memref<64x256xbf16, #tpu.memory_space<vmem>>, vector<64x256xbf16>
    %cst_345 = arith.constant dense<0.000000e+00> : vector<8x256xf32>
    %1079 = tpu.matmul %1077, %1078, %cst_345 {dimension_numbers = #tpu.dot_dimension_numbers<[1], [0], [0], [1], [0, 0, 1, 1], [], []>} : vector<8x64xbf16>, vector<64x256xbf16>, vector<8x256xf32> -> vector<8x256xf32>
    %1080 = arith.addf %1076, %1079 : vector<8x256xf32>
    %1081 = vector.extract_strided_slice %1080 {offsets = [0, 0], sizes = [8, 128], strides = [1, 1]} : vector<8x256xf32> to vector<8x128xf32>
    %1082 = arith.negf %1081 : vector<8x128xf32>
    %1083 = math.exp %1082 : vector<8x128xf32>
    %cst_346 = arith.constant 1.000000e+00 : f32
    %1084 = vector.broadcast %cst_346 : f32 to vector<8x128xf32>
    %1085 = arith.addf %1084, %1083 : vector<8x128xf32>
    %1086 = arith.divf %1084, %1085 : vector<8x128xf32>
    %1087 = vector.extract_strided_slice %1080 {offsets = [0, 128], sizes = [8, 64], strides = [1, 1]} : vector<8x256xf32> to vector<8x64xf32>
    %1088 = math.tanh %1087 : vector<8x64xf32>
    %1089 = vector.extract_strided_slice %1080 {offsets = [0, 192], sizes = [8, 64], strides = [1, 1]} : vector<8x256xf32> to vector<8x64xf32>
    %1090 = arith.negf %1089 : vector<8x64xf32>
    %1091 = math.exp %1090 : vector<8x64xf32>
    %cst_347 = arith.constant 1.000000e+00 : f32
    %1092 = vector.broadcast %cst_347 : f32 to vector<8x64xf32>
    %1093 = arith.addf %1092, %1091 : vector<8x64xf32>
    %1094 = arith.divf %1092, %1093 : vector<8x64xf32>
    %1095 = vector.extract_strided_slice %1086 {offsets = [0, 64], sizes = [8, 64], strides = [1, 1]} : vector<8x128xf32> to vector<8x64xf32>
    %1096 = arith.mulf %1095, %1063 : vector<8x64xf32>
    %1097 = vector.extract_strided_slice %1086 {offsets = [0, 0], sizes = [8, 64], strides = [1, 1]} : vector<8x128xf32> to vector<8x64xf32>
    %1098 = arith.mulf %1097, %1088 : vector<8x64xf32>
    %1099 = arith.addf %1096, %1098 : vector<8x64xf32>
    %1100 = math.tanh %1099 : vector<8x64xf32>
    %1101 = arith.mulf %1094, %1100 : vector<8x64xf32>
    %1102 = arith.index_cast %1074 : i32 to index
    %c0_348 = arith.constant 0 : index
    %1103 = vector.load %arg20[%1102, %c0_348] : memref<64x64xf32, #tpu.memory_space<vmem>>, vector<8x64xf32>
    %1104 = tpu.concatenate %1101, %1103 in 1 : vector<8x64xf32>, vector<8x64xf32> -> vector<8x128xf32>
    %1105 = arith.index_cast %c4_i32_340 : i32 to index
    %c0_349 = arith.constant 0 : index
    %c0_350 = arith.constant 0 : index
    %1106 = vector.load %arg14[%1105, %c0_349, %c0_350] : memref<8x8x128xf32, #tpu.memory_space<vmem>>, vector<1x8x128xf32>
    %1107 = vector.shape_cast %1106 : vector<1x8x128xf32> to vector<8x128xf32>
    %1108 = vector.shape_cast %1104 : vector<8x128xf32> to vector<1x8x128xf32>
    tpu.vector_store %arg14[%1105, %c0_349, %c0_350], %1108 {strides = array<i32>} : memref<8x8x128xf32, #tpu.memory_space<vmem>>, vector<1x8x128xf32>,
    %c5_i32_351 = arith.constant 5 : i32
    %c8_i32_352 = arith.constant 8 : i32
    %1109 = arith.muli %c5_i32_351, %c8_i32_352 : i32
    %1110 = tpu.assume_multiple %1109, 8 : i32
    %1111 = arith.index_cast %1110 : i32 to index
    %c0_353 = arith.constant 0 : index
    %1112 = vector.load %arg17[%1111, %c0_353] : memref<64x256xf32, #tpu.memory_space<vmem>>, vector<8x256xf32>
    %1113 = arith.truncf %1101 : vector<8x64xf32> to vector<8x64xbf16>
    %c0_354 = arith.constant 0 : index
    %c0_355 = arith.constant 0 : index
    %1114 = vector.load %arg12[%c0_354, %c0_355] : memref<64x256xbf16, #tpu.memory_space<vmem>>, vector<64x256xbf16>
    %cst_356 = arith.constant dense<0.000000e+00> : vector<8x256xf32>
    %1115 = tpu.matmul %1113, %1114, %cst_356 {dimension_numbers = #tpu.dot_dimension_numbers<[1], [0], [0], [1], [0, 0, 1, 1], [], []>} : vector<8x64xbf16>, vector<64x256xbf16>, vector<8x256xf32> -> vector<8x256xf32>
    %1116 = arith.addf %1112, %1115 : vector<8x256xf32>
    %1117 = vector.extract_strided_slice %1116 {offsets = [0, 0], sizes = [8, 128], strides = [1, 1]} : vector<8x256xf32> to vector<8x128xf32>
    %1118 = arith.negf %1117 : vector<8x128xf32>
    %1119 = math.exp %1118 : vector<8x128xf32>
    %cst_357 = arith.constant 1.000000e+00 : f32
    %1120 = vector.broadcast %cst_357 : f32 to vector<8x128xf32>
    %1121 = arith.addf %1120, %1119 : vector<8x128xf32>
    %1122 = arith.divf %1120, %1121 : vector<8x128xf32>
    %1123 = vector.extract_strided_slice %1116 {offsets = [0, 128], sizes = [8, 64], strides = [1, 1]} : vector<8x256xf32> to vector<8x64xf32>
    %1124 = math.tanh %1123 : vector<8x64xf32>
    %1125 = vector.extract_strided_slice %1116 {offsets = [0, 192], sizes = [8, 64], strides = [1, 1]} : vector<8x256xf32> to vector<8x64xf32>
    %1126 = arith.negf %1125 : vector<8x64xf32>
    %1127 = math.exp %1126 : vector<8x64xf32>
    %cst_358 = arith.constant 1.000000e+00 : f32
    %1128 = vector.broadcast %cst_358 : f32 to vector<8x64xf32>
    %1129 = arith.addf %1128, %1127 : vector<8x64xf32>
    %1130 = arith.divf %1128, %1129 : vector<8x64xf32>
    %1131 = vector.extract_strided_slice %1122 {offsets = [0, 64], sizes = [8, 64], strides = [1, 1]} : vector<8x128xf32> to vector<8x64xf32>
    %1132 = arith.mulf %1131, %1099 : vector<8x64xf32>
    %1133 = vector.extract_strided_slice %1122 {offsets = [0, 0], sizes = [8, 64], strides = [1, 1]} : vector<8x128xf32> to vector<8x64xf32>
    %1134 = arith.mulf %1133, %1124 : vector<8x64xf32>
    %1135 = arith.addf %1132, %1134 : vector<8x64xf32>
    %1136 = math.tanh %1135 : vector<8x64xf32>
    %1137 = arith.mulf %1130, %1136 : vector<8x64xf32>
    %1138 = arith.index_cast %1110 : i32 to index
    %c0_359 = arith.constant 0 : index
    %1139 = vector.load %arg20[%1138, %c0_359] : memref<64x64xf32, #tpu.memory_space<vmem>>, vector<8x64xf32>
    %1140 = tpu.concatenate %1137, %1139 in 1 : vector<8x64xf32>, vector<8x64xf32> -> vector<8x128xf32>
    %1141 = arith.index_cast %c5_i32_351 : i32 to index
    %c0_360 = arith.constant 0 : index
    %c0_361 = arith.constant 0 : index
    %1142 = vector.load %arg14[%1141, %c0_360, %c0_361] : memref<8x8x128xf32, #tpu.memory_space<vmem>>, vector<1x8x128xf32>
    %1143 = vector.shape_cast %1142 : vector<1x8x128xf32> to vector<8x128xf32>
    %1144 = vector.shape_cast %1140 : vector<8x128xf32> to vector<1x8x128xf32>
    tpu.vector_store %arg14[%1141, %c0_360, %c0_361], %1144 {strides = array<i32>} : memref<8x8x128xf32, #tpu.memory_space<vmem>>, vector<1x8x128xf32>,
    %c6_i32_362 = arith.constant 6 : i32
    %c8_i32_363 = arith.constant 8 : i32
    %1145 = arith.muli %c6_i32_362, %c8_i32_363 : i32
    %1146 = tpu.assume_multiple %1145, 8 : i32
    %1147 = arith.index_cast %1146 : i32 to index
    %c0_364 = arith.constant 0 : index
    %1148 = vector.load %arg17[%1147, %c0_364] : memref<64x256xf32, #tpu.memory_space<vmem>>, vector<8x256xf32>
    %1149 = arith.truncf %1137 : vector<8x64xf32> to vector<8x64xbf16>
    %c0_365 = arith.constant 0 : index
    %c0_366 = arith.constant 0 : index
    %1150 = vector.load %arg12[%c0_365, %c0_366] : memref<64x256xbf16, #tpu.memory_space<vmem>>, vector<64x256xbf16>
    %cst_367 = arith.constant dense<0.000000e+00> : vector<8x256xf32>
    %1151 = tpu.matmul %1149, %1150, %cst_367 {dimension_numbers = #tpu.dot_dimension_numbers<[1], [0], [0], [1], [0, 0, 1, 1], [], []>} : vector<8x64xbf16>, vector<64x256xbf16>, vector<8x256xf32> -> vector<8x256xf32>
    %1152 = arith.addf %1148, %1151 : vector<8x256xf32>
    %1153 = vector.extract_strided_slice %1152 {offsets = [0, 0], sizes = [8, 128], strides = [1, 1]} : vector<8x256xf32> to vector<8x128xf32>
    %1154 = arith.negf %1153 : vector<8x128xf32>
    %1155 = math.exp %1154 : vector<8x128xf32>
    %cst_368 = arith.constant 1.000000e+00 : f32
    %1156 = vector.broadcast %cst_368 : f32 to vector<8x128xf32>
    %1157 = arith.addf %1156, %1155 : vector<8x128xf32>
    %1158 = arith.divf %1156, %1157 : vector<8x128xf32>
    %1159 = vector.extract_strided_slice %1152 {offsets = [0, 128], sizes = [8, 64], strides = [1, 1]} : vector<8x256xf32> to vector<8x64xf32>
    %1160 = math.tanh %1159 : vector<8x64xf32>
    %1161 = vector.extract_strided_slice %1152 {offsets = [0, 192], sizes = [8, 64], strides = [1, 1]} : vector<8x256xf32> to vector<8x64xf32>
    %1162 = arith.negf %1161 : vector<8x64xf32>
    %1163 = math.exp %1162 : vector<8x64xf32>
    %cst_369 = arith.constant 1.000000e+00 : f32
    %1164 = vector.broadcast %cst_369 : f32 to vector<8x64xf32>
    %1165 = arith.addf %1164, %1163 : vector<8x64xf32>
    %1166 = arith.divf %1164, %1165 : vector<8x64xf32>
    %1167 = vector.extract_strided_slice %1158 {offsets = [0, 64], sizes = [8, 64], strides = [1, 1]} : vector<8x128xf32> to vector<8x64xf32>
    %1168 = arith.mulf %1167, %1135 : vector<8x64xf32>
    %1169 = vector.extract_strided_slice %1158 {offsets = [0, 0], sizes = [8, 64], strides = [1, 1]} : vector<8x128xf32> to vector<8x64xf32>
    %1170 = arith.mulf %1169, %1160 : vector<8x64xf32>
    %1171 = arith.addf %1168, %1170 : vector<8x64xf32>
    %1172 = math.tanh %1171 : vector<8x64xf32>
    %1173 = arith.mulf %1166, %1172 : vector<8x64xf32>
    %1174 = arith.index_cast %1146 : i32 to index
    %c0_370 = arith.constant 0 : index
    %1175 = vector.load %arg20[%1174, %c0_370] : memref<64x64xf32, #tpu.memory_space<vmem>>, vector<8x64xf32>
    %1176 = tpu.concatenate %1173, %1175 in 1 : vector<8x64xf32>, vector<8x64xf32> -> vector<8x128xf32>
    %1177 = arith.index_cast %c6_i32_362 : i32 to index
    %c0_371 = arith.constant 0 : index
    %c0_372 = arith.constant 0 : index
    %1178 = vector.load %arg14[%1177, %c0_371, %c0_372] : memref<8x8x128xf32, #tpu.memory_space<vmem>>, vector<1x8x128xf32>
    %1179 = vector.shape_cast %1178 : vector<1x8x128xf32> to vector<8x128xf32>
    %1180 = vector.shape_cast %1176 : vector<8x128xf32> to vector<1x8x128xf32>
    tpu.vector_store %arg14[%1177, %c0_371, %c0_372], %1180 {strides = array<i32>} : memref<8x8x128xf32, #tpu.memory_space<vmem>>, vector<1x8x128xf32>,
    %c7_i32_373 = arith.constant 7 : i32
    %c8_i32_374 = arith.constant 8 : i32
    %1181 = arith.muli %c7_i32_373, %c8_i32_374 : i32
    %1182 = tpu.assume_multiple %1181, 8 : i32
    %1183 = arith.index_cast %1182 : i32 to index
    %c0_375 = arith.constant 0 : index
    %1184 = vector.load %arg17[%1183, %c0_375] : memref<64x256xf32, #tpu.memory_space<vmem>>, vector<8x256xf32>
    %1185 = arith.truncf %1173 : vector<8x64xf32> to vector<8x64xbf16>
    %c0_376 = arith.constant 0 : index
    %c0_377 = arith.constant 0 : index
    %1186 = vector.load %arg12[%c0_376, %c0_377] : memref<64x256xbf16, #tpu.memory_space<vmem>>, vector<64x256xbf16>
    %cst_378 = arith.constant dense<0.000000e+00> : vector<8x256xf32>
    %1187 = tpu.matmul %1185, %1186, %cst_378 {dimension_numbers = #tpu.dot_dimension_numbers<[1], [0], [0], [1], [0, 0, 1, 1], [], []>} : vector<8x64xbf16>, vector<64x256xbf16>, vector<8x256xf32> -> vector<8x256xf32>
    %1188 = arith.addf %1184, %1187 : vector<8x256xf32>
    %1189 = vector.extract_strided_slice %1188 {offsets = [0, 0], sizes = [8, 128], strides = [1, 1]} : vector<8x256xf32> to vector<8x128xf32>
    %1190 = arith.negf %1189 : vector<8x128xf32>
    %1191 = math.exp %1190 : vector<8x128xf32>
    %cst_379 = arith.constant 1.000000e+00 : f32
    %1192 = vector.broadcast %cst_379 : f32 to vector<8x128xf32>
    %1193 = arith.addf %1192, %1191 : vector<8x128xf32>
    %1194 = arith.divf %1192, %1193 : vector<8x128xf32>
    %1195 = vector.extract_strided_slice %1188 {offsets = [0, 128], sizes = [8, 64], strides = [1, 1]} : vector<8x256xf32> to vector<8x64xf32>
    %1196 = math.tanh %1195 : vector<8x64xf32>
    %1197 = vector.extract_strided_slice %1188 {offsets = [0, 192], sizes = [8, 64], strides = [1, 1]} : vector<8x256xf32> to vector<8x64xf32>
    %1198 = arith.negf %1197 : vector<8x64xf32>
    %1199 = math.exp %1198 : vector<8x64xf32>
    %cst_380 = arith.constant 1.000000e+00 : f32
    %1200 = vector.broadcast %cst_380 : f32 to vector<8x64xf32>
    %1201 = arith.addf %1200, %1199 : vector<8x64xf32>
    %1202 = arith.divf %1200, %1201 : vector<8x64xf32>
    %1203 = vector.extract_strided_slice %1194 {offsets = [0, 64], sizes = [8, 64], strides = [1, 1]} : vector<8x128xf32> to vector<8x64xf32>
    %1204 = arith.mulf %1203, %1171 : vector<8x64xf32>
    %1205 = vector.extract_strided_slice %1194 {offsets = [0, 0], sizes = [8, 64], strides = [1, 1]} : vector<8x128xf32> to vector<8x64xf32>
    %1206 = arith.mulf %1205, %1196 : vector<8x64xf32>
    %1207 = arith.addf %1204, %1206 : vector<8x64xf32>
    %1208 = math.tanh %1207 : vector<8x64xf32>
    %1209 = arith.mulf %1202, %1208 : vector<8x64xf32>
    %1210 = arith.index_cast %1182 : i32 to index
    %c0_381 = arith.constant 0 : index
    %1211 = vector.load %arg20[%1210, %c0_381] : memref<64x64xf32, #tpu.memory_space<vmem>>, vector<8x64xf32>
    %1212 = tpu.concatenate %1209, %1211 in 1 : vector<8x64xf32>, vector<8x64xf32> -> vector<8x128xf32>
    %1213 = arith.index_cast %c7_i32_373 : i32 to index
    %c0_382 = arith.constant 0 : index
    %c0_383 = arith.constant 0 : index
    %1214 = vector.load %arg14[%1213, %c0_382, %c0_383] : memref<8x8x128xf32, #tpu.memory_space<vmem>>, vector<1x8x128xf32>
    %1215 = vector.shape_cast %1214 : vector<1x8x128xf32> to vector<8x128xf32>
    %1216 = vector.shape_cast %1212 : vector<8x128xf32> to vector<1x8x128xf32>
    tpu.vector_store %arg14[%1213, %c0_382, %c0_383], %1216 {strides = array<i32>} : memref<8x8x128xf32, #tpu.memory_space<vmem>>, vector<1x8x128xf32>,
    %c8_i32_384 = arith.constant 8 : i32
    return
  }
}

</mosaic_0001>

<llo_original>
// kernel: seqvae_forward.1
$region0: #{seqvae_forward.1}
  #allocation0 [shape = 'u32[]', space=smem, size = 0x4, offset = 0x4, fixed_abs, tag = 'smem constant byte address 0x4 - core index']
  #allocation1 [shape = 'u32[72,128]{1,0:T(1,128)}', space=vmem, size = 0x9000, scoped, tag = 'internal scratch']
  #allocation2 [shape = 'f32[64,512]{1,0:T(8,128)}', space=vmem, size = 0x20000, scoped, tag = 'scratch operand']
  #allocation3 [shape = 'f32[64,256]{1,0:T(8,128)}', space=vmem, size = 0x10000, scoped, tag = 'scratch operand']
  #allocation4 [shape = 'f32[64,256]{1,0:T(8,128)}', space=vmem, size = 0x10000, scoped, tag = 'scratch operand']
  #allocation5 [shape = 'bf16[64,128]{1,0:T(8,128)(2,1)}', space=vmem, size = 0x4000, scoped, tag = 'scratch operand']
  #allocation6 [shape = 'bf16[64,32]{1,0:T(8,128)(2,1)}', space=vmem, size = 0x4000, scoped, tag = 'scratch operand']
  #allocation7 [shape = 'f32[64,64]{1,0:T(8,128)}', space=vmem, size = 0x8000, scoped, tag = 'scratch operand']
  %s0 = inlined_call_operand.hbm [shape: f32[8,8,32], index: 0, kind: input, shape index: {}]
  %s1 = inlined_call_operand.hbm [shape: f32[8,8,32], index: 1, kind: input, shape index: {}]
  %s2 = inlined_call_operand.hbm [shape: bf16[32,512], index: 2, kind: input, shape index: {}]
  %s3 = inlined_call_operand.hbm [shape: bf16[128,512], index: 3, kind: input, shape index: {}]
  %s4 = inlined_call_operand.hbm [shape: f32[1,512], index: 4, kind: input, shape index: {}]
  %s5 = inlined_call_operand.hbm [shape: bf16[128,256], index: 5, kind: input, shape index: {}]
  %s6 = inlined_call_operand.hbm [shape: bf16[64,256], index: 6, kind: input, shape index: {}]
  %s7 = inlined_call_operand.vmem [shape: f32[1,256], index: 7, kind: input, shape index: {}]
  %s8 = inlined_call_operand.hbm [shape: bf16[32,512], index: 8, kind: input, shape index: {}]
  %s9 = inlined_call_operand.hbm [shape: bf16[128,512], index: 9, kind: input, shape index: {}]
  %s10 = inlined_call_operand.vmem [shape: f32[1,512], index: 10, kind: input, shape index: {}]
  %s11 = inlined_call_operand.hbm [shape: bf16[128,256], index: 11, kind: input, shape index: {}]
  %s12 = inlined_call_operand.hbm [shape: bf16[64,256], index: 12, kind: input, shape index: {}]
  %s13 = inlined_call_operand.vmem [shape: f32[1,256], index: 13, kind: input, shape index: {}]
  %s14 = inlined_call_operand.vmem [shape: f32[8,8,128], index: 14, kind: output, shape index: {}]
  %s15 = sld [smem:[#allocation0]]
  $region110: #{seqvae_forward.1} parent=0
    _
  %s17 = ssub.s32 1, %s15
  %s18 = scalar_select 0, %s17, %s15
  $region1: #{seqvae_forward.1} parent=0
    #allocation8 [shape = 'u8[32768]{0}', space=vmem, size = 0x8000, scoped, tag = 'input window, operand 0, single buffered']
    #allocation9 [shape = 's32[1]{0}', space=sflag, size = 0x4, scoped, tag = 'scoped memory for seqvae_forward.1']
    #allocation10 [shape = 'u8[32768]{0}', space=vmem, size = 0x8000, scoped, tag = 'input window, operand 1, single buffered']
    #allocation11 [shape = 's32[1]{0}', space=sflag, size = 0x4, scoped, tag = 'scoped memory for seqvae_forward.1']
    #allocation12 [shape = 'u8[32768]{0}', space=vmem, size = 0x8000, scoped, tag = 'input window, operand 2, single buffered']
    #allocation13 [shape = 'u8[131072]{0}', space=vmem, size = 0x20000, scoped, tag = 'input window, operand 3, single buffered']
    #allocation14 [shape = 's32[1]{0}', space=sflag, size = 0x4, scoped, tag = 'scoped memory for seqvae_forward.1']
    #allocation15 [shape = 'u8[2048]{0}', space=vmem, size = 0x800, scoped, tag = 'input window, operand 4, single buffered']
    #allocation16 [shape = 'u8[65536]{0}', space=vmem, size = 0x10000, scoped, tag = 'input window, operand 5, single buffered']
    #allocation17 [shape = 's32[1]{0}', space=sflag, size = 0x4, scoped, tag = 'scoped memory for seqvae_forward.1']
    #allocation18 [shape = 'u8[32768]{0}', space=vmem, size = 0x8000, scoped, tag = 'input window, operand 6, single buffered']
    #allocation19 [shape = 'u8[32768]{0}', space=vmem, size = 0x8000, scoped, tag = 'input window, operand 8, single buffered']
    #allocation20 [shape = 's32[1]{0}', space=sflag, size = 0x4, scoped, tag = 'scoped memory for seqvae_forward.1']
    #allocation21 [shape = 'u8[131072]{0}', space=vmem, size = 0x20000, scoped, tag = 'input window, operand 9, single buffered']
    #allocation22 [shape = 'u8[65536]{0}', space=vmem, size = 0x10000, scoped, tag = 'input window, operand 11, single buffered']
    #allocation23 [shape = 's32[1]{0}', space=sflag, size = 0x4, scoped, tag = 'scoped memory for seqvae_forward.1']
    #allocation24 [shape = 'u8[32768]{0}', space=vmem, size = 0x8000, scoped, tag = 'input window, operand 12, single buffered']
    %19 = vsyncpa [#allocation9], 0
    %20 = vsyncpa [#allocation11], 0
    %21 = vsyncpa [#allocation14], 0
    %22 = vsyncpa [#allocation17], 0
    %23 = vsyncpa [#allocation20], 0
    %24 = vsyncpa [#allocation23], 0
    // Predicated region
    $region2: #{seqvae_forward.1} parent=1 // pred_check
      _
    $region3: #{seqvae_forward.1} parent=1 // pred_check_branch
      %26 = sbr.rel (0) target = $region5
    $region4: #{seqvae_forward.1} parent=1 // pred_region
      %28 = vsyncadd [#allocation9], 0
      %s29 = sshll.u32 %s0, 4
      %s30 = int_to_ptr.hbm [resolvable:$true] %s29
      %s31 = sshll.u32 [#allocation8], 4
      %s32 = int_to_ptr.vmem [resolvable:$true] %s31
      %37 = dma.hbm_to_vmem [thread:$0]  %s30, 1024, %s32, [#allocation9], 128, 128, 8
    $region5: #{seqvae_forward.1} parent=1 // pred_fallthru
      _
    // Predicated region
    $region6: #{seqvae_forward.1} parent=1 // pred_check
      _
    $region7: #{seqvae_forward.1} parent=1 // pred_check_branch
      %39 = sbr.rel (0) target = $region9
    $region8: #{seqvae_forward.1} parent=1 // pred_region
      %41 = vsyncadd [#allocation11], 0
      %s42 = sshll.u32 %s1, 4
      %s43 = int_to_ptr.hbm [resolvable:$true] %s42
      %s44 = sshll.u32 [#allocation10], 4
      %s45 = int_to_ptr.vmem [resolvable:$true] %s44
      %50 = dma.hbm_to_vmem [thread:$0]  %s43, 1024, %s45, [#allocation11], 128, 128, 8
    $region9: #{seqvae_forward.1} parent=1 // pred_fallthru
      _
    // Predicated region
    $region10: #{seqvae_forward.1} parent=1 // pred_check
      _
    $region11: #{seqvae_forward.1} parent=1 // pred_check_branch
      %52 = sbr.rel (0) target = $region13
    $region12: #{seqvae_forward.1} parent=1 // pred_region
      %54 = vsyncadd [#allocation11], 0
      %s55 = sshll.u32 %s2, 4
      %s56 = int_to_ptr.hbm [resolvable:$true] %s55
      %s57 = sshll.u32 [#allocation12], 4
      %s58 = int_to_ptr.vmem [resolvable:$true] %s57
      %63 = dma.hbm_to_vmem [thread:$0]  %s56, 1024, %s58, [#allocation11], 256, 256, 16
    $region13: #{seqvae_forward.1} parent=1 // pred_fallthru
      _
    // Predicated region
    $region14: #{seqvae_forward.1} parent=1 // pred_check
      _
    $region15: #{seqvae_forward.1} parent=1 // pred_check_branch
      %65 = sbr.rel (0) target = $region17
    $region16: #{seqvae_forward.1} parent=1 // pred_region
      %67 = vsyncadd [#allocation14], 0
      %s68 = sshll.u32 %s3, 4
      %s69 = int_to_ptr.hbm [resolvable:$true] %s68
      %s70 = sshll.u32 [#allocation13], 4
      %s71 = int_to_ptr.vmem [resolvable:$true] %s70
      %76 = dma.hbm_to_vmem [thread:$0]  %s69, 4096, %s71, [#allocation14], 256, 256, 16
    $region17: #{seqvae_forward.1} parent=1 // pred_fallthru
      _
    // Predicated region
    $region18: #{seqvae_forward.1} parent=1 // pred_check
      _
    $region19: #{seqvae_forward.1} parent=1 // pred_check_branch
      %78 = sbr.rel (0) target = $region21
    $region20: #{seqvae_forward.1} parent=1 // pred_region
      %80 = vsyncadd [#allocation14], 0
      %s82 = sshll.u32 %s4, 4
      %s83 = int_to_ptr.hbm [resolvable:$true] %s82
      %s84 = sshll.u32 [#allocation15], 4
      %s85 = int_to_ptr.vmem [resolvable:$true] %s84
      %87 = dma.hbm_to_vmem [thread:$0]  %s83, 64, %s85, [#allocation14]
    $region21: #{seqvae_forward.1} parent=1 // pred_fallthru
      _
    // Predicated region
    $region22: #{seqvae_forward.1} parent=1 // pred_check
      _
    $region23: #{seqvae_forward.1} parent=1 // pred_check_branch
      %89 = sbr.rel (0) target = $region25
    $region24: #{seqvae_forward.1} parent=1 // pred_region
      %91 = vsyncadd [#allocation17], 0
      %s92 = sshll.u32 %s5, 4
      %s93 = int_to_ptr.hbm [resolvable:$true] %s92
      %s94 = sshll.u32 [#allocation16], 4
      %s95 = int_to_ptr.vmem [resolvable:$true] %s94
      %100 = dma.hbm_to_vmem [thread:$0]  %s93, 2048, %s95, [#allocation17], 128, 128, 8
    $region25: #{seqvae_forward.1} parent=1 // pred_fallthru
      _
    // Predicated region
    $region26: #{seqvae_forward.1} parent=1 // pred_check
      _
    $region27: #{seqvae_forward.1} parent=1 // pred_check_branch
      %102 = sbr.rel (0) target = $region29
    $region28: #{seqvae_forward.1} parent=1 // pred_region
      %104 = vsyncadd [#allocation17], 0
      %s105 = sshll.u32 %s6, 4
      %s106 = int_to_ptr.hbm [resolvable:$true] %s105
      %s107 = sshll.u32 [#allocation18], 4
      %s108 = int_to_ptr.vmem [resolvable:$true] %s107
      %113 = dma.hbm_to_vmem [thread:$0]  %s106, 1024, %s108, [#allocation17], 128, 128, 8
    $region29: #{seqvae_forward.1} parent=1 // pred_fallthru
      _
    // Predicated region
    $region30: #{seqvae_forward.1} parent=1 // pred_check
      _
    $region31: #{seqvae_forward.1} parent=1 // pred_check_branch
      %115 = sbr.rel (0) target = $region33
    $region32: #{seqvae_forward.1} parent=1 // pred_region
      _
    $region33: #{seqvae_forward.1} parent=1 // pred_fallthru
      _
    // Predicated region
    $region34: #{seqvae_forward.1} parent=1 // pred_check
      _
    $region35: #{seqvae_forward.1} parent=1 // pred_check_branch
      %117 = sbr.rel (0) target = $region37
    $region36: #{seqvae_forward.1} parent=1 // pred_region
      %119 = vsyncadd [#allocation20], 0
      %s120 = sshll.u32 %s8, 4
      %s121 = int_to_ptr.hbm [resolvable:$true] %s120
      %s122 = sshll.u32 [#allocation19], 4
      %s123 = int_to_ptr.vmem [resolvable:$true] %s122
      %128 = dma.hbm_to_vmem [thread:$0]  %s121, 1024, %s123, [#allocation20], 256, 256, 16
    $region37: #{seqvae_forward.1} parent=1 // pred_fallthru
      _
    // Predicated region
    $region38: #{seqvae_forward.1} parent=1 // pred_check
      _
    $region39: #{seqvae_forward.1} parent=1 // pred_check_branch
      %130 = sbr.rel (0) target = $region41
    $region40: #{seqvae_forward.1} parent=1 // pred_region
      %132 = vsyncadd [#allocation20], 0
      %s133 = sshll.u32 %s9, 4
      %s134 = int_to_ptr.hbm [resolvable:$true] %s133
      %s135 = sshll.u32 [#allocation21], 4
      %s136 = int_to_ptr.vmem [resolvable:$true] %s135
      %141 = dma.hbm_to_vmem [thread:$0]  %s134, 4096, %s136, [#allocation20], 256, 256, 16
    $region41: #{seqvae_forward.1} parent=1 // pred_fallthru
      _
    // Predicated region
    $region42: #{seqvae_forward.1} parent=1 // pred_check
      _
    $region43: #{seqvae_forward.1} parent=1 // pred_check_branch
      %143 = sbr.rel (0) target = $region45
    $region44: #{seqvae_forward.1} parent=1 // pred_region
      _
    $region45: #{seqvae_forward.1} parent=1 // pred_fallthru
      _
    // Predicated region
    $region46: #{seqvae_forward.1} parent=1 // pred_check
      _
    $region47: #{seqvae_forward.1} parent=1 // pred_check_branch
      %145 = sbr.rel (0) target = $region49
    $region48: #{seqvae_forward.1} parent=1 // pred_region
      %147 = vsyncadd [#allocation23], 0
      %s148 = sshll.u32 %s11, 4
      %s149 = int_to_ptr.hbm [resolvable:$true] %s148
      %s150 = sshll.u32 [#allocation22], 4
      %s151 = int_to_ptr.vmem [resolvable:$true] %s150
      %156 = dma.hbm_to_vmem [thread:$0]  %s149, 2048, %s151, [#allocation23], 128, 128, 8
    $region49: #{seqvae_forward.1} parent=1 // pred_fallthru
      _
    // Predicated region
    $region50: #{seqvae_forward.1} parent=1 // pred_check
      _
    $region51: #{seqvae_forward.1} parent=1 // pred_check_branch
      %158 = sbr.rel (0) target = $region53
    $region52: #{seqvae_forward.1} parent=1 // pred_region
      %160 = vsyncadd [#allocation23], 0
      %s161 = sshll.u32 %s12, 4
      %s162 = int_to_ptr.hbm [resolvable:$true] %s161
      %s163 = sshll.u32 [#allocation24], 4
      %s164 = int_to_ptr.vmem [resolvable:$true] %s163
      %169 = dma.hbm_to_vmem [thread:$0]  %s162, 1024, %s164, [#allocation23], 128, 128, 8
    $region53: #{seqvae_forward.1} parent=1 // pred_fallthru
      _
    // Predicated region
    $region54: #{seqvae_forward.1} parent=1 // pred_check
      _
    $region55: #{seqvae_forward.1} parent=1 // pred_check_branch
      %171 = sbr.rel (0) target = $region57
    $region56: #{seqvae_forward.1} parent=1 // pred_region
      _
    $region57: #{seqvae_forward.1} parent=1 // pred_fallthru
      _
    // Predicated region
    $region58: #{seqvae_forward.1} parent=1 // pred_check
      _
    $region59: #{seqvae_forward.1} parent=1 // pred_check_branch
      %173 = sbr.rel (0) target = $region61
    $region60: #{seqvae_forward.1} parent=1 // pred_region
      %175 = dma.done [#allocation9], 1024
    $region61: #{seqvae_forward.1} parent=1 // pred_fallthru
      _
    // Predicated region
    $region62: #{seqvae_forward.1} parent=1 // pred_check
      _
    $region63: #{seqvae_forward.1} parent=1 // pred_check_branch
      %177 = sbr.rel (0) target = $region65
    $region64: #{seqvae_forward.1} parent=1 // pred_region
      %179 = dma.done [#allocation11], 1024
    $region65: #{seqvae_forward.1} parent=1 // pred_fallthru
      _
    // Predicated region
    $region66: #{seqvae_forward.1} parent=1 // pred_check
      _
    $region67: #{seqvae_forward.1} parent=1 // pred_check_branch
      %181 = sbr.rel (0) target = $region69
    $region68: #{seqvae_forward.1} parent=1 // pred_region
      %183 = dma.done [#allocation11], 1024
    $region69: #{seqvae_forward.1} parent=1 // pred_fallthru
      _
    // Predicated region
    $region70: #{seqvae_forward.1} parent=1 // pred_check
      _
    $region71: #{seqvae_forward.1} parent=1 // pred_check_branch
      %185 = sbr.rel (0) target = $region73
    $region72: #{seqvae_forward.1} parent=1 // pred_region
      %187 = dma.done [#allocation14], 4096
    $region73: #{seqvae_forward.1} parent=1 // pred_fallthru
      _
    // Predicated region
    $region74: #{seqvae_forward.1} parent=1 // pred_check
      _
    $region75: #{seqvae_forward.1} parent=1 // pred_check_branch
      %189 = sbr.rel (0) target = $region77
    $region76: #{seqvae_forward.1} parent=1 // pred_region
      %191 = dma.done [#allocation14], 64
    $region77: #{seqvae_forward.1} parent=1 // pred_fallthru
      _
    // Predicated region
    $region78: #{seqvae_forward.1} parent=1 // pred_check
      _
    $region79: #{seqvae_forward.1} parent=1 // pred_check_branch
      %193 = sbr.rel (0) target = $region81
    $region80: #{seqvae_forward.1} parent=1 // pred_region
      %195 = dma.done [#allocation17], 2048
    $region81: #{seqvae_forward.1} parent=1 // pred_fallthru
      _
    // Predicated region
    $region82: #{seqvae_forward.1} parent=1 // pred_check
      _
    $region83: #{seqvae_forward.1} parent=1 // pred_check_branch
      %197 = sbr.rel (0) target = $region85
    $region84: #{seqvae_forward.1} parent=1 // pred_region
      %199 = dma.done [#allocation17], 1024
    $region85: #{seqvae_forward.1} parent=1 // pred_fallthru
      _
    // Predicated region
    $region86: #{seqvae_forward.1} parent=1 // pred_check
      _
    $region87: #{seqvae_forward.1} parent=1 // pred_check_branch
      %201 = sbr.rel (0) target = $region89
    $region88: #{seqvae_forward.1} parent=1 // pred_region
      %203 = dma.done [#allocation20], 1024
    $region89: #{seqvae_forward.1} parent=1 // pred_fallthru
      _
    // Predicated region
    $region90: #{seqvae_forward.1} parent=1 // pred_check
      _
    $region91: #{seqvae_forward.1} parent=1 // pred_check_branch
      %205 = sbr.rel (0) target = $region93
    $region92: #{seqvae_forward.1} parent=1 // pred_region
      %207 = dma.done [#allocation20], 4096
    $region93: #{seqvae_forward.1} parent=1 // pred_fallthru
      _
    // Predicated region
    $region94: #{seqvae_forward.1} parent=1 // pred_check
      _
    $region95: #{seqvae_forward.1} parent=1 // pred_check_branch
      %209 = sbr.rel (0) target = $region97
    $region96: #{seqvae_forward.1} parent=1 // pred_region
      %211 = dma.done [#allocation23], 2048
    $region97: #{seqvae_forward.1} parent=1 // pred_fallthru
      _
    // Predicated region
    $region98: #{seqvae_forward.1} parent=1 // pred_check
      _
    $region99: #{seqvae_forward.1} parent=1 // pred_check_branch
      %213 = sbr.rel (0) target = $region101
    $region100: #{seqvae_forward.1} parent=1 // pred_region
      %215 = dma.done [#allocation23], 1024
    $region101: #{seqvae_forward.1} parent=1 // pred_fallthru
      _
    %v217 = vld [vmem:[#allocation8] sm:$0xff]
    %v218 = vld [vmem:[#allocation8 + $0x8] sm:$0xff]
    %v219 = vld [vmem:[#allocation8 + $0x10] sm:$0xff]
    %v220 = vld [vmem:[#allocation8 + $0x18] sm:$0xff]
    %v221 = vld [vmem:[#allocation8 + $0x20] sm:$0xff]
    %v222 = vld [vmem:[#allocation8 + $0x28] sm:$0xff]
    %v223 = vld [vmem:[#allocation8 + $0x30] sm:$0xff]
    %v224 = vld [vmem:[#allocation8 + $0x38] sm:$0xff]
    %v225 = vpack.c.bf16 %v218, %v217
    %v226 = vpack.c.bf16 %v220, %v219
    %v227 = vpack.c.bf16 %v222, %v221
    %v228 = vpack.c.bf16 %v224, %v223
    %v229 = vld [vmem:[#allocation12] sm:$0xff]
    %v230 = vld [vmem:[#allocation12 + $0x8] sm:$0xff]
    %v231 = vld [vmem:[#allocation12 + $0x10] sm:$0xff]
    %v232 = vld [vmem:[#allocation12 + $0x18] sm:$0xff]
    %v233 = vld [vmem:[#allocation12 + $0x20] sm:$0xff]
    %v234 = vld [vmem:[#allocation12 + $0x28] sm:$0xff]
    %v235 = vld [vmem:[#allocation12 + $0x30] sm:$0xff]
    %v236 = vld [vmem:[#allocation12 + $0x38] sm:$0xff]
    %v237 = vld [vmem:[#allocation15] sm:$0xf]
    %v239 = vperm.slane %v237, 0
    %v240 = vperm.slane %v237, 1
    %v241 = vperm.slane %v237, 2
    %v242 = vperm.slane %v237, 3
    %v255 = vunpack.c.l.b16 %v229
    %v256 = vunpack.c.h.b16 %v229
    %v257 = vunpack.c.l.b16 %v230
    %v258 = vunpack.c.h.b16 %v230
    %v259 = vunpack.c.l.b16 %v231
    %v260 = vunpack.c.h.b16 %v231
    %v261 = vunpack.c.l.b16 %v232
    %v262 = vunpack.c.h.b16 %v232
    %v263 = vunpack.c.l.b16 %v233
    %v264 = vunpack.c.h.b16 %v233
    %v265 = vunpack.c.l.b16 %v234
    %v266 = vunpack.c.h.b16 %v234
    %v267 = vunpack.c.l.b16 %v235
    %v268 = vunpack.c.h.b16 %v235
    %v269 = vunpack.c.l.b16 %v236
    %v270 = vunpack.c.h.b16 %v236
    %v271 = vpack.c.b16 %v259, %v255
    %v272 = vpack.c.b16 %v260, %v256
    %v273 = vpack.c.b16 %v261, %v257
    %v274 = vpack.c.b16 %v262, %v258
    %v275 = vpack.c.b16 %v267, %v263
    %v276 = vpack.c.b16 %v268, %v264
    %v277 = vpack.c.b16 %v269, %v265
    %v278 = vpack.c.b16 %v270, %v266
    %vm287 = vcmask 261120
    %v289 = vsel %vm287, %v225, 0
    %v292 = vsel %vm287, %v226, 0
    %v295 = vsel %vm287, %v227, 0
    %v298 = vsel %vm287, %v228, 0
    %300 = vmatpush.bf16.msra.mxu0 0
    %301 = vmatpush.bf16.msra.mxu0 0
    %302 = vmatpush.bf16.msra.mxu0 0
    %303 = vmatpush.bf16.msra.mxu0 0
    %304 = vmatpush.bf16.msra.mxu0 0
    %305 = vmatpush.bf16.msra.mxu0 0
    %306 = vmatpush.bf16.msra.mxu0 %v275
    %307 = vmatpush.bf16.msra.mxu0 %v271
    %308 = vmatmul.bf16.gmra.mxu0 %v289
    %v309 = vpop.f32.mrf.mxu0
    %v310 = vadd.f32 %v239, %v309
    %v311 = vpop.f32.mrf.mxu0
    %v312 = vadd.f32 %v239, %v311
    %313 = vmatmul.bf16.gmra.mxu0 %v292
    %v314 = vpop.f32.mrf.mxu0
    %v315 = vadd.f32 %v239, %v314
    %v316 = vpop.f32.mrf.mxu0
    %v317 = vadd.f32 %v239, %v316
    %318 = vmatmul.bf16.gmra.mxu0 %v295
    %v319 = vpop.f32.mrf.mxu0
    %v320 = vadd.f32 %v239, %v319
    %v321 = vpop.f32.mrf.mxu0
    %v322 = vadd.f32 %v239, %v321
    %323 = vmatmul.bf16.gmra.mxu0 %v298
    %v324 = vpop.f32.mrf.mxu0
    %v325 = vadd.f32 %v239, %v324
    %v326 = vpop.f32.mrf.mxu0
    %v327 = vadd.f32 %v239, %v326
    %328 = vdwg.mxu0
    %329 = vmatpush.bf16.msra.mxu0 0
    %330 = vmatpush.bf16.msra.mxu0 0
    %331 = vmatpush.bf16.msra.mxu0 0
    %332 = vmatpush.bf16.msra.mxu0 0
    %333 = vmatpush.bf16.msra.mxu0 0
    %334 = vmatpush.bf16.msra.mxu0 0
    %335 = vmatpush.bf16.msra.mxu0 %v276
    %336 = vmatpush.bf16.msra.mxu0 %v272
    %337 = vmatmul.bf16.gmra.mxu0 %v289
    %v338 = vpop.f32.mrf.mxu0
    %v339 = vadd.f32 %v240, %v338
    %v340 = vpop.f32.mrf.mxu0
    %v341 = vadd.f32 %v240, %v340
    %342 = vmatmul.bf16.gmra.mxu0 %v292
    %v343 = vpop.f32.mrf.mxu0
    %v344 = vadd.f32 %v240, %v343
    %v345 = vpop.f32.mrf.mxu0
    %v346 = vadd.f32 %v240, %v345
    %347 = vmatmul.bf16.gmra.mxu0 %v295
    %v348 = vpop.f32.mrf.mxu0
    %v349 = vadd.f32 %v240, %v348
    %v350 = vpop.f32.mrf.mxu0
    %v351 = vadd.f32 %v240, %v350
    %352 = vmatmul.bf16.gmra.mxu0 %v298
    %v353 = vpop.f32.mrf.mxu0
    %v354 = vadd.f32 %v240, %v353
    %v355 = vpop.f32.mrf.mxu0
    %v356 = vadd.f32 %v240, %v355
    %357 = vdwg.mxu0
    %358 = vmatpush.bf16.msra.mxu0 0
    %359 = vmatpush.bf16.msra.mxu0 0
    %360 = vmatpush.bf16.msra.mxu0 0
    %361 = vmatpush.bf16.msra.mxu0 0
    %362 = vmatpush.bf16.msra.mxu0 0
    %363 = vmatpush.bf16.msra.mxu0 0
    %364 = vmatpush.bf16.msra.mxu0 %v277
    %365 = vmatpush.bf16.msra.mxu0 %v273
    %366 = vmatmul.bf16.gmra.mxu0 %v289
    %v367 = vpop.f32.mrf.mxu0
    %v368 = vadd.f32 %v241, %v367
    %v369 = vpop.f32.mrf.mxu0
    %v370 = vadd.f32 %v241, %v369
    %371 = vmatmul.bf16.gmra.mxu0 %v292
    %v372 = vpop.f32.mrf.mxu0
    %v373 = vadd.f32 %v241, %v372
    %v374 = vpop.f32.mrf.mxu0
    %v375 = vadd.f32 %v241, %v374
    %376 = vmatmul.bf16.gmra.mxu0 %v295
    %v377 = vpop.f32.mrf.mxu0
    %v378 = vadd.f32 %v241, %v377
    %v379 = vpop.f32.mrf.mxu0
    %v380 = vadd.f32 %v241, %v379
    %381 = vmatmul.bf16.gmra.mxu0 %v298
    %v382 = vpop.f32.mrf.mxu0
    %v383 = vadd.f32 %v241, %v382
    %v384 = vpop.f32.mrf.mxu0
    %v385 = vadd.f32 %v241, %v384
    %386 = vdwg.mxu0
    %387 = vmatpush.bf16.msra.mxu0 0
    %388 = vmatpush.bf16.msra.mxu0 0
    %389 = vmatpush.bf16.msra.mxu0 0
    %390 = vmatpush.bf16.msra.mxu0 0
    %391 = vmatpush.bf16.msra.mxu0 0
    %392 = vmatpush.bf16.msra.mxu0 0
    %393 = vmatpush.bf16.msra.mxu0 %v278
    %394 = vmatpush.bf16.msra.mxu0 %v274
    %395 = vmatmul.bf16.gmra.mxu0 %v289
    %v396 = vpop.f32.mrf.mxu0
    %v397 = vadd.f32 %v242, %v396
    %v398 = vpop.f32.mrf.mxu0
    %v399 = vadd.f32 %v242, %v398
    %400 = vmatmul.bf16.gmra.mxu0 %v292
    %v401 = vpop.f32.mrf.mxu0
    %v402 = vadd.f32 %v242, %v401
    %v403 = vpop.f32.mrf.mxu0
    %v404 = vadd.f32 %v242, %v403
    %405 = vmatmul.bf16.gmra.mxu0 %v295
    %v406 = vpop.f32.mrf.mxu0
    %v407 = vadd.f32 %v242, %v406
    %v408 = vpop.f32.mrf.mxu0
    %v409 = vadd.f32 %v242, %v408
    %410 = vmatmul.bf16.gmra.mxu0 %v298
    %v411 = vpop.f32.mrf.mxu0
    %v412 = vadd.f32 %v242, %v411
    %v413 = vpop.f32.mrf.mxu0
    %v414 = vadd.f32 %v242, %v413
    %415 = vdwg.mxu0
    %416 = vst [vmem:[#allocation2] sm:$0xff] %v310
    %417 = vst [vmem:[#allocation2 + $0x8] sm:$0xff] %v339
    %418 = vst [vmem:[#allocation2 + $0x10] sm:$0xff] %v368
    %419 = vst [vmem:[#allocation2 + $0x18] sm:$0xff] %v397
    %420 = vst [vmem:[#allocation2 + $0x20] sm:$0xff] %v312
    %421 = vst [vmem:[#allocation2 + $0x28] sm:$0xff] %v341
    %422 = vst [vmem:[#allocation2 + $0x30] sm:$0xff] %v370
    %423 = vst [vmem:[#allocation2 + $0x38] sm:$0xff] %v399
    %424 = vst [vmem:[#allocation2 + $0x40] sm:$0xff] %v315
    %425 = vst [vmem:[#allocation2 + $0x48] sm:$0xff] %v344
    %426 = vst [vmem:[#allocation2 + $0x50] sm:$0xff] %v373
    %427 = vst [vmem:[#allocation2 + $0x58] sm:$0xff] %v402
    %428 = vst [vmem:[#allocation2 + $0x60] sm:$0xff] %v317
    %429 = vst [vmem:[#allocation2 + $0x68] sm:$0xff] %v346
    %430 = vst [vmem:[#allocation2 + $0x70] sm:$0xff] %v375
    %431 = vst [vmem:[#allocation2 + $0x78] sm:$0xff] %v404
    %432 = vst [vmem:[#allocation2 + $0x80] sm:$0xff] %v320
    %433 = vst [vmem:[#allocation2 + $0x88] sm:$0xff] %v349
    %434 = vst [vmem:[#allocation2 + $0x90] sm:$0xff] %v378
    %435 = vst [vmem:[#allocation2 + $0x98] sm:$0xff] %v407
    %436 = vst [vmem:[#allocation2 + $0xa0] sm:$0xff] %v322
    %437 = vst [vmem:[#allocation2 + $0xa8] sm:$0xff] %v351
    %438 = vst [vmem:[#allocation2 + $0xb0] sm:$0xff] %v380
    %439 = vst [vmem:[#allocation2 + $0xb8] sm:$0xff] %v409
    %440 = vst [vmem:[#allocation2 + $0xc0] sm:$0xff] %v325
    %441 = vst [vmem:[#allocation2 + $0xc8] sm:$0xff] %v354
    %442 = vst [vmem:[#allocation2 + $0xd0] sm:$0xff] %v383
    %443 = vst [vmem:[#allocation2 + $0xd8] sm:$0xff] %v412
    %444 = vst [vmem:[#allocation2 + $0xe0] sm:$0xff] %v327
    %445 = vst [vmem:[#allocation2 + $0xe8] sm:$0xff] %v356
    %446 = vst [vmem:[#allocation2 + $0xf0] sm:$0xff] %v385
    %447 = vst [vmem:[#allocation2 + $0xf8] sm:$0xff] %v414
    %s448 = smul.u32 0, 4
    %s449 = smul.addr %s448, 8
    %s450 = scalar_lea.vmem [#allocation2], %s449
    %v451 = vld [vmem:[%s450] sm:$0xff]
    %v452 = vld [vmem:[%s450 + $0x8] sm:$0xff]
    %v453 = vld [vmem:[%s450 + $0x10] sm:$0xff]
    %v454 = vld [vmem:[%s450 + $0x18] sm:$0xff]
    %v455 = vld [vmem:[#allocation13] sm:$0xff]
    %v456 = vld [vmem:[#allocation13 + $0x8] sm:$0xff]
    %v457 = vld [vmem:[#allocation13 + $0x10] sm:$0xff]
    %v458 = vld [vmem:[#allocation13 + $0x18] sm:$0xff]
    %v459 = vld [vmem:[#allocation13 + $0x20] sm:$0xff]
    %v460 = vld [vmem:[#allocation13 + $0x28] sm:$0xff]
    %v461 = vld [vmem:[#allocation13 + $0x30] sm:$0xff]
    %v462 = vld [vmem:[#allocation13 + $0x38] sm:$0xff]
    %v463 = vld [vmem:[#allocation13 + $0x40] sm:$0xff]
    %v464 = vld [vmem:[#allocation13 + $0x48] sm:$0xff]
    %v465 = vld [vmem:[#allocation13 + $0x50] sm:$0xff]
    %v466 = vld [vmem:[#allocation13 + $0x58] sm:$0xff]
    %v467 = vld [vmem:[#allocation13 + $0x60] sm:$0xff]
    %v468 = vld [vmem:[#allocation13 + $0x68] sm:$0xff]
    %v469 = vld [vmem:[#allocation13 + $0x70] sm:$0xff]
    %v470 = vld [vmem:[#allocation13 + $0x78] sm:$0xff]
    %v471 = vld [vmem:[#allocation13 + $0x80] sm:$0xff]
    %v472 = vld [vmem:[#allocation13 + $0x88] sm:$0xff]
    %v473 = vld [vmem:[#allocation13 + $0x90] sm:$0xff]
    %v474 = vld [vmem:[#allocation13 + $0x98] sm:$0xff]
    %v475 = vld [vmem:[#allocation13 + $0xa0] sm:$0xff]
    %v476 = vld [vmem:[#allocation13 + $0xa8] sm:$0xff]
    %v477 = vld [vmem:[#allocation13 + $0xb0] sm:$0xff]
    %v478 = vld [vmem:[#allocation13 + $0xb8] sm:$0xff]
    %v479 = vld [vmem:[#allocation13 + $0xc0] sm:$0xff]
    %v480 = vld [vmem:[#allocation13 + $0xc8] sm:$0xff]
    %v481 = vld [vmem:[#allocation13 + $0xd0] sm:$0xff]
    %v482 = vld [vmem:[#allocation13 + $0xd8] sm:$0xff]
    %v483 = vld [vmem:[#allocation13 + $0xe0] sm:$0xff]
    %v484 = vld [vmem:[#allocation13 + $0xe8] sm:$0xff]
    %v485 = vld [vmem:[#allocation13 + $0xf0] sm:$0xff]
    %v486 = vld [vmem:[#allocation13 + $0xf8] sm:$0xff]
    %v519 = vunpack.c.l.b16 %v455
    %v520 = vunpack.c.h.b16 %v455
    %v521 = vunpack.c.l.b16 %v456
    %v522 = vunpack.c.h.b16 %v456
    %v523 = vunpack.c.l.b16 %v457
    %v524 = vunpack.c.h.b16 %v457
    %v525 = vunpack.c.l.b16 %v458
    %v526 = vunpack.c.h.b16 %v458
    %v527 = vunpack.c.l.b16 %v459
    %v528 = vunpack.c.h.b16 %v459
    %v529 = vunpack.c.l.b16 %v460
    %v530 = vunpack.c.h.b16 %v460
    %v531 = vunpack.c.l.b16 %v461
    %v532 = vunpack.c.h.b16 %v461
    %v533 = vunpack.c.l.b16 %v462
    %v534 = vunpack.c.h.b16 %v462
    %v535 = vunpack.c.l.b16 %v463
    %v536 = vunpack.c.h.b16 %v463
    %v537 = vunpack.c.l.b16 %v464
    %v538 = vunpack.c.h.b16 %v464
    %v539 = vunpack.c.l.b16 %v465
    %v540 = vunpack.c.h.b16 %v465
    %v541 = vunpack.c.l.b16 %v466
    %v542 = vunpack.c.h.b16 %v466
    %v543 = vunpack.c.l.b16 %v467
    %v544 = vunpack.c.h.b16 %v467
    %v545 = vunpack.c.l.b16 %v468
    %v546 = vunpack.c.h.b16 %v468
    %v547 = vunpack.c.l.b16 %v469
    %v548 = vunpack.c.h.b16 %v469
    %v549 = vunpack.c.l.b16 %v470
    %v550 = vunpack.c.h.b16 %v470
    %v551 = vunpack.c.l.b16 %v471
    %v552 = vunpack.c.h.b16 %v471
    %v553 = vunpack.c.l.b16 %v472
    %v554 = vunpack.c.h.b16 %v472
    %v555 = vunpack.c.l.b16 %v473
    %v556 = vunpack.c.h.b16 %v473
    %v557 = vunpack.c.l.b16 %v474
    %v558 = vunpack.c.h.b16 %v474
    %v559 = vunpack.c.l.b16 %v475
    %v560 = vunpack.c.h.b16 %v475
    %v561 = vunpack.c.l.b16 %v476
    %v562 = vunpack.c.h.b16 %v476
    %v563 = vunpack.c.l.b16 %v477
    %v564 = vunpack.c.h.b16 %v477
    %v565 = vunpack.c.l.b16 %v478
    %v566 = vunpack.c.h.b16 %v478
    %v567 = vunpack.c.l.b16 %v479
    %v568 = vunpack.c.h.b16 %v479
    %v569 = vunpack.c.l.b16 %v480
    %v570 = vunpack.c.h.b16 %v480
    %v571 = vunpack.c.l.b16 %v481
    %v572 = vunpack.c.h.b16 %v481
    %v573 = vunpack.c.l.b16 %v482
    %v574 = vunpack.c.h.b16 %v482
    %v575 = vunpack.c.l.b16 %v483
    %v576 = vunpack.c.h.b16 %v483
    %v577 = vunpack.c.l.b16 %v484
    %v578 = vunpack.c.h.b16 %v484
    %v579 = vunpack.c.l.b16 %v485
    %v580 = vunpack.c.h.b16 %v485
    %v581 = vunpack.c.l.b16 %v486
    %v582 = vunpack.c.h.b16 %v486
    %v583 = vpack.c.b16 %v523, %v519
    %v584 = vpack.c.b16 %v524, %v520
    %v585 = vpack.c.b16 %v525, %v521
    %v586 = vpack.c.b16 %v526, %v522
    %v587 = vpack.c.b16 %v531, %v527
    %v588 = vpack.c.b16 %v532, %v528
    %v589 = vpack.c.b16 %v533, %v529
    %v590 = vpack.c.b16 %v534, %v530
    %v591 = vpack.c.b16 %v539, %v535
    %v592 = vpack.c.b16 %v540, %v536
    %v593 = vpack.c.b16 %v541, %v537
    %v594 = vpack.c.b16 %v542, %v538
    %v595 = vpack.c.b16 %v547, %v543
    %v596 = vpack.c.b16 %v548, %v544
    %v597 = vpack.c.b16 %v549, %v545
    %v598 = vpack.c.b16 %v550, %v546
    %v599 = vpack.c.b16 %v555, %v551
    %v600 = vpack.c.b16 %v556, %v552
    %v601 = vpack.c.b16 %v557, %v553
    %v602 = vpack.c.b16 %v558, %v554
    %v603 = vpack.c.b16 %v563, %v559
    %v604 = vpack.c.b16 %v564, %v560
    %v605 = vpack.c.b16 %v565, %v561
    %v606 = vpack.c.b16 %v566, %v562
    %v607 = vpack.c.b16 %v571, %v567
    %v608 = vpack.c.b16 %v572, %v568
    %v609 = vpack.c.b16 %v573, %v569
    %v610 = vpack.c.b16 %v574, %v570
    %v611 = vpack.c.b16 %v579, %v575
    %v612 = vpack.c.b16 %v580, %v576
    %v613 = vpack.c.b16 %v581, %v577
    %v614 = vpack.c.b16 %v582, %v578
    %647 = vmatpush.bf16.msra.mxu0 %v611
    %648 = vmatpush.bf16.msra.mxu0 %v607
    %649 = vmatpush.bf16.msra.mxu0 %v603
    %650 = vmatpush.bf16.msra.mxu0 %v599
    %651 = vmatpush.bf16.msra.mxu0 %v595
    %652 = vmatpush.bf16.msra.mxu0 %v591
    %653 = vmatpush.bf16.msra.mxu0 %v587
    %654 = vmatpush.bf16.msra.mxu0 %v583
    %655 = vmatmul.bf16.gmra.mxu0 0
    %v656 = vpop.f32.mrf.mxu0
    %v657 = vadd.f32 0.0, %v656
    %v658 = vpop.f32.mrf.mxu0
    %659 = vdwg.mxu0
    %660 = vmatpush.bf16.msra.mxu0 %v612
    %661 = vmatpush.bf16.msra.mxu0 %v608
    %662 = vmatpush.bf16.msra.mxu0 %v604
    %663 = vmatpush.bf16.msra.mxu0 %v600
    %664 = vmatpush.bf16.msra.mxu0 %v596
    %665 = vmatpush.bf16.msra.mxu0 %v592
    %666 = vmatpush.bf16.msra.mxu0 %v588
    %667 = vmatpush.bf16.msra.mxu0 %v584
    %668 = vmatmul.bf16.gmra.mxu0 0
    %v669 = vpop.f32.mrf.mxu0
    %v670 = vadd.f32 0.0, %v669
    %v671 = vpop.f32.mrf.mxu0
    %672 = vdwg.mxu0
    %673 = vmatpush.bf16.msra.mxu0 %v613
    %674 = vmatpush.bf16.msra.mxu0 %v609
    %675 = vmatpush.bf16.msra.mxu0 %v605
    %676 = vmatpush.bf16.msra.mxu0 %v601
    %677 = vmatpush.bf16.msra.mxu0 %v597
    %678 = vmatpush.bf16.msra.mxu0 %v593
    %679 = vmatpush.bf16.msra.mxu0 %v589
    %680 = vmatpush.bf16.msra.mxu0 %v585
    %681 = vmatmul.bf16.gmra.mxu0 0
    %v682 = vpop.f32.mrf.mxu0
    %v683 = vadd.f32 0.0, %v682
    %v684 = vpop.f32.mrf.mxu0
    %685 = vdwg.mxu0
    %686 = vmatpush.bf16.msra.mxu0 %v614
    %687 = vmatpush.bf16.msra.mxu0 %v610
    %688 = vmatpush.bf16.msra.mxu0 %v606
    %689 = vmatpush.bf16.msra.mxu0 %v602
    %690 = vmatpush.bf16.msra.mxu0 %v598
    %691 = vmatpush.bf16.msra.mxu0 %v594
    %692 = vmatpush.bf16.msra.mxu0 %v590
    %693 = vmatpush.bf16.msra.mxu0 %v586
    %694 = vmatmul.bf16.gmra.mxu0 0
    %v695 = vpop.f32.mrf.mxu0
    %v696 = vadd.f32 0.0, %v695
    %v697 = vpop.f32.mrf.mxu0
    %698 = vdwg.mxu0
    %v699 = vadd.f32 %v451, %v657
    %v700 = vadd.f32 %v452, %v670
    %v701 = vadd.f32 %v453, %v683
    %v702 = vadd.f32 %v454, %v696
    %v703 = vxor.u32 %v699, 2147483648
    %v704 = vxor.u32 %v700, 2147483648
    %v705 = vmul.f32 %v703, 1.442695
    %v706 = vpow.pop %v705
    %v707 = vmul.f32 %v704, 1.442695
    %v708 = vpow.pop %v707
    %v709 = vadd.f32 %v706, 1.0
    %v710 = vadd.f32 %v708, 1.0
    %v711 = vrcp.pop %v709
    %v712 = vmul.f32 %v709, %v711
    %v713 = vsub.f32 1.0, %v712
    %v714 = vmul.f32 %v711, %v713
    %v715 = vadd.f32 %v711, %v714
    %vm716 = vweird.f32 %v709
    %vm717 = vweird.f32 %v711
    %vm718 = vmor %vm716, %vm717
    %v719 = vsel %vm718, %v711, %v715
    %v720 = vand.u32 2147483647, %v709
    %vm721 = vcmp.eq.f32.partialorder %v720, 8.507059e+37
    %v722 = vand.u32 %v709, 2147483648
    %v723 = vor.u32 1.1754944e-38, %v722
    %v724 = vsel %vm721, %v723, %v719
    %v725 = vmul.f32 1.0, %v724
    %v726 = vrcp.pop %v710
    %v727 = vmul.f32 %v710, %v726
    %v728 = vsub.f32 1.0, %v727
    %v729 = vmul.f32 %v726, %v728
    %v730 = vadd.f32 %v726, %v729
    %vm731 = vweird.f32 %v710
    %vm732 = vweird.f32 %v726
    %vm733 = vmor %vm731, %vm732
    %v734 = vsel %vm733, %v726, %v730
    %v735 = vand.u32 2147483647, %v710
    %vm736 = vcmp.eq.f32.partialorder %v735, 8.507059e+37
    %v737 = vand.u32 %v710, 2147483648
    %v738 = vor.u32 1.1754944e-38, %v737
    %v739 = vsel %vm736, %v738, %v734
    %v740 = vmul.f32 1.0, %v739
    %v741 = vtanh.pop %v701
    %v742 = vxor.u32 %v702, 2147483648
    %v743 = vmul.f32 %v742, 1.442695
    %v744 = vpow.pop %v743
    %v745 = vadd.f32 %v744, 1.0
    %v746 = vrcp.pop %v745
    %v747 = vmul.f32 %v745, %v746
    %v748 = vsub.f32 1.0, %v747
    %v749 = vmul.f32 %v746, %v748
    %v750 = vadd.f32 %v746, %v749
    %vm751 = vweird.f32 %v745
    %vm752 = vweird.f32 %v746
    %vm753 = vmor %vm751, %vm752
    %v754 = vsel %vm753, %v746, %v750
    %v755 = vand.u32 2147483647, %v745
    %vm756 = vcmp.eq.f32.partialorder %v755, 8.507059e+37
    %v757 = vand.u32 %v745, 2147483648
    %v758 = vor.u32 1.1754944e-38, %v757
    %v759 = vsel %vm756, %v758, %v754
    %v760 = vmul.f32 1.0, %v759
    %v761 = vmul.f32 %v740, 0.0
    %v762 = vmul.f32 %v725, %v741
    %v763 = vadd.f32 %v761, %v762
    %v764 = vtanh.pop %v763
    %v765 = vmul.f32 %v760, %v764
    %v766 = vmax.f32 %v765, 0.0
    %v767 = vpack.c.bf16 %v766, %v766
    %768 = vst [vmem:[#allocation5] sm:$0xf] %v767
    %s769 = smul.u32 1, 4
    %s770 = smul.addr %s769, 8
    %s771 = scalar_lea.vmem [#allocation2], %s770
    %v772 = vld [vmem:[%s771] sm:$0xff]
    %v773 = vld [vmem:[%s771 + $0x8] sm:$0xff]
    %v774 = vld [vmem:[%s771 + $0x10] sm:$0xff]
    %v775 = vld [vmem:[%s771 + $0x18] sm:$0xff]
    %v776 = vpack.c.bf16 %v765, %v765
    %v777 = vld [vmem:[#allocation13] sm:$0xff]
    %v778 = vld [vmem:[#allocation13 + $0x8] sm:$0xff]
    %v779 = vld [vmem:[#allocation13 + $0x10] sm:$0xff]
    %v780 = vld [vmem:[#allocation13 + $0x18] sm:$0xff]
    %v781 = vld [vmem:[#allocation13 + $0x20] sm:$0xff]
    %v782 = vld [vmem:[#allocation13 + $0x28] sm:$0xff]
    %v783 = vld [vmem:[#allocation13 + $0x30] sm:$0xff]
    %v784 = vld [vmem:[#allocation13 + $0x38] sm:$0xff]
    %v785 = vld [vmem:[#allocation13 + $0x40] sm:$0xff]
    %v786 = vld [vmem:[#allocation13 + $0x48] sm:$0xff]
    %v787 = vld [vmem:[#allocation13 + $0x50] sm:$0xff]
    %v788 = vld [vmem:[#allocation13 + $0x58] sm:$0xff]
    %v789 = vld [vmem:[#allocation13 + $0x60] sm:$0xff]
    %v790 = vld [vmem:[#allocation13 + $0x68] sm:$0xff]
    %v791 = vld [vmem:[#allocation13 + $0x70] sm:$0xff]
    %v792 = vld [vmem:[#allocation13 + $0x78] sm:$0xff]
    %v793 = vld [vmem:[#allocation13 + $0x80] sm:$0xff]
    %v794 = vld [vmem:[#allocation13 + $0x88] sm:$0xff]
    %v795 = vld [vmem:[#allocation13 + $0x90] sm:$0xff]
    %v796 = vld [vmem:[#allocation13 + $0x98] sm:$0xff]
    %v797 = vld [vmem:[#allocation13 + $0xa0] sm:$0xff]
    %v798 = vld [vmem:[#allocation13 + $0xa8] sm:$0xff]
    %v799 = vld [vmem:[#allocation13 + $0xb0] sm:$0xff]
    %v800 = vld [vmem:[#allocation13 + $0xb8] sm:$0xff]
    %v801 = vld [vmem:[#allocation13 + $0xc0] sm:$0xff]
    %v802 = vld [vmem:[#allocation13 + $0xc8] sm:$0xff]
    %v803 = vld [vmem:[#allocation13 + $0xd0] sm:$0xff]
    %v804 = vld [vmem:[#allocation13 + $0xd8] sm:$0xff]
    %v805 = vld [vmem:[#allocation13 + $0xe0] sm:$0xff]
    %v806 = vld [vmem:[#allocation13 + $0xe8] sm:$0xff]
    %v807 = vld [vmem:[#allocation13 + $0xf0] sm:$0xff]
    %v808 = vld [vmem:[#allocation13 + $0xf8] sm:$0xff]
    %v841 = vunpack.c.l.b16 %v777
    %v842 = vunpack.c.h.b16 %v777
    %v843 = vunpack.c.l.b16 %v778
    %v844 = vunpack.c.h.b16 %v778
    %v845 = vunpack.c.l.b16 %v779
    %v846 = vunpack.c.h.b16 %v779
    %v847 = vunpack.c.l.b16 %v780
    %v848 = vunpack.c.h.b16 %v780
    %v849 = vunpack.c.l.b16 %v781
    %v850 = vunpack.c.h.b16 %v781
    %v851 = vunpack.c.l.b16 %v782
    %v852 = vunpack.c.h.b16 %v782
    %v853 = vunpack.c.l.b16 %v783
    %v854 = vunpack.c.h.b16 %v783
    %v855 = vunpack.c.l.b16 %v784
    %v856 = vunpack.c.h.b16 %v784
    %v857 = vunpack.c.l.b16 %v785
    %v858 = vunpack.c.h.b16 %v785
    %v859 = vunpack.c.l.b16 %v786
    %v860 = vunpack.c.h.b16 %v786
    %v861 = vunpack.c.l.b16 %v787
    %v862 = vunpack.c.h.b16 %v787
    %v863 = vunpack.c.l.b16 %v788
    %v864 = vunpack.c.h.b16 %v788
    %v865 = vunpack.c.l.b16 %v789
    %v866 = vunpack.c.h.b16 %v789
    %v867 = vunpack.c.l.b16 %v790
    %v868 = vunpack.c.h.b16 %v790
    %v869 = vunpack.c.l.b16 %v791
    %v870 = vunpack.c.h.b16 %v791
    %v871 = vunpack.c.l.b16 %v792
    %v872 = vunpack.c.h.b16 %v792
    %v873 = vunpack.c.l.b16 %v793
    %v874 = vunpack.c.h.b16 %v793
    %v875 = vunpack.c.l.b16 %v794
    %v876 = vunpack.c.h.b16 %v794
    %v877 = vunpack.c.l.b16 %v795
    %v878 = vunpack.c.h.b16 %v795
    %v879 = vunpack.c.l.b16 %v796
    %v880 = vunpack.c.h.b16 %v796
    %v881 = vunpack.c.l.b16 %v797
    %v882 = vunpack.c.h.b16 %v797
    %v883 = vunpack.c.l.b16 %v798
    %v884 = vunpack.c.h.b16 %v798
    %v885 = vunpack.c.l.b16 %v799
    %v886 = vunpack.c.h.b16 %v799
    %v887 = vunpack.c.l.b16 %v800
    %v888 = vunpack.c.h.b16 %v800
    %v889 = vunpack.c.l.b16 %v801
    %v890 = vunpack.c.h.b16 %v801
    %v891 = vunpack.c.l.b16 %v802
    %v892 = vunpack.c.h.b16 %v802
    %v893 = vunpack.c.l.b16 %v803
    %v894 = vunpack.c.h.b16 %v803
    %v895 = vunpack.c.l.b16 %v804
    %v896 = vunpack.c.h.b16 %v804
    %v897 = vunpack.c.l.b16 %v805
    %v898 = vunpack.c.h.b16 %v805
    %v899 = vunpack.c.l.b16 %v806
    %v900 = vunpack.c.h.b16 %v806
    %v901 = vunpack.c.l.b16 %v807
    %v902 = vunpack.c.h.b16 %v807
    %v903 = vunpack.c.l.b16 %v808
    %v904 = vunpack.c.h.b16 %v808
    %v905 = vpack.c.b16 %v845, %v841
    %v906 = vpack.c.b16 %v846, %v842
    %v907 = vpack.c.b16 %v847, %v843
    %v908 = vpack.c.b16 %v848, %v844
    %v909 = vpack.c.b16 %v853, %v849
    %v910 = vpack.c.b16 %v854, %v850
    %v911 = vpack.c.b16 %v855, %v851
    %v912 = vpack.c.b16 %v856, %v852
    %v913 = vpack.c.b16 %v861, %v857
    %v914 = vpack.c.b16 %v862, %v858
    %v915 = vpack.c.b16 %v863, %v859
    %v916 = vpack.c.b16 %v864, %v860
    %v917 = vpack.c.b16 %v869, %v865
    %v918 = vpack.c.b16 %v870, %v866
    %v919 = vpack.c.b16 %v871, %v867
    %v920 = vpack.c.b16 %v872, %v868
    %v921 = vpack.c.b16 %v877, %v873
    %v922 = vpack.c.b16 %v878, %v874
    %v923 = vpack.c.b16 %v879, %v875
    %v924 = vpack.c.b16 %v880, %v876
    %v925 = vpack.c.b16 %v885, %v881
    %v926 = vpack.c.b16 %v886, %v882
    %v927 = vpack.c.b16 %v887, %v883
    %v928 = vpack.c.b16 %v888, %v884
    %v929 = vpack.c.b16 %v893, %v889
    %v930 = vpack.c.b16 %v894, %v890
    %v931 = vpack.c.b16 %v895, %v891
    %v932 = vpack.c.b16 %v896, %v892
    %v933 = vpack.c.b16 %v901, %v897
    %v934 = vpack.c.b16 %v902, %v898
    %v935 = vpack.c.b16 %v903, %v899
    %v936 = vpack.c.b16 %v904, %v900
    %969 = vmatpush.bf16.msra.mxu0 %v933
    %970 = vmatpush.bf16.msra.mxu0 %v929
    %971 = vmatpush.bf16.msra.mxu0 %v925
    %972 = vmatpush.bf16.msra.mxu0 %v921
    %973 = vmatpush.bf16.msra.mxu0 %v917
    %974 = vmatpush.bf16.msra.mxu0 %v913
    %975 = vmatpush.bf16.msra.mxu0 %v909
    %976 = vmatpush.bf16.msra.mxu0 %v905
    %977 = vmatmul.bf16.gmra.mxu0 %v776
    %v978 = vpop.f32.mrf.mxu0
    %v979 = vadd.f32 0.0, %v978
    %v980 = vpop.f32.mrf.mxu0
    %981 = vdwg.mxu0
    %982 = vmatpush.bf16.msra.mxu0 %v934
    %983 = vmatpush.bf16.msra.mxu0 %v930
    %984 = vmatpush.bf16.msra.mxu0 %v926
    %985 = vmatpush.bf16.msra.mxu0 %v922
    %986 = vmatpush.bf16.msra.mxu0 %v918
    %987 = vmatpush.bf16.msra.mxu0 %v914
    %988 = vmatpush.bf16.msra.mxu0 %v910
    %989 = vmatpush.bf16.msra.mxu0 %v906
    %990 = vmatmul.bf16.gmra.mxu0 %v776
    %v991 = vpop.f32.mrf.mxu0
    %v992 = vadd.f32 0.0, %v991
    %v993 = vpop.f32.mrf.mxu0
    %994 = vdwg.mxu0
    %995 = vmatpush.bf16.msra.mxu0 %v935
    %996 = vmatpush.bf16.msra.mxu0 %v931
    %997 = vmatpush.bf16.msra.mxu0 %v927
    %998 = vmatpush.bf16.msra.mxu0 %v923
    %999 = vmatpush.bf16.msra.mxu0 %v919
    %1000 = vmatpush.bf16.msra.mxu0 %v915
    %1001 = vmatpush.bf16.msra.mxu0 %v911
    %1002 = vmatpush.bf16.msra.mxu0 %v907
    %1003 = vmatmul.bf16.gmra.mxu0 %v776
    %v1004 = vpop.f32.mrf.mxu0
    %v1005 = vadd.f32 0.0, %v1004
    %v1006 = vpop.f32.mrf.mxu0
    %1007 = vdwg.mxu0
    %1008 = vmatpush.bf16.msra.mxu0 %v936
    %1009 = vmatpush.bf16.msra.mxu0 %v932
    %1010 = vmatpush.bf16.msra.mxu0 %v928
    %1011 = vmatpush.bf16.msra.mxu0 %v924
    %1012 = vmatpush.bf16.msra.mxu0 %v920
    %1013 = vmatpush.bf16.msra.mxu0 %v916
    %1014 = vmatpush.bf16.msra.mxu0 %v912
    %1015 = vmatpush.bf16.msra.mxu0 %v908
    %1016 = vmatmul.bf16.gmra.mxu0 %v776
    %v1017 = vpop.f32.mrf.mxu0
    %v1018 = vadd.f32 0.0, %v1017
    %v1019 = vpop.f32.mrf.mxu0
    %1020 = vdwg.mxu0
    %v1021 = vadd.f32 %v772, %v979
    %v1022 = vadd.f32 %v773, %v992
    %v1023 = vadd.f32 %v774, %v1005
    %v1024 = vadd.f32 %v775, %v1018
    %v1025 = vxor.u32 %v1021, 2147483648
    %v1026 = vxor.u32 %v1022, 2147483648
    %v1027 = vmul.f32 %v1025, 1.442695
    %v1028 = vpow.pop %v1027
    %v1029 = vmul.f32 %v1026, 1.442695
    %v1030 = vpow.pop %v1029
    %v1031 = vadd.f32 %v1028, 1.0
    %v1032 = vadd.f32 %v1030, 1.0
    %v1033 = vrcp.pop %v1031
    %v1034 = vmul.f32 %v1031, %v1033
    %v1035 = vsub.f32 1.0, %v1034
    %v1036 = vmul.f32 %v1033, %v1035
    %v1037 = vadd.f32 %v1033, %v1036
    %vm1038 = vweird.f32 %v1031
    %vm1039 = vweird.f32 %v1033
    %vm1040 = vmor %vm1038, %vm1039
    %v1041 = vsel %vm1040, %v1033, %v1037
    %v1042 = vand.u32 2147483647, %v1031
    %vm1043 = vcmp.eq.f32.partialorder %v1042, 8.507059e+37
    %v1044 = vand.u32 %v1031, 2147483648
    %v1045 = vor.u32 1.1754944e-38, %v1044
    %v1046 = vsel %vm1043, %v1045, %v1041
    %v1047 = vmul.f32 1.0, %v1046
    %v1048 = vrcp.pop %v1032
    %v1049 = vmul.f32 %v1032, %v1048
    %v1050 = vsub.f32 1.0, %v1049
    %v1051 = vmul.f32 %v1048, %v1050
    %v1052 = vadd.f32 %v1048, %v1051
    %vm1053 = vweird.f32 %v1032
    %vm1054 = vweird.f32 %v1048
    %vm1055 = vmor %vm1053, %vm1054
    %v1056 = vsel %vm1055, %v1048, %v1052
    %v1057 = vand.u32 2147483647, %v1032
    %vm1058 = vcmp.eq.f32.partialorder %v1057, 8.507059e+37
    %v1059 = vand.u32 %v1032, 2147483648
    %v1060 = vor.u32 1.1754944e-38, %v1059
    %v1061 = vsel %vm1058, %v1060, %v1056
    %v1062 = vmul.f32 1.0, %v1061
    %v1063 = vtanh.pop %v1023
    %v1064 = vxor.u32 %v1024, 2147483648
    %v1065 = vmul.f32 %v1064, 1.442695
    %v1066 = vpow.pop %v1065
    %v1067 = vadd.f32 %v1066, 1.0
    %v1068 = vrcp.pop %v1067
    %v1069 = vmul.f32 %v1067, %v1068
    %v1070 = vsub.f32 1.0, %v1069
    %v1071 = vmul.f32 %v1068, %v1070
    %v1072 = vadd.f32 %v1068, %v1071
    %vm1073 = vweird.f32 %v1067
    %vm1074 = vweird.f32 %v1068
    %vm1075 = vmor %vm1073, %vm1074
    %v1076 = vsel %vm1075, %v1068, %v1072
    %v1077 = vand.u32 2147483647, %v1067
    %vm1078 = vcmp.eq.f32.partialorder %v1077, 8.507059e+37
    %v1079 = vand.u32 %v1067, 2147483648
    %v1080 = vor.u32 1.1754944e-38, %v1079
    %v1081 = vsel %vm1078, %v1080, %v1076
    %v1082 = vmul.f32 1.0, %v1081
    %v1083 = vmul.f32 %v1062, %v763
    %v1084 = vmul.f32 %v1047, %v1063
    %v1085 = vadd.f32 %v1083, %v1084
    %v1086 = vtanh.pop %v1085
    %v1087 = vmul.f32 %v1082, %v1086
    %v1088 = vmax.f32 %v1087, 0.0
    %v1089 = vpack.c.bf16 %v1088, %v1088
    %s1090 = scalar_lea.vmem [#allocation5], 4
    %1091 = vst [vmem:[%s1090] sm:$0xf] %v1089
    %s1092 = smul.u32 2, 4
    %s1093 = smul.addr %s1092, 8
    %s1094 = scalar_lea.vmem [#allocation2], %s1093
    %v1095 = vld [vmem:[%s1094] sm:$0xff]
    %v1096 = vld [vmem:[%s1094 + $0x8] sm:$0xff]
    %v1097 = vld [vmem:[%s1094 + $0x10] sm:$0xff]
    %v1098 = vld [vmem:[%s1094 + $0x18] sm:$0xff]
    %v1099 = vpack.c.bf16 %v1087, %v1087
    %v1100 = vld [vmem:[#allocation13] sm:$0xff]
    %v1101 = vld [vmem:[#allocation13 + $0x8] sm:$0xff]
    %v1102 = vld [vmem:[#allocation13 + $0x10] sm:$0xff]
    %v1103 = vld [vmem:[#allocation13 + $0x18] sm:$0xff]
    %v1104 = vld [vmem:[#allocation13 + $0x20] sm:$0xff]
    %v1105 = vld [vmem:[#allocation13 + $0x28] sm:$0xff]
    %v1106 = vld [vmem:[#allocation13 + $0x30] sm:$0xff]
    %v1107 = vld [vmem:[#allocation13 + $0x38] sm:$0xff]
    %v1108 = vld [vmem:[#allocation13 + $0x40] sm:$0xff]
    %v1109 = vld [vmem:[#allocation13 + $0x48] sm:$0xff]
    %v1110 = vld [vmem:[#allocation13 + $0x50] sm:$0xff]
    %v1111 = vld [vmem:[#allocation13 + $0x58] sm:$0xff]
    %v1112 = vld [vmem:[#allocation13 + $0x60] sm:$0xff]
    %v1113 = vld [vmem:[#allocation13 + $0x68] sm:$0xff]
    %v1114 = vld [vmem:[#allocation13 + $0x70] sm:$0xff]
    %v1115 = vld [vmem:[#allocation13 + $0x78] sm:$0xff]
    %v1116 = vld [vmem:[#allocation13 + $0x80] sm:$0xff]
    %v1117 = vld [vmem:[#allocation13 + $0x88] sm:$0xff]
    %v1118 = vld [vmem:[#allocation13 + $0x90] sm:$0xff]
    %v1119 = vld [vmem:[#allocation13 + $0x98] sm:$0xff]
    %v1120 = vld [vmem:[#allocation13 + $0xa0] sm:$0xff]
    %v1121 = vld [vmem:[#allocation13 + $0xa8] sm:$0xff]
    %v1122 = vld [vmem:[#allocation13 + $0xb0] sm:$0xff]
    %v1123 = vld [vmem:[#allocation13 + $0xb8] sm:$0xff]
    %v1124 = vld [vmem:[#allocation13 + $0xc0] sm:$0xff]
    %v1125 = vld [vmem:[#allocation13 + $0xc8] sm:$0xff]
    %v1126 = vld [vmem:[#allocation13 + $0xd0] sm:$0xff]
    %v1127 = vld [vmem:[#allocation13 + $0xd8] sm:$0xff]
    %v1128 = vld [vmem:[#allocation13 + $0xe0] sm:$0xff]
    %v1129 = vld [vmem:[#allocation13 + $0xe8] sm:$0xff]
    %v1130 = vld [vmem:[#allocation13 + $0xf0] sm:$0xff]
    %v1131 = vld [vmem:[#allocation13 + $0xf8] sm:$0xff]
    %v1164 = vunpack.c.l.b16 %v1100
    %v1165 = vunpack.c.h.b16 %v1100
    %v1166 = vunpack.c.l.b16 %v1101
    %v1167 = vunpack.c.h.b16 %v1101
    %v1168 = vunpack.c.l.b16 %v1102
    %v1169 = vunpack.c.h.b16 %v1102
    %v1170 = vunpack.c.l.b16 %v1103
    %v1171 = vunpack.c.h.b16 %v1103
    %v1172 = vunpack.c.l.b16 %v1104
    %v1173 = vunpack.c.h.b16 %v1104
    %v1174 = vunpack.c.l.b16 %v1105
    %v1175 = vunpack.c.h.b16 %v1105
    %v1176 = vunpack.c.l.b16 %v1106
    %v1177 = vunpack.c.h.b16 %v1106
    %v1178 = vunpack.c.l.b16 %v1107
    %v1179 = vunpack.c.h.b16 %v1107
    %v1180 = vunpack.c.l.b16 %v1108
    %v1181 = vunpack.c.h.b16 %v1108
    %v1182 = vunpack.c.l.b16 %v1109
    %v1183 = vunpack.c.h.b16 %v1109
    %v1184 = vunpack.c.l.b16 %v1110
    %v1185 = vunpack.c.h.b16 %v1110
    %v1186 = vunpack.c.l.b16 %v1111
    %v1187 = vunpack.c.h.b16 %v1111
    %v1188 = vunpack.c.l.b16 %v1112
    %v1189 = vunpack.c.h.b16 %v1112
    %v1190 = vunpack.c.l.b16 %v1113
    %v1191 = vunpack.c.h.b16 %v1113
    %v1192 = vunpack.c.l.b16 %v1114
    %v1193 = vunpack.c.h.b16 %v1114
    %v1194 = vunpack.c.l.b16 %v1115
    %v1195 = vunpack.c.h.b16 %v1115
    %v1196 = vunpack.c.l.b16 %v1116
    %v1197 = vunpack.c.h.b16 %v1116
    %v1198 = vunpack.c.l.b16 %v1117
    %v1199 = vunpack.c.h.b16 %v1117
    %v1200 = vunpack.c.l.b16 %v1118
    %v1201 = vunpack.c.h.b16 %v1118
    %v1202 = vunpack.c.l.b16 %v1119
    %v1203 = vunpack.c.h.b16 %v1119
    %v1204 = vunpack.c.l.b16 %v1120
    %v1205 = vunpack.c.h.b16 %v1120
    %v1206 = vunpack.c.l.b16 %v1121
    %v1207 = vunpack.c.h.b16 %v1121
    %v1208 = vunpack.c.l.b16 %v1122
    %v1209 = vunpack.c.h.b16 %v1122
    %v1210 = vunpack.c.l.b16 %v1123
    %v1211 = vunpack.c.h.b16 %v1123
    %v1212 = vunpack.c.l.b16 %v1124
    %v1213 = vunpack.c.h.b16 %v1124
    %v1214 = vunpack.c.l.b16 %v1125
    %v1215 = vunpack.c.h.b16 %v1125
    %v1216 = vunpack.c.l.b16 %v1126
    %v1217 = vunpack.c.h.b16 %v1126
    %v1218 = vunpack.c.l.b16 %v1127
    %v1219 = vunpack.c.h.b16 %v1127
    %v1220 = vunpack.c.l.b16 %v1128
    %v1221 = vunpack.c.h.b16 %v1128
    %v1222 = vunpack.c.l.b16 %v1129
    %v1223 = vunpack.c.h.b16 %v1129
    %v1224 = vunpack.c.l.b16 %v1130
    %v1225 = vunpack.c.h.b16 %v1130
    %v1226 = vunpack.c.l.b16 %v1131
    %v1227 = vunpack.c.h.b16 %v1131
    %v1228 = vpack.c.b16 %v1168, %v1164
    %v1229 = vpack.c.b16 %v1169, %v1165
    %v1230 = vpack.c.b16 %v1170, %v1166
    %v1231 = vpack.c.b16 %v1171, %v1167
    %v1232 = vpack.c.b16 %v1176, %v1172
    %v1233 = vpack.c.b16 %v1177, %v1173
    %v1234 = vpack.c.b16 %v1178, %v1174
    %v1235 = vpack.c.b16 %v1179, %v1175
    %v1236 = vpack.c.b16 %v1184, %v1180
    %v1237 = vpack.c.b16 %v1185, %v1181
    %v1238 = vpack.c.b16 %v1186, %v1182
    %v1239 = vpack.c.b16 %v1187, %v1183
    %v1240 = vpack.c.b16 %v1192, %v1188
    %v1241 = vpack.c.b16 %v1193, %v1189
    %v1242 = vpack.c.b16 %v1194, %v1190
    %v1243 = vpack.c.b16 %v1195, %v1191
    %v1244 = vpack.c.b16 %v1200, %v1196
    %v1245 = vpack.c.b16 %v1201, %v1197
    %v1246 = vpack.c.b16 %v1202, %v1198
    %v1247 = vpack.c.b16 %v1203, %v1199
    %v1248 = vpack.c.b16 %v1208, %v1204
    %v1249 = vpack.c.b16 %v1209, %v1205
    %v1250 = vpack.c.b16 %v1210, %v1206
    %v1251 = vpack.c.b16 %v1211, %v1207
    %v1252 = vpack.c.b16 %v1216, %v1212
    %v1253 = vpack.c.b16 %v1217, %v1213
    %v1254 = vpack.c.b16 %v1218, %v1214
    %v1255 = vpack.c.b16 %v1219, %v1215
    %v1256 = vpack.c.b16 %v1224, %v1220
    %v1257 = vpack.c.b16 %v1225, %v1221
    %v1258 = vpack.c.b16 %v1226, %v1222
    %v1259 = vpack.c.b16 %v1227, %v1223
    %1292 = vmatpush.bf16.msra.mxu0 %v1256
    %1293 = vmatpush.bf16.msra.mxu0 %v1252
    %1294 = vmatpush.bf16.msra.mxu0 %v1248
    %1295 = vmatpush.bf16.msra.mxu0 %v1244
    %1296 = vmatpush.bf16.msra.mxu0 %v1240
    %1297 = vmatpush.bf16.msra.mxu0 %v1236
    %1298 = vmatpush.bf16.msra.mxu0 %v1232
    %1299 = vmatpush.bf16.msra.mxu0 %v1228
    %1300 = vmatmul.bf16.gmra.mxu0 %v1099
    %v1301 = vpop.f32.mrf.mxu0
    %v1302 = vadd.f32 0.0, %v1301
    %v1303 = vpop.f32.mrf.mxu0
    %1304 = vdwg.mxu0
    %1305 = vmatpush.bf16.msra.mxu0 %v1257
    %1306 = vmatpush.bf16.msra.mxu0 %v1253
    %1307 = vmatpush.bf16.msra.mxu0 %v1249
    %1308 = vmatpush.bf16.msra.mxu0 %v1245
    %1309 = vmatpush.bf16.msra.mxu0 %v1241
    %1310 = vmatpush.bf16.msra.mxu0 %v1237
    %1311 = vmatpush.bf16.msra.mxu0 %v1233
    %1312 = vmatpush.bf16.msra.mxu0 %v1229
    %1313 = vmatmul.bf16.gmra.mxu0 %v1099
    %v1314 = vpop.f32.mrf.mxu0
    %v1315 = vadd.f32 0.0, %v1314
    %v1316 = vpop.f32.mrf.mxu0
    %1317 = vdwg.mxu0
    %1318 = vmatpush.bf16.msra.mxu0 %v1258
    %1319 = vmatpush.bf16.msra.mxu0 %v1254
    %1320 = vmatpush.bf16.msra.mxu0 %v1250
    %1321 = vmatpush.bf16.msra.mxu0 %v1246
    %1322 = vmatpush.bf16.msra.mxu0 %v1242
    %1323 = vmatpush.bf16.msra.mxu0 %v1238
    %1324 = vmatpush.bf16.msra.mxu0 %v1234
    %1325 = vmatpush.bf16.msra.mxu0 %v1230
    %1326 = vmatmul.bf16.gmra.mxu0 %v1099
    %v1327 = vpop.f32.mrf.mxu0
    %v1328 = vadd.f32 0.0, %v1327
    %v1329 = vpop.f32.mrf.mxu0
    %1330 = vdwg.mxu0
    %1331 = vmatpush.bf16.msra.mxu0 %v1259
    %1332 = vmatpush.bf16.msra.mxu0 %v1255
    %1333 = vmatpush.bf16.msra.mxu0 %v1251
    %1334 = vmatpush.bf16.msra.mxu0 %v1247
    %1335 = vmatpush.bf16.msra.mxu0 %v1243
    %1336 = vmatpush.bf16.msra.mxu0 %v1239
    %1337 = vmatpush.bf16.msra.mxu0 %v1235
    %1338 = vmatpush.bf16.msra.mxu0 %v1231
    %1339 = vmatmul.bf16.gmra.mxu0 %v1099
    %v1340 = vpop.f32.mrf.mxu0
    %v1341 = vadd.f32 0.0, %v1340
    %v1342 = vpop.f32.mrf.mxu0
    %1343 = vdwg.mxu0
    %v1344 = vadd.f32 %v1095, %v1302
    %v1345 = vadd.f32 %v1096, %v1315
    %v1346 = vadd.f32 %v1097, %v1328
    %v1347 = vadd.f32 %v1098, %v1341
    %v1348 = vxor.u32 %v1344, 2147483648
    %v1349 = vxor.u32 %v1345, 2147483648
    %v1350 = vmul.f32 %v1348, 1.442695
    %v1351 = vpow.pop %v1350
    %v1352 = vmul.f32 %v1349, 1.442695
    %v1353 = vpow.pop %v1352
    %v1354 = vadd.f32 %v1351, 1.0
    %v1355 = vadd.f32 %v1353, 1.0
    %v1356 = vrcp.pop %v1354
    %v1357 = vmul.f32 %v1354, %v1356
    %v1358 = vsub.f32 1.0, %v1357
    %v1359 = vmul.f32 %v1356, %v1358
    %v1360 = vadd.f32 %v1356, %v1359
    %vm1361 = vweird.f32 %v1354
    %vm1362 = vweird.f32 %v1356
    %vm1363 = vmor %vm1361, %vm1362
    %v1364 = vsel %vm1363, %v1356, %v1360
    %v1365 = vand.u32 2147483647, %v1354
    %vm1366 = vcmp.eq.f32.partialorder %v1365, 8.507059e+37
    %v1367 = vand.u32 %v1354, 2147483648
    %v1368 = vor.u32 1.1754944e-38, %v1367
    %v1369 = vsel %vm1366, %v1368, %v1364
    %v1370 = vmul.f32 1.0, %v1369
    %v1371 = vrcp.pop %v1355
    %v1372 = vmul.f32 %v1355, %v1371
    %v1373 = vsub.f32 1.0, %v1372
    %v1374 = vmul.f32 %v1371, %v1373
    %v1375 = vadd.f32 %v1371, %v1374
    %vm1376 = vweird.f32 %v1355
    %vm1377 = vweird.f32 %v1371
    %vm1378 = vmor %vm1376, %vm1377
    %v1379 = vsel %vm1378, %v1371, %v1375
    %v1380 = vand.u32 2147483647, %v1355
    %vm1381 = vcmp.eq.f32.partialorder %v1380, 8.507059e+37
    %v1382 = vand.u32 %v1355, 2147483648
    %v1383 = vor.u32 1.1754944e-38, %v1382
    %v1384 = vsel %vm1381, %v1383, %v1379
    %v1385 = vmul.f32 1.0, %v1384
    %v1386 = vtanh.pop %v1346
    %v1387 = vxor.u32 %v1347, 2147483648
    %v1388 = vmul.f32 %v1387, 1.442695
    %v1389 = vpow.pop %v1388
    %v1390 = vadd.f32 %v1389, 1.0
    %v1391 = vrcp.pop %v1390
    %v1392 = vmul.f32 %v1390, %v1391
    %v1393 = vsub.f32 1.0, %v1392
    %v1394 = vmul.f32 %v1391, %v1393
    %v1395 = vadd.f32 %v1391, %v1394
    %vm1396 = vweird.f32 %v1390
    %vm1397 = vweird.f32 %v1391
    %vm1398 = vmor %vm1396, %vm1397
    %v1399 = vsel %vm1398, %v1391, %v1395
    %v1400 = vand.u32 2147483647, %v1390
    %vm1401 = vcmp.eq.f32.partialorder %v1400, 8.507059e+37
    %v1402 = vand.u32 %v1390, 2147483648
    %v1403 = vor.u32 1.1754944e-38, %v1402
    %v1404 = vsel %vm1401, %v1403, %v1399
    %v1405 = vmul.f32 1.0, %v1404
    %v1406 = vmul.f32 %v1385, %v1085
    %v1407 = vmul.f32 %v1370, %v1386
    %v1408 = vadd.f32 %v1406, %v1407
    %v1409 = vtanh.pop %v1408
    %v1410 = vmul.f32 %v1405, %v1409
    %v1411 = vmax.f32 %v1410, 0.0
    %v1412 = vpack.c.bf16 %v1411, %v1411
    %s1413 = scalar_lea.vmem [#allocation5], 8
    %1414 = vst [vmem:[%s1413] sm:$0xf] %v1412
    %s1415 = smul.u32 3, 4
    %s1416 = smul.addr %s1415, 8
    %s1417 = scalar_lea.vmem [#allocation2], %s1416
    %v1418 = vld [vmem:[%s1417] sm:$0xff]
    %v1419 = vld [vmem:[%s1417 + $0x8] sm:$0xff]
    %v1420 = vld [vmem:[%s1417 + $0x10] sm:$0xff]
    %v1421 = vld [vmem:[%s1417 + $0x18] sm:$0xff]
    %v1422 = vpack.c.bf16 %v1410, %v1410
    %v1423 = vld [vmem:[#allocation13] sm:$0xff]
    %v1424 = vld [vmem:[#allocation13 + $0x8] sm:$0xff]
    %v1425 = vld [vmem:[#allocation13 + $0x10] sm:$0xff]
    %v1426 = vld [vmem:[#allocation13 + $0x18] sm:$0xff]
    %v1427 = vld [vmem:[#allocation13 + $0x20] sm:$0xff]
    %v1428 = vld [vmem:[#allocation13 + $0x28] sm:$0xff]
    %v1429 = vld [vmem:[#allocation13 + $0x30] sm:$0xff]
    %v1430 = vld [vmem:[#allocation13 + $0x38] sm:$0xff]
    %v1431 = vld [vmem:[#allocation13 + $0x40] sm:$0xff]
    %v1432 = vld [vmem:[#allocation13 + $0x48] sm:$0xff]
    %v1433 = vld [vmem:[#allocation13 + $0x50] sm:$0xff]
    %v1434 = vld [vmem:[#allocation13 + $0x58] sm:$0xff]
    %v1435 = vld [vmem:[#allocation13 + $0x60] sm:$0xff]
    %v1436 = vld [vmem:[#allocation13 + $0x68] sm:$0xff]
    %v1437 = vld [vmem:[#allocation13 + $0x70] sm:$0xff]
    %v1438 = vld [vmem:[#allocation13 + $0x78] sm:$0xff]
    %v1439 = vld [vmem:[#allocation13 + $0x80] sm:$0xff]
    %v1440 = vld [vmem:[#allocation13 + $0x88] sm:$0xff]
    %v1441 = vld [vmem:[#allocation13 + $0x90] sm:$0xff]
    %v1442 = vld [vmem:[#allocation13 + $0x98] sm:$0xff]
    %v1443 = vld [vmem:[#allocation13 + $0xa0] sm:$0xff]
    %v1444 = vld [vmem:[#allocation13 + $0xa8] sm:$0xff]
    %v1445 = vld [vmem:[#allocation13 + $0xb0] sm:$0xff]
    %v1446 = vld [vmem:[#allocation13 + $0xb8] sm:$0xff]
    %v1447 = vld [vmem:[#allocation13 + $0xc0] sm:$0xff]
    %v1448 = vld [vmem:[#allocation13 + $0xc8] sm:$0xff]
    %v1449 = vld [vmem:[#allocation13 + $0xd0] sm:$0xff]
    %v1450 = vld [vmem:[#allocation13 + $0xd8] sm:$0xff]
    %v1451 = vld [vmem:[#allocation13 + $0xe0] sm:$0xff]
    %v1452 = vld [vmem:[#allocation13 + $0xe8] sm:$0xff]
    %v1453 = vld [vmem:[#allocation13 + $0xf0] sm:$0xff]
    %v1454 = vld [vmem:[#allocation13 + $0xf8] sm:$0xff]
    %v1487 = vunpack.c.l.b16 %v1423
    %v1488 = vunpack.c.h.b16 %v1423
    %v1489 = vunpack.c.l.b16 %v1424
    %v1490 = vunpack.c.h.b16 %v1424
    %v1491 = vunpack.c.l.b16 %v1425
    %v1492 = vunpack.c.h.b16 %v1425
    %v1493 = vunpack.c.l.b16 %v1426
    %v1494 = vunpack.c.h.b16 %v1426
    %v1495 = vunpack.c.l.b16 %v1427
    %v1496 = vunpack.c.h.b16 %v1427
    %v1497 = vunpack.c.l.b16 %v1428
    %v1498 = vunpack.c.h.b16 %v1428
    %v1499 = vunpack.c.l.b16 %v1429
    %v1500 = vunpack.c.h.b16 %v1429
    %v1501 = vunpack.c.l.b16 %v1430
    %v1502 = vunpack.c.h.b16 %v1430
    %v1503 = vunpack.c.l.b16 %v1431
    %v1504 = vunpack.c.h.b16 %v1431
    %v1505 = vunpack.c.l.b16 %v1432
    %v1506 = vunpack.c.h.b16 %v1432
    %v1507 = vunpack.c.l.b16 %v1433
    %v1508 = vunpack.c.h.b16 %v1433
    %v1509 = vunpack.c.l.b16 %v1434
    %v1510 = vunpack.c.h.b16 %v1434
    %v1511 = vunpack.c.l.b16 %v1435
    %v1512 = vunpack.c.h.b16 %v1435
    %v1513 = vunpack.c.l.b16 %v1436
    %v1514 = vunpack.c.h.b16 %v1436
    %v1515 = vunpack.c.l.b16 %v1437
    %v1516 = vunpack.c.h.b16 %v1437
    %v1517 = vunpack.c.l.b16 %v1438
    %v1518 = vunpack.c.h.b16 %v1438
    %v1519 = vunpack.c.l.b16 %v1439
    %v1520 = vunpack.c.h.b16 %v1439
    %v1521 = vunpack.c.l.b16 %v1440
    %v1522 = vunpack.c.h.b16 %v1440
    %v1523 = vunpack.c.l.b16 %v1441
    %v1524 = vunpack.c.h.b16 %v1441
    %v1525 = vunpack.c.l.b16 %v1442
    %v1526 = vunpack.c.h.b16 %v1442
    %v1527 = vunpack.c.l.b16 %v1443
    %v1528 = vunpack.c.h.b16 %v1443
    %v1529 = vunpack.c.l.b16 %v1444
    %v1530 = vunpack.c.h.b16 %v1444
    %v1531 = vunpack.c.l.b16 %v1445
    %v1532 = vunpack.c.h.b16 %v1445
    %v1533 = vunpack.c.l.b16 %v1446
    %v1534 = vunpack.c.h.b16 %v1446
    %v1535 = vunpack.c.l.b16 %v1447
    %v1536 = vunpack.c.h.b16 %v1447
    %v1537 = vunpack.c.l.b16 %v1448
    %v1538 = vunpack.c.h.b16 %v1448
    %v1539 = vunpack.c.l.b16 %v1449
    %v1540 = vunpack.c.h.b16 %v1449
    %v1541 = vunpack.c.l.b16 %v1450
    %v1542 = vunpack.c.h.b16 %v1450
    %v1543 = vunpack.c.l.b16 %v1451
    %v1544 = vunpack.c.h.b16 %v1451
    %v1545 = vunpack.c.l.b16 %v1452
    %v1546 = vunpack.c.h.b16 %v1452
    %v1547 = vunpack.c.l.b16 %v1453
    %v1548 = vunpack.c.h.b16 %v1453
    %v1549 = vunpack.c.l.b16 %v1454
    %v1550 = vunpack.c.h.b16 %v1454
    %v1551 = vpack.c.b16 %v1491, %v1487
    %v1552 = vpack.c.b16 %v1492, %v1488
    %v1553 = vpack.c.b16 %v1493, %v1489
    %v1554 = vpack.c.b16 %v1494, %v1490
    %v1555 = vpack.c.b16 %v1499, %v1495
    %v1556 = vpack.c.b16 %v1500, %v1496
    %v1557 = vpack.c.b16 %v1501, %v1497
    %v1558 = vpack.c.b16 %v1502, %v1498
    %v1559 = vpack.c.b16 %v1507, %v1503
    %v1560 = vpack.c.b16 %v1508, %v1504
    %v1561 = vpack.c.b16 %v1509, %v1505
    %v1562 = vpack.c.b16 %v1510, %v1506
    %v1563 = vpack.c.b16 %v1515, %v1511
    %v1564 = vpack.c.b16 %v1516, %v1512
    %v1565 = vpack.c.b16 %v1517, %v1513
    %v1566 = vpack.c.b16 %v1518, %v1514
    %v1567 = vpack.c.b16 %v1523, %v1519
    %v1568 = vpack.c.b16 %v1524, %v1520
    %v1569 = vpack.c.b16 %v1525, %v1521
    %v1570 = vpack.c.b16 %v1526, %v1522
    %v1571 = vpack.c.b16 %v1531, %v1527
    %v1572 = vpack.c.b16 %v1532, %v1528
    %v1573 = vpack.c.b16 %v1533, %v1529
    %v1574 = vpack.c.b16 %v1534, %v1530
    %v1575 = vpack.c.b16 %v1539, %v1535
    %v1576 = vpack.c.b16 %v1540, %v1536
    %v1577 = vpack.c.b16 %v1541, %v1537
    %v1578 = vpack.c.b16 %v1542, %v1538
    %v1579 = vpack.c.b16 %v1547, %v1543
    %v1580 = vpack.c.b16 %v1548, %v1544
    %v1581 = vpack.c.b16 %v1549, %v1545
    %v1582 = vpack.c.b16 %v1550, %v1546
    %1615 = vmatpush.bf16.msra.mxu0 %v1579
    %1616 = vmatpush.bf16.msra.mxu0 %v1575
    %1617 = vmatpush.bf16.msra.mxu0 %v1571
    %1618 = vmatpush.bf16.msra.mxu0 %v1567
    %1619 = vmatpush.bf16.msra.mxu0 %v1563
    %1620 = vmatpush.bf16.msra.mxu0 %v1559
    %1621 = vmatpush.bf16.msra.mxu0 %v1555
    %1622 = vmatpush.bf16.msra.mxu0 %v1551
    %1623 = vmatmul.bf16.gmra.mxu0 %v1422
    %v1624 = vpop.f32.mrf.mxu0
    %v1625 = vadd.f32 0.0, %v1624
    %v1626 = vpop.f32.mrf.mxu0
    %1627 = vdwg.mxu0
    %1628 = vmatpush.bf16.msra.mxu0 %v1580
    %1629 = vmatpush.bf16.msra.mxu0 %v1576
    %1630 = vmatpush.bf16.msra.mxu0 %v1572
    %1631 = vmatpush.bf16.msra.mxu0 %v1568
    %1632 = vmatpush.bf16.msra.mxu0 %v1564
    %1633 = vmatpush.bf16.msra.mxu0 %v1560
    %1634 = vmatpush.bf16.msra.mxu0 %v1556
    %1635 = vmatpush.bf16.msra.mxu0 %v1552
    %1636 = vmatmul.bf16.gmra.mxu0 %v1422
    %v1637 = vpop.f32.mrf.mxu0
    %v1638 = vadd.f32 0.0, %v1637
    %v1639 = vpop.f32.mrf.mxu0
    %1640 = vdwg.mxu0
    %1641 = vmatpush.bf16.msra.mxu0 %v1581
    %1642 = vmatpush.bf16.msra.mxu0 %v1577
    %1643 = vmatpush.bf16.msra.mxu0 %v1573
    %1644 = vmatpush.bf16.msra.mxu0 %v1569
    %1645 = vmatpush.bf16.msra.mxu0 %v1565
    %1646 = vmatpush.bf16.msra.mxu0 %v1561
    %1647 = vmatpush.bf16.msra.mxu0 %v1557
    %1648 = vmatpush.bf16.msra.mxu0 %v1553
    %1649 = vmatmul.bf16.gmra.mxu0 %v1422
    %v1650 = vpop.f32.mrf.mxu0
    %v1651 = vadd.f32 0.0, %v1650
    %v1652 = vpop.f32.mrf.mxu0
    %1653 = vdwg.mxu0
    %1654 = vmatpush.bf16.msra.mxu0 %v1582
    %1655 = vmatpush.bf16.msra.mxu0 %v1578
    %1656 = vmatpush.bf16.msra.mxu0 %v1574
    %1657 = vmatpush.bf16.msra.mxu0 %v1570
    %1658 = vmatpush.bf16.msra.mxu0 %v1566
    %1659 = vmatpush.bf16.msra.mxu0 %v1562
    %1660 = vmatpush.bf16.msra.mxu0 %v1558
    %1661 = vmatpush.bf16.msra.mxu0 %v1554
    %1662 = vmatmul.bf16.gmra.mxu0 %v1422
    %v1663 = vpop.f32.mrf.mxu0
    %v1664 = vadd.f32 0.0, %v1663
    %v1665 = vpop.f32.mrf.mxu0
    %1666 = vdwg.mxu0
    %v1667 = vadd.f32 %v1418, %v1625
    %v1668 = vadd.f32 %v1419, %v1638
    %v1669 = vadd.f32 %v1420, %v1651
    %v1670 = vadd.f32 %v1421, %v1664
    %v1671 = vxor.u32 %v1667, 2147483648
    %v1672 = vxor.u32 %v1668, 2147483648
    %v1673 = vmul.f32 %v1671, 1.442695
    %v1674 = vpow.pop %v1673
    %v1675 = vmul.f32 %v1672, 1.442695
    %v1676 = vpow.pop %v1675
    %v1677 = vadd.f32 %v1674, 1.0
    %v1678 = vadd.f32 %v1676, 1.0
    %v1679 = vrcp.pop %v1677
    %v1680 = vmul.f32 %v1677, %v1679
    %v1681 = vsub.f32 1.0, %v1680
    %v1682 = vmul.f32 %v1679, %v1681
    %v1683 = vadd.f32 %v1679, %v1682
    %vm1684 = vweird.f32 %v1677
    %vm1685 = vweird.f32 %v1679
    %vm1686 = vmor %vm1684, %vm1685
    %v1687 = vsel %vm1686, %v1679, %v1683
    %v1688 = vand.u32 2147483647, %v1677
    %vm1689 = vcmp.eq.f32.partialorder %v1688, 8.507059e+37
    %v1690 = vand.u32 %v1677, 2147483648
    %v1691 = vor.u32 1.1754944e-38, %v1690
    %v1692 = vsel %vm1689, %v1691, %v1687
    %v1693 = vmul.f32 1.0, %v1692
    %v1694 = vrcp.pop %v1678
    %v1695 = vmul.f32 %v1678, %v1694
    %v1696 = vsub.f32 1.0, %v1695
    %v1697 = vmul.f32 %v1694, %v1696
    %v1698 = vadd.f32 %v1694, %v1697
    %vm1699 = vweird.f32 %v1678
    %vm1700 = vweird.f32 %v1694
    %vm1701 = vmor %vm1699, %vm1700
    %v1702 = vsel %vm1701, %v1694, %v1698
    %v1703 = vand.u32 2147483647, %v1678
    %vm1704 = vcmp.eq.f32.partialorder %v1703, 8.507059e+37
    %v1705 = vand.u32 %v1678, 2147483648
    %v1706 = vor.u32 1.1754944e-38, %v1705
    %v1707 = vsel %vm1704, %v1706, %v1702
    %v1708 = vmul.f32 1.0, %v1707
    %v1709 = vtanh.pop %v1669
    %v1710 = vxor.u32 %v1670, 2147483648
    %v1711 = vmul.f32 %v1710, 1.442695
    %v1712 = vpow.pop %v1711
    %v1713 = vadd.f32 %v1712, 1.0
    %v1714 = vrcp.pop %v1713
    %v1715 = vmul.f32 %v1713, %v1714
    %v1716 = vsub.f32 1.0, %v1715
    %v1717 = vmul.f32 %v1714, %v1716
    %v1718 = vadd.f32 %v1714, %v1717
    %vm1719 = vweird.f32 %v1713
    %vm1720 = vweird.f32 %v1714
    %vm1721 = vmor %vm1719, %vm1720
    %v1722 = vsel %vm1721, %v1714, %v1718
    %v1723 = vand.u32 2147483647, %v1713
    %vm1724 = vcmp.eq.f32.partialorder %v1723, 8.507059e+37
    %v1725 = vand.u32 %v1713, 2147483648
    %v1726 = vor.u32 1.1754944e-38, %v1725
    %v1727 = vsel %vm1724, %v1726, %v1722
    %v1728 = vmul.f32 1.0, %v1727
    %v1729 = vmul.f32 %v1708, %v1408
    %v1730 = vmul.f32 %v1693, %v1709
    %v1731 = vadd.f32 %v1729, %v1730
    %v1732 = vtanh.pop %v1731
    %v1733 = vmul.f32 %v1728, %v1732
    %v1734 = vmax.f32 %v1733, 0.0
    %v1735 = vpack.c.bf16 %v1734, %v1734
    %s1736 = scalar_lea.vmem [#allocation5], 12
    %1737 = vst [vmem:[%s1736] sm:$0xf] %v1735
    %s1738 = smul.u32 4, 4
    %s1739 = smul.addr %s1738, 8
    %s1740 = scalar_lea.vmem [#allocation2], %s1739
    %v1741 = vld [vmem:[%s1740] sm:$0xff]
    %v1742 = vld [vmem:[%s1740 + $0x8] sm:$0xff]
    %v1743 = vld [vmem:[%s1740 + $0x10] sm:$0xff]
    %v1744 = vld [vmem:[%s1740 + $0x18] sm:$0xff]
    %v1745 = vpack.c.bf16 %v1733, %v1733
    %v1746 = vld [vmem:[#allocation13] sm:$0xff]
    %v1747 = vld [vmem:[#allocation13 + $0x8] sm:$0xff]
    %v1748 = vld [vmem:[#allocation13 + $0x10] sm:$0xff]
    %v1749 = vld [vmem:[#allocation13 + $0x18] sm:$0xff]
    %v1750 = vld [vmem:[#allocation13 + $0x20] sm:$0xff]
    %v1751 = vld [vmem:[#allocation13 + $0x28] sm:$0xff]
    %v1752 = vld [vmem:[#allocation13 + $0x30] sm:$0xff]
    %v1753 = vld [vmem:[#allocation13 + $0x38] sm:$0xff]
    %v1754 = vld [vmem:[#allocation13 + $0x40] sm:$0xff]
    %v1755 = vld [vmem:[#allocation13 + $0x48] sm:$0xff]
    %v1756 = vld [vmem:[#allocation13 + $0x50] sm:$0xff]
    %v1757 = vld [vmem:[#allocation13 + $0x58] sm:$0xff]
    %v1758 = vld [vmem:[#allocation13 + $0x60] sm:$0xff]
    %v1759 = vld [vmem:[#allocation13 + $0x68] sm:$0xff]
    %v1760 = vld [vmem:[#allocation13 + $0x70] sm:$0xff]
    %v1761 = vld [vmem:[#allocation13 + $0x78] sm:$0xff]
    %v1762 = vld [vmem:[#allocation13 + $0x80] sm:$0xff]
    %v1763 = vld [vmem:[#allocation13 + $0x88] sm:$0xff]
    %v1764 = vld [vmem:[#allocation13 + $0x90] sm:$0xff]
    %v1765 = vld [vmem:[#allocation13 + $0x98] sm:$0xff]
    %v1766 = vld [vmem:[#allocation13 + $0xa0] sm:$0xff]
    %v1767 = vld [vmem:[#allocation13 + $0xa8] sm:$0xff]
    %v1768 = vld [vmem:[#allocation13 + $0xb0] sm:$0xff]
    %v1769 = vld [vmem:[#allocation13 + $0xb8] sm:$0xff]
    %v1770 = vld [vmem:[#allocation13 + $0xc0] sm:$0xff]
    %v1771 = vld [vmem:[#allocation13 + $0xc8] sm:$0xff]
    %v1772 = vld [vmem:[#allocation13 + $0xd0] sm:$0xff]
    %v1773 = vld [vmem:[#allocation13 + $0xd8] sm:$0xff]
    %v1774 = vld [vmem:[#allocation13 + $0xe0] sm:$0xff]
    %v1775 = vld [vmem:[#allocation13 + $0xe8] sm:$0xff]
    %v1776 = vld [vmem:[#allocation13 + $0xf0] sm:$0xff]
    %v1777 = vld [vmem:[#allocation13 + $0xf8] sm:$0xff]
    %v1810 = vunpack.c.l.b16 %v1746
    %v1811 = vunpack.c.h.b16 %v1746
    %v1812 = vunpack.c.l.b16 %v1747
    %v1813 = vunpack.c.h.b16 %v1747
    %v1814 = vunpack.c.l.b16 %v1748
    %v1815 = vunpack.c.h.b16 %v1748
    %v1816 = vunpack.c.l.b16 %v1749
    %v1817 = vunpack.c.h.b16 %v1749
    %v1818 = vunpack.c.l.b16 %v1750
    %v1819 = vunpack.c.h.b16 %v1750
    %v1820 = vunpack.c.l.b16 %v1751
    %v1821 = vunpack.c.h.b16 %v1751
    %v1822 = vunpack.c.l.b16 %v1752
    %v1823 = vunpack.c.h.b16 %v1752
    %v1824 = vunpack.c.l.b16 %v1753
    %v1825 = vunpack.c.h.b16 %v1753
    %v1826 = vunpack.c.l.b16 %v1754
    %v1827 = vunpack.c.h.b16 %v1754
    %v1828 = vunpack.c.l.b16 %v1755
    %v1829 = vunpack.c.h.b16 %v1755
    %v1830 = vunpack.c.l.b16 %v1756
    %v1831 = vunpack.c.h.b16 %v1756
    %v1832 = vunpack.c.l.b16 %v1757
    %v1833 = vunpack.c.h.b16 %v1757
    %v1834 = vunpack.c.l.b16 %v1758
    %v1835 = vunpack.c.h.b16 %v1758
    %v1836 = vunpack.c.l.b16 %v1759
    %v1837 = vunpack.c.h.b16 %v1759
    %v1838 = vunpack.c.l.b16 %v1760
    %v1839 = vunpack.c.h.b16 %v1760
    %v1840 = vunpack.c.l.b16 %v1761
    %v1841 = vunpack.c.h.b16 %v1761
    %v1842 = vunpack.c.l.b16 %v1762
    %v1843 = vunpack.c.h.b16 %v1762
    %v1844 = vunpack.c.l.b16 %v1763
    %v1845 = vunpack.c.h.b16 %v1763
    %v1846 = vunpack.c.l.b16 %v1764
    %v1847 = vunpack.c.h.b16 %v1764
    %v1848 = vunpack.c.l.b16 %v1765
    %v1849 = vunpack.c.h.b16 %v1765
    %v1850 = vunpack.c.l.b16 %v1766
    %v1851 = vunpack.c.h.b16 %v1766
    %v1852 = vunpack.c.l.b16 %v1767
    %v1853 = vunpack.c.h.b16 %v1767
    %v1854 = vunpack.c.l.b16 %v1768
    %v1855 = vunpack.c.h.b16 %v1768
    %v1856 = vunpack.c.l.b16 %v1769
    %v1857 = vunpack.c.h.b16 %v1769
    %v1858 = vunpack.c.l.b16 %v1770
    %v1859 = vunpack.c.h.b16 %v1770
    %v1860 = vunpack.c.l.b16 %v1771
    %v1861 = vunpack.c.h.b16 %v1771
    %v1862 = vunpack.c.l.b16 %v1772
    %v1863 = vunpack.c.h.b16 %v1772
    %v1864 = vunpack.c.l.b16 %v1773
    %v1865 = vunpack.c.h.b16 %v1773
    %v1866 = vunpack.c.l.b16 %v1774
    %v1867 = vunpack.c.h.b16 %v1774
    %v1868 = vunpack.c.l.b16 %v1775
    %v1869 = vunpack.c.h.b16 %v1775
    %v1870 = vunpack.c.l.b16 %v1776
    %v1871 = vunpack.c.h.b16 %v1776
    %v1872 = vunpack.c.l.b16 %v1777
    %v1873 = vunpack.c.h.b16 %v1777
    %v1874 = vpack.c.b16 %v1814, %v1810
    %v1875 = vpack.c.b16 %v1815, %v1811
    %v1876 = vpack.c.b16 %v1816, %v1812
    %v1877 = vpack.c.b16 %v1817, %v1813
    %v1878 = vpack.c.b16 %v1822, %v1818
    %v1879 = vpack.c.b16 %v1823, %v1819
    %v1880 = vpack.c.b16 %v1824, %v1820
    %v1881 = vpack.c.b16 %v1825, %v1821
    %v1882 = vpack.c.b16 %v1830, %v1826
    %v1883 = vpack.c.b16 %v1831, %v1827
    %v1884 = vpack.c.b16 %v1832, %v1828
    %v1885 = vpack.c.b16 %v1833, %v1829
    %v1886 = vpack.c.b16 %v1838, %v1834
    %v1887 = vpack.c.b16 %v1839, %v1835
    %v1888 = vpack.c.b16 %v1840, %v1836
    %v1889 = vpack.c.b16 %v1841, %v1837
    %v1890 = vpack.c.b16 %v1846, %v1842
    %v1891 = vpack.c.b16 %v1847, %v1843
    %v1892 = vpack.c.b16 %v1848, %v1844
    %v1893 = vpack.c.b16 %v1849, %v1845
    %v1894 = vpack.c.b16 %v1854, %v1850
    %v1895 = vpack.c.b16 %v1855, %v1851
    %v1896 = vpack.c.b16 %v1856, %v1852
    %v1897 = vpack.c.b16 %v1857, %v1853
    %v1898 = vpack.c.b16 %v1862, %v1858
    %v1899 = vpack.c.b16 %v1863, %v1859
    %v1900 = vpack.c.b16 %v1864, %v1860
    %v1901 = vpack.c.b16 %v1865, %v1861
    %v1902 = vpack.c.b16 %v1870, %v1866
    %v1903 = vpack.c.b16 %v1871, %v1867
    %v1904 = vpack.c.b16 %v1872, %v1868
    %v1905 = vpack.c.b16 %v1873, %v1869
    %1938 = vmatpush.bf16.msra.mxu0 %v1902
    %1939 = vmatpush.bf16.msra.mxu0 %v1898
    %1940 = vmatpush.bf16.msra.mxu0 %v1894
    %1941 = vmatpush.bf16.msra.mxu0 %v1890
    %1942 = vmatpush.bf16.msra.mxu0 %v1886
    %1943 = vmatpush.bf16.msra.mxu0 %v1882
    %1944 = vmatpush.bf16.msra.mxu0 %v1878
    %1945 = vmatpush.bf16.msra.mxu0 %v1874
    %1946 = vmatmul.bf16.gmra.mxu0 %v1745
    %v1947 = vpop.f32.mrf.mxu0
    %v1948 = vadd.f32 0.0, %v1947
    %v1949 = vpop.f32.mrf.mxu0
    %1950 = vdwg.mxu0
    %1951 = vmatpush.bf16.msra.mxu0 %v1903
    %1952 = vmatpush.bf16.msra.mxu0 %v1899
    %1953 = vmatpush.bf16.msra.mxu0 %v1895
    %1954 = vmatpush.bf16.msra.mxu0 %v1891
    %1955 = vmatpush.bf16.msra.mxu0 %v1887
    %1956 = vmatpush.bf16.msra.mxu0 %v1883
    %1957 = vmatpush.bf16.msra.mxu0 %v1879
    %1958 = vmatpush.bf16.msra.mxu0 %v1875
    %1959 = vmatmul.bf16.gmra.mxu0 %v1745
    %v1960 = vpop.f32.mrf.mxu0
    %v1961 = vadd.f32 0.0, %v1960
    %v1962 = vpop.f32.mrf.mxu0
    %1963 = vdwg.mxu0
    %1964 = vmatpush.bf16.msra.mxu0 %v1904
    %1965 = vmatpush.bf16.msra.mxu0 %v1900
    %1966 = vmatpush.bf16.msra.mxu0 %v1896
    %1967 = vmatpush.bf16.msra.mxu0 %v1892
    %1968 = vmatpush.bf16.msra.mxu0 %v1888
    %1969 = vmatpush.bf16.msra.mxu0 %v1884
    %1970 = vmatpush.bf16.msra.mxu0 %v1880
    %1971 = vmatpush.bf16.msra.mxu0 %v1876
    %1972 = vmatmul.bf16.gmra.mxu0 %v1745
    %v1973 = vpop.f32.mrf.mxu0
    %v1974 = vadd.f32 0.0, %v1973
    %v1975 = vpop.f32.mrf.mxu0
    %1976 = vdwg.mxu0
    %1977 = vmatpush.bf16.msra.mxu0 %v1905
    %1978 = vmatpush.bf16.msra.mxu0 %v1901
    %1979 = vmatpush.bf16.msra.mxu0 %v1897
    %1980 = vmatpush.bf16.msra.mxu0 %v1893
    %1981 = vmatpush.bf16.msra.mxu0 %v1889
    %1982 = vmatpush.bf16.msra.mxu0 %v1885
    %1983 = vmatpush.bf16.msra.mxu0 %v1881
    %1984 = vmatpush.bf16.msra.mxu0 %v1877
    %1985 = vmatmul.bf16.gmra.mxu0 %v1745
    %v1986 = vpop.f32.mrf.mxu0
    %v1987 = vadd.f32 0.0, %v1986
    %v1988 = vpop.f32.mrf.mxu0
    %1989 = vdwg.mxu0
    %v1990 = vadd.f32 %v1741, %v1948
    %v1991 = vadd.f32 %v1742, %v1961
    %v1992 = vadd.f32 %v1743, %v1974
    %v1993 = vadd.f32 %v1744, %v1987
    %v1994 = vxor.u32 %v1990, 2147483648
    %v1995 = vxor.u32 %v1991, 2147483648
    %v1996 = vmul.f32 %v1994, 1.442695
    %v1997 = vpow.pop %v1996
    %v1998 = vmul.f32 %v1995, 1.442695
    %v1999 = vpow.pop %v1998
    %v2000 = vadd.f32 %v1997, 1.0
    %v2001 = vadd.f32 %v1999, 1.0
    %v2002 = vrcp.pop %v2000
    %v2003 = vmul.f32 %v2000, %v2002
    %v2004 = vsub.f32 1.0, %v2003
    %v2005 = vmul.f32 %v2002, %v2004
    %v2006 = vadd.f32 %v2002, %v2005
    %vm2007 = vweird.f32 %v2000
    %vm2008 = vweird.f32 %v2002
    %vm2009 = vmor %vm2007, %vm2008
    %v2010 = vsel %vm2009, %v2002, %v2006
    %v2011 = vand.u32 2147483647, %v2000
    %vm2012 = vcmp.eq.f32.partialorder %v2011, 8.507059e+37
    %v2013 = vand.u32 %v2000, 2147483648
    %v2014 = vor.u32 1.1754944e-38, %v2013
    %v2015 = vsel %vm2012, %v2014, %v2010
    %v2016 = vmul.f32 1.0, %v2015
    %v2017 = vrcp.pop %v2001
    %v2018 = vmul.f32 %v2001, %v2017
    %v2019 = vsub.f32 1.0, %v2018
    %v2020 = vmul.f32 %v2017, %v2019
    %v2021 = vadd.f32 %v2017, %v2020
    %vm2022 = vweird.f32 %v2001
    %vm2023 = vweird.f32 %v2017
    %vm2024 = vmor %vm2022, %vm2023
    %v2025 = vsel %vm2024, %v2017, %v2021
    %v2026 = vand.u32 2147483647, %v2001
    %vm2027 = vcmp.eq.f32.partialorder %v2026, 8.507059e+37
    %v2028 = vand.u32 %v2001, 2147483648
    %v2029 = vor.u32 1.1754944e-38, %v2028
    %v2030 = vsel %vm2027, %v2029, %v2025
    %v2031 = vmul.f32 1.0, %v2030
    %v2032 = vtanh.pop %v1992
    %v2033 = vxor.u32 %v1993, 2147483648
    %v2034 = vmul.f32 %v2033, 1.442695
    %v2035 = vpow.pop %v2034
    %v2036 = vadd.f32 %v2035, 1.0
    %v2037 = vrcp.pop %v2036
    %v2038 = vmul.f32 %v2036, %v2037
    %v2039 = vsub.f32 1.0, %v2038
    %v2040 = vmul.f32 %v2037, %v2039
    %v2041 = vadd.f32 %v2037, %v2040
    %vm2042 = vweird.f32 %v2036
    %vm2043 = vweird.f32 %v2037
    %vm2044 = vmor %vm2042, %vm2043
    %v2045 = vsel %vm2044, %v2037, %v2041
    %v2046 = vand.u32 2147483647, %v2036
    %vm2047 = vcmp.eq.f32.partialorder %v2046, 8.507059e+37
    %v2048 = vand.u32 %v2036, 2147483648
    %v2049 = vor.u32 1.1754944e-38, %v2048
    %v2050 = vsel %vm2047, %v2049, %v2045
    %v2051 = vmul.f32 1.0, %v2050
    %v2052 = vmul.f32 %v2031, %v1731
    %v2053 = vmul.f32 %v2016, %v2032
    %v2054 = vadd.f32 %v2052, %v2053
    %v2055 = vtanh.pop %v2054
    %v2056 = vmul.f32 %v2051, %v2055
    %v2057 = vmax.f32 %v2056, 0.0
    %v2058 = vpack.c.bf16 %v2057, %v2057
    %s2059 = scalar_lea.vmem [#allocation5], 16
    %2060 = vst [vmem:[%s2059] sm:$0xf] %v2058
    %s2061 = smul.u32 5, 4
    %s2062 = smul.addr %s2061, 8
    %s2063 = scalar_lea.vmem [#allocation2], %s2062
    %v2064 = vld [vmem:[%s2063] sm:$0xff]
    %v2065 = vld [vmem:[%s2063 + $0x8] sm:$0xff]
    %v2066 = vld [vmem:[%s2063 + $0x10] sm:$0xff]
    %v2067 = vld [vmem:[%s2063 + $0x18] sm:$0xff]
    %v2068 = vpack.c.bf16 %v2056, %v2056
    %v2069 = vld [vmem:[#allocation13] sm:$0xff]
    %v2070 = vld [vmem:[#allocation13 + $0x8] sm:$0xff]
    %v2071 = vld [vmem:[#allocation13 + $0x10] sm:$0xff]
    %v2072 = vld [vmem:[#allocation13 + $0x18] sm:$0xff]
    %v2073 = vld [vmem:[#allocation13 + $0x20] sm:$0xff]
    %v2074 = vld [vmem:[#allocation13 + $0x28] sm:$0xff]
    %v2075 = vld [vmem:[#allocation13 + $0x30] sm:$0xff]
    %v2076 = vld [vmem:[#allocation13 + $0x38] sm:$0xff]
    %v2077 = vld [vmem:[#allocation13 + $0x40] sm:$0xff]
    %v2078 = vld [vmem:[#allocation13 + $0x48] sm:$0xff]
    %v2079 = vld [vmem:[#allocation13 + $0x50] sm:$0xff]
    %v2080 = vld [vmem:[#allocation13 + $0x58] sm:$0xff]
    %v2081 = vld [vmem:[#allocation13 + $0x60] sm:$0xff]
    %v2082 = vld [vmem:[#allocation13 + $0x68] sm:$0xff]
    %v2083 = vld [vmem:[#allocation13 + $0x70] sm:$0xff]
    %v2084 = vld [vmem:[#allocation13 + $0x78] sm:$0xff]
    %v2085 = vld [vmem:[#allocation13 + $0x80] sm:$0xff]
    %v2086 = vld [vmem:[#allocation13 + $0x88] sm:$0xff]
    %v2087 = vld [vmem:[#allocation13 + $0x90] sm:$0xff]
    %v2088 = vld [vmem:[#allocation13 + $0x98] sm:$0xff]
    %v2089 = vld [vmem:[#allocation13 + $0xa0] sm:$0xff]
    %v2090 = vld [vmem:[#allocation13 + $0xa8] sm:$0xff]
    %v2091 = vld [vmem:[#allocation13 + $0xb0] sm:$0xff]
    %v2092 = vld [vmem:[#allocation13 + $0xb8] sm:$0xff]
    %v2093 = vld [vmem:[#allocation13 + $0xc0] sm:$0xff]
    %v2094 = vld [vmem:[#allocation13 + $0xc8] sm:$0xff]
    %v2095 = vld [vmem:[#allocation13 + $0xd0] sm:$0xff]
    %v2096 = vld [vmem:[#allocation13 + $0xd8] sm:$0xff]
    %v2097 = vld [vmem:[#allocation13 + $0xe0] sm:$0xff]
    %v2098 = vld [vmem:[#allocation13 + $0xe8] sm:$0xff]
    %v2099 = vld [vmem:[#allocation13 + $0xf0] sm:$0xff]
    %v2100 = vld [vmem:[#allocation13 + $0xf8] sm:$0xff]
    %v2133 = vunpack.c.l.b16 %v2069
    %v2134 = vunpack.c.h.b16 %v2069
    %v2135 = vunpack.c.l.b16 %v2070
    %v2136 = vunpack.c.h.b16 %v2070
    %v2137 = vunpack.c.l.b16 %v2071
    %v2138 = vunpack.c.h.b16 %v2071
    %v2139 = vunpack.c.l.b16 %v2072
    %v2140 = vunpack.c.h.b16 %v2072
    %v2141 = vunpack.c.l.b16 %v2073
    %v2142 = vunpack.c.h.b16 %v2073
    %v2143 = vunpack.c.l.b16 %v2074
    %v2144 = vunpack.c.h.b16 %v2074
    %v2145 = vunpack.c.l.b16 %v2075
    %v2146 = vunpack.c.h.b16 %v2075
    %v2147 = vunpack.c.l.b16 %v2076
    %v2148 = vunpack.c.h.b16 %v2076
    %v2149 = vunpack.c.l.b16 %v2077
    %v2150 = vunpack.c.h.b16 %v2077
    %v2151 = vunpack.c.l.b16 %v2078
    %v2152 = vunpack.c.h.b16 %v2078
    %v2153 = vunpack.c.l.b16 %v2079
    %v2154 = vunpack.c.h.b16 %v2079
    %v2155 = vunpack.c.l.b16 %v2080
    %v2156 = vunpack.c.h.b16 %v2080
    %v2157 = vunpack.c.l.b16 %v2081
    %v2158 = vunpack.c.h.b16 %v2081
    %v2159 = vunpack.c.l.b16 %v2082
    %v2160 = vunpack.c.h.b16 %v2082
    %v2161 = vunpack.c.l.b16 %v2083
    %v2162 = vunpack.c.h.b16 %v2083
    %v2163 = vunpack.c.l.b16 %v2084
    %v2164 = vunpack.c.h.b16 %v2084
    %v2165 = vunpack.c.l.b16 %v2085
    %v2166 = vunpack.c.h.b16 %v2085
    %v2167 = vunpack.c.l.b16 %v2086
    %v2168 = vunpack.c.h.b16 %v2086
    %v2169 = vunpack.c.l.b16 %v2087
    %v2170 = vunpack.c.h.b16 %v2087
    %v2171 = vunpack.c.l.b16 %v2088
    %v2172 = vunpack.c.h.b16 %v2088
    %v2173 = vunpack.c.l.b16 %v2089
    %v2174 = vunpack.c.h.b16 %v2089
    %v2175 = vunpack.c.l.b16 %v2090
    %v2176 = vunpack.c.h.b16 %v2090
    %v2177 = vunpack.c.l.b16 %v2091
    %v2178 = vunpack.c.h.b16 %v2091
    %v2179 = vunpack.c.l.b16 %v2092
    %v2180 = vunpack.c.h.b16 %v2092
    %v2181 = vunpack.c.l.b16 %v2093
    %v2182 = vunpack.c.h.b16 %v2093
    %v2183 = vunpack.c.l.b16 %v2094
    %v2184 = vunpack.c.h.b16 %v2094
    %v2185 = vunpack.c.l.b16 %v2095
    %v2186 = vunpack.c.h.b16 %v2095
    %v2187 = vunpack.c.l.b16 %v2096
    %v2188 = vunpack.c.h.b16 %v2096
    %v2189 = vunpack.c.l.b16 %v2097
    %v2190 = vunpack.c.h.b16 %v2097
    %v2191 = vunpack.c.l.b16 %v2098
    %v2192 = vunpack.c.h.b16 %v2098
    %v2193 = vunpack.c.l.b16 %v2099
    %v2194 = vunpack.c.h.b16 %v2099
    %v2195 = vunpack.c.l.b16 %v2100
    %v2196 = vunpack.c.h.b16 %v2100
    %v2197 = vpack.c.b16 %v2137, %v2133
    %v2198 = vpack.c.b16 %v2138, %v2134
    %v2199 = vpack.c.b16 %v2139, %v2135
    %v2200 = vpack.c.b16 %v2140, %v2136
    %v2201 = vpack.c.b16 %v2145, %v2141
    %v2202 = vpack.c.b16 %v2146, %v2142
    %v2203 = vpack.c.b16 %v2147, %v2143
    %v2204 = vpack.c.b16 %v2148, %v2144
    %v2205 = vpack.c.b16 %v2153, %v2149
    %v2206 = vpack.c.b16 %v2154, %v2150
    %v2207 = vpack.c.b16 %v2155, %v2151
    %v2208 = vpack.c.b16 %v2156, %v2152
    %v2209 = vpack.c.b16 %v2161, %v2157
    %v2210 = vpack.c.b16 %v2162, %v2158
    %v2211 = vpack.c.b16 %v2163, %v2159
    %v2212 = vpack.c.b16 %v2164, %v2160
    %v2213 = vpack.c.b16 %v2169, %v2165
    %v2214 = vpack.c.b16 %v2170, %v2166
    %v2215 = vpack.c.b16 %v2171, %v2167
    %v2216 = vpack.c.b16 %v2172, %v2168
    %v2217 = vpack.c.b16 %v2177, %v2173
    %v2218 = vpack.c.b16 %v2178, %v2174
    %v2219 = vpack.c.b16 %v2179, %v2175
    %v2220 = vpack.c.b16 %v2180, %v2176
    %v2221 = vpack.c.b16 %v2185, %v2181
    %v2222 = vpack.c.b16 %v2186, %v2182
    %v2223 = vpack.c.b16 %v2187, %v2183
    %v2224 = vpack.c.b16 %v2188, %v2184
    %v2225 = vpack.c.b16 %v2193, %v2189
    %v2226 = vpack.c.b16 %v2194, %v2190
    %v2227 = vpack.c.b16 %v2195, %v2191
    %v2228 = vpack.c.b16 %v2196, %v2192
    %2261 = vmatpush.bf16.msra.mxu0 %v2225
    %2262 = vmatpush.bf16.msra.mxu0 %v2221
    %2263 = vmatpush.bf16.msra.mxu0 %v2217
    %2264 = vmatpush.bf16.msra.mxu0 %v2213
    %2265 = vmatpush.bf16.msra.mxu0 %v2209
    %2266 = vmatpush.bf16.msra.mxu0 %v2205
    %2267 = vmatpush.bf16.msra.mxu0 %v2201
    %2268 = vmatpush.bf16.msra.mxu0 %v2197
    %2269 = vmatmul.bf16.gmra.mxu0 %v2068
    %v2270 = vpop.f32.mrf.mxu0
    %v2271 = vadd.f32 0.0, %v2270
    %v2272 = vpop.f32.mrf.mxu0
    %2273 = vdwg.mxu0
    %2274 = vmatpush.bf16.msra.mxu0 %v2226
    %2275 = vmatpush.bf16.msra.mxu0 %v2222
    %2276 = vmatpush.bf16.msra.mxu0 %v2218
    %2277 = vmatpush.bf16.msra.mxu0 %v2214
    %2278 = vmatpush.bf16.msra.mxu0 %v2210
    %2279 = vmatpush.bf16.msra.mxu0 %v2206
    %2280 = vmatpush.bf16.msra.mxu0 %v2202
    %2281 = vmatpush.bf16.msra.mxu0 %v2198
    %2282 = vmatmul.bf16.gmra.mxu0 %v2068
    %v2283 = vpop.f32.mrf.mxu0
    %v2284 = vadd.f32 0.0, %v2283
    %v2285 = vpop.f32.mrf.mxu0
    %2286 = vdwg.mxu0
    %2287 = vmatpush.bf16.msra.mxu0 %v2227
    %2288 = vmatpush.bf16.msra.mxu0 %v2223
    %2289 = vmatpush.bf16.msra.mxu0 %v2219
    %2290 = vmatpush.bf16.msra.mxu0 %v2215
    %2291 = vmatpush.bf16.msra.mxu0 %v2211
    %2292 = vmatpush.bf16.msra.mxu0 %v2207
    %2293 = vmatpush.bf16.msra.mxu0 %v2203
    %2294 = vmatpush.bf16.msra.mxu0 %v2199
    %2295 = vmatmul.bf16.gmra.mxu0 %v2068
    %v2296 = vpop.f32.mrf.mxu0
    %v2297 = vadd.f32 0.0, %v2296
    %v2298 = vpop.f32.mrf.mxu0
    %2299 = vdwg.mxu0
    %2300 = vmatpush.bf16.msra.mxu0 %v2228
    %2301 = vmatpush.bf16.msra.mxu0 %v2224
    %2302 = vmatpush.bf16.msra.mxu0 %v2220
    %2303 = vmatpush.bf16.msra.mxu0 %v2216
    %2304 = vmatpush.bf16.msra.mxu0 %v2212
    %2305 = vmatpush.bf16.msra.mxu0 %v2208
    %2306 = vmatpush.bf16.msra.mxu0 %v2204
    %2307 = vmatpush.bf16.msra.mxu0 %v2200
    %2308 = vmatmul.bf16.gmra.mxu0 %v2068
    %v2309 = vpop.f32.mrf.mxu0
    %v2310 = vadd.f32 0.0, %v2309
    %v2311 = vpop.f32.mrf.mxu0
    %2312 = vdwg.mxu0
    %v2313 = vadd.f32 %v2064, %v2271
    %v2314 = vadd.f32 %v2065, %v2284
    %v2315 = vadd.f32 %v2066, %v2297
    %v2316 = vadd.f32 %v2067, %v2310
    %v2317 = vxor.u32 %v2313, 2147483648
    %v2318 = vxor.u32 %v2314, 2147483648
    %v2319 = vmul.f32 %v2317, 1.442695
    %v2320 = vpow.pop %v2319
    %v2321 = vmul.f32 %v2318, 1.442695
    %v2322 = vpow.pop %v2321
    %v2323 = vadd.f32 %v2320, 1.0
    %v2324 = vadd.f32 %v2322, 1.0
    %v2325 = vrcp.pop %v2323
    %v2326 = vmul.f32 %v2323, %v2325
    %v2327 = vsub.f32 1.0, %v2326
    %v2328 = vmul.f32 %v2325, %v2327
    %v2329 = vadd.f32 %v2325, %v2328
    %vm2330 = vweird.f32 %v2323
    %vm2331 = vweird.f32 %v2325
    %vm2332 = vmor %vm2330, %vm2331
    %v2333 = vsel %vm2332, %v2325, %v2329
    %v2334 = vand.u32 2147483647, %v2323
    %vm2335 = vcmp.eq.f32.partialorder %v2334, 8.507059e+37
    %v2336 = vand.u32 %v2323, 2147483648
    %v2337 = vor.u32 1.1754944e-38, %v2336
    %v2338 = vsel %vm2335, %v2337, %v2333
    %v2339 = vmul.f32 1.0, %v2338
    %v2340 = vrcp.pop %v2324
    %v2341 = vmul.f32 %v2324, %v2340
    %v2342 = vsub.f32 1.0, %v2341
    %v2343 = vmul.f32 %v2340, %v2342
    %v2344 = vadd.f32 %v2340, %v2343
    %vm2345 = vweird.f32 %v2324
    %vm2346 = vweird.f32 %v2340
    %vm2347 = vmor %vm2345, %vm2346
    %v2348 = vsel %vm2347, %v2340, %v2344
    %v2349 = vand.u32 2147483647, %v2324
    %vm2350 = vcmp.eq.f32.partialorder %v2349, 8.507059e+37
    %v2351 = vand.u32 %v2324, 2147483648
    %v2352 = vor.u32 1.1754944e-38, %v2351
    %v2353 = vsel %vm2350, %v2352, %v2348
    %v2354 = vmul.f32 1.0, %v2353
    %v2355 = vtanh.pop %v2315
    %v2356 = vxor.u32 %v2316, 2147483648
    %v2357 = vmul.f32 %v2356, 1.442695
    %v2358 = vpow.pop %v2357
    %v2359 = vadd.f32 %v2358, 1.0
    %v2360 = vrcp.pop %v2359
    %v2361 = vmul.f32 %v2359, %v2360
    %v2362 = vsub.f32 1.0, %v2361
    %v2363 = vmul.f32 %v2360, %v2362
    %v2364 = vadd.f32 %v2360, %v2363
    %vm2365 = vweird.f32 %v2359
    %vm2366 = vweird.f32 %v2360
    %vm2367 = vmor %vm2365, %vm2366
    %v2368 = vsel %vm2367, %v2360, %v2364
    %v2369 = vand.u32 2147483647, %v2359
    %vm2370 = vcmp.eq.f32.partialorder %v2369, 8.507059e+37
    %v2371 = vand.u32 %v2359, 2147483648
    %v2372 = vor.u32 1.1754944e-38, %v2371
    %v2373 = vsel %vm2370, %v2372, %v2368
    %v2374 = vmul.f32 1.0, %v2373
    %v2375 = vmul.f32 %v2354, %v2054
    %v2376 = vmul.f32 %v2339, %v2355
    %v2377 = vadd.f32 %v2375, %v2376
    %v2378 = vtanh.pop %v2377
    %v2379 = vmul.f32 %v2374, %v2378
    %v2380 = vmax.f32 %v2379, 0.0
    %v2381 = vpack.c.bf16 %v2380, %v2380
    %s2382 = scalar_lea.vmem [#allocation5], 20
    %2383 = vst [vmem:[%s2382] sm:$0xf] %v2381
    %s2384 = smul.u32 6, 4
    %s2385 = smul.addr %s2384, 8
    %s2386 = scalar_lea.vmem [#allocation2], %s2385
    %v2387 = vld [vmem:[%s2386] sm:$0xff]
    %v2388 = vld [vmem:[%s2386 + $0x8] sm:$0xff]
    %v2389 = vld [vmem:[%s2386 + $0x10] sm:$0xff]
    %v2390 = vld [vmem:[%s2386 + $0x18] sm:$0xff]
    %v2391 = vpack.c.bf16 %v2379, %v2379
    %v2392 = vld [vmem:[#allocation13] sm:$0xff]
    %v2393 = vld [vmem:[#allocation13 + $0x8] sm:$0xff]
    %v2394 = vld [vmem:[#allocation13 + $0x10] sm:$0xff]
    %v2395 = vld [vmem:[#allocation13 + $0x18] sm:$0xff]
    %v2396 = vld [vmem:[#allocation13 + $0x20] sm:$0xff]
    %v2397 = vld [vmem:[#allocation13 + $0x28] sm:$0xff]
    %v2398 = vld [vmem:[#allocation13 + $0x30] sm:$0xff]
    %v2399 = vld [vmem:[#allocation13 + $0x38] sm:$0xff]
    %v2400 = vld [vmem:[#allocation13 + $0x40] sm:$0xff]
    %v2401 = vld [vmem:[#allocation13 + $0x48] sm:$0xff]
    %v2402 = vld [vmem:[#allocation13 + $0x50] sm:$0xff]
    %v2403 = vld [vmem:[#allocation13 + $0x58] sm:$0xff]
    %v2404 = vld [vmem:[#allocation13 + $0x60] sm:$0xff]
    %v2405 = vld [vmem:[#allocation13 + $0x68] sm:$0xff]
    %v2406 = vld [vmem:[#allocation13 + $0x70] sm:$0xff]
    %v2407 = vld [vmem:[#allocation13 + $0x78] sm:$0xff]
    %v2408 = vld [vmem:[#allocation13 + $0x80] sm:$0xff]
    %v2409 = vld [vmem:[#allocation13 + $0x88] sm:$0xff]
    %v2410 = vld [vmem:[#allocation13 + $0x90] sm:$0xff]
    %v2411 = vld [vmem:[#allocation13 + $0x98] sm:$0xff]
    %v2412 = vld [vmem:[#allocation13 + $0xa0] sm:$0xff]
    %v2413 = vld [vmem:[#allocation13 + $0xa8] sm:$0xff]
    %v2414 = vld [vmem:[#allocation13 + $0xb0] sm:$0xff]
    %v2415 = vld [vmem:[#allocation13 + $0xb8] sm:$0xff]
    %v2416 = vld [vmem:[#allocation13 + $0xc0] sm:$0xff]
    %v2417 = vld [vmem:[#allocation13 + $0xc8] sm:$0xff]
    %v2418 = vld [vmem:[#allocation13 + $0xd0] sm:$0xff]
    %v2419 = vld [vmem:[#allocation13 + $0xd8] sm:$0xff]
    %v2420 = vld [vmem:[#allocation13 + $0xe0] sm:$0xff]
    %v2421 = vld [vmem:[#allocation13 + $0xe8] sm:$0xff]
    %v2422 = vld [vmem:[#allocation13 + $0xf0] sm:$0xff]
    %v2423 = vld [vmem:[#allocation13 + $0xf8] sm:$0xff]
    %v2456 = vunpack.c.l.b16 %v2392
    %v2457 = vunpack.c.h.b16 %v2392
    %v2458 = vunpack.c.l.b16 %v2393
    %v2459 = vunpack.c.h.b16 %v2393
    %v2460 = vunpack.c.l.b16 %v2394
    %v2461 = vunpack.c.h.b16 %v2394
    %v2462 = vunpack.c.l.b16 %v2395
    %v2463 = vunpack.c.h.b16 %v2395
    %v2464 = vunpack.c.l.b16 %v2396
    %v2465 = vunpack.c.h.b16 %v2396
    %v2466 = vunpack.c.l.b16 %v2397
    %v2467 = vunpack.c.h.b16 %v2397
    %v2468 = vunpack.c.l.b16 %v2398
    %v2469 = vunpack.c.h.b16 %v2398
    %v2470 = vunpack.c.l.b16 %v2399
    %v2471 = vunpack.c.h.b16 %v2399
    %v2472 = vunpack.c.l.b16 %v2400
    %v2473 = vunpack.c.h.b16 %v2400
    %v2474 = vunpack.c.l.b16 %v2401
    %v2475 = vunpack.c.h.b16 %v2401
    %v2476 = vunpack.c.l.b16 %v2402
    %v2477 = vunpack.c.h.b16 %v2402
    %v2478 = vunpack.c.l.b16 %v2403
    %v2479 = vunpack.c.h.b16 %v2403
    %v2480 = vunpack.c.l.b16 %v2404
    %v2481 = vunpack.c.h.b16 %v2404
    %v2482 = vunpack.c.l.b16 %v2405
    %v2483 = vunpack.c.h.b16 %v2405
    %v2484 = vunpack.c.l.b16 %v2406
    %v2485 = vunpack.c.h.b16 %v2406
    %v2486 = vunpack.c.l.b16 %v2407
    %v2487 = vunpack.c.h.b16 %v2407
    %v2488 = vunpack.c.l.b16 %v2408
    %v2489 = vunpack.c.h.b16 %v2408
    %v2490 = vunpack.c.l.b16 %v2409
    %v2491 = vunpack.c.h.b16 %v2409
    %v2492 = vunpack.c.l.b16 %v2410
    %v2493 = vunpack.c.h.b16 %v2410
    %v2494 = vunpack.c.l.b16 %v2411
    %v2495 = vunpack.c.h.b16 %v2411
    %v2496 = vunpack.c.l.b16 %v2412
    %v2497 = vunpack.c.h.b16 %v2412
    %v2498 = vunpack.c.l.b16 %v2413
    %v2499 = vunpack.c.h.b16 %v2413
    %v2500 = vunpack.c.l.b16 %v2414
    %v2501 = vunpack.c.h.b16 %v2414
    %v2502 = vunpack.c.l.b16 %v2415
    %v2503 = vunpack.c.h.b16 %v2415
    %v2504 = vunpack.c.l.b16 %v2416
    %v2505 = vunpack.c.h.b16 %v2416
    %v2506 = vunpack.c.l.b16 %v2417
    %v2507 = vunpack.c.h.b16 %v2417
    %v2508 = vunpack.c.l.b16 %v2418
    %v2509 = vunpack.c.h.b16 %v2418
    %v2510 = vunpack.c.l.b16 %v2419
    %v2511 = vunpack.c.h.b16 %v2419
    %v2512 = vunpack.c.l.b16 %v2420
    %v2513 = vunpack.c.h.b16 %v2420
    %v2514 = vunpack.c.l.b16 %v2421
    %v2515 = vunpack.c.h.b16 %v2421
    %v2516 = vunpack.c.l.b16 %v2422
    %v2517 = vunpack.c.h.b16 %v2422
    %v2518 = vunpack.c.l.b16 %v2423
    %v2519 = vunpack.c.h.b16 %v2423
    %v2520 = vpack.c.b16 %v2460, %v2456
    %v2521 = vpack.c.b16 %v2461, %v2457
    %v2522 = vpack.c.b16 %v2462, %v2458
    %v2523 = vpack.c.b16 %v2463, %v2459
    %v2524 = vpack.c.b16 %v2468, %v2464
    %v2525 = vpack.c.b16 %v2469, %v2465
    %v2526 = vpack.c.b16 %v2470, %v2466
    %v2527 = vpack.c.b16 %v2471, %v2467
    %v2528 = vpack.c.b16 %v2476, %v2472
    %v2529 = vpack.c.b16 %v2477, %v2473
    %v2530 = vpack.c.b16 %v2478, %v2474
    %v2531 = vpack.c.b16 %v2479, %v2475
    %v2532 = vpack.c.b16 %v2484, %v2480
    %v2533 = vpack.c.b16 %v2485, %v2481
    %v2534 = vpack.c.b16 %v2486, %v2482
    %v2535 = vpack.c.b16 %v2487, %v2483
    %v2536 = vpack.c.b16 %v2492, %v2488
    %v2537 = vpack.c.b16 %v2493, %v2489
    %v2538 = vpack.c.b16 %v2494, %v2490
    %v2539 = vpack.c.b16 %v2495, %v2491
    %v2540 = vpack.c.b16 %v2500, %v2496
    %v2541 = vpack.c.b16 %v2501, %v2497
    %v2542 = vpack.c.b16 %v2502, %v2498
    %v2543 = vpack.c.b16 %v2503, %v2499
    %v2544 = vpack.c.b16 %v2508, %v2504
    %v2545 = vpack.c.b16 %v2509, %v2505
    %v2546 = vpack.c.b16 %v2510, %v2506
    %v2547 = vpack.c.b16 %v2511, %v2507
    %v2548 = vpack.c.b16 %v2516, %v2512
    %v2549 = vpack.c.b16 %v2517, %v2513
    %v2550 = vpack.c.b16 %v2518, %v2514
    %v2551 = vpack.c.b16 %v2519, %v2515
    %2584 = vmatpush.bf16.msra.mxu0 %v2548
    %2585 = vmatpush.bf16.msra.mxu0 %v2544
    %2586 = vmatpush.bf16.msra.mxu0 %v2540
    %2587 = vmatpush.bf16.msra.mxu0 %v2536
    %2588 = vmatpush.bf16.msra.mxu0 %v2532
    %2589 = vmatpush.bf16.msra.mxu0 %v2528
    %2590 = vmatpush.bf16.msra.mxu0 %v2524
    %2591 = vmatpush.bf16.msra.mxu0 %v2520
    %2592 = vmatmul.bf16.gmra.mxu0 %v2391
    %v2593 = vpop.f32.mrf.mxu0
    %v2594 = vadd.f32 0.0, %v2593
    %v2595 = vpop.f32.mrf.mxu0
    %2596 = vdwg.mxu0
    %2597 = vmatpush.bf16.msra.mxu0 %v2549
    %2598 = vmatpush.bf16.msra.mxu0 %v2545
    %2599 = vmatpush.bf16.msra.mxu0 %v2541
    %2600 = vmatpush.bf16.msra.mxu0 %v2537
    %2601 = vmatpush.bf16.msra.mxu0 %v2533
    %2602 = vmatpush.bf16.msra.mxu0 %v2529
    %2603 = vmatpush.bf16.msra.mxu0 %v2525
    %2604 = vmatpush.bf16.msra.mxu0 %v2521
    %2605 = vmatmul.bf16.gmra.mxu0 %v2391
    %v2606 = vpop.f32.mrf.mxu0
    %v2607 = vadd.f32 0.0, %v2606
    %v2608 = vpop.f32.mrf.mxu0
    %2609 = vdwg.mxu0
    %2610 = vmatpush.bf16.msra.mxu0 %v2550
    %2611 = vmatpush.bf16.msra.mxu0 %v2546
    %2612 = vmatpush.bf16.msra.mxu0 %v2542
    %2613 = vmatpush.bf16.msra.mxu0 %v2538
    %2614 = vmatpush.bf16.msra.mxu0 %v2534
    %2615 = vmatpush.bf16.msra.mxu0 %v2530
    %2616 = vmatpush.bf16.msra.mxu0 %v2526
    %2617 = vmatpush.bf16.msra.mxu0 %v2522
    %2618 = vmatmul.bf16.gmra.mxu0 %v2391
    %v2619 = vpop.f32.mrf.mxu0
    %v2620 = vadd.f32 0.0, %v2619
    %v2621 = vpop.f32.mrf.mxu0
    %2622 = vdwg.mxu0
    %2623 = vmatpush.bf16.msra.mxu0 %v2551
    %2624 = vmatpush.bf16.msra.mxu0 %v2547
    %2625 = vmatpush.bf16.msra.mxu0 %v2543
    %2626 = vmatpush.bf16.msra.mxu0 %v2539
    %2627 = vmatpush.bf16.msra.mxu0 %v2535
    %2628 = vmatpush.bf16.msra.mxu0 %v2531
    %2629 = vmatpush.bf16.msra.mxu0 %v2527
    %2630 = vmatpush.bf16.msra.mxu0 %v2523
    %2631 = vmatmul.bf16.gmra.mxu0 %v2391
    %v2632 = vpop.f32.mrf.mxu0
    %v2633 = vadd.f32 0.0, %v2632
    %v2634 = vpop.f32.mrf.mxu0
    %2635 = vdwg.mxu0
    %v2636 = vadd.f32 %v2387, %v2594
    %v2637 = vadd.f32 %v2388, %v2607
    %v2638 = vadd.f32 %v2389, %v2620
    %v2639 = vadd.f32 %v2390, %v2633
    %v2640 = vxor.u32 %v2636, 2147483648
    %v2641 = vxor.u32 %v2637, 2147483648
    %v2642 = vmul.f32 %v2640, 1.442695
    %v2643 = vpow.pop %v2642
    %v2644 = vmul.f32 %v2641, 1.442695
    %v2645 = vpow.pop %v2644
    %v2646 = vadd.f32 %v2643, 1.0
    %v2647 = vadd.f32 %v2645, 1.0
    %v2648 = vrcp.pop %v2646
    %v2649 = vmul.f32 %v2646, %v2648
    %v2650 = vsub.f32 1.0, %v2649
    %v2651 = vmul.f32 %v2648, %v2650
    %v2652 = vadd.f32 %v2648, %v2651
    %vm2653 = vweird.f32 %v2646
    %vm2654 = vweird.f32 %v2648
    %vm2655 = vmor %vm2653, %vm2654
    %v2656 = vsel %vm2655, %v2648, %v2652
    %v2657 = vand.u32 2147483647, %v2646
    %vm2658 = vcmp.eq.f32.partialorder %v2657, 8.507059e+37
    %v2659 = vand.u32 %v2646, 2147483648
    %v2660 = vor.u32 1.1754944e-38, %v2659
    %v2661 = vsel %vm2658, %v2660, %v2656
    %v2662 = vmul.f32 1.0, %v2661
    %v2663 = vrcp.pop %v2647
    %v2664 = vmul.f32 %v2647, %v2663
    %v2665 = vsub.f32 1.0, %v2664
    %v2666 = vmul.f32 %v2663, %v2665
    %v2667 = vadd.f32 %v2663, %v2666
    %vm2668 = vweird.f32 %v2647
    %vm2669 = vweird.f32 %v2663
    %vm2670 = vmor %vm2668, %vm2669
    %v2671 = vsel %vm2670, %v2663, %v2667
    %v2672 = vand.u32 2147483647, %v2647
    %vm2673 = vcmp.eq.f32.partialorder %v2672, 8.507059e+37
    %v2674 = vand.u32 %v2647, 2147483648
    %v2675 = vor.u32 1.1754944e-38, %v2674
    %v2676 = vsel %vm2673, %v2675, %v2671
    %v2677 = vmul.f32 1.0, %v2676
    %v2678 = vtanh.pop %v2638
    %v2679 = vxor.u32 %v2639, 2147483648
    %v2680 = vmul.f32 %v2679, 1.442695
    %v2681 = vpow.pop %v2680
    %v2682 = vadd.f32 %v2681, 1.0
    %v2683 = vrcp.pop %v2682
    %v2684 = vmul.f32 %v2682, %v2683
    %v2685 = vsub.f32 1.0, %v2684
    %v2686 = vmul.f32 %v2683, %v2685
    %v2687 = vadd.f32 %v2683, %v2686
    %vm2688 = vweird.f32 %v2682
    %vm2689 = vweird.f32 %v2683
    %vm2690 = vmor %vm2688, %vm2689
    %v2691 = vsel %vm2690, %v2683, %v2687
    %v2692 = vand.u32 2147483647, %v2682
    %vm2693 = vcmp.eq.f32.partialorder %v2692, 8.507059e+37
    %v2694 = vand.u32 %v2682, 2147483648
    %v2695 = vor.u32 1.1754944e-38, %v2694
    %v2696 = vsel %vm2693, %v2695, %v2691
    %v2697 = vmul.f32 1.0, %v2696
    %v2698 = vmul.f32 %v2677, %v2377
    %v2699 = vmul.f32 %v2662, %v2678
    %v2700 = vadd.f32 %v2698, %v2699
    %v2701 = vtanh.pop %v2700
    %v2702 = vmul.f32 %v2697, %v2701
    %v2703 = vmax.f32 %v2702, 0.0
    %v2704 = vpack.c.bf16 %v2703, %v2703
    %s2705 = scalar_lea.vmem [#allocation5], 24
    %2706 = vst [vmem:[%s2705] sm:$0xf] %v2704
    %s2707 = smul.u32 7, 4
    %s2708 = smul.addr %s2707, 8
    %s2709 = scalar_lea.vmem [#allocation2], %s2708
    %v2710 = vld [vmem:[%s2709] sm:$0xff]
    %v2711 = vld [vmem:[%s2709 + $0x8] sm:$0xff]
    %v2712 = vld [vmem:[%s2709 + $0x10] sm:$0xff]
    %v2713 = vld [vmem:[%s2709 + $0x18] sm:$0xff]
    %v2714 = vpack.c.bf16 %v2702, %v2702
    %v2715 = vld [vmem:[#allocation13] sm:$0xff]
    %v2716 = vld [vmem:[#allocation13 + $0x8] sm:$0xff]
    %v2717 = vld [vmem:[#allocation13 + $0x10] sm:$0xff]
    %v2718 = vld [vmem:[#allocation13 + $0x18] sm:$0xff]
    %v2719 = vld [vmem:[#allocation13 + $0x20] sm:$0xff]
    %v2720 = vld [vmem:[#allocation13 + $0x28] sm:$0xff]
    %v2721 = vld [vmem:[#allocation13 + $0x30] sm:$0xff]
    %v2722 = vld [vmem:[#allocation13 + $0x38] sm:$0xff]
    %v2723 = vld [vmem:[#allocation13 + $0x40] sm:$0xff]
    %v2724 = vld [vmem:[#allocation13 + $0x48] sm:$0xff]
    %v2725 = vld [vmem:[#allocation13 + $0x50] sm:$0xff]
    %v2726 = vld [vmem:[#allocation13 + $0x58] sm:$0xff]
    %v2727 = vld [vmem:[#allocation13 + $0x60] sm:$0xff]
    %v2728 = vld [vmem:[#allocation13 + $0x68] sm:$0xff]
    %v2729 = vld [vmem:[#allocation13 + $0x70] sm:$0xff]
    %v2730 = vld [vmem:[#allocation13 + $0x78] sm:$0xff]
    %v2731 = vld [vmem:[#allocation13 + $0x80] sm:$0xff]
    %v2732 = vld [vmem:[#allocation13 + $0x88] sm:$0xff]
    %v2733 = vld [vmem:[#allocation13 + $0x90] sm:$0xff]
    %v2734 = vld [vmem:[#allocation13 + $0x98] sm:$0xff]
    %v2735 = vld [vmem:[#allocation13 + $0xa0] sm:$0xff]
    %v2736 = vld [vmem:[#allocation13 + $0xa8] sm:$0xff]
    %v2737 = vld [vmem:[#allocation13 + $0xb0] sm:$0xff]
    %v2738 = vld [vmem:[#allocation13 + $0xb8] sm:$0xff]
    %v2739 = vld [vmem:[#allocation13 + $0xc0] sm:$0xff]
    %v2740 = vld [vmem:[#allocation13 + $0xc8] sm:$0xff]
    %v2741 = vld [vmem:[#allocation13 + $0xd0] sm:$0xff]
    %v2742 = vld [vmem:[#allocation13 + $0xd8] sm:$0xff]
    %v2743 = vld [vmem:[#allocation13 + $0xe0] sm:$0xff]
    %v2744 = vld [vmem:[#allocation13 + $0xe8] sm:$0xff]
    %v2745 = vld [vmem:[#allocation13 + $0xf0] sm:$0xff]
    %v2746 = vld [vmem:[#allocation13 + $0xf8] sm:$0xff]
    %v2779 = vunpack.c.l.b16 %v2715
    %v2780 = vunpack.c.h.b16 %v2715
    %v2781 = vunpack.c.l.b16 %v2716
    %v2782 = vunpack.c.h.b16 %v2716
    %v2783 = vunpack.c.l.b16 %v2717
    %v2784 = vunpack.c.h.b16 %v2717
    %v2785 = vunpack.c.l.b16 %v2718
    %v2786 = vunpack.c.h.b16 %v2718
    %v2787 = vunpack.c.l.b16 %v2719
    %v2788 = vunpack.c.h.b16 %v2719
    %v2789 = vunpack.c.l.b16 %v2720
    %v2790 = vunpack.c.h.b16 %v2720
    %v2791 = vunpack.c.l.b16 %v2721
    %v2792 = vunpack.c.h.b16 %v2721
    %v2793 = vunpack.c.l.b16 %v2722
    %v2794 = vunpack.c.h.b16 %v2722
    %v2795 = vunpack.c.l.b16 %v2723
    %v2796 = vunpack.c.h.b16 %v2723
    %v2797 = vunpack.c.l.b16 %v2724
    %v2798 = vunpack.c.h.b16 %v2724
    %v2799 = vunpack.c.l.b16 %v2725
    %v2800 = vunpack.c.h.b16 %v2725
    %v2801 = vunpack.c.l.b16 %v2726
    %v2802 = vunpack.c.h.b16 %v2726
    %v2803 = vunpack.c.l.b16 %v2727
    %v2804 = vunpack.c.h.b16 %v2727
    %v2805 = vunpack.c.l.b16 %v2728
    %v2806 = vunpack.c.h.b16 %v2728
    %v2807 = vunpack.c.l.b16 %v2729
    %v2808 = vunpack.c.h.b16 %v2729
    %v2809 = vunpack.c.l.b16 %v2730
    %v2810 = vunpack.c.h.b16 %v2730
    %v2811 = vunpack.c.l.b16 %v2731
    %v2812 = vunpack.c.h.b16 %v2731
    %v2813 = vunpack.c.l.b16 %v2732
    %v2814 = vunpack.c.h.b16 %v2732
    %v2815 = vunpack.c.l.b16 %v2733
    %v2816 = vunpack.c.h.b16 %v2733
    %v2817 = vunpack.c.l.b16 %v2734
    %v2818 = vunpack.c.h.b16 %v2734
    %v2819 = vunpack.c.l.b16 %v2735
    %v2820 = vunpack.c.h.b16 %v2735
    %v2821 = vunpack.c.l.b16 %v2736
    %v2822 = vunpack.c.h.b16 %v2736
    %v2823 = vunpack.c.l.b16 %v2737
    %v2824 = vunpack.c.h.b16 %v2737
    %v2825 = vunpack.c.l.b16 %v2738
    %v2826 = vunpack.c.h.b16 %v2738
    %v2827 = vunpack.c.l.b16 %v2739
    %v2828 = vunpack.c.h.b16 %v2739
    %v2829 = vunpack.c.l.b16 %v2740
    %v2830 = vunpack.c.h.b16 %v2740
    %v2831 = vunpack.c.l.b16 %v2741
    %v2832 = vunpack.c.h.b16 %v2741
    %v2833 = vunpack.c.l.b16 %v2742
    %v2834 = vunpack.c.h.b16 %v2742
    %v2835 = vunpack.c.l.b16 %v2743
    %v2836 = vunpack.c.h.b16 %v2743
    %v2837 = vunpack.c.l.b16 %v2744
    %v2838 = vunpack.c.h.b16 %v2744
    %v2839 = vunpack.c.l.b16 %v2745
    %v2840 = vunpack.c.h.b16 %v2745
    %v2841 = vunpack.c.l.b16 %v2746
    %v2842 = vunpack.c.h.b16 %v2746
    %v2843 = vpack.c.b16 %v2783, %v2779
    %v2844 = vpack.c.b16 %v2784, %v2780
    %v2845 = vpack.c.b16 %v2785, %v2781
    %v2846 = vpack.c.b16 %v2786, %v2782
    %v2847 = vpack.c.b16 %v2791, %v2787
    %v2848 = vpack.c.b16 %v2792, %v2788
    %v2849 = vpack.c.b16 %v2793, %v2789
    %v2850 = vpack.c.b16 %v2794, %v2790
    %v2851 = vpack.c.b16 %v2799, %v2795
    %v2852 = vpack.c.b16 %v2800, %v2796
    %v2853 = vpack.c.b16 %v2801, %v2797
    %v2854 = vpack.c.b16 %v2802, %v2798
    %v2855 = vpack.c.b16 %v2807, %v2803
    %v2856 = vpack.c.b16 %v2808, %v2804
    %v2857 = vpack.c.b16 %v2809, %v2805
    %v2858 = vpack.c.b16 %v2810, %v2806
    %v2859 = vpack.c.b16 %v2815, %v2811
    %v2860 = vpack.c.b16 %v2816, %v2812
    %v2861 = vpack.c.b16 %v2817, %v2813
    %v2862 = vpack.c.b16 %v2818, %v2814
    %v2863 = vpack.c.b16 %v2823, %v2819
    %v2864 = vpack.c.b16 %v2824, %v2820
    %v2865 = vpack.c.b16 %v2825, %v2821
    %v2866 = vpack.c.b16 %v2826, %v2822
    %v2867 = vpack.c.b16 %v2831, %v2827
    %v2868 = vpack.c.b16 %v2832, %v2828
    %v2869 = vpack.c.b16 %v2833, %v2829
    %v2870 = vpack.c.b16 %v2834, %v2830
    %v2871 = vpack.c.b16 %v2839, %v2835
    %v2872 = vpack.c.b16 %v2840, %v2836
    %v2873 = vpack.c.b16 %v2841, %v2837
    %v2874 = vpack.c.b16 %v2842, %v2838
    %2907 = vmatpush.bf16.msra.mxu0 %v2871
    %2908 = vmatpush.bf16.msra.mxu0 %v2867
    %2909 = vmatpush.bf16.msra.mxu0 %v2863
    %2910 = vmatpush.bf16.msra.mxu0 %v2859
    %2911 = vmatpush.bf16.msra.mxu0 %v2855
    %2912 = vmatpush.bf16.msra.mxu0 %v2851
    %2913 = vmatpush.bf16.msra.mxu0 %v2847
    %2914 = vmatpush.bf16.msra.mxu0 %v2843
    %2915 = vmatmul.bf16.gmra.mxu0 %v2714
    %v2916 = vpop.f32.mrf.mxu0
    %v2917 = vadd.f32 0.0, %v2916
    %v2918 = vpop.f32.mrf.mxu0
    %2919 = vdwg.mxu0
    %2920 = vmatpush.bf16.msra.mxu0 %v2872
    %2921 = vmatpush.bf16.msra.mxu0 %v2868
    %2922 = vmatpush.bf16.msra.mxu0 %v2864
    %2923 = vmatpush.bf16.msra.mxu0 %v2860
    %2924 = vmatpush.bf16.msra.mxu0 %v2856
    %2925 = vmatpush.bf16.msra.mxu0 %v2852
    %2926 = vmatpush.bf16.msra.mxu0 %v2848
    %2927 = vmatpush.bf16.msra.mxu0 %v2844
    %2928 = vmatmul.bf16.gmra.mxu0 %v2714
    %v2929 = vpop.f32.mrf.mxu0
    %v2930 = vadd.f32 0.0, %v2929
    %v2931 = vpop.f32.mrf.mxu0
    %2932 = vdwg.mxu0
    %2933 = vmatpush.bf16.msra.mxu0 %v2873
    %2934 = vmatpush.bf16.msra.mxu0 %v2869
    %2935 = vmatpush.bf16.msra.mxu0 %v2865
    %2936 = vmatpush.bf16.msra.mxu0 %v2861
    %2937 = vmatpush.bf16.msra.mxu0 %v2857
    %2938 = vmatpush.bf16.msra.mxu0 %v2853
    %2939 = vmatpush.bf16.msra.mxu0 %v2849
    %2940 = vmatpush.bf16.msra.mxu0 %v2845
    %2941 = vmatmul.bf16.gmra.mxu0 %v2714
    %v2942 = vpop.f32.mrf.mxu0
    %v2943 = vadd.f32 0.0, %v2942
    %v2944 = vpop.f32.mrf.mxu0
    %2945 = vdwg.mxu0
    %2946 = vmatpush.bf16.msra.mxu0 %v2874
    %2947 = vmatpush.bf16.msra.mxu0 %v2870
    %2948 = vmatpush.bf16.msra.mxu0 %v2866
    %2949 = vmatpush.bf16.msra.mxu0 %v2862
    %2950 = vmatpush.bf16.msra.mxu0 %v2858
    %2951 = vmatpush.bf16.msra.mxu0 %v2854
    %2952 = vmatpush.bf16.msra.mxu0 %v2850
    %2953 = vmatpush.bf16.msra.mxu0 %v2846
    %2954 = vmatmul.bf16.gmra.mxu0 %v2714
    %v2955 = vpop.f32.mrf.mxu0
    %v2956 = vadd.f32 0.0, %v2955
    %v2957 = vpop.f32.mrf.mxu0
    %2958 = vdwg.mxu0
    %v2959 = vadd.f32 %v2710, %v2917
    %v2960 = vadd.f32 %v2711, %v2930
    %v2961 = vadd.f32 %v2712, %v2943
    %v2962 = vadd.f32 %v2713, %v2956
    %v2963 = vxor.u32 %v2959, 2147483648
    %v2964 = vxor.u32 %v2960, 2147483648
    %v2965 = vmul.f32 %v2963, 1.442695
    %v2966 = vpow.pop %v2965
    %v2967 = vmul.f32 %v2964, 1.442695
    %v2968 = vpow.pop %v2967
    %v2969 = vadd.f32 %v2966, 1.0
    %v2970 = vadd.f32 %v2968, 1.0
    %v2971 = vrcp.pop %v2969
    %v2972 = vmul.f32 %v2969, %v2971
    %v2973 = vsub.f32 1.0, %v2972
    %v2974 = vmul.f32 %v2971, %v2973
    %v2975 = vadd.f32 %v2971, %v2974
    %vm2976 = vweird.f32 %v2969
    %vm2977 = vweird.f32 %v2971
    %vm2978 = vmor %vm2976, %vm2977
    %v2979 = vsel %vm2978, %v2971, %v2975
    %v2980 = vand.u32 2147483647, %v2969
    %vm2981 = vcmp.eq.f32.partialorder %v2980, 8.507059e+37
    %v2982 = vand.u32 %v2969, 2147483648
    %v2983 = vor.u32 1.1754944e-38, %v2982
    %v2984 = vsel %vm2981, %v2983, %v2979
    %v2985 = vmul.f32 1.0, %v2984
    %v2986 = vrcp.pop %v2970
    %v2987 = vmul.f32 %v2970, %v2986
    %v2988 = vsub.f32 1.0, %v2987
    %v2989 = vmul.f32 %v2986, %v2988
    %v2990 = vadd.f32 %v2986, %v2989
    %vm2991 = vweird.f32 %v2970
    %vm2992 = vweird.f32 %v2986
    %vm2993 = vmor %vm2991, %vm2992
    %v2994 = vsel %vm2993, %v2986, %v2990
    %v2995 = vand.u32 2147483647, %v2970
    %vm2996 = vcmp.eq.f32.partialorder %v2995, 8.507059e+37
    %v2997 = vand.u32 %v2970, 2147483648
    %v2998 = vor.u32 1.1754944e-38, %v2997
    %v2999 = vsel %vm2996, %v2998, %v2994
    %v3000 = vmul.f32 1.0, %v2999
    %v3001 = vtanh.pop %v2961
    %v3002 = vxor.u32 %v2962, 2147483648
    %v3003 = vmul.f32 %v3002, 1.442695
    %v3004 = vpow.pop %v3003
    %v3005 = vadd.f32 %v3004, 1.0
    %v3006 = vrcp.pop %v3005
    %v3007 = vmul.f32 %v3005, %v3006
    %v3008 = vsub.f32 1.0, %v3007
    %v3009 = vmul.f32 %v3006, %v3008
    %v3010 = vadd.f32 %v3006, %v3009
    %vm3011 = vweird.f32 %v3005
    %vm3012 = vweird.f32 %v3006
    %vm3013 = vmor %vm3011, %vm3012
    %v3014 = vsel %vm3013, %v3006, %v3010
    %v3015 = vand.u32 2147483647, %v3005
    %vm3016 = vcmp.eq.f32.partialorder %v3015, 8.507059e+37
    %v3017 = vand.u32 %v3005, 2147483648
    %v3018 = vor.u32 1.1754944e-38, %v3017
    %v3019 = vsel %vm3016, %v3018, %v3014
    %v3020 = vmul.f32 1.0, %v3019
    %v3021 = vmul.f32 %v3000, %v2700
    %v3022 = vmul.f32 %v2985, %v3001
    %v3023 = vadd.f32 %v3021, %v3022
    %v3024 = vtanh.pop %v3023
    %v3025 = vmul.f32 %v3020, %v3024
    %v3026 = vmax.f32 %v3025, 0.0
    %v3027 = vpack.c.bf16 %v3026, %v3026
    %s3028 = scalar_lea.vmem [#allocation5], 28
    %3029 = vst [vmem:[%s3028] sm:$0xf] %v3027
    %v3030 = vld [vmem:[#allocation5] sm:$0xf]
    %v3031 = vld [vmem:[#allocation5 + $0x4] sm:$0xf]
    %v3032 = vld [vmem:[#allocation5 + $0x8] sm:$0xf]
    %v3033 = vld [vmem:[#allocation5 + $0xc] sm:$0xf]
    %v3034 = vld [vmem:[#allocation5 + $0x10] sm:$0xf]
    %v3035 = vld [vmem:[#allocation5 + $0x14] sm:$0xf]
    %v3036 = vld [vmem:[#allocation5 + $0x18] sm:$0xf]
    %v3037 = vld [vmem:[#allocation5 + $0x1c] sm:$0xf]
    %v3038 = vld [vmem:[#allocation16] sm:$0xff]
    %v3039 = vld [vmem:[#allocation16 + $0x8] sm:$0xff]
    %v3040 = vld [vmem:[#allocation16 + $0x10] sm:$0xff]
    %v3041 = vld [vmem:[#allocation16 + $0x18] sm:$0xff]
    %v3042 = vld [vmem:[#allocation16 + $0x20] sm:$0xff]
    %v3043 = vld [vmem:[#allocation16 + $0x28] sm:$0xff]
    %v3044 = vld [vmem:[#allocation16 + $0x30] sm:$0xff]
    %v3045 = vld [vmem:[#allocation16 + $0x38] sm:$0xff]
    %v3046 = vld [vmem:[#allocation16 + $0x40] sm:$0xff]
    %v3047 = vld [vmem:[#allocation16 + $0x48] sm:$0xff]
    %v3048 = vld [vmem:[#allocation16 + $0x50] sm:$0xff]
    %v3049 = vld [vmem:[#allocation16 + $0x58] sm:$0xff]
    %v3050 = vld [vmem:[#allocation16 + $0x60] sm:$0xff]
    %v3051 = vld [vmem:[#allocation16 + $0x68] sm:$0xff]
    %v3052 = vld [vmem:[#allocation16 + $0x70] sm:$0xff]
    %v3053 = vld [vmem:[#allocation16 + $0x78] sm:$0xff]
    %v3054 = vld [vmem:[%s7] sm:$0x3]
    %v3056 = vperm.slane %v3054, 0
    %v3057 = vperm.slane %v3054, 1
    %v3068 = vunpack.c.l.b16 %v3030
    %v3069 = vunpack.c.l.b16 %v3031
    %v3070 = vunpack.c.l.b16 %v3032
    %v3071 = vunpack.c.l.b16 %v3033
    %v3072 = vunpack.c.l.b16 %v3034
    %v3073 = vunpack.c.l.b16 %v3035
    %v3074 = vunpack.c.l.b16 %v3036
    %v3075 = vunpack.c.l.b16 %v3037
    %v3076 = vpack.c.b16 %v3069, %v3068
    %v3077 = vpack.c.b16 %v3071, %v3070
    %v3078 = vpack.c.b16 %v3073, %v3072
    %v3079 = vpack.c.b16 %v3075, %v3074
    %v3100 = vunpack.c.l.b16 %v3038
    %v3101 = vunpack.c.h.b16 %v3038
    %v3102 = vunpack.c.l.b16 %v3039
    %v3103 = vunpack.c.h.b16 %v3039
    %v3104 = vunpack.c.l.b16 %v3040
    %v3105 = vunpack.c.h.b16 %v3040
    %v3106 = vunpack.c.l.b16 %v3041
    %v3107 = vunpack.c.h.b16 %v3041
    %v3108 = vunpack.c.l.b16 %v3042
    %v3109 = vunpack.c.h.b16 %v3042
    %v3110 = vunpack.c.l.b16 %v3043
    %v3111 = vunpack.c.h.b16 %v3043
    %v3112 = vunpack.c.l.b16 %v3044
    %v3113 = vunpack.c.h.b16 %v3044
    %v3114 = vunpack.c.l.b16 %v3045
    %v3115 = vunpack.c.h.b16 %v3045
    %v3116 = vunpack.c.l.b16 %v3046
    %v3117 = vunpack.c.h.b16 %v3046
    %v3118 = vunpack.c.l.b16 %v3047
    %v3119 = vunpack.c.h.b16 %v3047
    %v3120 = vunpack.c.l.b16 %v3048
    %v3121 = vunpack.c.h.b16 %v3048
    %v3122 = vunpack.c.l.b16 %v3049
    %v3123 = vunpack.c.h.b16 %v3049
    %v3124 = vunpack.c.l.b16 %v3050
    %v3125 = vunpack.c.h.b16 %v3050
    %v3126 = vunpack.c.l.b16 %v3051
    %v3127 = vunpack.c.h.b16 %v3051
    %v3128 = vunpack.c.l.b16 %v3052
    %v3129 = vunpack.c.h.b16 %v3052
    %v3130 = vunpack.c.l.b16 %v3053
    %v3131 = vunpack.c.h.b16 %v3053
    %v3132 = vpack.c.b16 %v3102, %v3100
    %v3133 = vpack.c.b16 %v3103, %v3101
    %v3134 = vpack.c.b16 %v3106, %v3104
    %v3135 = vpack.c.b16 %v3107, %v3105
    %v3136 = vpack.c.b16 %v3110, %v3108
    %v3137 = vpack.c.b16 %v3111, %v3109
    %v3138 = vpack.c.b16 %v3114, %v3112
    %v3139 = vpack.c.b16 %v3115, %v3113
    %v3140 = vpack.c.b16 %v3118, %v3116
    %v3141 = vpack.c.b16 %v3119, %v3117
    %v3142 = vpack.c.b16 %v3122, %v3120
    %v3143 = vpack.c.b16 %v3123, %v3121
    %v3144 = vpack.c.b16 %v3126, %v3124
    %v3145 = vpack.c.b16 %v3127, %v3125
    %v3146 = vpack.c.b16 %v3130, %v3128
    %v3147 = vpack.c.b16 %v3131, %v3129
    %3164 = vmatpush.bf16.msra.mxu0 %v3146
    %3165 = vmatpush.bf16.msra.mxu0 %v3144
    %3166 = vmatpush.bf16.msra.mxu0 %v3142
    %3167 = vmatpush.bf16.msra.mxu0 %v3140
    %3168 = vmatpush.bf16.msra.mxu0 %v3138
    %3169 = vmatpush.bf16.msra.mxu0 %v3136
    %3170 = vmatpush.bf16.msra.mxu0 %v3134
    %3171 = vmatpush.bf16.msra.mxu0 %v3132
    %3172 = vmatmul.bf16.gmra.mxu0 %v3076
    %v3173 = vpop.f32.mrf.mxu0
    %v3174 = vadd.f32 %v3056, %v3173
    %v3175 = vpop.f32.mrf.mxu0
    %v3176 = vadd.f32 %v3056, %v3175
    %3177 = vmatmul.bf16.gmra.mxu0 %v3077
    %v3178 = vpop.f32.mrf.mxu0
    %v3179 = vadd.f32 %v3056, %v3178
    %v3180 = vpop.f32.mrf.mxu0
    %v3181 = vadd.f32 %v3056, %v3180
    %3182 = vmatmul.bf16.gmra.mxu0 %v3078
    %v3183 = vpop.f32.mrf.mxu0
    %v3184 = vadd.f32 %v3056, %v3183
    %v3185 = vpop.f32.mrf.mxu0
    %v3186 = vadd.f32 %v3056, %v3185
    %3187 = vmatmul.bf16.gmra.mxu0 %v3079
    %v3188 = vpop.f32.mrf.mxu0
    %v3189 = vadd.f32 %v3056, %v3188
    %v3190 = vpop.f32.mrf.mxu0
    %v3191 = vadd.f32 %v3056, %v3190
    %3192 = vdwg.mxu0
    %3193 = vmatpush.bf16.msra.mxu0 %v3147
    %3194 = vmatpush.bf16.msra.mxu0 %v3145
    %3195 = vmatpush.bf16.msra.mxu0 %v3143
    %3196 = vmatpush.bf16.msra.mxu0 %v3141
    %3197 = vmatpush.bf16.msra.mxu0 %v3139
    %3198 = vmatpush.bf16.msra.mxu0 %v3137
    %3199 = vmatpush.bf16.msra.mxu0 %v3135
    %3200 = vmatpush.bf16.msra.mxu0 %v3133
    %3201 = vmatmul.bf16.gmra.mxu0 %v3076
    %v3202 = vpop.f32.mrf.mxu0
    %v3203 = vadd.f32 %v3057, %v3202
    %v3204 = vpop.f32.mrf.mxu0
    %v3205 = vadd.f32 %v3057, %v3204
    %3206 = vmatmul.bf16.gmra.mxu0 %v3077
    %v3207 = vpop.f32.mrf.mxu0
    %v3208 = vadd.f32 %v3057, %v3207
    %v3209 = vpop.f32.mrf.mxu0
    %v3210 = vadd.f32 %v3057, %v3209
    %3211 = vmatmul.bf16.gmra.mxu0 %v3078
    %v3212 = vpop.f32.mrf.mxu0
    %v3213 = vadd.f32 %v3057, %v3212
    %v3214 = vpop.f32.mrf.mxu0
    %v3215 = vadd.f32 %v3057, %v3214
    %3216 = vmatmul.bf16.gmra.mxu0 %v3079
    %v3217 = vpop.f32.mrf.mxu0
    %v3218 = vadd.f32 %v3057, %v3217
    %v3219 = vpop.f32.mrf.mxu0
    %v3220 = vadd.f32 %v3057, %v3219
    %3221 = vdwg.mxu0
    %3222 = vst [vmem:[#allocation3] sm:$0xff] %v3174
    %3223 = vst [vmem:[#allocation3 + $0x8] sm:$0xff] %v3203
    %3224 = vst [vmem:[#allocation3 + $0x10] sm:$0xff] %v3176
    %3225 = vst [vmem:[#allocation3 + $0x18] sm:$0xff] %v3205
    %3226 = vst [vmem:[#allocation3 + $0x20] sm:$0xff] %v3179
    %3227 = vst [vmem:[#allocation3 + $0x28] sm:$0xff] %v3208
    %3228 = vst [vmem:[#allocation3 + $0x30] sm:$0xff] %v3181
    %3229 = vst [vmem:[#allocation3 + $0x38] sm:$0xff] %v3210
    %3230 = vst [vmem:[#allocation3 + $0x40] sm:$0xff] %v3184
    %3231 = vst [vmem:[#allocation3 + $0x48] sm:$0xff] %v3213
    %3232 = vst [vmem:[#allocation3 + $0x50] sm:$0xff] %v3186
    %3233 = vst [vmem:[#allocation3 + $0x58] sm:$0xff] %v3215
    %3234 = vst [vmem:[#allocation3 + $0x60] sm:$0xff] %v3189
    %3235 = vst [vmem:[#allocation3 + $0x68] sm:$0xff] %v3218
    %3236 = vst [vmem:[#allocation3 + $0x70] sm:$0xff] %v3191
    %3237 = vst [vmem:[#allocation3 + $0x78] sm:$0xff] %v3220
    %s3238 = smul.u32 0, 2
    %s3239 = smul.addr %s3238, 8
    %s3240 = scalar_lea.vmem [#allocation3], %s3239
    %v3241 = vld [vmem:[%s3240] sm:$0xff]
    %v3242 = vld [vmem:[%s3240 + $0x8] sm:$0xff]
    %v3243 = vld [vmem:[#allocation18] sm:$0xff]
    %v3244 = vld [vmem:[#allocation18 + $0x8] sm:$0xff]
    %v3245 = vld [vmem:[#allocation18 + $0x10] sm:$0xff]
    %v3246 = vld [vmem:[#allocation18 + $0x18] sm:$0xff]
    %v3247 = vld [vmem:[#allocation18 + $0x20] sm:$0xff]
    %v3248 = vld [vmem:[#allocation18 + $0x28] sm:$0xff]
    %v3249 = vld [vmem:[#allocation18 + $0x30] sm:$0xff]
    %v3250 = vld [vmem:[#allocation18 + $0x38] sm:$0xff]
    %v3259 = vunpack.c.l.b16 %v3243
    %v3260 = vunpack.c.h.b16 %v3243
    %v3261 = vunpack.c.l.b16 %v3244
    %v3262 = vunpack.c.h.b16 %v3244
    %v3263 = vunpack.c.l.b16 %v3245
    %v3264 = vunpack.c.h.b16 %v3245
    %v3265 = vunpack.c.l.b16 %v3246
    %v3266 = vunpack.c.h.b16 %v3246
    %v3267 = vunpack.c.l.b16 %v3247
    %v3268 = vunpack.c.h.b16 %v3247
    %v3269 = vunpack.c.l.b16 %v3248
    %v3270 = vunpack.c.h.b16 %v3248
    %v3271 = vunpack.c.l.b16 %v3249
    %v3272 = vunpack.c.h.b16 %v3249
    %v3273 = vunpack.c.l.b16 %v3250
    %v3274 = vunpack.c.h.b16 %v3250
    %v3275 = vpack.c.b16 %v3261, %v3259
    %v3276 = vpack.c.b16 %v3262, %v3260
    %v3277 = vpack.c.b16 %v3265, %v3263
    %v3278 = vpack.c.b16 %v3266, %v3264
    %v3279 = vpack.c.b16 %v3269, %v3267
    %v3280 = vpack.c.b16 %v3270, %v3268
    %v3281 = vpack.c.b16 %v3273, %v3271
    %v3282 = vpack.c.b16 %v3274, %v3272
    %vm3291 = vcmask 523264
    %v3293 = vsel %vm3291, 0, 0
    %3295 = vmatpush.bf16.msra.mxu0 0
    %3296 = vmatpush.bf16.msra.mxu0 0
    %3297 = vmatpush.bf16.msra.mxu0 0
    %3298 = vmatpush.bf16.msra.mxu0 0
    %3299 = vmatpush.bf16.msra.mxu0 %v3281
    %3300 = vmatpush.bf16.msra.mxu0 %v3279
    %3301 = vmatpush.bf16.msra.mxu0 %v3277
    %3302 = vmatpush.bf16.msra.mxu0 %v3275
    %3303 = vmatmul.bf16.gmra.mxu0 %v3293
    %v3304 = vpop.f32.mrf.mxu0
    %v3305 = vadd.f32 0.0, %v3304
    %v3306 = vpop.f32.mrf.mxu0
    %3307 = vdwg.mxu0
    %3308 = vmatpush.bf16.msra.mxu0 0
    %3309 = vmatpush.bf16.msra.mxu0 0
    %3310 = vmatpush.bf16.msra.mxu0 0
    %3311 = vmatpush.bf16.msra.mxu0 0
    %3312 = vmatpush.bf16.msra.mxu0 %v3282
    %3313 = vmatpush.bf16.msra.mxu0 %v3280
    %3314 = vmatpush.bf16.msra.mxu0 %v3278
    %3315 = vmatpush.bf16.msra.mxu0 %v3276
    %3316 = vmatmul.bf16.gmra.mxu0 %v3293
    %v3317 = vpop.f32.mrf.mxu0
    %v3318 = vadd.f32 0.0, %v3317
    %v3319 = vpop.f32.mrf.mxu0
    %3320 = vdwg.mxu0
    %v3321 = vadd.f32 %v3241, %v3305
    %v3322 = vadd.f32 %v3242, %v3318
    %v3323 = vxor.u32 %v3321, 2147483648
    %v3324 = vmul.f32 %v3323, 1.442695
    %v3325 = vpow.pop %v3324
    %v3326 = vadd.f32 %v3325, 1.0
    %v3327 = vrcp.pop %v3326
    %v3328 = vmul.f32 %v3326, %v3327
    %v3329 = vsub.f32 1.0, %v3328
    %v3330 = vmul.f32 %v3327, %v3329
    %v3331 = vadd.f32 %v3327, %v3330
    %vm3332 = vweird.f32 %v3326
    %vm3333 = vweird.f32 %v3327
    %vm3334 = vmor %vm3332, %vm3333
    %v3335 = vsel %vm3334, %v3327, %v3331
    %v3336 = vand.u32 2147483647, %v3326
    %vm3337 = vcmp.eq.f32.partialorder %v3336, 8.507059e+37
    %v3338 = vand.u32 %v3326, 2147483648
    %v3339 = vor.u32 1.1754944e-38, %v3338
    %v3340 = vsel %vm3337, %v3339, %v3335
    %v3341 = vmul.f32 1.0, %v3340
    %v3342 = vtanh.pop %v3322
    %v3343 = vxor.u32 %v3322, 2147483648
    %v3344 = vmul.f32 %v3343, 1.442695
    %v3345 = vpow.pop %v3344
    %v3346 = vadd.f32 %v3345, 1.0
    %v3347 = vrcp.pop %v3346
    %v3348 = vmul.f32 %v3346, %v3347
    %v3349 = vsub.f32 1.0, %v3348
    %v3350 = vmul.f32 %v3347, %v3349
    %v3351 = vadd.f32 %v3347, %v3350
    %vm3352 = vweird.f32 %v3346
    %vm3353 = vweird.f32 %v3347
    %vm3354 = vmor %vm3352, %vm3353
    %v3355 = vsel %vm3354, %v3347, %v3351
    %v3356 = vand.u32 2147483647, %v3346
    %vm3357 = vcmp.eq.f32.partialorder %v3356, 8.507059e+37
    %v3358 = vand.u32 %v3346, 2147483648
    %v3359 = vor.u32 1.1754944e-38, %v3358
    %v3360 = vsel %vm3357, %v3359, %v3355
    %v3361 = vmul.f32 1.0, %v3360
    %v3362 = vmul.f32 %v3341, 0.0
    %v3363 = vmul.f32 %v3341, %v3342
    %3365 = vrot.lane.b32.xlu0 %v3363, 64
    %v3366 = vpop.permute.xlu0 %3365
    %v3368 = vadd.f32 %v3362, %v3366
    %v3369 = vtanh.pop %v3368
    %v3370 = vmul.f32 %v3361, %v3369
    %3372 = vrot.lane.b32.xlu0 %v3370, 64
    %v3373 = vpop.permute.xlu0 %3372
    %3375 = vst.msk [vmem:[#allocation7] sm:$0xff] %vm3291, %v3373
    %v3376 = vld [vmem:[#allocation10] sm:$0xff]
    %v3377 = vmul.f32 %v3370, 0.5
    %v3378 = vmul.f32 %v3377, 1.442695
    %v3379 = vpow.pop %v3378
    %3381 = vrot.lane.b32.xlu0 %v3379, 32
    %v3382 = vpop.permute.xlu0 %3381
    %v3384 = vmul.f32 %v3376, %v3382
    %3386 = vrot.lane.b32.xlu0 %v3384, 64
    %v3387 = vpop.permute.xlu0 %3386
    %v3389 = vadd.f32 %v3370, %v3387
    %v3390 = vpack.c.bf16 %v3389, %v3389
    %3392 = vrot.lane.b32.xlu0 %v3390, 64
    %v3393 = vpop.permute.xlu0 %3392
    %vm3395 = vcmask 257024
    %3396 = vst.msk [vmem:[#allocation6] sm:$0xf] %vm3395, %v3393
    %s3397 = smul.u32 1, 2
    %s3398 = smul.addr %s3397, 8
    %s3399 = scalar_lea.vmem [#allocation3], %s3398
    %v3400 = vld [vmem:[%s3399] sm:$0xff]
    %v3401 = vld [vmem:[%s3399 + $0x8] sm:$0xff]
    %v3402 = vpack.c.bf16 %v3370, %v3370
    %v3403 = vld [vmem:[#allocation18] sm:$0xff]
    %v3404 = vld [vmem:[#allocation18 + $0x8] sm:$0xff]
    %v3405 = vld [vmem:[#allocation18 + $0x10] sm:$0xff]
    %v3406 = vld [vmem:[#allocation18 + $0x18] sm:$0xff]
    %v3407 = vld [vmem:[#allocation18 + $0x20] sm:$0xff]
    %v3408 = vld [vmem:[#allocation18 + $0x28] sm:$0xff]
    %v3409 = vld [vmem:[#allocation18 + $0x30] sm:$0xff]
    %v3410 = vld [vmem:[#allocation18 + $0x38] sm:$0xff]
    %3412 = vrot.lane.b32.xlu0 %v3402, 64
    %v3413 = vpop.permute.xlu0 %3412
    %v3422 = vunpack.c.l.b16 %v3403
    %v3423 = vunpack.c.h.b16 %v3403
    %v3424 = vunpack.c.l.b16 %v3404
    %v3425 = vunpack.c.h.b16 %v3404
    %v3426 = vunpack.c.l.b16 %v3405
    %v3427 = vunpack.c.h.b16 %v3405
    %v3428 = vunpack.c.l.b16 %v3406
    %v3429 = vunpack.c.h.b16 %v3406
    %v3430 = vunpack.c.l.b16 %v3407
    %v3431 = vunpack.c.h.b16 %v3407
    %v3432 = vunpack.c.l.b16 %v3408
    %v3433 = vunpack.c.h.b16 %v3408
    %v3434 = vunpack.c.l.b16 %v3409
    %v3435 = vunpack.c.h.b16 %v3409
    %v3436 = vunpack.c.l.b16 %v3410
    %v3437 = vunpack.c.h.b16 %v3410
    %v3438 = vpack.c.b16 %v3424, %v3422
    %v3439 = vpack.c.b16 %v3425, %v3423
    %v3440 = vpack.c.b16 %v3428, %v3426
    %v3441 = vpack.c.b16 %v3429, %v3427
    %v3442 = vpack.c.b16 %v3432, %v3430
    %v3443 = vpack.c.b16 %v3433, %v3431
    %v3444 = vpack.c.b16 %v3436, %v3434
    %v3445 = vpack.c.b16 %v3437, %v3435
    %v3455 = vsel %vm3291, %v3413, 0
    %3457 = vmatpush.bf16.msra.mxu0 0
    %3458 = vmatpush.bf16.msra.mxu0 0
    %3459 = vmatpush.bf16.msra.mxu0 0
    %3460 = vmatpush.bf16.msra.mxu0 0
    %3461 = vmatpush.bf16.msra.mxu0 %v3444
    %3462 = vmatpush.bf16.msra.mxu0 %v3442
    %3463 = vmatpush.bf16.msra.mxu0 %v3440
    %3464 = vmatpush.bf16.msra.mxu0 %v3438
    %3465 = vmatmul.bf16.gmra.mxu0 %v3455
    %v3466 = vpop.f32.mrf.mxu0
    %v3467 = vadd.f32 0.0, %v3466
    %v3468 = vpop.f32.mrf.mxu0
    %3469 = vdwg.mxu0
    %3470 = vmatpush.bf16.msra.mxu0 0
    %3471 = vmatpush.bf16.msra.mxu0 0
    %3472 = vmatpush.bf16.msra.mxu0 0
    %3473 = vmatpush.bf16.msra.mxu0 0
    %3474 = vmatpush.bf16.msra.mxu0 %v3445
    %3475 = vmatpush.bf16.msra.mxu0 %v3443
    %3476 = vmatpush.bf16.msra.mxu0 %v3441
    %3477 = vmatpush.bf16.msra.mxu0 %v3439
    %3478 = vmatmul.bf16.gmra.mxu0 %v3455
    %v3479 = vpop.f32.mrf.mxu0
    %v3480 = vadd.f32 0.0, %v3479
    %v3481 = vpop.f32.mrf.mxu0
    %3482 = vdwg.mxu0
    %v3483 = vadd.f32 %v3400, %v3467
    %v3484 = vadd.f32 %v3401, %v3480
    %v3485 = vxor.u32 %v3483, 2147483648
    %v3486 = vmul.f32 %v3485, 1.442695
    %v3487 = vpow.pop %v3486
    %v3488 = vadd.f32 %v3487, 1.0
    %v3489 = vrcp.pop %v3488
    %v3490 = vmul.f32 %v3488, %v3489
    %v3491 = vsub.f32 1.0, %v3490
    %v3492 = vmul.f32 %v3489, %v3491
    %v3493 = vadd.f32 %v3489, %v3492
    %vm3494 = vweird.f32 %v3488
    %vm3495 = vweird.f32 %v3489
    %vm3496 = vmor %vm3494, %vm3495
    %v3497 = vsel %vm3496, %v3489, %v3493
    %v3498 = vand.u32 2147483647, %v3488
    %vm3499 = vcmp.eq.f32.partialorder %v3498, 8.507059e+37
    %v3500 = vand.u32 %v3488, 2147483648
    %v3501 = vor.u32 1.1754944e-38, %v3500
    %v3502 = vsel %vm3499, %v3501, %v3497
    %v3503 = vmul.f32 1.0, %v3502
    %v3504 = vtanh.pop %v3484
    %v3505 = vxor.u32 %v3484, 2147483648
    %v3506 = vmul.f32 %v3505, 1.442695
    %v3507 = vpow.pop %v3506
    %v3508 = vadd.f32 %v3507, 1.0
    %v3509 = vrcp.pop %v3508
    %v3510 = vmul.f32 %v3508, %v3509
    %v3511 = vsub.f32 1.0, %v3510
    %v3512 = vmul.f32 %v3509, %v3511
    %v3513 = vadd.f32 %v3509, %v3512
    %vm3514 = vweird.f32 %v3508
    %vm3515 = vweird.f32 %v3509
    %vm3516 = vmor %vm3514, %vm3515
    %v3517 = vsel %vm3516, %v3509, %v3513
    %v3518 = vand.u32 2147483647, %v3508
    %vm3519 = vcmp.eq.f32.partialorder %v3518, 8.507059e+37
    %v3520 = vand.u32 %v3508, 2147483648
    %v3521 = vor.u32 1.1754944e-38, %v3520
    %v3522 = vsel %vm3519, %v3521, %v3517
    %v3523 = vmul.f32 1.0, %v3522
    %v3524 = vmul.f32 %v3503, %v3368
    %v3525 = vmul.f32 %v3503, %v3504
    %3527 = vrot.lane.b32.xlu0 %v3525, 64
    %v3528 = vpop.permute.xlu0 %3527
    %v3530 = vadd.f32 %v3524, %v3528
    %v3531 = vtanh.pop %v3530
    %v3532 = vmul.f32 %v3523, %v3531
    %3534 = vrot.lane.b32.xlu0 %v3532, 64
    %v3535 = vpop.permute.xlu0 %3534
    %s3537 = scalar_lea.vmem [#allocation7], 8
    %3538 = vst.msk [vmem:[%s3537] sm:$0xff] %vm3291, %v3535
    %s3539 = scalar_lea.vmem [#allocation10], 8
    %v3540 = vld [vmem:[%s3539] sm:$0xff]
    %v3541 = vmul.f32 %v3532, 0.5
    %v3542 = vmul.f32 %v3541, 1.442695
    %v3543 = vpow.pop %v3542
    %3545 = vrot.lane.b32.xlu0 %v3543, 32
    %v3546 = vpop.permute.xlu0 %3545
    %v3548 = vmul.f32 %v3540, %v3546
    %3550 = vrot.lane.b32.xlu0 %v3548, 64
    %v3551 = vpop.permute.xlu0 %3550
    %v3553 = vadd.f32 %v3532, %v3551
    %v3554 = vpack.c.bf16 %v3553, %v3553
    %3556 = vrot.lane.b32.xlu0 %v3554, 64
    %v3557 = vpop.permute.xlu0 %3556
    %s3559 = scalar_lea.vmem [#allocation6], 4
    %3560 = vst.msk [vmem:[%s3559] sm:$0xf] %vm3395, %v3557
    %s3561 = smul.u32 2, 2
    %s3562 = smul.addr %s3561, 8
    %s3563 = scalar_lea.vmem [#allocation3], %s3562
    %v3564 = vld [vmem:[%s3563] sm:$0xff]
    %v3565 = vld [vmem:[%s3563 + $0x8] sm:$0xff]
    %v3566 = vpack.c.bf16 %v3532, %v3532
    %v3567 = vld [vmem:[#allocation18] sm:$0xff]
    %v3568 = vld [vmem:[#allocation18 + $0x8] sm:$0xff]
    %v3569 = vld [vmem:[#allocation18 + $0x10] sm:$0xff]
    %v3570 = vld [vmem:[#allocation18 + $0x18] sm:$0xff]
    %v3571 = vld [vmem:[#allocation18 + $0x20] sm:$0xff]
    %v3572 = vld [vmem:[#allocation18 + $0x28] sm:$0xff]
    %v3573 = vld [vmem:[#allocation18 + $0x30] sm:$0xff]
    %v3574 = vld [vmem:[#allocation18 + $0x38] sm:$0xff]
    %3576 = vrot.lane.b32.xlu0 %v3566, 64
    %v3577 = vpop.permute.xlu0 %3576
    %v3586 = vunpack.c.l.b16 %v3567
    %v3587 = vunpack.c.h.b16 %v3567
    %v3588 = vunpack.c.l.b16 %v3568
    %v3589 = vunpack.c.h.b16 %v3568
    %v3590 = vunpack.c.l.b16 %v3569
    %v3591 = vunpack.c.h.b16 %v3569
    %v3592 = vunpack.c.l.b16 %v3570
    %v3593 = vunpack.c.h.b16 %v3570
    %v3594 = vunpack.c.l.b16 %v3571
    %v3595 = vunpack.c.h.b16 %v3571
    %v3596 = vunpack.c.l.b16 %v3572
    %v3597 = vunpack.c.h.b16 %v3572
    %v3598 = vunpack.c.l.b16 %v3573
    %v3599 = vunpack.c.h.b16 %v3573
    %v3600 = vunpack.c.l.b16 %v3574
    %v3601 = vunpack.c.h.b16 %v3574
    %v3602 = vpack.c.b16 %v3588, %v3586
    %v3603 = vpack.c.b16 %v3589, %v3587
    %v3604 = vpack.c.b16 %v3592, %v3590
    %v3605 = vpack.c.b16 %v3593, %v3591
    %v3606 = vpack.c.b16 %v3596, %v3594
    %v3607 = vpack.c.b16 %v3597, %v3595
    %v3608 = vpack.c.b16 %v3600, %v3598
    %v3609 = vpack.c.b16 %v3601, %v3599
    %v3619 = vsel %vm3291, %v3577, 0
    %3621 = vmatpush.bf16.msra.mxu0 0
    %3622 = vmatpush.bf16.msra.mxu0 0
    %3623 = vmatpush.bf16.msra.mxu0 0
    %3624 = vmatpush.bf16.msra.mxu0 0
    %3625 = vmatpush.bf16.msra.mxu0 %v3608
    %3626 = vmatpush.bf16.msra.mxu0 %v3606
    %3627 = vmatpush.bf16.msra.mxu0 %v3604
    %3628 = vmatpush.bf16.msra.mxu0 %v3602
    %3629 = vmatmul.bf16.gmra.mxu0 %v3619
    %v3630 = vpop.f32.mrf.mxu0
    %v3631 = vadd.f32 0.0, %v3630
    %v3632 = vpop.f32.mrf.mxu0
    %3633 = vdwg.mxu0
    %3634 = vmatpush.bf16.msra.mxu0 0
    %3635 = vmatpush.bf16.msra.mxu0 0
    %3636 = vmatpush.bf16.msra.mxu0 0
    %3637 = vmatpush.bf16.msra.mxu0 0
    %3638 = vmatpush.bf16.msra.mxu0 %v3609
    %3639 = vmatpush.bf16.msra.mxu0 %v3607
    %3640 = vmatpush.bf16.msra.mxu0 %v3605
    %3641 = vmatpush.bf16.msra.mxu0 %v3603
    %3642 = vmatmul.bf16.gmra.mxu0 %v3619
    %v3643 = vpop.f32.mrf.mxu0
    %v3644 = vadd.f32 0.0, %v3643
    %v3645 = vpop.f32.mrf.mxu0
    %3646 = vdwg.mxu0
    %v3647 = vadd.f32 %v3564, %v3631
    %v3648 = vadd.f32 %v3565, %v3644
    %v3649 = vxor.u32 %v3647, 2147483648
    %v3650 = vmul.f32 %v3649, 1.442695
    %v3651 = vpow.pop %v3650
    %v3652 = vadd.f32 %v3651, 1.0
    %v3653 = vrcp.pop %v3652
    %v3654 = vmul.f32 %v3652, %v3653
    %v3655 = vsub.f32 1.0, %v3654
    %v3656 = vmul.f32 %v3653, %v3655
    %v3657 = vadd.f32 %v3653, %v3656
    %vm3658 = vweird.f32 %v3652
    %vm3659 = vweird.f32 %v3653
    %vm3660 = vmor %vm3658, %vm3659
    %v3661 = vsel %vm3660, %v3653, %v3657
    %v3662 = vand.u32 2147483647, %v3652
    %vm3663 = vcmp.eq.f32.partialorder %v3662, 8.507059e+37
    %v3664 = vand.u32 %v3652, 2147483648
    %v3665 = vor.u32 1.1754944e-38, %v3664
    %v3666 = vsel %vm3663, %v3665, %v3661
    %v3667 = vmul.f32 1.0, %v3666
    %v3668 = vtanh.pop %v3648
    %v3669 = vxor.u32 %v3648, 2147483648
    %v3670 = vmul.f32 %v3669, 1.442695
    %v3671 = vpow.pop %v3670
    %v3672 = vadd.f32 %v3671, 1.0
    %v3673 = vrcp.pop %v3672
    %v3674 = vmul.f32 %v3672, %v3673
    %v3675 = vsub.f32 1.0, %v3674
    %v3676 = vmul.f32 %v3673, %v3675
    %v3677 = vadd.f32 %v3673, %v3676
    %vm3678 = vweird.f32 %v3672
    %vm3679 = vweird.f32 %v3673
    %vm3680 = vmor %vm3678, %vm3679
    %v3681 = vsel %vm3680, %v3673, %v3677
    %v3682 = vand.u32 2147483647, %v3672
    %vm3683 = vcmp.eq.f32.partialorder %v3682, 8.507059e+37
    %v3684 = vand.u32 %v3672, 2147483648
    %v3685 = vor.u32 1.1754944e-38, %v3684
    %v3686 = vsel %vm3683, %v3685, %v3681
    %v3687 = vmul.f32 1.0, %v3686
    %v3688 = vmul.f32 %v3667, %v3530
    %v3689 = vmul.f32 %v3667, %v3668
    %3691 = vrot.lane.b32.xlu0 %v3689, 64
    %v3692 = vpop.permute.xlu0 %3691
    %v3694 = vadd.f32 %v3688, %v3692
    %v3695 = vtanh.pop %v3694
    %v3696 = vmul.f32 %v3687, %v3695
    %3698 = vrot.lane.b32.xlu0 %v3696, 64
    %v3699 = vpop.permute.xlu0 %3698
    %s3701 = scalar_lea.vmem [#allocation7], 16
    %3702 = vst.msk [vmem:[%s3701] sm:$0xff] %vm3291, %v3699
    %s3703 = scalar_lea.vmem [#allocation10], 16
    %v3704 = vld [vmem:[%s3703] sm:$0xff]
    %v3705 = vmul.f32 %v3696, 0.5
    %v3706 = vmul.f32 %v3705, 1.442695
    %v3707 = vpow.pop %v3706
    %3709 = vrot.lane.b32.xlu0 %v3707, 32
    %v3710 = vpop.permute.xlu0 %3709
    %v3712 = vmul.f32 %v3704, %v3710
    %3714 = vrot.lane.b32.xlu0 %v3712, 64
    %v3715 = vpop.permute.xlu0 %3714
    %v3717 = vadd.f32 %v3696, %v3715
    %v3718 = vpack.c.bf16 %v3717, %v3717
    %3720 = vrot.lane.b32.xlu0 %v3718, 64
    %v3721 = vpop.permute.xlu0 %3720
    %s3723 = scalar_lea.vmem [#allocation6], 8
    %3724 = vst.msk [vmem:[%s3723] sm:$0xf] %vm3395, %v3721
    %s3725 = smul.u32 3, 2
    %s3726 = smul.addr %s3725, 8
    %s3727 = scalar_lea.vmem [#allocation3], %s3726
    %v3728 = vld [vmem:[%s3727] sm:$0xff]
    %v3729 = vld [vmem:[%s3727 + $0x8] sm:$0xff]
    %v3730 = vpack.c.bf16 %v3696, %v3696
    %v3731 = vld [vmem:[#allocation18] sm:$0xff]
    %v3732 = vld [vmem:[#allocation18 + $0x8] sm:$0xff]
    %v3733 = vld [vmem:[#allocation18 + $0x10] sm:$0xff]
    %v3734 = vld [vmem:[#allocation18 + $0x18] sm:$0xff]
    %v3735 = vld [vmem:[#allocation18 + $0x20] sm:$0xff]
    %v3736 = vld [vmem:[#allocation18 + $0x28] sm:$0xff]
    %v3737 = vld [vmem:[#allocation18 + $0x30] sm:$0xff]
    %v3738 = vld [vmem:[#allocation18 + $0x38] sm:$0xff]
    %3740 = vrot.lane.b32.xlu0 %v3730, 64
    %v3741 = vpop.permute.xlu0 %3740
    %v3750 = vunpack.c.l.b16 %v3731
    %v3751 = vunpack.c.h.b16 %v3731
    %v3752 = vunpack.c.l.b16 %v3732
    %v3753 = vunpack.c.h.b16 %v3732
    %v3754 = vunpack.c.l.b16 %v3733
    %v3755 = vunpack.c.h.b16 %v3733
    %v3756 = vunpack.c.l.b16 %v3734
    %v3757 = vunpack.c.h.b16 %v3734
    %v3758 = vunpack.c.l.b16 %v3735
    %v3759 = vunpack.c.h.b16 %v3735
    %v3760 = vunpack.c.l.b16 %v3736
    %v3761 = vunpack.c.h.b16 %v3736
    %v3762 = vunpack.c.l.b16 %v3737
    %v3763 = vunpack.c.h.b16 %v3737
    %v3764 = vunpack.c.l.b16 %v3738
    %v3765 = vunpack.c.h.b16 %v3738
    %v3766 = vpack.c.b16 %v3752, %v3750
    %v3767 = vpack.c.b16 %v3753, %v3751
    %v3768 = vpack.c.b16 %v3756, %v3754
    %v3769 = vpack.c.b16 %v3757, %v3755
    %v3770 = vpack.c.b16 %v3760, %v3758
    %v3771 = vpack.c.b16 %v3761, %v3759
    %v3772 = vpack.c.b16 %v3764, %v3762
    %v3773 = vpack.c.b16 %v3765, %v3763
    %v3783 = vsel %vm3291, %v3741, 0
    %3785 = vmatpush.bf16.msra.mxu0 0
    %3786 = vmatpush.bf16.msra.mxu0 0
    %3787 = vmatpush.bf16.msra.mxu0 0
    %3788 = vmatpush.bf16.msra.mxu0 0
    %3789 = vmatpush.bf16.msra.mxu0 %v3772
    %3790 = vmatpush.bf16.msra.mxu0 %v3770
    %3791 = vmatpush.bf16.msra.mxu0 %v3768
    %3792 = vmatpush.bf16.msra.mxu0 %v3766
    %3793 = vmatmul.bf16.gmra.mxu0 %v3783
    %v3794 = vpop.f32.mrf.mxu0
    %v3795 = vadd.f32 0.0, %v3794
    %v3796 = vpop.f32.mrf.mxu0
    %3797 = vdwg.mxu0
    %3798 = vmatpush.bf16.msra.mxu0 0
    %3799 = vmatpush.bf16.msra.mxu0 0
    %3800 = vmatpush.bf16.msra.mxu0 0
    %3801 = vmatpush.bf16.msra.mxu0 0
    %3802 = vmatpush.bf16.msra.mxu0 %v3773
    %3803 = vmatpush.bf16.msra.mxu0 %v3771
    %3804 = vmatpush.bf16.msra.mxu0 %v3769
    %3805 = vmatpush.bf16.msra.mxu0 %v3767
    %3806 = vmatmul.bf16.gmra.mxu0 %v3783
    %v3807 = vpop.f32.mrf.mxu0
    %v3808 = vadd.f32 0.0, %v3807
    %v3809 = vpop.f32.mrf.mxu0
    %3810 = vdwg.mxu0
    %v3811 = vadd.f32 %v3728, %v3795
    %v3812 = vadd.f32 %v3729, %v3808
    %v3813 = vxor.u32 %v3811, 2147483648
    %v3814 = vmul.f32 %v3813, 1.442695
    %v3815 = vpow.pop %v3814
    %v3816 = vadd.f32 %v3815, 1.0
    %v3817 = vrcp.pop %v3816
    %v3818 = vmul.f32 %v3816, %v3817
    %v3819 = vsub.f32 1.0, %v3818
    %v3820 = vmul.f32 %v3817, %v3819
    %v3821 = vadd.f32 %v3817, %v3820
    %vm3822 = vweird.f32 %v3816
    %vm3823 = vweird.f32 %v3817
    %vm3824 = vmor %vm3822, %vm3823
    %v3825 = vsel %vm3824, %v3817, %v3821
    %v3826 = vand.u32 2147483647, %v3816
    %vm3827 = vcmp.eq.f32.partialorder %v3826, 8.507059e+37
    %v3828 = vand.u32 %v3816, 2147483648
    %v3829 = vor.u32 1.1754944e-38, %v3828
    %v3830 = vsel %vm3827, %v3829, %v3825
    %v3831 = vmul.f32 1.0, %v3830
    %v3832 = vtanh.pop %v3812
    %v3833 = vxor.u32 %v3812, 2147483648
    %v3834 = vmul.f32 %v3833, 1.442695
    %v3835 = vpow.pop %v3834
    %v3836 = vadd.f32 %v3835, 1.0
    %v3837 = vrcp.pop %v3836
    %v3838 = vmul.f32 %v3836, %v3837
    %v3839 = vsub.f32 1.0, %v3838
    %v3840 = vmul.f32 %v3837, %v3839
    %v3841 = vadd.f32 %v3837, %v3840
    %vm3842 = vweird.f32 %v3836
    %vm3843 = vweird.f32 %v3837
    %vm3844 = vmor %vm3842, %vm3843
    %v3845 = vsel %vm3844, %v3837, %v3841
    %v3846 = vand.u32 2147483647, %v3836
    %vm3847 = vcmp.eq.f32.partialorder %v3846, 8.507059e+37
    %v3848 = vand.u32 %v3836, 2147483648
    %v3849 = vor.u32 1.1754944e-38, %v3848
    %v3850 = vsel %vm3847, %v3849, %v3845
    %v3851 = vmul.f32 1.0, %v3850
    %v3852 = vmul.f32 %v3831, %v3694
    %v3853 = vmul.f32 %v3831, %v3832
    %3855 = vrot.lane.b32.xlu0 %v3853, 64
    %v3856 = vpop.permute.xlu0 %3855
    %v3858 = vadd.f32 %v3852, %v3856
    %v3859 = vtanh.pop %v3858
    %v3860 = vmul.f32 %v3851, %v3859
    %3862 = vrot.lane.b32.xlu0 %v3860, 64
    %v3863 = vpop.permute.xlu0 %3862
    %s3865 = scalar_lea.vmem [#allocation7], 24
    %3866 = vst.msk [vmem:[%s3865] sm:$0xff] %vm3291, %v3863
    %s3867 = scalar_lea.vmem [#allocation10], 24
    %v3868 = vld [vmem:[%s3867] sm:$0xff]
    %v3869 = vmul.f32 %v3860, 0.5
    %v3870 = vmul.f32 %v3869, 1.442695
    %v3871 = vpow.pop %v3870
    %3873 = vrot.lane.b32.xlu0 %v3871, 32
    %v3874 = vpop.permute.xlu0 %3873
    %v3876 = vmul.f32 %v3868, %v3874
    %3878 = vrot.lane.b32.xlu0 %v3876, 64
    %v3879 = vpop.permute.xlu0 %3878
    %v3881 = vadd.f32 %v3860, %v3879
    %v3882 = vpack.c.bf16 %v3881, %v3881
    %3884 = vrot.lane.b32.xlu0 %v3882, 64
    %v3885 = vpop.permute.xlu0 %3884
    %s3887 = scalar_lea.vmem [#allocation6], 12
    %3888 = vst.msk [vmem:[%s3887] sm:$0xf] %vm3395, %v3885
    %s3889 = smul.u32 4, 2
    %s3890 = smul.addr %s3889, 8
    %s3891 = scalar_lea.vmem [#allocation3], %s3890
    %v3892 = vld [vmem:[%s3891] sm:$0xff]
    %v3893 = vld [vmem:[%s3891 + $0x8] sm:$0xff]
    %v3894 = vpack.c.bf16 %v3860, %v3860
    %v3895 = vld [vmem:[#allocation18] sm:$0xff]
    %v3896 = vld [vmem:[#allocation18 + $0x8] sm:$0xff]
    %v3897 = vld [vmem:[#allocation18 + $0x10] sm:$0xff]
    %v3898 = vld [vmem:[#allocation18 + $0x18] sm:$0xff]
    %v3899 = vld [vmem:[#allocation18 + $0x20] sm:$0xff]
    %v3900 = vld [vmem:[#allocation18 + $0x28] sm:$0xff]
    %v3901 = vld [vmem:[#allocation18 + $0x30] sm:$0xff]
    %v3902 = vld [vmem:[#allocation18 + $0x38] sm:$0xff]
    %3904 = vrot.lane.b32.xlu0 %v3894, 64
    %v3905 = vpop.permute.xlu0 %3904
    %v3914 = vunpack.c.l.b16 %v3895
    %v3915 = vunpack.c.h.b16 %v3895
    %v3916 = vunpack.c.l.b16 %v3896
    %v3917 = vunpack.c.h.b16 %v3896
    %v3918 = vunpack.c.l.b16 %v3897
    %v3919 = vunpack.c.h.b16 %v3897
    %v3920 = vunpack.c.l.b16 %v3898
    %v3921 = vunpack.c.h.b16 %v3898
    %v3922 = vunpack.c.l.b16 %v3899
    %v3923 = vunpack.c.h.b16 %v3899
    %v3924 = vunpack.c.l.b16 %v3900
    %v3925 = vunpack.c.h.b16 %v3900
    %v3926 = vunpack.c.l.b16 %v3901
    %v3927 = vunpack.c.h.b16 %v3901
    %v3928 = vunpack.c.l.b16 %v3902
    %v3929 = vunpack.c.h.b16 %v3902
    %v3930 = vpack.c.b16 %v3916, %v3914
    %v3931 = vpack.c.b16 %v3917, %v3915
    %v3932 = vpack.c.b16 %v3920, %v3918
    %v3933 = vpack.c.b16 %v3921, %v3919
    %v3934 = vpack.c.b16 %v3924, %v3922
    %v3935 = vpack.c.b16 %v3925, %v3923
    %v3936 = vpack.c.b16 %v3928, %v3926
    %v3937 = vpack.c.b16 %v3929, %v3927
    %v3947 = vsel %vm3291, %v3905, 0
    %3949 = vmatpush.bf16.msra.mxu0 0
    %3950 = vmatpush.bf16.msra.mxu0 0
    %3951 = vmatpush.bf16.msra.mxu0 0
    %3952 = vmatpush.bf16.msra.mxu0 0
    %3953 = vmatpush.bf16.msra.mxu0 %v3936
    %3954 = vmatpush.bf16.msra.mxu0 %v3934
    %3955 = vmatpush.bf16.msra.mxu0 %v3932
    %3956 = vmatpush.bf16.msra.mxu0 %v3930
    %3957 = vmatmul.bf16.gmra.mxu0 %v3947
    %v3958 = vpop.f32.mrf.mxu0
    %v3959 = vadd.f32 0.0, %v3958
    %v3960 = vpop.f32.mrf.mxu0
    %3961 = vdwg.mxu0
    %3962 = vmatpush.bf16.msra.mxu0 0
    %3963 = vmatpush.bf16.msra.mxu0 0
    %3964 = vmatpush.bf16.msra.mxu0 0
    %3965 = vmatpush.bf16.msra.mxu0 0
    %3966 = vmatpush.bf16.msra.mxu0 %v3937
    %3967 = vmatpush.bf16.msra.mxu0 %v3935
    %3968 = vmatpush.bf16.msra.mxu0 %v3933
    %3969 = vmatpush.bf16.msra.mxu0 %v3931
    %3970 = vmatmul.bf16.gmra.mxu0 %v3947
    %v3971 = vpop.f32.mrf.mxu0
    %v3972 = vadd.f32 0.0, %v3971
    %v3973 = vpop.f32.mrf.mxu0
    %3974 = vdwg.mxu0
    %v3975 = vadd.f32 %v3892, %v3959
    %v3976 = vadd.f32 %v3893, %v3972
    %v3977 = vxor.u32 %v3975, 2147483648
    %v3978 = vmul.f32 %v3977, 1.442695
    %v3979 = vpow.pop %v3978
    %v3980 = vadd.f32 %v3979, 1.0
    %v3981 = vrcp.pop %v3980
    %v3982 = vmul.f32 %v3980, %v3981
    %v3983 = vsub.f32 1.0, %v3982
    %v3984 = vmul.f32 %v3981, %v3983
    %v3985 = vadd.f32 %v3981, %v3984
    %vm3986 = vweird.f32 %v3980
    %vm3987 = vweird.f32 %v3981
    %vm3988 = vmor %vm3986, %vm3987
    %v3989 = vsel %vm3988, %v3981, %v3985
    %v3990 = vand.u32 2147483647, %v3980
    %vm3991 = vcmp.eq.f32.partialorder %v3990, 8.507059e+37
    %v3992 = vand.u32 %v3980, 2147483648
    %v3993 = vor.u32 1.1754944e-38, %v3992
    %v3994 = vsel %vm3991, %v3993, %v3989
    %v3995 = vmul.f32 1.0, %v3994
    %v3996 = vtanh.pop %v3976
    %v3997 = vxor.u32 %v3976, 2147483648
    %v3998 = vmul.f32 %v3997, 1.442695
    %v3999 = vpow.pop %v3998
    %v4000 = vadd.f32 %v3999, 1.0
    %v4001 = vrcp.pop %v4000
    %v4002 = vmul.f32 %v4000, %v4001
    %v4003 = vsub.f32 1.0, %v4002
    %v4004 = vmul.f32 %v4001, %v4003
    %v4005 = vadd.f32 %v4001, %v4004
    %vm4006 = vweird.f32 %v4000
    %vm4007 = vweird.f32 %v4001
    %vm4008 = vmor %vm4006, %vm4007
    %v4009 = vsel %vm4008, %v4001, %v4005
    %v4010 = vand.u32 2147483647, %v4000
    %vm4011 = vcmp.eq.f32.partialorder %v4010, 8.507059e+37
    %v4012 = vand.u32 %v4000, 2147483648
    %v4013 = vor.u32 1.1754944e-38, %v4012
    %v4014 = vsel %vm4011, %v4013, %v4009
    %v4015 = vmul.f32 1.0, %v4014
    %v4016 = vmul.f32 %v3995, %v3858
    %v4017 = vmul.f32 %v3995, %v3996
    %4019 = vrot.lane.b32.xlu0 %v4017, 64
    %v4020 = vpop.permute.xlu0 %4019
    %v4022 = vadd.f32 %v4016, %v4020
    %v4023 = vtanh.pop %v4022
    %v4024 = vmul.f32 %v4015, %v4023
    %4026 = vrot.lane.b32.xlu0 %v4024, 64
    %v4027 = vpop.permute.xlu0 %4026
    %s4029 = scalar_lea.vmem [#allocation7], 32
    %4030 = vst.msk [vmem:[%s4029] sm:$0xff] %vm3291, %v4027
    %s4031 = scalar_lea.vmem [#allocation10], 32
    %v4032 = vld [vmem:[%s4031] sm:$0xff]
    %v4033 = vmul.f32 %v4024, 0.5
    %v4034 = vmul.f32 %v4033, 1.442695
    %v4035 = vpow.pop %v4034
    %4037 = vrot.lane.b32.xlu0 %v4035, 32
    %v4038 = vpop.permute.xlu0 %4037
    %v4040 = vmul.f32 %v4032, %v4038
    %4042 = vrot.lane.b32.xlu0 %v4040, 64
    %v4043 = vpop.permute.xlu0 %4042
    %v4045 = vadd.f32 %v4024, %v4043
    %v4046 = vpack.c.bf16 %v4045, %v4045
    %4048 = vrot.lane.b32.xlu0 %v4046, 64
    %v4049 = vpop.permute.xlu0 %4048
    %s4051 = scalar_lea.vmem [#allocation6], 16
    %4052 = vst.msk [vmem:[%s4051] sm:$0xf] %vm3395, %v4049
    %s4053 = smul.u32 5, 2
    %s4054 = smul.addr %s4053, 8
    %s4055 = scalar_lea.vmem [#allocation3], %s4054
    %v4056 = vld [vmem:[%s4055] sm:$0xff]
    %v4057 = vld [vmem:[%s4055 + $0x8] sm:$0xff]
    %v4058 = vpack.c.bf16 %v4024, %v4024
    %v4059 = vld [vmem:[#allocation18] sm:$0xff]
    %v4060 = vld [vmem:[#allocation18 + $0x8] sm:$0xff]
    %v4061 = vld [vmem:[#allocation18 + $0x10] sm:$0xff]
    %v4062 = vld [vmem:[#allocation18 + $0x18] sm:$0xff]
    %v4063 = vld [vmem:[#allocation18 + $0x20] sm:$0xff]
    %v4064 = vld [vmem:[#allocation18 + $0x28] sm:$0xff]
    %v4065 = vld [vmem:[#allocation18 + $0x30] sm:$0xff]
    %v4066 = vld [vmem:[#allocation18 + $0x38] sm:$0xff]
    %4068 = vrot.lane.b32.xlu0 %v4058, 64
    %v4069 = vpop.permute.xlu0 %4068
    %v4078 = vunpack.c.l.b16 %v4059
    %v4079 = vunpack.c.h.b16 %v4059
    %v4080 = vunpack.c.l.b16 %v4060
    %v4081 = vunpack.c.h.b16 %v4060
    %v4082 = vunpack.c.l.b16 %v4061
    %v4083 = vunpack.c.h.b16 %v4061
    %v4084 = vunpack.c.l.b16 %v4062
    %v4085 = vunpack.c.h.b16 %v4062
    %v4086 = vunpack.c.l.b16 %v4063
    %v4087 = vunpack.c.h.b16 %v4063
    %v4088 = vunpack.c.l.b16 %v4064
    %v4089 = vunpack.c.h.b16 %v4064
    %v4090 = vunpack.c.l.b16 %v4065
    %v4091 = vunpack.c.h.b16 %v4065
    %v4092 = vunpack.c.l.b16 %v4066
    %v4093 = vunpack.c.h.b16 %v4066
    %v4094 = vpack.c.b16 %v4080, %v4078
    %v4095 = vpack.c.b16 %v4081, %v4079
    %v4096 = vpack.c.b16 %v4084, %v4082
    %v4097 = vpack.c.b16 %v4085, %v4083
    %v4098 = vpack.c.b16 %v4088, %v4086
    %v4099 = vpack.c.b16 %v4089, %v4087
    %v4100 = vpack.c.b16 %v4092, %v4090
    %v4101 = vpack.c.b16 %v4093, %v4091
    %v4111 = vsel %vm3291, %v4069, 0
    %4113 = vmatpush.bf16.msra.mxu0 0
    %4114 = vmatpush.bf16.msra.mxu0 0
    %4115 = vmatpush.bf16.msra.mxu0 0
    %4116 = vmatpush.bf16.msra.mxu0 0
    %4117 = vmatpush.bf16.msra.mxu0 %v4100
    %4118 = vmatpush.bf16.msra.mxu0 %v4098
    %4119 = vmatpush.bf16.msra.mxu0 %v4096
    %4120 = vmatpush.bf16.msra.mxu0 %v4094
    %4121 = vmatmul.bf16.gmra.mxu0 %v4111
    %v4122 = vpop.f32.mrf.mxu0
    %v4123 = vadd.f32 0.0, %v4122
    %v4124 = vpop.f32.mrf.mxu0
    %4125 = vdwg.mxu0
    %4126 = vmatpush.bf16.msra.mxu0 0
    %4127 = vmatpush.bf16.msra.mxu0 0
    %4128 = vmatpush.bf16.msra.mxu0 0
    %4129 = vmatpush.bf16.msra.mxu0 0
    %4130 = vmatpush.bf16.msra.mxu0 %v4101
    %4131 = vmatpush.bf16.msra.mxu0 %v4099
    %4132 = vmatpush.bf16.msra.mxu0 %v4097
    %4133 = vmatpush.bf16.msra.mxu0 %v4095
    %4134 = vmatmul.bf16.gmra.mxu0 %v4111
    %v4135 = vpop.f32.mrf.mxu0
    %v4136 = vadd.f32 0.0, %v4135
    %v4137 = vpop.f32.mrf.mxu0
    %4138 = vdwg.mxu0
    %v4139 = vadd.f32 %v4056, %v4123
    %v4140 = vadd.f32 %v4057, %v4136
    %v4141 = vxor.u32 %v4139, 2147483648
    %v4142 = vmul.f32 %v4141, 1.442695
    %v4143 = vpow.pop %v4142
    %v4144 = vadd.f32 %v4143, 1.0
    %v4145 = vrcp.pop %v4144
    %v4146 = vmul.f32 %v4144, %v4145
    %v4147 = vsub.f32 1.0, %v4146
    %v4148 = vmul.f32 %v4145, %v4147
    %v4149 = vadd.f32 %v4145, %v4148
    %vm4150 = vweird.f32 %v4144
    %vm4151 = vweird.f32 %v4145
    %vm4152 = vmor %vm4150, %vm4151
    %v4153 = vsel %vm4152, %v4145, %v4149
    %v4154 = vand.u32 2147483647, %v4144
    %vm4155 = vcmp.eq.f32.partialorder %v4154, 8.507059e+37
    %v4156 = vand.u32 %v4144, 2147483648
    %v4157 = vor.u32 1.1754944e-38, %v4156
    %v4158 = vsel %vm4155, %v4157, %v4153
    %v4159 = vmul.f32 1.0, %v4158
    %v4160 = vtanh.pop %v4140
    %v4161 = vxor.u32 %v4140, 2147483648
    %v4162 = vmul.f32 %v4161, 1.442695
    %v4163 = vpow.pop %v4162
    %v4164 = vadd.f32 %v4163, 1.0
    %v4165 = vrcp.pop %v4164
    %v4166 = vmul.f32 %v4164, %v4165
    %v4167 = vsub.f32 1.0, %v4166
    %v4168 = vmul.f32 %v4165, %v4167
    %v4169 = vadd.f32 %v4165, %v4168
    %vm4170 = vweird.f32 %v4164
    %vm4171 = vweird.f32 %v4165
    %vm4172 = vmor %vm4170, %vm4171
    %v4173 = vsel %vm4172, %v4165, %v4169
    %v4174 = vand.u32 2147483647, %v4164
    %vm4175 = vcmp.eq.f32.partialorder %v4174, 8.507059e+37
    %v4176 = vand.u32 %v4164, 2147483648
    %v4177 = vor.u32 1.1754944e-38, %v4176
    %v4178 = vsel %vm4175, %v4177, %v4173
    %v4179 = vmul.f32 1.0, %v4178
    %v4180 = vmul.f32 %v4159, %v4022
    %v4181 = vmul.f32 %v4159, %v4160
    %4183 = vrot.lane.b32.xlu0 %v4181, 64
    %v4184 = vpop.permute.xlu0 %4183
    %v4186 = vadd.f32 %v4180, %v4184
    %v4187 = vtanh.pop %v4186
    %v4188 = vmul.f32 %v4179, %v4187
    %4190 = vrot.lane.b32.xlu0 %v4188, 64
    %v4191 = vpop.permute.xlu0 %4190
    %s4193 = scalar_lea.vmem [#allocation7], 40
    %4194 = vst.msk [vmem:[%s4193] sm:$0xff] %vm3291, %v4191
    %s4195 = scalar_lea.vmem [#allocation10], 40
    %v4196 = vld [vmem:[%s4195] sm:$0xff]
    %v4197 = vmul.f32 %v4188, 0.5
    %v4198 = vmul.f32 %v4197, 1.442695
    %v4199 = vpow.pop %v4198
    %4201 = vrot.lane.b32.xlu0 %v4199, 32
    %v4202 = vpop.permute.xlu0 %4201
    %v4204 = vmul.f32 %v4196, %v4202
    %4206 = vrot.lane.b32.xlu0 %v4204, 64
    %v4207 = vpop.permute.xlu0 %4206
    %v4209 = vadd.f32 %v4188, %v4207
    %v4210 = vpack.c.bf16 %v4209, %v4209
    %4212 = vrot.lane.b32.xlu0 %v4210, 64
    %v4213 = vpop.permute.xlu0 %4212
    %s4215 = scalar_lea.vmem [#allocation6], 20
    %4216 = vst.msk [vmem:[%s4215] sm:$0xf] %vm3395, %v4213
    %s4217 = smul.u32 6, 2
    %s4218 = smul.addr %s4217, 8
    %s4219 = scalar_lea.vmem [#allocation3], %s4218
    %v4220 = vld [vmem:[%s4219] sm:$0xff]
    %v4221 = vld [vmem:[%s4219 + $0x8] sm:$0xff]
    %v4222 = vpack.c.bf16 %v4188, %v4188
    %v4223 = vld [vmem:[#allocation18] sm:$0xff]
    %v4224 = vld [vmem:[#allocation18 + $0x8] sm:$0xff]
    %v4225 = vld [vmem:[#allocation18 + $0x10] sm:$0xff]
    %v4226 = vld [vmem:[#allocation18 + $0x18] sm:$0xff]
    %v4227 = vld [vmem:[#allocation18 + $0x20] sm:$0xff]
    %v4228 = vld [vmem:[#allocation18 + $0x28] sm:$0xff]
    %v4229 = vld [vmem:[#allocation18 + $0x30] sm:$0xff]
    %v4230 = vld [vmem:[#allocation18 + $0x38] sm:$0xff]
    %4232 = vrot.lane.b32.xlu0 %v4222, 64
    %v4233 = vpop.permute.xlu0 %4232
    %v4242 = vunpack.c.l.b16 %v4223
    %v4243 = vunpack.c.h.b16 %v4223
    %v4244 = vunpack.c.l.b16 %v4224
    %v4245 = vunpack.c.h.b16 %v4224
    %v4246 = vunpack.c.l.b16 %v4225
    %v4247 = vunpack.c.h.b16 %v4225
    %v4248 = vunpack.c.l.b16 %v4226
    %v4249 = vunpack.c.h.b16 %v4226
    %v4250 = vunpack.c.l.b16 %v4227
    %v4251 = vunpack.c.h.b16 %v4227
    %v4252 = vunpack.c.l.b16 %v4228
    %v4253 = vunpack.c.h.b16 %v4228
    %v4254 = vunpack.c.l.b16 %v4229
    %v4255 = vunpack.c.h.b16 %v4229
    %v4256 = vunpack.c.l.b16 %v4230
    %v4257 = vunpack.c.h.b16 %v4230
    %v4258 = vpack.c.b16 %v4244, %v4242
    %v4259 = vpack.c.b16 %v4245, %v4243
    %v4260 = vpack.c.b16 %v4248, %v4246
    %v4261 = vpack.c.b16 %v4249, %v4247
    %v4262 = vpack.c.b16 %v4252, %v4250
    %v4263 = vpack.c.b16 %v4253, %v4251
    %v4264 = vpack.c.b16 %v4256, %v4254
    %v4265 = vpack.c.b16 %v4257, %v4255
    %v4275 = vsel %vm3291, %v4233, 0
    %4277 = vmatpush.bf16.msra.mxu0 0
    %4278 = vmatpush.bf16.msra.mxu0 0
    %4279 = vmatpush.bf16.msra.mxu0 0
    %4280 = vmatpush.bf16.msra.mxu0 0
    %4281 = vmatpush.bf16.msra.mxu0 %v4264
    %4282 = vmatpush.bf16.msra.mxu0 %v4262
    %4283 = vmatpush.bf16.msra.mxu0 %v4260
    %4284 = vmatpush.bf16.msra.mxu0 %v4258
    %4285 = vmatmul.bf16.gmra.mxu0 %v4275
    %v4286 = vpop.f32.mrf.mxu0
    %v4287 = vadd.f32 0.0, %v4286
    %v4288 = vpop.f32.mrf.mxu0
    %4289 = vdwg.mxu0
    %4290 = vmatpush.bf16.msra.mxu0 0
    %4291 = vmatpush.bf16.msra.mxu0 0
    %4292 = vmatpush.bf16.msra.mxu0 0
    %4293 = vmatpush.bf16.msra.mxu0 0
    %4294 = vmatpush.bf16.msra.mxu0 %v4265
    %4295 = vmatpush.bf16.msra.mxu0 %v4263
    %4296 = vmatpush.bf16.msra.mxu0 %v4261
    %4297 = vmatpush.bf16.msra.mxu0 %v4259
    %4298 = vmatmul.bf16.gmra.mxu0 %v4275
    %v4299 = vpop.f32.mrf.mxu0
    %v4300 = vadd.f32 0.0, %v4299
    %v4301 = vpop.f32.mrf.mxu0
    %4302 = vdwg.mxu0
    %v4303 = vadd.f32 %v4220, %v4287
    %v4304 = vadd.f32 %v4221, %v4300
    %v4305 = vxor.u32 %v4303, 2147483648
    %v4306 = vmul.f32 %v4305, 1.442695
    %v4307 = vpow.pop %v4306
    %v4308 = vadd.f32 %v4307, 1.0
    %v4309 = vrcp.pop %v4308
    %v4310 = vmul.f32 %v4308, %v4309
    %v4311 = vsub.f32 1.0, %v4310
    %v4312 = vmul.f32 %v4309, %v4311
    %v4313 = vadd.f32 %v4309, %v4312
    %vm4314 = vweird.f32 %v4308
    %vm4315 = vweird.f32 %v4309
    %vm4316 = vmor %vm4314, %vm4315
    %v4317 = vsel %vm4316, %v4309, %v4313
    %v4318 = vand.u32 2147483647, %v4308
    %vm4319 = vcmp.eq.f32.partialorder %v4318, 8.507059e+37
    %v4320 = vand.u32 %v4308, 2147483648
    %v4321 = vor.u32 1.1754944e-38, %v4320
    %v4322 = vsel %vm4319, %v4321, %v4317
    %v4323 = vmul.f32 1.0, %v4322
    %v4324 = vtanh.pop %v4304
    %v4325 = vxor.u32 %v4304, 2147483648
    %v4326 = vmul.f32 %v4325, 1.442695
    %v4327 = vpow.pop %v4326
    %v4328 = vadd.f32 %v4327, 1.0
    %v4329 = vrcp.pop %v4328
    %v4330 = vmul.f32 %v4328, %v4329
    %v4331 = vsub.f32 1.0, %v4330
    %v4332 = vmul.f32 %v4329, %v4331
    %v4333 = vadd.f32 %v4329, %v4332
    %vm4334 = vweird.f32 %v4328
    %vm4335 = vweird.f32 %v4329
    %vm4336 = vmor %vm4334, %vm4335
    %v4337 = vsel %vm4336, %v4329, %v4333
    %v4338 = vand.u32 2147483647, %v4328
    %vm4339 = vcmp.eq.f32.partialorder %v4338, 8.507059e+37
    %v4340 = vand.u32 %v4328, 2147483648
    %v4341 = vor.u32 1.1754944e-38, %v4340
    %v4342 = vsel %vm4339, %v4341, %v4337
    %v4343 = vmul.f32 1.0, %v4342
    %v4344 = vmul.f32 %v4323, %v4186
    %v4345 = vmul.f32 %v4323, %v4324
    %4347 = vrot.lane.b32.xlu0 %v4345, 64
    %v4348 = vpop.permute.xlu0 %4347
    %v4350 = vadd.f32 %v4344, %v4348
    %v4351 = vtanh.pop %v4350
    %v4352 = vmul.f32 %v4343, %v4351
    %4354 = vrot.lane.b32.xlu0 %v4352, 64
    %v4355 = vpop.permute.xlu0 %4354
    %s4357 = scalar_lea.vmem [#allocation7], 48
    %4358 = vst.msk [vmem:[%s4357] sm:$0xff] %vm3291, %v4355
    %s4359 = scalar_lea.vmem [#allocation10], 48
    %v4360 = vld [vmem:[%s4359] sm:$0xff]
    %v4361 = vmul.f32 %v4352, 0.5
    %v4362 = vmul.f32 %v4361, 1.442695
    %v4363 = vpow.pop %v4362
    %4365 = vrot.lane.b32.xlu0 %v4363, 32
    %v4366 = vpop.permute.xlu0 %4365
    %v4368 = vmul.f32 %v4360, %v4366
    %4370 = vrot.lane.b32.xlu0 %v4368, 64
    %v4371 = vpop.permute.xlu0 %4370
    %v4373 = vadd.f32 %v4352, %v4371
    %v4374 = vpack.c.bf16 %v4373, %v4373
    %4376 = vrot.lane.b32.xlu0 %v4374, 64
    %v4377 = vpop.permute.xlu0 %4376
    %s4379 = scalar_lea.vmem [#allocation6], 24
    %4380 = vst.msk [vmem:[%s4379] sm:$0xf] %vm3395, %v4377
    %s4381 = smul.u32 7, 2
    %s4382 = smul.addr %s4381, 8
    %s4383 = scalar_lea.vmem [#allocation3], %s4382
    %v4384 = vld [vmem:[%s4383] sm:$0xff]
    %v4385 = vld [vmem:[%s4383 + $0x8] sm:$0xff]
    %v4386 = vpack.c.bf16 %v4352, %v4352
    %v4387 = vld [vmem:[#allocation18] sm:$0xff]
    %v4388 = vld [vmem:[#allocation18 + $0x8] sm:$0xff]
    %v4389 = vld [vmem:[#allocation18 + $0x10] sm:$0xff]
    %v4390 = vld [vmem:[#allocation18 + $0x18] sm:$0xff]
    %v4391 = vld [vmem:[#allocation18 + $0x20] sm:$0xff]
    %v4392 = vld [vmem:[#allocation18 + $0x28] sm:$0xff]
    %v4393 = vld [vmem:[#allocation18 + $0x30] sm:$0xff]
    %v4394 = vld [vmem:[#allocation18 + $0x38] sm:$0xff]
    %4396 = vrot.lane.b32.xlu0 %v4386, 64
    %v4397 = vpop.permute.xlu0 %4396
    %v4406 = vunpack.c.l.b16 %v4387
    %v4407 = vunpack.c.h.b16 %v4387
    %v4408 = vunpack.c.l.b16 %v4388
    %v4409 = vunpack.c.h.b16 %v4388
    %v4410 = vunpack.c.l.b16 %v4389
    %v4411 = vunpack.c.h.b16 %v4389
    %v4412 = vunpack.c.l.b16 %v4390
    %v4413 = vunpack.c.h.b16 %v4390
    %v4414 = vunpack.c.l.b16 %v4391
    %v4415 = vunpack.c.h.b16 %v4391
    %v4416 = vunpack.c.l.b16 %v4392
    %v4417 = vunpack.c.h.b16 %v4392
    %v4418 = vunpack.c.l.b16 %v4393
    %v4419 = vunpack.c.h.b16 %v4393
    %v4420 = vunpack.c.l.b16 %v4394
    %v4421 = vunpack.c.h.b16 %v4394
    %v4422 = vpack.c.b16 %v4408, %v4406
    %v4423 = vpack.c.b16 %v4409, %v4407
    %v4424 = vpack.c.b16 %v4412, %v4410
    %v4425 = vpack.c.b16 %v4413, %v4411
    %v4426 = vpack.c.b16 %v4416, %v4414
    %v4427 = vpack.c.b16 %v4417, %v4415
    %v4428 = vpack.c.b16 %v4420, %v4418
    %v4429 = vpack.c.b16 %v4421, %v4419
    %v4439 = vsel %vm3291, %v4397, 0
    %4441 = vmatpush.bf16.msra.mxu0 0
    %4442 = vmatpush.bf16.msra.mxu0 0
    %4443 = vmatpush.bf16.msra.mxu0 0
    %4444 = vmatpush.bf16.msra.mxu0 0
    %4445 = vmatpush.bf16.msra.mxu0 %v4428
    %4446 = vmatpush.bf16.msra.mxu0 %v4426
    %4447 = vmatpush.bf16.msra.mxu0 %v4424
    %4448 = vmatpush.bf16.msra.mxu0 %v4422
    %4449 = vmatmul.bf16.gmra.mxu0 %v4439
    %v4450 = vpop.f32.mrf.mxu0
    %v4451 = vadd.f32 0.0, %v4450
    %v4452 = vpop.f32.mrf.mxu0
    %4453 = vdwg.mxu0
    %4454 = vmatpush.bf16.msra.mxu0 0
    %4455 = vmatpush.bf16.msra.mxu0 0
    %4456 = vmatpush.bf16.msra.mxu0 0
    %4457 = vmatpush.bf16.msra.mxu0 0
    %4458 = vmatpush.bf16.msra.mxu0 %v4429
    %4459 = vmatpush.bf16.msra.mxu0 %v4427
    %4460 = vmatpush.bf16.msra.mxu0 %v4425
    %4461 = vmatpush.bf16.msra.mxu0 %v4423
    %4462 = vmatmul.bf16.gmra.mxu0 %v4439
    %v4463 = vpop.f32.mrf.mxu0
    %v4464 = vadd.f32 0.0, %v4463
    %v4465 = vpop.f32.mrf.mxu0
    %4466 = vdwg.mxu0
    %v4467 = vadd.f32 %v4384, %v4451
    %v4468 = vadd.f32 %v4385, %v4464
    %v4469 = vxor.u32 %v4467, 2147483648
    %v4470 = vmul.f32 %v4469, 1.442695
    %v4471 = vpow.pop %v4470
    %v4472 = vadd.f32 %v4471, 1.0
    %v4473 = vrcp.pop %v4472
    %v4474 = vmul.f32 %v4472, %v4473
    %v4475 = vsub.f32 1.0, %v4474
    %v4476 = vmul.f32 %v4473, %v4475
    %v4477 = vadd.f32 %v4473, %v4476
    %vm4478 = vweird.f32 %v4472
    %vm4479 = vweird.f32 %v4473
    %vm4480 = vmor %vm4478, %vm4479
    %v4481 = vsel %vm4480, %v4473, %v4477
    %v4482 = vand.u32 2147483647, %v4472
    %vm4483 = vcmp.eq.f32.partialorder %v4482, 8.507059e+37
    %v4484 = vand.u32 %v4472, 2147483648
    %v4485 = vor.u32 1.1754944e-38, %v4484
    %v4486 = vsel %vm4483, %v4485, %v4481
    %v4487 = vmul.f32 1.0, %v4486
    %v4488 = vtanh.pop %v4468
    %v4489 = vxor.u32 %v4468, 2147483648
    %v4490 = vmul.f32 %v4489, 1.442695
    %v4491 = vpow.pop %v4490
    %v4492 = vadd.f32 %v4491, 1.0
    %v4493 = vrcp.pop %v4492
    %v4494 = vmul.f32 %v4492, %v4493
    %v4495 = vsub.f32 1.0, %v4494
    %v4496 = vmul.f32 %v4493, %v4495
    %v4497 = vadd.f32 %v4493, %v4496
    %vm4498 = vweird.f32 %v4492
    %vm4499 = vweird.f32 %v4493
    %vm4500 = vmor %vm4498, %vm4499
    %v4501 = vsel %vm4500, %v4493, %v4497
    %v4502 = vand.u32 2147483647, %v4492
    %vm4503 = vcmp.eq.f32.partialorder %v4502, 8.507059e+37
    %v4504 = vand.u32 %v4492, 2147483648
    %v4505 = vor.u32 1.1754944e-38, %v4504
    %v4506 = vsel %vm4503, %v4505, %v4501
    %v4507 = vmul.f32 1.0, %v4506
    %v4508 = vmul.f32 %v4487, %v4350
    %v4509 = vmul.f32 %v4487, %v4488
    %4511 = vrot.lane.b32.xlu0 %v4509, 64
    %v4512 = vpop.permute.xlu0 %4511
    %v4514 = vadd.f32 %v4508, %v4512
    %v4515 = vtanh.pop %v4514
    %v4516 = vmul.f32 %v4507, %v4515
    %4518 = vrot.lane.b32.xlu0 %v4516, 64
    %v4519 = vpop.permute.xlu0 %4518
    %s4521 = scalar_lea.vmem [#allocation7], 56
    %4522 = vst.msk [vmem:[%s4521] sm:$0xff] %vm3291, %v4519
    %s4523 = scalar_lea.vmem [#allocation10], 56
    %v4524 = vld [vmem:[%s4523] sm:$0xff]
    %v4525 = vmul.f32 %v4516, 0.5
    %v4526 = vmul.f32 %v4525, 1.442695
    %v4527 = vpow.pop %v4526
    %4529 = vrot.lane.b32.xlu0 %v4527, 32
    %v4530 = vpop.permute.xlu0 %4529
    %v4532 = vmul.f32 %v4524, %v4530
    %4534 = vrot.lane.b32.xlu0 %v4532, 64
    %v4535 = vpop.permute.xlu0 %4534
    %v4537 = vadd.f32 %v4516, %v4535
    %v4538 = vpack.c.bf16 %v4537, %v4537
    %4540 = vrot.lane.b32.xlu0 %v4538, 64
    %v4541 = vpop.permute.xlu0 %4540
    %s4543 = scalar_lea.vmem [#allocation6], 28
    %4544 = vst.msk [vmem:[%s4543] sm:$0xf] %vm3395, %v4541
    %v4545 = vld [vmem:[#allocation6] sm:$0xf]
    %v4546 = vld [vmem:[#allocation6 + $0x4] sm:$0xf]
    %v4547 = vld [vmem:[#allocation6 + $0x8] sm:$0xf]
    %v4548 = vld [vmem:[#allocation6 + $0xc] sm:$0xf]
    %v4549 = vld [vmem:[#allocation6 + $0x10] sm:$0xf]
    %v4550 = vld [vmem:[#allocation6 + $0x14] sm:$0xf]
    %v4551 = vld [vmem:[#allocation6 + $0x18] sm:$0xf]
    %v4552 = vld [vmem:[#allocation6 + $0x1c] sm:$0xf]
    %v4553 = vld [vmem:[#allocation19] sm:$0xff]
    %v4554 = vld [vmem:[#allocation19 + $0x8] sm:$0xff]
    %v4555 = vld [vmem:[#allocation19 + $0x10] sm:$0xff]
    %v4556 = vld [vmem:[#allocation19 + $0x18] sm:$0xff]
    %v4557 = vld [vmem:[#allocation19 + $0x20] sm:$0xff]
    %v4558 = vld [vmem:[#allocation19 + $0x28] sm:$0xff]
    %v4559 = vld [vmem:[#allocation19 + $0x30] sm:$0xff]
    %v4560 = vld [vmem:[#allocation19 + $0x38] sm:$0xff]
    %v4561 = vld [vmem:[%s10] sm:$0xf]
    %v4563 = vperm.slane %v4561, 0
    %v4564 = vperm.slane %v4561, 1
    %v4565 = vperm.slane %v4561, 2
    %v4566 = vperm.slane %v4561, 3
    %v4579 = vunpack.c.l.b16 %v4545
    %v4580 = vunpack.c.l.b16 %v4546
    %v4581 = vunpack.c.l.b16 %v4547
    %v4582 = vunpack.c.l.b16 %v4548
    %v4583 = vunpack.c.l.b16 %v4549
    %v4584 = vunpack.c.l.b16 %v4550
    %v4585 = vunpack.c.l.b16 %v4551
    %v4586 = vunpack.c.l.b16 %v4552
    %v4587 = vpack.c.b16 %v4580, %v4579
    %v4588 = vpack.c.b16 %v4582, %v4581
    %v4589 = vpack.c.b16 %v4584, %v4583
    %v4590 = vpack.c.b16 %v4586, %v4585
    %v4599 = vunpack.c.l.b16 %v4553
    %v4600 = vunpack.c.h.b16 %v4553
    %v4601 = vunpack.c.l.b16 %v4554
    %v4602 = vunpack.c.h.b16 %v4554
    %v4603 = vunpack.c.l.b16 %v4555
    %v4604 = vunpack.c.h.b16 %v4555
    %v4605 = vunpack.c.l.b16 %v4556
    %v4606 = vunpack.c.h.b16 %v4556
    %v4607 = vunpack.c.l.b16 %v4557
    %v4608 = vunpack.c.h.b16 %v4557
    %v4609 = vunpack.c.l.b16 %v4558
    %v4610 = vunpack.c.h.b16 %v4558
    %v4611 = vunpack.c.l.b16 %v4559
    %v4612 = vunpack.c.h.b16 %v4559
    %v4613 = vunpack.c.l.b16 %v4560
    %v4614 = vunpack.c.h.b16 %v4560
    %v4615 = vpack.c.b16 %v4603, %v4599
    %v4616 = vpack.c.b16 %v4604, %v4600
    %v4617 = vpack.c.b16 %v4605, %v4601
    %v4618 = vpack.c.b16 %v4606, %v4602
    %v4619 = vpack.c.b16 %v4611, %v4607
    %v4620 = vpack.c.b16 %v4612, %v4608
    %v4621 = vpack.c.b16 %v4613, %v4609
    %v4622 = vpack.c.b16 %v4614, %v4610
    %v4632 = vsel %vm287, %v4587, 0
    %v4635 = vsel %vm287, %v4588, 0
    %v4638 = vsel %vm287, %v4589, 0
    %v4641 = vsel %vm287, %v4590, 0
    %4643 = vmatpush.bf16.msra.mxu0 0
    %4644 = vmatpush.bf16.msra.mxu0 0
    %4645 = vmatpush.bf16.msra.mxu0 0
    %4646 = vmatpush.bf16.msra.mxu0 0
    %4647 = vmatpush.bf16.msra.mxu0 0
    %4648 = vmatpush.bf16.msra.mxu0 0
    %4649 = vmatpush.bf16.msra.mxu0 %v4619
    %4650 = vmatpush.bf16.msra.mxu0 %v4615
    %4651 = vmatmul.bf16.gmra.mxu0 %v4632
    %v4652 = vpop.f32.mrf.mxu0
    %v4653 = vadd.f32 %v4563, %v4652
    %v4654 = vpop.f32.mrf.mxu0
    %v4655 = vadd.f32 %v4563, %v4654
    %4656 = vmatmul.bf16.gmra.mxu0 %v4635
    %v4657 = vpop.f32.mrf.mxu0
    %v4658 = vadd.f32 %v4563, %v4657
    %v4659 = vpop.f32.mrf.mxu0
    %v4660 = vadd.f32 %v4563, %v4659
    %4661 = vmatmul.bf16.gmra.mxu0 %v4638
    %v4662 = vpop.f32.mrf.mxu0
    %v4663 = vadd.f32 %v4563, %v4662
    %v4664 = vpop.f32.mrf.mxu0
    %v4665 = vadd.f32 %v4563, %v4664
    %4666 = vmatmul.bf16.gmra.mxu0 %v4641
    %v4667 = vpop.f32.mrf.mxu0
    %v4668 = vadd.f32 %v4563, %v4667
    %v4669 = vpop.f32.mrf.mxu0
    %v4670 = vadd.f32 %v4563, %v4669
    %4671 = vdwg.mxu0
    %4672 = vmatpush.bf16.msra.mxu0 0
    %4673 = vmatpush.bf16.msra.mxu0 0
    %4674 = vmatpush.bf16.msra.mxu0 0
    %4675 = vmatpush.bf16.msra.mxu0 0
    %4676 = vmatpush.bf16.msra.mxu0 0
    %4677 = vmatpush.bf16.msra.mxu0 0
    %4678 = vmatpush.bf16.msra.mxu0 %v4620
    %4679 = vmatpush.bf16.msra.mxu0 %v4616
    %4680 = vmatmul.bf16.gmra.mxu0 %v4632
    %v4681 = vpop.f32.mrf.mxu0
    %v4682 = vadd.f32 %v4564, %v4681
    %v4683 = vpop.f32.mrf.mxu0
    %v4684 = vadd.f32 %v4564, %v4683
    %4685 = vmatmul.bf16.gmra.mxu0 %v4635
    %v4686 = vpop.f32.mrf.mxu0
    %v4687 = vadd.f32 %v4564, %v4686
    %v4688 = vpop.f32.mrf.mxu0
    %v4689 = vadd.f32 %v4564, %v4688
    %4690 = vmatmul.bf16.gmra.mxu0 %v4638
    %v4691 = vpop.f32.mrf.mxu0
    %v4692 = vadd.f32 %v4564, %v4691
    %v4693 = vpop.f32.mrf.mxu0
    %v4694 = vadd.f32 %v4564, %v4693
    %4695 = vmatmul.bf16.gmra.mxu0 %v4641
    %v4696 = vpop.f32.mrf.mxu0
    %v4697 = vadd.f32 %v4564, %v4696
    %v4698 = vpop.f32.mrf.mxu0
    %v4699 = vadd.f32 %v4564, %v4698
    %4700 = vdwg.mxu0
    %4701 = vmatpush.bf16.msra.mxu0 0
    %4702 = vmatpush.bf16.msra.mxu0 0
    %4703 = vmatpush.bf16.msra.mxu0 0
    %4704 = vmatpush.bf16.msra.mxu0 0
    %4705 = vmatpush.bf16.msra.mxu0 0
    %4706 = vmatpush.bf16.msra.mxu0 0
    %4707 = vmatpush.bf16.msra.mxu0 %v4621
    %4708 = vmatpush.bf16.msra.mxu0 %v4617
    %4709 = vmatmul.bf16.gmra.mxu0 %v4632
    %v4710 = vpop.f32.mrf.mxu0
    %v4711 = vadd.f32 %v4565, %v4710
    %v4712 = vpop.f32.mrf.mxu0
    %v4713 = vadd.f32 %v4565, %v4712
    %4714 = vmatmul.bf16.gmra.mxu0 %v4635
    %v4715 = vpop.f32.mrf.mxu0
    %v4716 = vadd.f32 %v4565, %v4715
    %v4717 = vpop.f32.mrf.mxu0
    %v4718 = vadd.f32 %v4565, %v4717
    %4719 = vmatmul.bf16.gmra.mxu0 %v4638
    %v4720 = vpop.f32.mrf.mxu0
    %v4721 = vadd.f32 %v4565, %v4720
    %v4722 = vpop.f32.mrf.mxu0
    %v4723 = vadd.f32 %v4565, %v4722
    %4724 = vmatmul.bf16.gmra.mxu0 %v4641
    %v4725 = vpop.f32.mrf.mxu0
    %v4726 = vadd.f32 %v4565, %v4725
    %v4727 = vpop.f32.mrf.mxu0
    %v4728 = vadd.f32 %v4565, %v4727
    %4729 = vdwg.mxu0
    %4730 = vmatpush.bf16.msra.mxu0 0
    %4731 = vmatpush.bf16.msra.mxu0 0
    %4732 = vmatpush.bf16.msra.mxu0 0
    %4733 = vmatpush.bf16.msra.mxu0 0
    %4734 = vmatpush.bf16.msra.mxu0 0
    %4735 = vmatpush.bf16.msra.mxu0 0
    %4736 = vmatpush.bf16.msra.mxu0 %v4622
    %4737 = vmatpush.bf16.msra.mxu0 %v4618
    %4738 = vmatmul.bf16.gmra.mxu0 %v4632
    %v4739 = vpop.f32.mrf.mxu0
    %v4740 = vadd.f32 %v4566, %v4739
    %v4741 = vpop.f32.mrf.mxu0
    %v4742 = vadd.f32 %v4566, %v4741
    %4743 = vmatmul.bf16.gmra.mxu0 %v4635
    %v4744 = vpop.f32.mrf.mxu0
    %v4745 = vadd.f32 %v4566, %v4744
    %v4746 = vpop.f32.mrf.mxu0
    %v4747 = vadd.f32 %v4566, %v4746
    %4748 = vmatmul.bf16.gmra.mxu0 %v4638
    %v4749 = vpop.f32.mrf.mxu0
    %v4750 = vadd.f32 %v4566, %v4749
    %v4751 = vpop.f32.mrf.mxu0
    %v4752 = vadd.f32 %v4566, %v4751
    %4753 = vmatmul.bf16.gmra.mxu0 %v4641
    %v4754 = vpop.f32.mrf.mxu0
    %v4755 = vadd.f32 %v4566, %v4754
    %v4756 = vpop.f32.mrf.mxu0
    %v4757 = vadd.f32 %v4566, %v4756
    %4758 = vdwg.mxu0
    %4759 = vst [vmem:[#allocation2] sm:$0xff] %v4653
    %4760 = vst [vmem:[#allocation2 + $0x8] sm:$0xff] %v4682
    %4761 = vst [vmem:[#allocation2 + $0x10] sm:$0xff] %v4711
    %4762 = vst [vmem:[#allocation2 + $0x18] sm:$0xff] %v4740
    %4763 = vst [vmem:[#allocation2 + $0x20] sm:$0xff] %v4655
    %4764 = vst [vmem:[#allocation2 + $0x28] sm:$0xff] %v4684
    %4765 = vst [vmem:[#allocation2 + $0x30] sm:$0xff] %v4713
    %4766 = vst [vmem:[#allocation2 + $0x38] sm:$0xff] %v4742
    %4767 = vst [vmem:[#allocation2 + $0x40] sm:$0xff] %v4658
    %4768 = vst [vmem:[#allocation2 + $0x48] sm:$0xff] %v4687
    %4769 = vst [vmem:[#allocation2 + $0x50] sm:$0xff] %v4716
    %4770 = vst [vmem:[#allocation2 + $0x58] sm:$0xff] %v4745
    %4771 = vst [vmem:[#allocation2 + $0x60] sm:$0xff] %v4660
    %4772 = vst [vmem:[#allocation2 + $0x68] sm:$0xff] %v4689
    %4773 = vst [vmem:[#allocation2 + $0x70] sm:$0xff] %v4718
    %4774 = vst [vmem:[#allocation2 + $0x78] sm:$0xff] %v4747
    %4775 = vst [vmem:[#allocation2 + $0x80] sm:$0xff] %v4663
    %4776 = vst [vmem:[#allocation2 + $0x88] sm:$0xff] %v4692
    %4777 = vst [vmem:[#allocation2 + $0x90] sm:$0xff] %v4721
    %4778 = vst [vmem:[#allocation2 + $0x98] sm:$0xff] %v4750
    %4779 = vst [vmem:[#allocation2 + $0xa0] sm:$0xff] %v4665
    %4780 = vst [vmem:[#allocation2 + $0xa8] sm:$0xff] %v4694
    %4781 = vst [vmem:[#allocation2 + $0xb0] sm:$0xff] %v4723
    %4782 = vst [vmem:[#allocation2 + $0xb8] sm:$0xff] %v4752
    %4783 = vst [vmem:[#allocation2 + $0xc0] sm:$0xff] %v4668
    %4784 = vst [vmem:[#allocation2 + $0xc8] sm:$0xff] %v4697
    %4785 = vst [vmem:[#allocation2 + $0xd0] sm:$0xff] %v4726
    %4786 = vst [vmem:[#allocation2 + $0xd8] sm:$0xff] %v4755
    %4787 = vst [vmem:[#allocation2 + $0xe0] sm:$0xff] %v4670
    %4788 = vst [vmem:[#allocation2 + $0xe8] sm:$0xff] %v4699
    %4789 = vst [vmem:[#allocation2 + $0xf0] sm:$0xff] %v4728
    %4790 = vst [vmem:[#allocation2 + $0xf8] sm:$0xff] %v4757
    %v4791 = vld [vmem:[%s450] sm:$0xff]
    %v4792 = vld [vmem:[%s450 + $0x8] sm:$0xff]
    %v4793 = vld [vmem:[%s450 + $0x10] sm:$0xff]
    %v4794 = vld [vmem:[%s450 + $0x18] sm:$0xff]
    %v4795 = vld [vmem:[#allocation21] sm:$0xff]
    %v4796 = vld [vmem:[#allocation21 + $0x8] sm:$0xff]
    %v4797 = vld [vmem:[#allocation21 + $0x10] sm:$0xff]
    %v4798 = vld [vmem:[#allocation21 + $0x18] sm:$0xff]
    %v4799 = vld [vmem:[#allocation21 + $0x20] sm:$0xff]
    %v4800 = vld [vmem:[#allocation21 + $0x28] sm:$0xff]
    %v4801 = vld [vmem:[#allocation21 + $0x30] sm:$0xff]
    %v4802 = vld [vmem:[#allocation21 + $0x38] sm:$0xff]
    %v4803 = vld [vmem:[#allocation21 + $0x40] sm:$0xff]
    %v4804 = vld [vmem:[#allocation21 + $0x48] sm:$0xff]
    %v4805 = vld [vmem:[#allocation21 + $0x50] sm:$0xff]
    %v4806 = vld [vmem:[#allocation21 + $0x58] sm:$0xff]
    %v4807 = vld [vmem:[#allocation21 + $0x60] sm:$0xff]
    %v4808 = vld [vmem:[#allocation21 + $0x68] sm:$0xff]
    %v4809 = vld [vmem:[#allocation21 + $0x70] sm:$0xff]
    %v4810 = vld [vmem:[#allocation21 + $0x78] sm:$0xff]
    %v4811 = vld [vmem:[#allocation21 + $0x80] sm:$0xff]
    %v4812 = vld [vmem:[#allocation21 + $0x88] sm:$0xff]
    %v4813 = vld [vmem:[#allocation21 + $0x90] sm:$0xff]
    %v4814 = vld [vmem:[#allocation21 + $0x98] sm:$0xff]
    %v4815 = vld [vmem:[#allocation21 + $0xa0] sm:$0xff]
    %v4816 = vld [vmem:[#allocation21 + $0xa8] sm:$0xff]
    %v4817 = vld [vmem:[#allocation21 + $0xb0] sm:$0xff]
    %v4818 = vld [vmem:[#allocation21 + $0xb8] sm:$0xff]
    %v4819 = vld [vmem:[#allocation21 + $0xc0] sm:$0xff]
    %v4820 = vld [vmem:[#allocation21 + $0xc8] sm:$0xff]
    %v4821 = vld [vmem:[#allocation21 + $0xd0] sm:$0xff]
    %v4822 = vld [vmem:[#allocation21 + $0xd8] sm:$0xff]
    %v4823 = vld [vmem:[#allocation21 + $0xe0] sm:$0xff]
    %v4824 = vld [vmem:[#allocation21 + $0xe8] sm:$0xff]
    %v4825 = vld [vmem:[#allocation21 + $0xf0] sm:$0xff]
    %v4826 = vld [vmem:[#allocation21 + $0xf8] sm:$0xff]
    %v4859 = vunpack.c.l.b16 %v4795
    %v4860 = vunpack.c.h.b16 %v4795
    %v4861 = vunpack.c.l.b16 %v4796
    %v4862 = vunpack.c.h.b16 %v4796
    %v4863 = vunpack.c.l.b16 %v4797
    %v4864 = vunpack.c.h.b16 %v4797
    %v4865 = vunpack.c.l.b16 %v4798
    %v4866 = vunpack.c.h.b16 %v4798
    %v4867 = vunpack.c.l.b16 %v4799
    %v4868 = vunpack.c.h.b16 %v4799
    %v4869 = vunpack.c.l.b16 %v4800
    %v4870 = vunpack.c.h.b16 %v4800
    %v4871 = vunpack.c.l.b16 %v4801
    %v4872 = vunpack.c.h.b16 %v4801
    %v4873 = vunpack.c.l.b16 %v4802
    %v4874 = vunpack.c.h.b16 %v4802
    %v4875 = vunpack.c.l.b16 %v4803
    %v4876 = vunpack.c.h.b16 %v4803
    %v4877 = vunpack.c.l.b16 %v4804
    %v4878 = vunpack.c.h.b16 %v4804
    %v4879 = vunpack.c.l.b16 %v4805
    %v4880 = vunpack.c.h.b16 %v4805
    %v4881 = vunpack.c.l.b16 %v4806
    %v4882 = vunpack.c.h.b16 %v4806
    %v4883 = vunpack.c.l.b16 %v4807
    %v4884 = vunpack.c.h.b16 %v4807
    %v4885 = vunpack.c.l.b16 %v4808
    %v4886 = vunpack.c.h.b16 %v4808
    %v4887 = vunpack.c.l.b16 %v4809
    %v4888 = vunpack.c.h.b16 %v4809
    %v4889 = vunpack.c.l.b16 %v4810
    %v4890 = vunpack.c.h.b16 %v4810
    %v4891 = vunpack.c.l.b16 %v4811
    %v4892 = vunpack.c.h.b16 %v4811
    %v4893 = vunpack.c.l.b16 %v4812
    %v4894 = vunpack.c.h.b16 %v4812
    %v4895 = vunpack.c.l.b16 %v4813
    %v4896 = vunpack.c.h.b16 %v4813
    %v4897 = vunpack.c.l.b16 %v4814
    %v4898 = vunpack.c.h.b16 %v4814
    %v4899 = vunpack.c.l.b16 %v4815
    %v4900 = vunpack.c.h.b16 %v4815
    %v4901 = vunpack.c.l.b16 %v4816
    %v4902 = vunpack.c.h.b16 %v4816
    %v4903 = vunpack.c.l.b16 %v4817
    %v4904 = vunpack.c.h.b16 %v4817
    %v4905 = vunpack.c.l.b16 %v4818
    %v4906 = vunpack.c.h.b16 %v4818
    %v4907 = vunpack.c.l.b16 %v4819
    %v4908 = vunpack.c.h.b16 %v4819
    %v4909 = vunpack.c.l.b16 %v4820
    %v4910 = vunpack.c.h.b16 %v4820
    %v4911 = vunpack.c.l.b16 %v4821
    %v4912 = vunpack.c.h.b16 %v4821
    %v4913 = vunpack.c.l.b16 %v4822
    %v4914 = vunpack.c.h.b16 %v4822
    %v4915 = vunpack.c.l.b16 %v4823
    %v4916 = vunpack.c.h.b16 %v4823
    %v4917 = vunpack.c.l.b16 %v4824
    %v4918 = vunpack.c.h.b16 %v4824
    %v4919 = vunpack.c.l.b16 %v4825
    %v4920 = vunpack.c.h.b16 %v4825
    %v4921 = vunpack.c.l.b16 %v4826
    %v4922 = vunpack.c.h.b16 %v4826
    %v4923 = vpack.c.b16 %v4863, %v4859
    %v4924 = vpack.c.b16 %v4864, %v4860
    %v4925 = vpack.c.b16 %v4865, %v4861
    %v4926 = vpack.c.b16 %v4866, %v4862
    %v4927 = vpack.c.b16 %v4871, %v4867
    %v4928 = vpack.c.b16 %v4872, %v4868
    %v4929 = vpack.c.b16 %v4873, %v4869
    %v4930 = vpack.c.b16 %v4874, %v4870
    %v4931 = vpack.c.b16 %v4879, %v4875
    %v4932 = vpack.c.b16 %v4880, %v4876
    %v4933 = vpack.c.b16 %v4881, %v4877
    %v4934 = vpack.c.b16 %v4882, %v4878
    %v4935 = vpack.c.b16 %v4887, %v4883
    %v4936 = vpack.c.b16 %v4888, %v4884
    %v4937 = vpack.c.b16 %v4889, %v4885
    %v4938 = vpack.c.b16 %v4890, %v4886
    %v4939 = vpack.c.b16 %v4895, %v4891
    %v4940 = vpack.c.b16 %v4896, %v4892
    %v4941 = vpack.c.b16 %v4897, %v4893
    %v4942 = vpack.c.b16 %v4898, %v4894
    %v4943 = vpack.c.b16 %v4903, %v4899
    %v4944 = vpack.c.b16 %v4904, %v4900
    %v4945 = vpack.c.b16 %v4905, %v4901
    %v4946 = vpack.c.b16 %v4906, %v4902
    %v4947 = vpack.c.b16 %v4911, %v4907
    %v4948 = vpack.c.b16 %v4912, %v4908
    %v4949 = vpack.c.b16 %v4913, %v4909
    %v4950 = vpack.c.b16 %v4914, %v4910
    %v4951 = vpack.c.b16 %v4919, %v4915
    %v4952 = vpack.c.b16 %v4920, %v4916
    %v4953 = vpack.c.b16 %v4921, %v4917
    %v4954 = vpack.c.b16 %v4922, %v4918
    %4987 = vmatpush.bf16.msra.mxu0 %v4951
    %4988 = vmatpush.bf16.msra.mxu0 %v4947
    %4989 = vmatpush.bf16.msra.mxu0 %v4943
    %4990 = vmatpush.bf16.msra.mxu0 %v4939
    %4991 = vmatpush.bf16.msra.mxu0 %v4935
    %4992 = vmatpush.bf16.msra.mxu0 %v4931
    %4993 = vmatpush.bf16.msra.mxu0 %v4927
    %4994 = vmatpush.bf16.msra.mxu0 %v4923
    %4995 = vmatmul.bf16.gmra.mxu0 0
    %v4996 = vpop.f32.mrf.mxu0
    %v4997 = vadd.f32 0.0, %v4996
    %v4998 = vpop.f32.mrf.mxu0
    %4999 = vdwg.mxu0
    %5000 = vmatpush.bf16.msra.mxu0 %v4952
    %5001 = vmatpush.bf16.msra.mxu0 %v4948
    %5002 = vmatpush.bf16.msra.mxu0 %v4944
    %5003 = vmatpush.bf16.msra.mxu0 %v4940
    %5004 = vmatpush.bf16.msra.mxu0 %v4936
    %5005 = vmatpush.bf16.msra.mxu0 %v4932
    %5006 = vmatpush.bf16.msra.mxu0 %v4928
    %5007 = vmatpush.bf16.msra.mxu0 %v4924
    %5008 = vmatmul.bf16.gmra.mxu0 0
    %v5009 = vpop.f32.mrf.mxu0
    %v5010 = vadd.f32 0.0, %v5009
    %v5011 = vpop.f32.mrf.mxu0
    %5012 = vdwg.mxu0
    %5013 = vmatpush.bf16.msra.mxu0 %v4953
    %5014 = vmatpush.bf16.msra.mxu0 %v4949
    %5015 = vmatpush.bf16.msra.mxu0 %v4945
    %5016 = vmatpush.bf16.msra.mxu0 %v4941
    %5017 = vmatpush.bf16.msra.mxu0 %v4937
    %5018 = vmatpush.bf16.msra.mxu0 %v4933
    %5019 = vmatpush.bf16.msra.mxu0 %v4929
    %5020 = vmatpush.bf16.msra.mxu0 %v4925
    %5021 = vmatmul.bf16.gmra.mxu0 0
    %v5022 = vpop.f32.mrf.mxu0
    %v5023 = vadd.f32 0.0, %v5022
    %v5024 = vpop.f32.mrf.mxu0
    %5025 = vdwg.mxu0
    %5026 = vmatpush.bf16.msra.mxu0 %v4954
    %5027 = vmatpush.bf16.msra.mxu0 %v4950
    %5028 = vmatpush.bf16.msra.mxu0 %v4946
    %5029 = vmatpush.bf16.msra.mxu0 %v4942
    %5030 = vmatpush.bf16.msra.mxu0 %v4938
    %5031 = vmatpush.bf16.msra.mxu0 %v4934
    %5032 = vmatpush.bf16.msra.mxu0 %v4930
    %5033 = vmatpush.bf16.msra.mxu0 %v4926
    %5034 = vmatmul.bf16.gmra.mxu0 0
    %v5035 = vpop.f32.mrf.mxu0
    %v5036 = vadd.f32 0.0, %v5035
    %v5037 = vpop.f32.mrf.mxu0
    %5038 = vdwg.mxu0
    %v5039 = vadd.f32 %v4791, %v4997
    %v5040 = vadd.f32 %v4792, %v5010
    %v5041 = vadd.f32 %v4793, %v5023
    %v5042 = vadd.f32 %v4794, %v5036
    %v5043 = vxor.u32 %v5039, 2147483648
    %v5044 = vxor.u32 %v5040, 2147483648
    %v5045 = vmul.f32 %v5043, 1.442695
    %v5046 = vpow.pop %v5045
    %v5047 = vmul.f32 %v5044, 1.442695
    %v5048 = vpow.pop %v5047
    %v5049 = vadd.f32 %v5046, 1.0
    %v5050 = vadd.f32 %v5048, 1.0
    %v5051 = vrcp.pop %v5049
    %v5052 = vmul.f32 %v5049, %v5051
    %v5053 = vsub.f32 1.0, %v5052
    %v5054 = vmul.f32 %v5051, %v5053
    %v5055 = vadd.f32 %v5051, %v5054
    %vm5056 = vweird.f32 %v5049
    %vm5057 = vweird.f32 %v5051
    %vm5058 = vmor %vm5056, %vm5057
    %v5059 = vsel %vm5058, %v5051, %v5055
    %v5060 = vand.u32 2147483647, %v5049
    %vm5061 = vcmp.eq.f32.partialorder %v5060, 8.507059e+37
    %v5062 = vand.u32 %v5049, 2147483648
    %v5063 = vor.u32 1.1754944e-38, %v5062
    %v5064 = vsel %vm5061, %v5063, %v5059
    %v5065 = vmul.f32 1.0, %v5064
    %v5066 = vrcp.pop %v5050
    %v5067 = vmul.f32 %v5050, %v5066
    %v5068 = vsub.f32 1.0, %v5067
    %v5069 = vmul.f32 %v5066, %v5068
    %v5070 = vadd.f32 %v5066, %v5069
    %vm5071 = vweird.f32 %v5050
    %vm5072 = vweird.f32 %v5066
    %vm5073 = vmor %vm5071, %vm5072
    %v5074 = vsel %vm5073, %v5066, %v5070
    %v5075 = vand.u32 2147483647, %v5050
    %vm5076 = vcmp.eq.f32.partialorder %v5075, 8.507059e+37
    %v5077 = vand.u32 %v5050, 2147483648
    %v5078 = vor.u32 1.1754944e-38, %v5077
    %v5079 = vsel %vm5076, %v5078, %v5074
    %v5080 = vmul.f32 1.0, %v5079
    %v5081 = vtanh.pop %v5041
    %v5082 = vxor.u32 %v5042, 2147483648
    %v5083 = vmul.f32 %v5082, 1.442695
    %v5084 = vpow.pop %v5083
    %v5085 = vadd.f32 %v5084, 1.0
    %v5086 = vrcp.pop %v5085
    %v5087 = vmul.f32 %v5085, %v5086
    %v5088 = vsub.f32 1.0, %v5087
    %v5089 = vmul.f32 %v5086, %v5088
    %v5090 = vadd.f32 %v5086, %v5089
    %vm5091 = vweird.f32 %v5085
    %vm5092 = vweird.f32 %v5086
    %vm5093 = vmor %vm5091, %vm5092
    %v5094 = vsel %vm5093, %v5086, %v5090
    %v5095 = vand.u32 2147483647, %v5085
    %vm5096 = vcmp.eq.f32.partialorder %v5095, 8.507059e+37
    %v5097 = vand.u32 %v5085, 2147483648
    %v5098 = vor.u32 1.1754944e-38, %v5097
    %v5099 = vsel %vm5096, %v5098, %v5094
    %v5100 = vmul.f32 1.0, %v5099
    %v5101 = vmul.f32 %v5080, 0.0
    %v5102 = vmul.f32 %v5065, %v5081
    %v5103 = vadd.f32 %v5101, %v5102
    %v5104 = vtanh.pop %v5103
    %v5105 = vmul.f32 %v5100, %v5104
    %v5106 = vmax.f32 %v5105, 0.0
    %v5107 = vpack.c.bf16 %v5106, %v5106
    %5108 = vst [vmem:[#allocation5] sm:$0xf] %v5107
    %v5109 = vld [vmem:[%s771] sm:$0xff]
    %v5110 = vld [vmem:[%s771 + $0x8] sm:$0xff]
    %v5111 = vld [vmem:[%s771 + $0x10] sm:$0xff]
    %v5112 = vld [vmem:[%s771 + $0x18] sm:$0xff]
    %v5113 = vpack.c.bf16 %v5105, %v5105
    %v5114 = vld [vmem:[#allocation21] sm:$0xff]
    %v5115 = vld [vmem:[#allocation21 + $0x8] sm:$0xff]
    %v5116 = vld [vmem:[#allocation21 + $0x10] sm:$0xff]
    %v5117 = vld [vmem:[#allocation21 + $0x18] sm:$0xff]
    %v5118 = vld [vmem:[#allocation21 + $0x20] sm:$0xff]
    %v5119 = vld [vmem:[#allocation21 + $0x28] sm:$0xff]
    %v5120 = vld [vmem:[#allocation21 + $0x30] sm:$0xff]
    %v5121 = vld [vmem:[#allocation21 + $0x38] sm:$0xff]
    %v5122 = vld [vmem:[#allocation21 + $0x40] sm:$0xff]
    %v5123 = vld [vmem:[#allocation21 + $0x48] sm:$0xff]
    %v5124 = vld [vmem:[#allocation21 + $0x50] sm:$0xff]
    %v5125 = vld [vmem:[#allocation21 + $0x58] sm:$0xff]
    %v5126 = vld [vmem:[#allocation21 + $0x60] sm:$0xff]
    %v5127 = vld [vmem:[#allocation21 + $0x68] sm:$0xff]
    %v5128 = vld [vmem:[#allocation21 + $0x70] sm:$0xff]
    %v5129 = vld [vmem:[#allocation21 + $0x78] sm:$0xff]
    %v5130 = vld [vmem:[#allocation21 + $0x80] sm:$0xff]
    %v5131 = vld [vmem:[#allocation21 + $0x88] sm:$0xff]
    %v5132 = vld [vmem:[#allocation21 + $0x90] sm:$0xff]
    %v5133 = vld [vmem:[#allocation21 + $0x98] sm:$0xff]
    %v5134 = vld [vmem:[#allocation21 + $0xa0] sm:$0xff]
    %v5135 = vld [vmem:[#allocation21 + $0xa8] sm:$0xff]
    %v5136 = vld [vmem:[#allocation21 + $0xb0] sm:$0xff]
    %v5137 = vld [vmem:[#allocation21 + $0xb8] sm:$0xff]
    %v5138 = vld [vmem:[#allocation21 + $0xc0] sm:$0xff]
    %v5139 = vld [vmem:[#allocation21 + $0xc8] sm:$0xff]
    %v5140 = vld [vmem:[#allocation21 + $0xd0] sm:$0xff]
    %v5141 = vld [vmem:[#allocation21 + $0xd8] sm:$0xff]
    %v5142 = vld [vmem:[#allocation21 + $0xe0] sm:$0xff]
    %v5143 = vld [vmem:[#allocation21 + $0xe8] sm:$0xff]
    %v5144 = vld [vmem:[#allocation21 + $0xf0] sm:$0xff]
    %v5145 = vld [vmem:[#allocation21 + $0xf8] sm:$0xff]
    %v5178 = vunpack.c.l.b16 %v5114
    %v5179 = vunpack.c.h.b16 %v5114
    %v5180 = vunpack.c.l.b16 %v5115
    %v5181 = vunpack.c.h.b16 %v5115
    %v5182 = vunpack.c.l.b16 %v5116
    %v5183 = vunpack.c.h.b16 %v5116
    %v5184 = vunpack.c.l.b16 %v5117
    %v5185 = vunpack.c.h.b16 %v5117
    %v5186 = vunpack.c.l.b16 %v5118
    %v5187 = vunpack.c.h.b16 %v5118
    %v5188 = vunpack.c.l.b16 %v5119
    %v5189 = vunpack.c.h.b16 %v5119
    %v5190 = vunpack.c.l.b16 %v5120
    %v5191 = vunpack.c.h.b16 %v5120
    %v5192 = vunpack.c.l.b16 %v5121
    %v5193 = vunpack.c.h.b16 %v5121
    %v5194 = vunpack.c.l.b16 %v5122
    %v5195 = vunpack.c.h.b16 %v5122
    %v5196 = vunpack.c.l.b16 %v5123
    %v5197 = vunpack.c.h.b16 %v5123
    %v5198 = vunpack.c.l.b16 %v5124
    %v5199 = vunpack.c.h.b16 %v5124
    %v5200 = vunpack.c.l.b16 %v5125
    %v5201 = vunpack.c.h.b16 %v5125
    %v5202 = vunpack.c.l.b16 %v5126
    %v5203 = vunpack.c.h.b16 %v5126
    %v5204 = vunpack.c.l.b16 %v5127
    %v5205 = vunpack.c.h.b16 %v5127
    %v5206 = vunpack.c.l.b16 %v5128
    %v5207 = vunpack.c.h.b16 %v5128
    %v5208 = vunpack.c.l.b16 %v5129
    %v5209 = vunpack.c.h.b16 %v5129
    %v5210 = vunpack.c.l.b16 %v5130
    %v5211 = vunpack.c.h.b16 %v5130
    %v5212 = vunpack.c.l.b16 %v5131
    %v5213 = vunpack.c.h.b16 %v5131
    %v5214 = vunpack.c.l.b16 %v5132
    %v5215 = vunpack.c.h.b16 %v5132
    %v5216 = vunpack.c.l.b16 %v5133
    %v5217 = vunpack.c.h.b16 %v5133
    %v5218 = vunpack.c.l.b16 %v5134
    %v5219 = vunpack.c.h.b16 %v5134
    %v5220 = vunpack.c.l.b16 %v5135
    %v5221 = vunpack.c.h.b16 %v5135
    %v5222 = vunpack.c.l.b16 %v5136
    %v5223 = vunpack.c.h.b16 %v5136
    %v5224 = vunpack.c.l.b16 %v5137
    %v5225 = vunpack.c.h.b16 %v5137
    %v5226 = vunpack.c.l.b16 %v5138
    %v5227 = vunpack.c.h.b16 %v5138
    %v5228 = vunpack.c.l.b16 %v5139
    %v5229 = vunpack.c.h.b16 %v5139
    %v5230 = vunpack.c.l.b16 %v5140
    %v5231 = vunpack.c.h.b16 %v5140
    %v5232 = vunpack.c.l.b16 %v5141
    %v5233 = vunpack.c.h.b16 %v5141
    %v5234 = vunpack.c.l.b16 %v5142
    %v5235 = vunpack.c.h.b16 %v5142
    %v5236 = vunpack.c.l.b16 %v5143
    %v5237 = vunpack.c.h.b16 %v5143
    %v5238 = vunpack.c.l.b16 %v5144
    %v5239 = vunpack.c.h.b16 %v5144
    %v5240 = vunpack.c.l.b16 %v5145
    %v5241 = vunpack.c.h.b16 %v5145
    %v5242 = vpack.c.b16 %v5182, %v5178
    %v5243 = vpack.c.b16 %v5183, %v5179
    %v5244 = vpack.c.b16 %v5184, %v5180
    %v5245 = vpack.c.b16 %v5185, %v5181
    %v5246 = vpack.c.b16 %v5190, %v5186
    %v5247 = vpack.c.b16 %v5191, %v5187
    %v5248 = vpack.c.b16 %v5192, %v5188
    %v5249 = vpack.c.b16 %v5193, %v5189
    %v5250 = vpack.c.b16 %v5198, %v5194
    %v5251 = vpack.c.b16 %v5199, %v5195
    %v5252 = vpack.c.b16 %v5200, %v5196
    %v5253 = vpack.c.b16 %v5201, %v5197
    %v5254 = vpack.c.b16 %v5206, %v5202
    %v5255 = vpack.c.b16 %v5207, %v5203
    %v5256 = vpack.c.b16 %v5208, %v5204
    %v5257 = vpack.c.b16 %v5209, %v5205
    %v5258 = vpack.c.b16 %v5214, %v5210
    %v5259 = vpack.c.b16 %v5215, %v5211
    %v5260 = vpack.c.b16 %v5216, %v5212
    %v5261 = vpack.c.b16 %v5217, %v5213
    %v5262 = vpack.c.b16 %v5222, %v5218
    %v5263 = vpack.c.b16 %v5223, %v5219
    %v5264 = vpack.c.b16 %v5224, %v5220
    %v5265 = vpack.c.b16 %v5225, %v5221
    %v5266 = vpack.c.b16 %v5230, %v5226
    %v5267 = vpack.c.b16 %v5231, %v5227
    %v5268 = vpack.c.b16 %v5232, %v5228
    %v5269 = vpack.c.b16 %v5233, %v5229
    %v5270 = vpack.c.b16 %v5238, %v5234
    %v5271 = vpack.c.b16 %v5239, %v5235
    %v5272 = vpack.c.b16 %v5240, %v5236
    %v5273 = vpack.c.b16 %v5241, %v5237
    %5306 = vmatpush.bf16.msra.mxu0 %v5270
    %5307 = vmatpush.bf16.msra.mxu0 %v5266
    %5308 = vmatpush.bf16.msra.mxu0 %v5262
    %5309 = vmatpush.bf16.msra.mxu0 %v5258
    %5310 = vmatpush.bf16.msra.mxu0 %v5254
    %5311 = vmatpush.bf16.msra.mxu0 %v5250
    %5312 = vmatpush.bf16.msra.mxu0 %v5246
    %5313 = vmatpush.bf16.msra.mxu0 %v5242
    %5314 = vmatmul.bf16.gmra.mxu0 %v5113
    %v5315 = vpop.f32.mrf.mxu0
    %v5316 = vadd.f32 0.0, %v5315
    %v5317 = vpop.f32.mrf.mxu0
    %5318 = vdwg.mxu0
    %5319 = vmatpush.bf16.msra.mxu0 %v5271
    %5320 = vmatpush.bf16.msra.mxu0 %v5267
    %5321 = vmatpush.bf16.msra.mxu0 %v5263
    %5322 = vmatpush.bf16.msra.mxu0 %v5259
    %5323 = vmatpush.bf16.msra.mxu0 %v5255
    %5324 = vmatpush.bf16.msra.mxu0 %v5251
    %5325 = vmatpush.bf16.msra.mxu0 %v5247
    %5326 = vmatpush.bf16.msra.mxu0 %v5243
    %5327 = vmatmul.bf16.gmra.mxu0 %v5113
    %v5328 = vpop.f32.mrf.mxu0
    %v5329 = vadd.f32 0.0, %v5328
    %v5330 = vpop.f32.mrf.mxu0
    %5331 = vdwg.mxu0
    %5332 = vmatpush.bf16.msra.mxu0 %v5272
    %5333 = vmatpush.bf16.msra.mxu0 %v5268
    %5334 = vmatpush.bf16.msra.mxu0 %v5264
    %5335 = vmatpush.bf16.msra.mxu0 %v5260
    %5336 = vmatpush.bf16.msra.mxu0 %v5256
    %5337 = vmatpush.bf16.msra.mxu0 %v5252
    %5338 = vmatpush.bf16.msra.mxu0 %v5248
    %5339 = vmatpush.bf16.msra.mxu0 %v5244
    %5340 = vmatmul.bf16.gmra.mxu0 %v5113
    %v5341 = vpop.f32.mrf.mxu0
    %v5342 = vadd.f32 0.0, %v5341
    %v5343 = vpop.f32.mrf.mxu0
    %5344 = vdwg.mxu0
    %5345 = vmatpush.bf16.msra.mxu0 %v5273
    %5346 = vmatpush.bf16.msra.mxu0 %v5269
    %5347 = vmatpush.bf16.msra.mxu0 %v5265
    %5348 = vmatpush.bf16.msra.mxu0 %v5261
    %5349 = vmatpush.bf16.msra.mxu0 %v5257
    %5350 = vmatpush.bf16.msra.mxu0 %v5253
    %5351 = vmatpush.bf16.msra.mxu0 %v5249
    %5352 = vmatpush.bf16.msra.mxu0 %v5245
    %5353 = vmatmul.bf16.gmra.mxu0 %v5113
    %v5354 = vpop.f32.mrf.mxu0
    %v5355 = vadd.f32 0.0, %v5354
    %v5356 = vpop.f32.mrf.mxu0
    %5357 = vdwg.mxu0
    %v5358 = vadd.f32 %v5109, %v5316
    %v5359 = vadd.f32 %v5110, %v5329
    %v5360 = vadd.f32 %v5111, %v5342
    %v5361 = vadd.f32 %v5112, %v5355
    %v5362 = vxor.u32 %v5358, 2147483648
    %v5363 = vxor.u32 %v5359, 2147483648
    %v5364 = vmul.f32 %v5362, 1.442695
    %v5365 = vpow.pop %v5364
    %v5366 = vmul.f32 %v5363, 1.442695
    %v5367 = vpow.pop %v5366
    %v5368 = vadd.f32 %v5365, 1.0
    %v5369 = vadd.f32 %v5367, 1.0
    %v5370 = vrcp.pop %v5368
    %v5371 = vmul.f32 %v5368, %v5370
    %v5372 = vsub.f32 1.0, %v5371
    %v5373 = vmul.f32 %v5370, %v5372
    %v5374 = vadd.f32 %v5370, %v5373
    %vm5375 = vweird.f32 %v5368
    %vm5376 = vweird.f32 %v5370
    %vm5377 = vmor %vm5375, %vm5376
    %v5378 = vsel %vm5377, %v5370, %v5374
    %v5379 = vand.u32 2147483647, %v5368
    %vm5380 = vcmp.eq.f32.partialorder %v5379, 8.507059e+37
    %v5381 = vand.u32 %v5368, 2147483648
    %v5382 = vor.u32 1.1754944e-38, %v5381
    %v5383 = vsel %vm5380, %v5382, %v5378
    %v5384 = vmul.f32 1.0, %v5383
    %v5385 = vrcp.pop %v5369
    %v5386 = vmul.f32 %v5369, %v5385
    %v5387 = vsub.f32 1.0, %v5386
    %v5388 = vmul.f32 %v5385, %v5387
    %v5389 = vadd.f32 %v5385, %v5388
    %vm5390 = vweird.f32 %v5369
    %vm5391 = vweird.f32 %v5385
    %vm5392 = vmor %vm5390, %vm5391
    %v5393 = vsel %vm5392, %v5385, %v5389
    %v5394 = vand.u32 2147483647, %v5369
    %vm5395 = vcmp.eq.f32.partialorder %v5394, 8.507059e+37
    %v5396 = vand.u32 %v5369, 2147483648
    %v5397 = vor.u32 1.1754944e-38, %v5396
    %v5398 = vsel %vm5395, %v5397, %v5393
    %v5399 = vmul.f32 1.0, %v5398
    %v5400 = vtanh.pop %v5360
    %v5401 = vxor.u32 %v5361, 2147483648
    %v5402 = vmul.f32 %v5401, 1.442695
    %v5403 = vpow.pop %v5402
    %v5404 = vadd.f32 %v5403, 1.0
    %v5405 = vrcp.pop %v5404
    %v5406 = vmul.f32 %v5404, %v5405
    %v5407 = vsub.f32 1.0, %v5406
    %v5408 = vmul.f32 %v5405, %v5407
    %v5409 = vadd.f32 %v5405, %v5408
    %vm5410 = vweird.f32 %v5404
    %vm5411 = vweird.f32 %v5405
    %vm5412 = vmor %vm5410, %vm5411
    %v5413 = vsel %vm5412, %v5405, %v5409
    %v5414 = vand.u32 2147483647, %v5404
    %vm5415 = vcmp.eq.f32.partialorder %v5414, 8.507059e+37
    %v5416 = vand.u32 %v5404, 2147483648
    %v5417 = vor.u32 1.1754944e-38, %v5416
    %v5418 = vsel %vm5415, %v5417, %v5413
    %v5419 = vmul.f32 1.0, %v5418
    %v5420 = vmul.f32 %v5399, %v5103
    %v5421 = vmul.f32 %v5384, %v5400
    %v5422 = vadd.f32 %v5420, %v5421
    %v5423 = vtanh.pop %v5422
    %v5424 = vmul.f32 %v5419, %v5423
    %v5425 = vmax.f32 %v5424, 0.0
    %v5426 = vpack.c.bf16 %v5425, %v5425
    %5427 = vst [vmem:[%s1090] sm:$0xf] %v5426
    %v5428 = vld [vmem:[%s1094] sm:$0xff]
    %v5429 = vld [vmem:[%s1094 + $0x8] sm:$0xff]
    %v5430 = vld [vmem:[%s1094 + $0x10] sm:$0xff]
    %v5431 = vld [vmem:[%s1094 + $0x18] sm:$0xff]
    %v5432 = vpack.c.bf16 %v5424, %v5424
    %v5433 = vld [vmem:[#allocation21] sm:$0xff]
    %v5434 = vld [vmem:[#allocation21 + $0x8] sm:$0xff]
    %v5435 = vld [vmem:[#allocation21 + $0x10] sm:$0xff]
    %v5436 = vld [vmem:[#allocation21 + $0x18] sm:$0xff]
    %v5437 = vld [vmem:[#allocation21 + $0x20] sm:$0xff]
    %v5438 = vld [vmem:[#allocation21 + $0x28] sm:$0xff]
    %v5439 = vld [vmem:[#allocation21 + $0x30] sm:$0xff]
    %v5440 = vld [vmem:[#allocation21 + $0x38] sm:$0xff]
    %v5441 = vld [vmem:[#allocation21 + $0x40] sm:$0xff]
    %v5442 = vld [vmem:[#allocation21 + $0x48] sm:$0xff]
    %v5443 = vld [vmem:[#allocation21 + $0x50] sm:$0xff]
    %v5444 = vld [vmem:[#allocation21 + $0x58] sm:$0xff]
    %v5445 = vld [vmem:[#allocation21 + $0x60] sm:$0xff]
    %v5446 = vld [vmem:[#allocation21 + $0x68] sm:$0xff]
    %v5447 = vld [vmem:[#allocation21 + $0x70] sm:$0xff]
    %v5448 = vld [vmem:[#allocation21 + $0x78] sm:$0xff]
    %v5449 = vld [vmem:[#allocation21 + $0x80] sm:$0xff]
    %v5450 = vld [vmem:[#allocation21 + $0x88] sm:$0xff]
    %v5451 = vld [vmem:[#allocation21 + $0x90] sm:$0xff]
    %v5452 = vld [vmem:[#allocation21 + $0x98] sm:$0xff]
    %v5453 = vld [vmem:[#allocation21 + $0xa0] sm:$0xff]
    %v5454 = vld [vmem:[#allocation21 + $0xa8] sm:$0xff]
    %v5455 = vld [vmem:[#allocation21 + $0xb0] sm:$0xff]
    %v5456 = vld [vmem:[#allocation21 + $0xb8] sm:$0xff]
    %v5457 = vld [vmem:[#allocation21 + $0xc0] sm:$0xff]
    %v5458 = vld [vmem:[#allocation21 + $0xc8] sm:$0xff]
    %v5459 = vld [vmem:[#allocation21 + $0xd0] sm:$0xff]
    %v5460 = vld [vmem:[#allocation21 + $0xd8] sm:$0xff]
    %v5461 = vld [vmem:[#allocation21 + $0xe0] sm:$0xff]
    %v5462 = vld [vmem:[#allocation21 + $0xe8] sm:$0xff]
    %v5463 = vld [vmem:[#allocation21 + $0xf0] sm:$0xff]
    %v5464 = vld [vmem:[#allocation21 + $0xf8] sm:$0xff]
    %v5497 = vunpack.c.l.b16 %v5433
    %v5498 = vunpack.c.h.b16 %v5433
    %v5499 = vunpack.c.l.b16 %v5434
    %v5500 = vunpack.c.h.b16 %v5434
    %v5501 = vunpack.c.l.b16 %v5435
    %v5502 = vunpack.c.h.b16 %v5435
    %v5503 = vunpack.c.l.b16 %v5436
    %v5504 = vunpack.c.h.b16 %v5436
    %v5505 = vunpack.c.l.b16 %v5437
    %v5506 = vunpack.c.h.b16 %v5437
    %v5507 = vunpack.c.l.b16 %v5438
    %v5508 = vunpack.c.h.b16 %v5438
    %v5509 = vunpack.c.l.b16 %v5439
    %v5510 = vunpack.c.h.b16 %v5439
    %v5511 = vunpack.c.l.b16 %v5440
    %v5512 = vunpack.c.h.b16 %v5440
    %v5513 = vunpack.c.l.b16 %v5441
    %v5514 = vunpack.c.h.b16 %v5441
    %v5515 = vunpack.c.l.b16 %v5442
    %v5516 = vunpack.c.h.b16 %v5442
    %v5517 = vunpack.c.l.b16 %v5443
    %v5518 = vunpack.c.h.b16 %v5443
    %v5519 = vunpack.c.l.b16 %v5444
    %v5520 = vunpack.c.h.b16 %v5444
    %v5521 = vunpack.c.l.b16 %v5445
    %v5522 = vunpack.c.h.b16 %v5445
    %v5523 = vunpack.c.l.b16 %v5446
    %v5524 = vunpack.c.h.b16 %v5446
    %v5525 = vunpack.c.l.b16 %v5447
    %v5526 = vunpack.c.h.b16 %v5447
    %v5527 = vunpack.c.l.b16 %v5448
    %v5528 = vunpack.c.h.b16 %v5448
    %v5529 = vunpack.c.l.b16 %v5449
    %v5530 = vunpack.c.h.b16 %v5449
    %v5531 = vunpack.c.l.b16 %v5450
    %v5532 = vunpack.c.h.b16 %v5450
    %v5533 = vunpack.c.l.b16 %v5451
    %v5534 = vunpack.c.h.b16 %v5451
    %v5535 = vunpack.c.l.b16 %v5452
    %v5536 = vunpack.c.h.b16 %v5452
    %v5537 = vunpack.c.l.b16 %v5453
    %v5538 = vunpack.c.h.b16 %v5453
    %v5539 = vunpack.c.l.b16 %v5454
    %v5540 = vunpack.c.h.b16 %v5454
    %v5541 = vunpack.c.l.b16 %v5455
    %v5542 = vunpack.c.h.b16 %v5455
    %v5543 = vunpack.c.l.b16 %v5456
    %v5544 = vunpack.c.h.b16 %v5456
    %v5545 = vunpack.c.l.b16 %v5457
    %v5546 = vunpack.c.h.b16 %v5457
    %v5547 = vunpack.c.l.b16 %v5458
    %v5548 = vunpack.c.h.b16 %v5458
    %v5549 = vunpack.c.l.b16 %v5459
    %v5550 = vunpack.c.h.b16 %v5459
    %v5551 = vunpack.c.l.b16 %v5460
    %v5552 = vunpack.c.h.b16 %v5460
    %v5553 = vunpack.c.l.b16 %v5461
    %v5554 = vunpack.c.h.b16 %v5461
    %v5555 = vunpack.c.l.b16 %v5462
    %v5556 = vunpack.c.h.b16 %v5462
    %v5557 = vunpack.c.l.b16 %v5463
    %v5558 = vunpack.c.h.b16 %v5463
    %v5559 = vunpack.c.l.b16 %v5464
    %v5560 = vunpack.c.h.b16 %v5464
    %v5561 = vpack.c.b16 %v5501, %v5497
    %v5562 = vpack.c.b16 %v5502, %v5498
    %v5563 = vpack.c.b16 %v5503, %v5499
    %v5564 = vpack.c.b16 %v5504, %v5500
    %v5565 = vpack.c.b16 %v5509, %v5505
    %v5566 = vpack.c.b16 %v5510, %v5506
    %v5567 = vpack.c.b16 %v5511, %v5507
    %v5568 = vpack.c.b16 %v5512, %v5508
    %v5569 = vpack.c.b16 %v5517, %v5513
    %v5570 = vpack.c.b16 %v5518, %v5514
    %v5571 = vpack.c.b16 %v5519, %v5515
    %v5572 = vpack.c.b16 %v5520, %v5516
    %v5573 = vpack.c.b16 %v5525, %v5521
    %v5574 = vpack.c.b16 %v5526, %v5522
    %v5575 = vpack.c.b16 %v5527, %v5523
    %v5576 = vpack.c.b16 %v5528, %v5524
    %v5577 = vpack.c.b16 %v5533, %v5529
    %v5578 = vpack.c.b16 %v5534, %v5530
    %v5579 = vpack.c.b16 %v5535, %v5531
    %v5580 = vpack.c.b16 %v5536, %v5532
    %v5581 = vpack.c.b16 %v5541, %v5537
    %v5582 = vpack.c.b16 %v5542, %v5538
    %v5583 = vpack.c.b16 %v5543, %v5539
    %v5584 = vpack.c.b16 %v5544, %v5540
    %v5585 = vpack.c.b16 %v5549, %v5545
    %v5586 = vpack.c.b16 %v5550, %v5546
    %v5587 = vpack.c.b16 %v5551, %v5547
    %v5588 = vpack.c.b16 %v5552, %v5548
    %v5589 = vpack.c.b16 %v5557, %v5553
    %v5590 = vpack.c.b16 %v5558, %v5554
    %v5591 = vpack.c.b16 %v5559, %v5555
    %v5592 = vpack.c.b16 %v5560, %v5556
    %5625 = vmatpush.bf16.msra.mxu0 %v5589
    %5626 = vmatpush.bf16.msra.mxu0 %v5585
    %5627 = vmatpush.bf16.msra.mxu0 %v5581
    %5628 = vmatpush.bf16.msra.mxu0 %v5577
    %5629 = vmatpush.bf16.msra.mxu0 %v5573
    %5630 = vmatpush.bf16.msra.mxu0 %v5569
    %5631 = vmatpush.bf16.msra.mxu0 %v5565
    %5632 = vmatpush.bf16.msra.mxu0 %v5561
    %5633 = vmatmul.bf16.gmra.mxu0 %v5432
    %v5634 = vpop.f32.mrf.mxu0
    %v5635 = vadd.f32 0.0, %v5634
    %v5636 = vpop.f32.mrf.mxu0
    %5637 = vdwg.mxu0
    %5638 = vmatpush.bf16.msra.mxu0 %v5590
    %5639 = vmatpush.bf16.msra.mxu0 %v5586
    %5640 = vmatpush.bf16.msra.mxu0 %v5582
    %5641 = vmatpush.bf16.msra.mxu0 %v5578
    %5642 = vmatpush.bf16.msra.mxu0 %v5574
    %5643 = vmatpush.bf16.msra.mxu0 %v5570
    %5644 = vmatpush.bf16.msra.mxu0 %v5566
    %5645 = vmatpush.bf16.msra.mxu0 %v5562
    %5646 = vmatmul.bf16.gmra.mxu0 %v5432
    %v5647 = vpop.f32.mrf.mxu0
    %v5648 = vadd.f32 0.0, %v5647
    %v5649 = vpop.f32.mrf.mxu0
    %5650 = vdwg.mxu0
    %5651 = vmatpush.bf16.msra.mxu0 %v5591
    %5652 = vmatpush.bf16.msra.mxu0 %v5587
    %5653 = vmatpush.bf16.msra.mxu0 %v5583
    %5654 = vmatpush.bf16.msra.mxu0 %v5579
    %5655 = vmatpush.bf16.msra.mxu0 %v5575
    %5656 = vmatpush.bf16.msra.mxu0 %v5571
    %5657 = vmatpush.bf16.msra.mxu0 %v5567
    %5658 = vmatpush.bf16.msra.mxu0 %v5563
    %5659 = vmatmul.bf16.gmra.mxu0 %v5432
    %v5660 = vpop.f32.mrf.mxu0
    %v5661 = vadd.f32 0.0, %v5660
    %v5662 = vpop.f32.mrf.mxu0
    %5663 = vdwg.mxu0
    %5664 = vmatpush.bf16.msra.mxu0 %v5592
    %5665 = vmatpush.bf16.msra.mxu0 %v5588
    %5666 = vmatpush.bf16.msra.mxu0 %v5584
    %5667 = vmatpush.bf16.msra.mxu0 %v5580
    %5668 = vmatpush.bf16.msra.mxu0 %v5576
    %5669 = vmatpush.bf16.msra.mxu0 %v5572
    %5670 = vmatpush.bf16.msra.mxu0 %v5568
    %5671 = vmatpush.bf16.msra.mxu0 %v5564
    %5672 = vmatmul.bf16.gmra.mxu0 %v5432
    %v5673 = vpop.f32.mrf.mxu0
    %v5674 = vadd.f32 0.0, %v5673
    %v5675 = vpop.f32.mrf.mxu0
    %5676 = vdwg.mxu0
    %v5677 = vadd.f32 %v5428, %v5635
    %v5678 = vadd.f32 %v5429, %v5648
    %v5679 = vadd.f32 %v5430, %v5661
    %v5680 = vadd.f32 %v5431, %v5674
    %v5681 = vxor.u32 %v5677, 2147483648
    %v5682 = vxor.u32 %v5678, 2147483648
    %v5683 = vmul.f32 %v5681, 1.442695
    %v5684 = vpow.pop %v5683
    %v5685 = vmul.f32 %v5682, 1.442695
    %v5686 = vpow.pop %v5685
    %v5687 = vadd.f32 %v5684, 1.0
    %v5688 = vadd.f32 %v5686, 1.0
    %v5689 = vrcp.pop %v5687
    %v5690 = vmul.f32 %v5687, %v5689
    %v5691 = vsub.f32 1.0, %v5690
    %v5692 = vmul.f32 %v5689, %v5691
    %v5693 = vadd.f32 %v5689, %v5692
    %vm5694 = vweird.f32 %v5687
    %vm5695 = vweird.f32 %v5689
    %vm5696 = vmor %vm5694, %vm5695
    %v5697 = vsel %vm5696, %v5689, %v5693
    %v5698 = vand.u32 2147483647, %v5687
    %vm5699 = vcmp.eq.f32.partialorder %v5698, 8.507059e+37
    %v5700 = vand.u32 %v5687, 2147483648
    %v5701 = vor.u32 1.1754944e-38, %v5700
    %v5702 = vsel %vm5699, %v5701, %v5697
    %v5703 = vmul.f32 1.0, %v5702
    %v5704 = vrcp.pop %v5688
    %v5705 = vmul.f32 %v5688, %v5704
    %v5706 = vsub.f32 1.0, %v5705
    %v5707 = vmul.f32 %v5704, %v5706
    %v5708 = vadd.f32 %v5704, %v5707
    %vm5709 = vweird.f32 %v5688
    %vm5710 = vweird.f32 %v5704
    %vm5711 = vmor %vm5709, %vm5710
    %v5712 = vsel %vm5711, %v5704, %v5708
    %v5713 = vand.u32 2147483647, %v5688
    %vm5714 = vcmp.eq.f32.partialorder %v5713, 8.507059e+37
    %v5715 = vand.u32 %v5688, 2147483648
    %v5716 = vor.u32 1.1754944e-38, %v5715
    %v5717 = vsel %vm5714, %v5716, %v5712
    %v5718 = vmul.f32 1.0, %v5717
    %v5719 = vtanh.pop %v5679
    %v5720 = vxor.u32 %v5680, 2147483648
    %v5721 = vmul.f32 %v5720, 1.442695
    %v5722 = vpow.pop %v5721
    %v5723 = vadd.f32 %v5722, 1.0
    %v5724 = vrcp.pop %v5723
    %v5725 = vmul.f32 %v5723, %v5724
    %v5726 = vsub.f32 1.0, %v5725
    %v5727 = vmul.f32 %v5724, %v5726
    %v5728 = vadd.f32 %v5724, %v5727
    %vm5729 = vweird.f32 %v5723
    %vm5730 = vweird.f32 %v5724
    %vm5731 = vmor %vm5729, %vm5730
    %v5732 = vsel %vm5731, %v5724, %v5728
    %v5733 = vand.u32 2147483647, %v5723
    %vm5734 = vcmp.eq.f32.partialorder %v5733, 8.507059e+37
    %v5735 = vand.u32 %v5723, 2147483648
    %v5736 = vor.u32 1.1754944e-38, %v5735
    %v5737 = vsel %vm5734, %v5736, %v5732
    %v5738 = vmul.f32 1.0, %v5737
    %v5739 = vmul.f32 %v5718, %v5422
    %v5740 = vmul.f32 %v5703, %v5719
    %v5741 = vadd.f32 %v5739, %v5740
    %v5742 = vtanh.pop %v5741
    %v5743 = vmul.f32 %v5738, %v5742
    %v5744 = vmax.f32 %v5743, 0.0
    %v5745 = vpack.c.bf16 %v5744, %v5744
    %5746 = vst [vmem:[%s1413] sm:$0xf] %v5745
    %v5747 = vld [vmem:[%s1417] sm:$0xff]
    %v5748 = vld [vmem:[%s1417 + $0x8] sm:$0xff]
    %v5749 = vld [vmem:[%s1417 + $0x10] sm:$0xff]
    %v5750 = vld [vmem:[%s1417 + $0x18] sm:$0xff]
    %v5751 = vpack.c.bf16 %v5743, %v5743
    %v5752 = vld [vmem:[#allocation21] sm:$0xff]
    %v5753 = vld [vmem:[#allocation21 + $0x8] sm:$0xff]
    %v5754 = vld [vmem:[#allocation21 + $0x10] sm:$0xff]
    %v5755 = vld [vmem:[#allocation21 + $0x18] sm:$0xff]
    %v5756 = vld [vmem:[#allocation21 + $0x20] sm:$0xff]
    %v5757 = vld [vmem:[#allocation21 + $0x28] sm:$0xff]
    %v5758 = vld [vmem:[#allocation21 + $0x30] sm:$0xff]
    %v5759 = vld [vmem:[#allocation21 + $0x38] sm:$0xff]
    %v5760 = vld [vmem:[#allocation21 + $0x40] sm:$0xff]
    %v5761 = vld [vmem:[#allocation21 + $0x48] sm:$0xff]
    %v5762 = vld [vmem:[#allocation21 + $0x50] sm:$0xff]
    %v5763 = vld [vmem:[#allocation21 + $0x58] sm:$0xff]
    %v5764 = vld [vmem:[#allocation21 + $0x60] sm:$0xff]
    %v5765 = vld [vmem:[#allocation21 + $0x68] sm:$0xff]
    %v5766 = vld [vmem:[#allocation21 + $0x70] sm:$0xff]
    %v5767 = vld [vmem:[#allocation21 + $0x78] sm:$0xff]
    %v5768 = vld [vmem:[#allocation21 + $0x80] sm:$0xff]
    %v5769 = vld [vmem:[#allocation21 + $0x88] sm:$0xff]
    %v5770 = vld [vmem:[#allocation21 + $0x90] sm:$0xff]
    %v5771 = vld [vmem:[#allocation21 + $0x98] sm:$0xff]
    %v5772 = vld [vmem:[#allocation21 + $0xa0] sm:$0xff]
    %v5773 = vld [vmem:[#allocation21 + $0xa8] sm:$0xff]
    %v5774 = vld [vmem:[#allocation21 + $0xb0] sm:$0xff]
    %v5775 = vld [vmem:[#allocation21 + $0xb8] sm:$0xff]
    %v5776 = vld [vmem:[#allocation21 + $0xc0] sm:$0xff]
    %v5777 = vld [vmem:[#allocation21 + $0xc8] sm:$0xff]
    %v5778 = vld [vmem:[#allocation21 + $0xd0] sm:$0xff]
    %v5779 = vld [vmem:[#allocation21 + $0xd8] sm:$0xff]
    %v5780 = vld [vmem:[#allocation21 + $0xe0] sm:$0xff]
    %v5781 = vld [vmem:[#allocation21 + $0xe8] sm:$0xff]
    %v5782 = vld [vmem:[#allocation21 + $0xf0] sm:$0xff]
    %v5783 = vld [vmem:[#allocation21 + $0xf8] sm:$0xff]
    %v5816 = vunpack.c.l.b16 %v5752
    %v5817 = vunpack.c.h.b16 %v5752
    %v5818 = vunpack.c.l.b16 %v5753
    %v5819 = vunpack.c.h.b16 %v5753
    %v5820 = vunpack.c.l.b16 %v5754
    %v5821 = vunpack.c.h.b16 %v5754
    %v5822 = vunpack.c.l.b16 %v5755
    %v5823 = vunpack.c.h.b16 %v5755
    %v5824 = vunpack.c.l.b16 %v5756
    %v5825 = vunpack.c.h.b16 %v5756
    %v5826 = vunpack.c.l.b16 %v5757
    %v5827 = vunpack.c.h.b16 %v5757
    %v5828 = vunpack.c.l.b16 %v5758
    %v5829 = vunpack.c.h.b16 %v5758
    %v5830 = vunpack.c.l.b16 %v5759
    %v5831 = vunpack.c.h.b16 %v5759
    %v5832 = vunpack.c.l.b16 %v5760
    %v5833 = vunpack.c.h.b16 %v5760
    %v5834 = vunpack.c.l.b16 %v5761
    %v5835 = vunpack.c.h.b16 %v5761
    %v5836 = vunpack.c.l.b16 %v5762
    %v5837 = vunpack.c.h.b16 %v5762
    %v5838 = vunpack.c.l.b16 %v5763
    %v5839 = vunpack.c.h.b16 %v5763
    %v5840 = vunpack.c.l.b16 %v5764
    %v5841 = vunpack.c.h.b16 %v5764
    %v5842 = vunpack.c.l.b16 %v5765
    %v5843 = vunpack.c.h.b16 %v5765
    %v5844 = vunpack.c.l.b16 %v5766
    %v5845 = vunpack.c.h.b16 %v5766
    %v5846 = vunpack.c.l.b16 %v5767
    %v5847 = vunpack.c.h.b16 %v5767
    %v5848 = vunpack.c.l.b16 %v5768
    %v5849 = vunpack.c.h.b16 %v5768
    %v5850 = vunpack.c.l.b16 %v5769
    %v5851 = vunpack.c.h.b16 %v5769
    %v5852 = vunpack.c.l.b16 %v5770
    %v5853 = vunpack.c.h.b16 %v5770
    %v5854 = vunpack.c.l.b16 %v5771
    %v5855 = vunpack.c.h.b16 %v5771
    %v5856 = vunpack.c.l.b16 %v5772
    %v5857 = vunpack.c.h.b16 %v5772
    %v5858 = vunpack.c.l.b16 %v5773
    %v5859 = vunpack.c.h.b16 %v5773
    %v5860 = vunpack.c.l.b16 %v5774
    %v5861 = vunpack.c.h.b16 %v5774
    %v5862 = vunpack.c.l.b16 %v5775
    %v5863 = vunpack.c.h.b16 %v5775
    %v5864 = vunpack.c.l.b16 %v5776
    %v5865 = vunpack.c.h.b16 %v5776
    %v5866 = vunpack.c.l.b16 %v5777
    %v5867 = vunpack.c.h.b16 %v5777
    %v5868 = vunpack.c.l.b16 %v5778
    %v5869 = vunpack.c.h.b16 %v5778
    %v5870 = vunpack.c.l.b16 %v5779
    %v5871 = vunpack.c.h.b16 %v5779
    %v5872 = vunpack.c.l.b16 %v5780
    %v5873 = vunpack.c.h.b16 %v5780
    %v5874 = vunpack.c.l.b16 %v5781
    %v5875 = vunpack.c.h.b16 %v5781
    %v5876 = vunpack.c.l.b16 %v5782
    %v5877 = vunpack.c.h.b16 %v5782
    %v5878 = vunpack.c.l.b16 %v5783
    %v5879 = vunpack.c.h.b16 %v5783
    %v5880 = vpack.c.b16 %v5820, %v5816
    %v5881 = vpack.c.b16 %v5821, %v5817
    %v5882 = vpack.c.b16 %v5822, %v5818
    %v5883 = vpack.c.b16 %v5823, %v5819
    %v5884 = vpack.c.b16 %v5828, %v5824
    %v5885 = vpack.c.b16 %v5829, %v5825
    %v5886 = vpack.c.b16 %v5830, %v5826
    %v5887 = vpack.c.b16 %v5831, %v5827
    %v5888 = vpack.c.b16 %v5836, %v5832
    %v5889 = vpack.c.b16 %v5837, %v5833
    %v5890 = vpack.c.b16 %v5838, %v5834
    %v5891 = vpack.c.b16 %v5839, %v5835
    %v5892 = vpack.c.b16 %v5844, %v5840
    %v5893 = vpack.c.b16 %v5845, %v5841
    %v5894 = vpack.c.b16 %v5846, %v5842
    %v5895 = vpack.c.b16 %v5847, %v5843
    %v5896 = vpack.c.b16 %v5852, %v5848
    %v5897 = vpack.c.b16 %v5853, %v5849
    %v5898 = vpack.c.b16 %v5854, %v5850
    %v5899 = vpack.c.b16 %v5855, %v5851
    %v5900 = vpack.c.b16 %v5860, %v5856
    %v5901 = vpack.c.b16 %v5861, %v5857
    %v5902 = vpack.c.b16 %v5862, %v5858
    %v5903 = vpack.c.b16 %v5863, %v5859
    %v5904 = vpack.c.b16 %v5868, %v5864
    %v5905 = vpack.c.b16 %v5869, %v5865
    %v5906 = vpack.c.b16 %v5870, %v5866
    %v5907 = vpack.c.b16 %v5871, %v5867
    %v5908 = vpack.c.b16 %v5876, %v5872
    %v5909 = vpack.c.b16 %v5877, %v5873
    %v5910 = vpack.c.b16 %v5878, %v5874
    %v5911 = vpack.c.b16 %v5879, %v5875
    %5944 = vmatpush.bf16.msra.mxu0 %v5908
    %5945 = vmatpush.bf16.msra.mxu0 %v5904
    %5946 = vmatpush.bf16.msra.mxu0 %v5900
    %5947 = vmatpush.bf16.msra.mxu0 %v5896
    %5948 = vmatpush.bf16.msra.mxu0 %v5892
    %5949 = vmatpush.bf16.msra.mxu0 %v5888
    %5950 = vmatpush.bf16.msra.mxu0 %v5884
    %5951 = vmatpush.bf16.msra.mxu0 %v5880
    %5952 = vmatmul.bf16.gmra.mxu0 %v5751
    %v5953 = vpop.f32.mrf.mxu0
    %v5954 = vadd.f32 0.0, %v5953
    %v5955 = vpop.f32.mrf.mxu0
    %5956 = vdwg.mxu0
    %5957 = vmatpush.bf16.msra.mxu0 %v5909
    %5958 = vmatpush.bf16.msra.mxu0 %v5905
    %5959 = vmatpush.bf16.msra.mxu0 %v5901
    %5960 = vmatpush.bf16.msra.mxu0 %v5897
    %5961 = vmatpush.bf16.msra.mxu0 %v5893
    %5962 = vmatpush.bf16.msra.mxu0 %v5889
    %5963 = vmatpush.bf16.msra.mxu0 %v5885
    %5964 = vmatpush.bf16.msra.mxu0 %v5881
    %5965 = vmatmul.bf16.gmra.mxu0 %v5751
    %v5966 = vpop.f32.mrf.mxu0
    %v5967 = vadd.f32 0.0, %v5966
    %v5968 = vpop.f32.mrf.mxu0
    %5969 = vdwg.mxu0
    %5970 = vmatpush.bf16.msra.mxu0 %v5910
    %5971 = vmatpush.bf16.msra.mxu0 %v5906
    %5972 = vmatpush.bf16.msra.mxu0 %v5902
    %5973 = vmatpush.bf16.msra.mxu0 %v5898
    %5974 = vmatpush.bf16.msra.mxu0 %v5894
    %5975 = vmatpush.bf16.msra.mxu0 %v5890
    %5976 = vmatpush.bf16.msra.mxu0 %v5886
    %5977 = vmatpush.bf16.msra.mxu0 %v5882
    %5978 = vmatmul.bf16.gmra.mxu0 %v5751
    %v5979 = vpop.f32.mrf.mxu0
    %v5980 = vadd.f32 0.0, %v5979
    %v5981 = vpop.f32.mrf.mxu0
    %5982 = vdwg.mxu0
    %5983 = vmatpush.bf16.msra.mxu0 %v5911
    %5984 = vmatpush.bf16.msra.mxu0 %v5907
    %5985 = vmatpush.bf16.msra.mxu0 %v5903
    %5986 = vmatpush.bf16.msra.mxu0 %v5899
    %5987 = vmatpush.bf16.msra.mxu0 %v5895
    %5988 = vmatpush.bf16.msra.mxu0 %v5891
    %5989 = vmatpush.bf16.msra.mxu0 %v5887
    %5990 = vmatpush.bf16.msra.mxu0 %v5883
    %5991 = vmatmul.bf16.gmra.mxu0 %v5751
    %v5992 = vpop.f32.mrf.mxu0
    %v5993 = vadd.f32 0.0, %v5992
    %v5994 = vpop.f32.mrf.mxu0
    %5995 = vdwg.mxu0
    %v5996 = vadd.f32 %v5747, %v5954
    %v5997 = vadd.f32 %v5748, %v5967
    %v5998 = vadd.f32 %v5749, %v5980
    %v5999 = vadd.f32 %v5750, %v5993
    %v6000 = vxor.u32 %v5996, 2147483648
    %v6001 = vxor.u32 %v5997, 2147483648
    %v6002 = vmul.f32 %v6000, 1.442695
    %v6003 = vpow.pop %v6002
    %v6004 = vmul.f32 %v6001, 1.442695
    %v6005 = vpow.pop %v6004
    %v6006 = vadd.f32 %v6003, 1.0
    %v6007 = vadd.f32 %v6005, 1.0
    %v6008 = vrcp.pop %v6006
    %v6009 = vmul.f32 %v6006, %v6008
    %v6010 = vsub.f32 1.0, %v6009
    %v6011 = vmul.f32 %v6008, %v6010
    %v6012 = vadd.f32 %v6008, %v6011
    %vm6013 = vweird.f32 %v6006
    %vm6014 = vweird.f32 %v6008
    %vm6015 = vmor %vm6013, %vm6014
    %v6016 = vsel %vm6015, %v6008, %v6012
    %v6017 = vand.u32 2147483647, %v6006
    %vm6018 = vcmp.eq.f32.partialorder %v6017, 8.507059e+37
    %v6019 = vand.u32 %v6006, 2147483648
    %v6020 = vor.u32 1.1754944e-38, %v6019
    %v6021 = vsel %vm6018, %v6020, %v6016
    %v6022 = vmul.f32 1.0, %v6021
    %v6023 = vrcp.pop %v6007
    %v6024 = vmul.f32 %v6007, %v6023
    %v6025 = vsub.f32 1.0, %v6024
    %v6026 = vmul.f32 %v6023, %v6025
    %v6027 = vadd.f32 %v6023, %v6026
    %vm6028 = vweird.f32 %v6007
    %vm6029 = vweird.f32 %v6023
    %vm6030 = vmor %vm6028, %vm6029
    %v6031 = vsel %vm6030, %v6023, %v6027
    %v6032 = vand.u32 2147483647, %v6007
    %vm6033 = vcmp.eq.f32.partialorder %v6032, 8.507059e+37
    %v6034 = vand.u32 %v6007, 2147483648
    %v6035 = vor.u32 1.1754944e-38, %v6034
    %v6036 = vsel %vm6033, %v6035, %v6031
    %v6037 = vmul.f32 1.0, %v6036
    %v6038 = vtanh.pop %v5998
    %v6039 = vxor.u32 %v5999, 2147483648
    %v6040 = vmul.f32 %v6039, 1.442695
    %v6041 = vpow.pop %v6040
    %v6042 = vadd.f32 %v6041, 1.0
    %v6043 = vrcp.pop %v6042
    %v6044 = vmul.f32 %v6042, %v6043
    %v6045 = vsub.f32 1.0, %v6044
    %v6046 = vmul.f32 %v6043, %v6045
    %v6047 = vadd.f32 %v6043, %v6046
    %vm6048 = vweird.f32 %v6042
    %vm6049 = vweird.f32 %v6043
    %vm6050 = vmor %vm6048, %vm6049
    %v6051 = vsel %vm6050, %v6043, %v6047
    %v6052 = vand.u32 2147483647, %v6042
    %vm6053 = vcmp.eq.f32.partialorder %v6052, 8.507059e+37
    %v6054 = vand.u32 %v6042, 2147483648
    %v6055 = vor.u32 1.1754944e-38, %v6054
    %v6056 = vsel %vm6053, %v6055, %v6051
    %v6057 = vmul.f32 1.0, %v6056
    %v6058 = vmul.f32 %v6037, %v5741
    %v6059 = vmul.f32 %v6022, %v6038
    %v6060 = vadd.f32 %v6058, %v6059
    %v6061 = vtanh.pop %v6060
    %v6062 = vmul.f32 %v6057, %v6061
    %v6063 = vmax.f32 %v6062, 0.0
    %v6064 = vpack.c.bf16 %v6063, %v6063
    %6065 = vst [vmem:[%s1736] sm:$0xf] %v6064
    %v6066 = vld [vmem:[%s1740] sm:$0xff]
    %v6067 = vld [vmem:[%s1740 + $0x8] sm:$0xff]
    %v6068 = vld [vmem:[%s1740 + $0x10] sm:$0xff]
    %v6069 = vld [vmem:[%s1740 + $0x18] sm:$0xff]
    %v6070 = vpack.c.bf16 %v6062, %v6062
    %v6071 = vld [vmem:[#allocation21] sm:$0xff]
    %v6072 = vld [vmem:[#allocation21 + $0x8] sm:$0xff]
    %v6073 = vld [vmem:[#allocation21 + $0x10] sm:$0xff]
    %v6074 = vld [vmem:[#allocation21 + $0x18] sm:$0xff]
    %v6075 = vld [vmem:[#allocation21 + $0x20] sm:$0xff]
    %v6076 = vld [vmem:[#allocation21 + $0x28] sm:$0xff]
    %v6077 = vld [vmem:[#allocation21 + $0x30] sm:$0xff]
    %v6078 = vld [vmem:[#allocation21 + $0x38] sm:$0xff]
    %v6079 = vld [vmem:[#allocation21 + $0x40] sm:$0xff]
    %v6080 = vld [vmem:[#allocation21 + $0x48] sm:$0xff]
    %v6081 = vld [vmem:[#allocation21 + $0x50] sm:$0xff]
    %v6082 = vld [vmem:[#allocation21 + $0x58] sm:$0xff]
    %v6083 = vld [vmem:[#allocation21 + $0x60] sm:$0xff]
    %v6084 = vld [vmem:[#allocation21 + $0x68] sm:$0xff]
    %v6085 = vld [vmem:[#allocation21 + $0x70] sm:$0xff]
    %v6086 = vld [vmem:[#allocation21 + $0x78] sm:$0xff]
    %v6087 = vld [vmem:[#allocation21 + $0x80] sm:$0xff]
    %v6088 = vld [vmem:[#allocation21 + $0x88] sm:$0xff]
    %v6089 = vld [vmem:[#allocation21 + $0x90] sm:$0xff]
    %v6090 = vld [vmem:[#allocation21 + $0x98] sm:$0xff]
    %v6091 = vld [vmem:[#allocation21 + $0xa0] sm:$0xff]
    %v6092 = vld [vmem:[#allocation21 + $0xa8] sm:$0xff]
    %v6093 = vld [vmem:[#allocation21 + $0xb0] sm:$0xff]
    %v6094 = vld [vmem:[#allocation21 + $0xb8] sm:$0xff]
    %v6095 = vld [vmem:[#allocation21 + $0xc0] sm:$0xff]
    %v6096 = vld [vmem:[#allocation21 + $0xc8] sm:$0xff]
    %v6097 = vld [vmem:[#allocation21 + $0xd0] sm:$0xff]
    %v6098 = vld [vmem:[#allocation21 + $0xd8] sm:$0xff]
    %v6099 = vld [vmem:[#allocation21 + $0xe0] sm:$0xff]
    %v6100 = vld [vmem:[#allocation21 + $0xe8] sm:$0xff]
    %v6101 = vld [vmem:[#allocation21 + $0xf0] sm:$0xff]
    %v6102 = vld [vmem:[#allocation21 + $0xf8] sm:$0xff]
    %v6135 = vunpack.c.l.b16 %v6071
    %v6136 = vunpack.c.h.b16 %v6071
    %v6137 = vunpack.c.l.b16 %v6072
    %v6138 = vunpack.c.h.b16 %v6072
    %v6139 = vunpack.c.l.b16 %v6073
    %v6140 = vunpack.c.h.b16 %v6073
    %v6141 = vunpack.c.l.b16 %v6074
    %v6142 = vunpack.c.h.b16 %v6074
    %v6143 = vunpack.c.l.b16 %v6075
    %v6144 = vunpack.c.h.b16 %v6075
    %v6145 = vunpack.c.l.b16 %v6076
    %v6146 = vunpack.c.h.b16 %v6076
    %v6147 = vunpack.c.l.b16 %v6077
    %v6148 = vunpack.c.h.b16 %v6077
    %v6149 = vunpack.c.l.b16 %v6078
    %v6150 = vunpack.c.h.b16 %v6078
    %v6151 = vunpack.c.l.b16 %v6079
    %v6152 = vunpack.c.h.b16 %v6079
    %v6153 = vunpack.c.l.b16 %v6080
    %v6154 = vunpack.c.h.b16 %v6080
    %v6155 = vunpack.c.l.b16 %v6081
    %v6156 = vunpack.c.h.b16 %v6081
    %v6157 = vunpack.c.l.b16 %v6082
    %v6158 = vunpack.c.h.b16 %v6082
    %v6159 = vunpack.c.l.b16 %v6083
    %v6160 = vunpack.c.h.b16 %v6083
    %v6161 = vunpack.c.l.b16 %v6084
    %v6162 = vunpack.c.h.b16 %v6084
    %v6163 = vunpack.c.l.b16 %v6085
    %v6164 = vunpack.c.h.b16 %v6085
    %v6165 = vunpack.c.l.b16 %v6086
    %v6166 = vunpack.c.h.b16 %v6086
    %v6167 = vunpack.c.l.b16 %v6087
    %v6168 = vunpack.c.h.b16 %v6087
    %v6169 = vunpack.c.l.b16 %v6088
    %v6170 = vunpack.c.h.b16 %v6088
    %v6171 = vunpack.c.l.b16 %v6089
    %v6172 = vunpack.c.h.b16 %v6089
    %v6173 = vunpack.c.l.b16 %v6090
    %v6174 = vunpack.c.h.b16 %v6090
    %v6175 = vunpack.c.l.b16 %v6091
    %v6176 = vunpack.c.h.b16 %v6091
    %v6177 = vunpack.c.l.b16 %v6092
    %v6178 = vunpack.c.h.b16 %v6092
    %v6179 = vunpack.c.l.b16 %v6093
    %v6180 = vunpack.c.h.b16 %v6093
    %v6181 = vunpack.c.l.b16 %v6094
    %v6182 = vunpack.c.h.b16 %v6094
    %v6183 = vunpack.c.l.b16 %v6095
    %v6184 = vunpack.c.h.b16 %v6095
    %v6185 = vunpack.c.l.b16 %v6096
    %v6186 = vunpack.c.h.b16 %v6096
    %v6187 = vunpack.c.l.b16 %v6097
    %v6188 = vunpack.c.h.b16 %v6097
    %v6189 = vunpack.c.l.b16 %v6098
    %v6190 = vunpack.c.h.b16 %v6098
    %v6191 = vunpack.c.l.b16 %v6099
    %v6192 = vunpack.c.h.b16 %v6099
    %v6193 = vunpack.c.l.b16 %v6100
    %v6194 = vunpack.c.h.b16 %v6100
    %v6195 = vunpack.c.l.b16 %v6101
    %v6196 = vunpack.c.h.b16 %v6101
    %v6197 = vunpack.c.l.b16 %v6102
    %v6198 = vunpack.c.h.b16 %v6102
    %v6199 = vpack.c.b16 %v6139, %v6135
    %v6200 = vpack.c.b16 %v6140, %v6136
    %v6201 = vpack.c.b16 %v6141, %v6137
    %v6202 = vpack.c.b16 %v6142, %v6138
    %v6203 = vpack.c.b16 %v6147, %v6143
    %v6204 = vpack.c.b16 %v6148, %v6144
    %v6205 = vpack.c.b16 %v6149, %v6145
    %v6206 = vpack.c.b16 %v6150, %v6146
    %v6207 = vpack.c.b16 %v6155, %v6151
    %v6208 = vpack.c.b16 %v6156, %v6152
    %v6209 = vpack.c.b16 %v6157, %v6153
    %v6210 = vpack.c.b16 %v6158, %v6154
    %v6211 = vpack.c.b16 %v6163, %v6159
    %v6212 = vpack.c.b16 %v6164, %v6160
    %v6213 = vpack.c.b16 %v6165, %v6161
    %v6214 = vpack.c.b16 %v6166, %v6162
    %v6215 = vpack.c.b16 %v6171, %v6167
    %v6216 = vpack.c.b16 %v6172, %v6168
    %v6217 = vpack.c.b16 %v6173, %v6169
    %v6218 = vpack.c.b16 %v6174, %v6170
    %v6219 = vpack.c.b16 %v6179, %v6175
    %v6220 = vpack.c.b16 %v6180, %v6176
    %v6221 = vpack.c.b16 %v6181, %v6177
    %v6222 = vpack.c.b16 %v6182, %v6178
    %v6223 = vpack.c.b16 %v6187, %v6183
    %v6224 = vpack.c.b16 %v6188, %v6184
    %v6225 = vpack.c.b16 %v6189, %v6185
    %v6226 = vpack.c.b16 %v6190, %v6186
    %v6227 = vpack.c.b16 %v6195, %v6191
    %v6228 = vpack.c.b16 %v6196, %v6192
    %v6229 = vpack.c.b16 %v6197, %v6193
    %v6230 = vpack.c.b16 %v6198, %v6194
    %6263 = vmatpush.bf16.msra.mxu0 %v6227
    %6264 = vmatpush.bf16.msra.mxu0 %v6223
    %6265 = vmatpush.bf16.msra.mxu0 %v6219
    %6266 = vmatpush.bf16.msra.mxu0 %v6215
    %6267 = vmatpush.bf16.msra.mxu0 %v6211
    %6268 = vmatpush.bf16.msra.mxu0 %v6207
    %6269 = vmatpush.bf16.msra.mxu0 %v6203
    %6270 = vmatpush.bf16.msra.mxu0 %v6199
    %6271 = vmatmul.bf16.gmra.mxu0 %v6070
    %v6272 = vpop.f32.mrf.mxu0
    %v6273 = vadd.f32 0.0, %v6272
    %v6274 = vpop.f32.mrf.mxu0
    %6275 = vdwg.mxu0
    %6276 = vmatpush.bf16.msra.mxu0 %v6228
    %6277 = vmatpush.bf16.msra.mxu0 %v6224
    %6278 = vmatpush.bf16.msra.mxu0 %v6220
    %6279 = vmatpush.bf16.msra.mxu0 %v6216
    %6280 = vmatpush.bf16.msra.mxu0 %v6212
    %6281 = vmatpush.bf16.msra.mxu0 %v6208
    %6282 = vmatpush.bf16.msra.mxu0 %v6204
    %6283 = vmatpush.bf16.msra.mxu0 %v6200
    %6284 = vmatmul.bf16.gmra.mxu0 %v6070
    %v6285 = vpop.f32.mrf.mxu0
    %v6286 = vadd.f32 0.0, %v6285
    %v6287 = vpop.f32.mrf.mxu0
    %6288 = vdwg.mxu0
    %6289 = vmatpush.bf16.msra.mxu0 %v6229
    %6290 = vmatpush.bf16.msra.mxu0 %v6225
    %6291 = vmatpush.bf16.msra.mxu0 %v6221
    %6292 = vmatpush.bf16.msra.mxu0 %v6217
    %6293 = vmatpush.bf16.msra.mxu0 %v6213
    %6294 = vmatpush.bf16.msra.mxu0 %v6209
    %6295 = vmatpush.bf16.msra.mxu0 %v6205
    %6296 = vmatpush.bf16.msra.mxu0 %v6201
    %6297 = vmatmul.bf16.gmra.mxu0 %v6070
    %v6298 = vpop.f32.mrf.mxu0
    %v6299 = vadd.f32 0.0, %v6298
    %v6300 = vpop.f32.mrf.mxu0
    %6301 = vdwg.mxu0
    %6302 = vmatpush.bf16.msra.mxu0 %v6230
    %6303 = vmatpush.bf16.msra.mxu0 %v6226
    %6304 = vmatpush.bf16.msra.mxu0 %v6222
    %6305 = vmatpush.bf16.msra.mxu0 %v6218
    %6306 = vmatpush.bf16.msra.mxu0 %v6214
    %6307 = vmatpush.bf16.msra.mxu0 %v6210
    %6308 = vmatpush.bf16.msra.mxu0 %v6206
    %6309 = vmatpush.bf16.msra.mxu0 %v6202
    %6310 = vmatmul.bf16.gmra.mxu0 %v6070
    %v6311 = vpop.f32.mrf.mxu0
    %v6312 = vadd.f32 0.0, %v6311
    %v6313 = vpop.f32.mrf.mxu0
    %6314 = vdwg.mxu0
    %v6315 = vadd.f32 %v6066, %v6273
    %v6316 = vadd.f32 %v6067, %v6286
    %v6317 = vadd.f32 %v6068, %v6299
    %v6318 = vadd.f32 %v6069, %v6312
    %v6319 = vxor.u32 %v6315, 2147483648
    %v6320 = vxor.u32 %v6316, 2147483648
    %v6321 = vmul.f32 %v6319, 1.442695
    %v6322 = vpow.pop %v6321
    %v6323 = vmul.f32 %v6320, 1.442695
    %v6324 = vpow.pop %v6323
    %v6325 = vadd.f32 %v6322, 1.0
    %v6326 = vadd.f32 %v6324, 1.0
    %v6327 = vrcp.pop %v6325
    %v6328 = vmul.f32 %v6325, %v6327
    %v6329 = vsub.f32 1.0, %v6328
    %v6330 = vmul.f32 %v6327, %v6329
    %v6331 = vadd.f32 %v6327, %v6330
    %vm6332 = vweird.f32 %v6325
    %vm6333 = vweird.f32 %v6327
    %vm6334 = vmor %vm6332, %vm6333
    %v6335 = vsel %vm6334, %v6327, %v6331
    %v6336 = vand.u32 2147483647, %v6325
    %vm6337 = vcmp.eq.f32.partialorder %v6336, 8.507059e+37
    %v6338 = vand.u32 %v6325, 2147483648
    %v6339 = vor.u32 1.1754944e-38, %v6338
    %v6340 = vsel %vm6337, %v6339, %v6335
    %v6341 = vmul.f32 1.0, %v6340
    %v6342 = vrcp.pop %v6326
    %v6343 = vmul.f32 %v6326, %v6342
    %v6344 = vsub.f32 1.0, %v6343
    %v6345 = vmul.f32 %v6342, %v6344
    %v6346 = vadd.f32 %v6342, %v6345
    %vm6347 = vweird.f32 %v6326
    %vm6348 = vweird.f32 %v6342
    %vm6349 = vmor %vm6347, %vm6348
    %v6350 = vsel %vm6349, %v6342, %v6346
    %v6351 = vand.u32 2147483647, %v6326
    %vm6352 = vcmp.eq.f32.partialorder %v6351, 8.507059e+37
    %v6353 = vand.u32 %v6326, 2147483648
    %v6354 = vor.u32 1.1754944e-38, %v6353
    %v6355 = vsel %vm6352, %v6354, %v6350
    %v6356 = vmul.f32 1.0, %v6355
    %v6357 = vtanh.pop %v6317
    %v6358 = vxor.u32 %v6318, 2147483648
    %v6359 = vmul.f32 %v6358, 1.442695
    %v6360 = vpow.pop %v6359
    %v6361 = vadd.f32 %v6360, 1.0
    %v6362 = vrcp.pop %v6361
    %v6363 = vmul.f32 %v6361, %v6362
    %v6364 = vsub.f32 1.0, %v6363
    %v6365 = vmul.f32 %v6362, %v6364
    %v6366 = vadd.f32 %v6362, %v6365
    %vm6367 = vweird.f32 %v6361
    %vm6368 = vweird.f32 %v6362
    %vm6369 = vmor %vm6367, %vm6368
    %v6370 = vsel %vm6369, %v6362, %v6366
    %v6371 = vand.u32 2147483647, %v6361
    %vm6372 = vcmp.eq.f32.partialorder %v6371, 8.507059e+37
    %v6373 = vand.u32 %v6361, 2147483648
    %v6374 = vor.u32 1.1754944e-38, %v6373
    %v6375 = vsel %vm6372, %v6374, %v6370
    %v6376 = vmul.f32 1.0, %v6375
    %v6377 = vmul.f32 %v6356, %v6060
    %v6378 = vmul.f32 %v6341, %v6357
    %v6379 = vadd.f32 %v6377, %v6378
    %v6380 = vtanh.pop %v6379
    %v6381 = vmul.f32 %v6376, %v6380
    %v6382 = vmax.f32 %v6381, 0.0
    %v6383 = vpack.c.bf16 %v6382, %v6382
    %6384 = vst [vmem:[%s2059] sm:$0xf] %v6383
    %v6385 = vld [vmem:[%s2063] sm:$0xff]
    %v6386 = vld [vmem:[%s2063 + $0x8] sm:$0xff]
    %v6387 = vld [vmem:[%s2063 + $0x10] sm:$0xff]
    %v6388 = vld [vmem:[%s2063 + $0x18] sm:$0xff]
    %v6389 = vpack.c.bf16 %v6381, %v6381
    %v6390 = vld [vmem:[#allocation21] sm:$0xff]
    %v6391 = vld [vmem:[#allocation21 + $0x8] sm:$0xff]
    %v6392 = vld [vmem:[#allocation21 + $0x10] sm:$0xff]
    %v6393 = vld [vmem:[#allocation21 + $0x18] sm:$0xff]
    %v6394 = vld [vmem:[#allocation21 + $0x20] sm:$0xff]
    %v6395 = vld [vmem:[#allocation21 + $0x28] sm:$0xff]
    %v6396 = vld [vmem:[#allocation21 + $0x30] sm:$0xff]
    %v6397 = vld [vmem:[#allocation21 + $0x38] sm:$0xff]
    %v6398 = vld [vmem:[#allocation21 + $0x40] sm:$0xff]
    %v6399 = vld [vmem:[#allocation21 + $0x48] sm:$0xff]
    %v6400 = vld [vmem:[#allocation21 + $0x50] sm:$0xff]
    %v6401 = vld [vmem:[#allocation21 + $0x58] sm:$0xff]
    %v6402 = vld [vmem:[#allocation21 + $0x60] sm:$0xff]
    %v6403 = vld [vmem:[#allocation21 + $0x68] sm:$0xff]
    %v6404 = vld [vmem:[#allocation21 + $0x70] sm:$0xff]
    %v6405 = vld [vmem:[#allocation21 + $0x78] sm:$0xff]
    %v6406 = vld [vmem:[#allocation21 + $0x80] sm:$0xff]
    %v6407 = vld [vmem:[#allocation21 + $0x88] sm:$0xff]
    %v6408 = vld [vmem:[#allocation21 + $0x90] sm:$0xff]
    %v6409 = vld [vmem:[#allocation21 + $0x98] sm:$0xff]
    %v6410 = vld [vmem:[#allocation21 + $0xa0] sm:$0xff]
    %v6411 = vld [vmem:[#allocation21 + $0xa8] sm:$0xff]
    %v6412 = vld [vmem:[#allocation21 + $0xb0] sm:$0xff]
    %v6413 = vld [vmem:[#allocation21 + $0xb8] sm:$0xff]
    %v6414 = vld [vmem:[#allocation21 + $0xc0] sm:$0xff]
    %v6415 = vld [vmem:[#allocation21 + $0xc8] sm:$0xff]
    %v6416 = vld [vmem:[#allocation21 + $0xd0] sm:$0xff]
    %v6417 = vld [vmem:[#allocation21 + $0xd8] sm:$0xff]
    %v6418 = vld [vmem:[#allocation21 + $0xe0] sm:$0xff]
    %v6419 = vld [vmem:[#allocation21 + $0xe8] sm:$0xff]
    %v6420 = vld [vmem:[#allocation21 + $0xf0] sm:$0xff]
    %v6421 = vld [vmem:[#allocation21 + $0xf8] sm:$0xff]
    %v6454 = vunpack.c.l.b16 %v6390
    %v6455 = vunpack.c.h.b16 %v6390
    %v6456 = vunpack.c.l.b16 %v6391
    %v6457 = vunpack.c.h.b16 %v6391
    %v6458 = vunpack.c.l.b16 %v6392
    %v6459 = vunpack.c.h.b16 %v6392
    %v6460 = vunpack.c.l.b16 %v6393
    %v6461 = vunpack.c.h.b16 %v6393
    %v6462 = vunpack.c.l.b16 %v6394
    %v6463 = vunpack.c.h.b16 %v6394
    %v6464 = vunpack.c.l.b16 %v6395
    %v6465 = vunpack.c.h.b16 %v6395
    %v6466 = vunpack.c.l.b16 %v6396
    %v6467 = vunpack.c.h.b16 %v6396
    %v6468 = vunpack.c.l.b16 %v6397
    %v6469 = vunpack.c.h.b16 %v6397
    %v6470 = vunpack.c.l.b16 %v6398
    %v6471 = vunpack.c.h.b16 %v6398
    %v6472 = vunpack.c.l.b16 %v6399
    %v6473 = vunpack.c.h.b16 %v6399
    %v6474 = vunpack.c.l.b16 %v6400
    %v6475 = vunpack.c.h.b16 %v6400
    %v6476 = vunpack.c.l.b16 %v6401
    %v6477 = vunpack.c.h.b16 %v6401
    %v6478 = vunpack.c.l.b16 %v6402
    %v6479 = vunpack.c.h.b16 %v6402
    %v6480 = vunpack.c.l.b16 %v6403
    %v6481 = vunpack.c.h.b16 %v6403
    %v6482 = vunpack.c.l.b16 %v6404
    %v6483 = vunpack.c.h.b16 %v6404
    %v6484 = vunpack.c.l.b16 %v6405
    %v6485 = vunpack.c.h.b16 %v6405
    %v6486 = vunpack.c.l.b16 %v6406
    %v6487 = vunpack.c.h.b16 %v6406
    %v6488 = vunpack.c.l.b16 %v6407
    %v6489 = vunpack.c.h.b16 %v6407
    %v6490 = vunpack.c.l.b16 %v6408
    %v6491 = vunpack.c.h.b16 %v6408
    %v6492 = vunpack.c.l.b16 %v6409
    %v6493 = vunpack.c.h.b16 %v6409
    %v6494 = vunpack.c.l.b16 %v6410
    %v6495 = vunpack.c.h.b16 %v6410
    %v6496 = vunpack.c.l.b16 %v6411
    %v6497 = vunpack.c.h.b16 %v6411
    %v6498 = vunpack.c.l.b16 %v6412
    %v6499 = vunpack.c.h.b16 %v6412
    %v6500 = vunpack.c.l.b16 %v6413
    %v6501 = vunpack.c.h.b16 %v6413
    %v6502 = vunpack.c.l.b16 %v6414
    %v6503 = vunpack.c.h.b16 %v6414
    %v6504 = vunpack.c.l.b16 %v6415
    %v6505 = vunpack.c.h.b16 %v6415
    %v6506 = vunpack.c.l.b16 %v6416
    %v6507 = vunpack.c.h.b16 %v6416
    %v6508 = vunpack.c.l.b16 %v6417
    %v6509 = vunpack.c.h.b16 %v6417
    %v6510 = vunpack.c.l.b16 %v6418
    %v6511 = vunpack.c.h.b16 %v6418
    %v6512 = vunpack.c.l.b16 %v6419
    %v6513 = vunpack.c.h.b16 %v6419
    %v6514 = vunpack.c.l.b16 %v6420
    %v6515 = vunpack.c.h.b16 %v6420
    %v6516 = vunpack.c.l.b16 %v6421
    %v6517 = vunpack.c.h.b16 %v6421
    %v6518 = vpack.c.b16 %v6458, %v6454
    %v6519 = vpack.c.b16 %v6459, %v6455
    %v6520 = vpack.c.b16 %v6460, %v6456
    %v6521 = vpack.c.b16 %v6461, %v6457
    %v6522 = vpack.c.b16 %v6466, %v6462
    %v6523 = vpack.c.b16 %v6467, %v6463
    %v6524 = vpack.c.b16 %v6468, %v6464
    %v6525 = vpack.c.b16 %v6469, %v6465
    %v6526 = vpack.c.b16 %v6474, %v6470
    %v6527 = vpack.c.b16 %v6475, %v6471
    %v6528 = vpack.c.b16 %v6476, %v6472
    %v6529 = vpack.c.b16 %v6477, %v6473
    %v6530 = vpack.c.b16 %v6482, %v6478
    %v6531 = vpack.c.b16 %v6483, %v6479
    %v6532 = vpack.c.b16 %v6484, %v6480
    %v6533 = vpack.c.b16 %v6485, %v6481
    %v6534 = vpack.c.b16 %v6490, %v6486
    %v6535 = vpack.c.b16 %v6491, %v6487
    %v6536 = vpack.c.b16 %v6492, %v6488
    %v6537 = vpack.c.b16 %v6493, %v6489
    %v6538 = vpack.c.b16 %v6498, %v6494
    %v6539 = vpack.c.b16 %v6499, %v6495
    %v6540 = vpack.c.b16 %v6500, %v6496
    %v6541 = vpack.c.b16 %v6501, %v6497
    %v6542 = vpack.c.b16 %v6506, %v6502
    %v6543 = vpack.c.b16 %v6507, %v6503
    %v6544 = vpack.c.b16 %v6508, %v6504
    %v6545 = vpack.c.b16 %v6509, %v6505
    %v6546 = vpack.c.b16 %v6514, %v6510
    %v6547 = vpack.c.b16 %v6515, %v6511
    %v6548 = vpack.c.b16 %v6516, %v6512
    %v6549 = vpack.c.b16 %v6517, %v6513
    %6582 = vmatpush.bf16.msra.mxu0 %v6546
    %6583 = vmatpush.bf16.msra.mxu0 %v6542
    %6584 = vmatpush.bf16.msra.mxu0 %v6538
    %6585 = vmatpush.bf16.msra.mxu0 %v6534
    %6586 = vmatpush.bf16.msra.mxu0 %v6530
    %6587 = vmatpush.bf16.msra.mxu0 %v6526
    %6588 = vmatpush.bf16.msra.mxu0 %v6522
    %6589 = vmatpush.bf16.msra.mxu0 %v6518
    %6590 = vmatmul.bf16.gmra.mxu0 %v6389
    %v6591 = vpop.f32.mrf.mxu0
    %v6592 = vadd.f32 0.0, %v6591
    %v6593 = vpop.f32.mrf.mxu0
    %6594 = vdwg.mxu0
    %6595 = vmatpush.bf16.msra.mxu0 %v6547
    %6596 = vmatpush.bf16.msra.mxu0 %v6543
    %6597 = vmatpush.bf16.msra.mxu0 %v6539
    %6598 = vmatpush.bf16.msra.mxu0 %v6535
    %6599 = vmatpush.bf16.msra.mxu0 %v6531
    %6600 = vmatpush.bf16.msra.mxu0 %v6527
    %6601 = vmatpush.bf16.msra.mxu0 %v6523
    %6602 = vmatpush.bf16.msra.mxu0 %v6519
    %6603 = vmatmul.bf16.gmra.mxu0 %v6389
    %v6604 = vpop.f32.mrf.mxu0
    %v6605 = vadd.f32 0.0, %v6604
    %v6606 = vpop.f32.mrf.mxu0
    %6607 = vdwg.mxu0
    %6608 = vmatpush.bf16.msra.mxu0 %v6548
    %6609 = vmatpush.bf16.msra.mxu0 %v6544
    %6610 = vmatpush.bf16.msra.mxu0 %v6540
    %6611 = vmatpush.bf16.msra.mxu0 %v6536
    %6612 = vmatpush.bf16.msra.mxu0 %v6532
    %6613 = vmatpush.bf16.msra.mxu0 %v6528
    %6614 = vmatpush.bf16.msra.mxu0 %v6524
    %6615 = vmatpush.bf16.msra.mxu0 %v6520
    %6616 = vmatmul.bf16.gmra.mxu0 %v6389
    %v6617 = vpop.f32.mrf.mxu0
    %v6618 = vadd.f32 0.0, %v6617
    %v6619 = vpop.f32.mrf.mxu0
    %6620 = vdwg.mxu0
    %6621 = vmatpush.bf16.msra.mxu0 %v6549
    %6622 = vmatpush.bf16.msra.mxu0 %v6545
    %6623 = vmatpush.bf16.msra.mxu0 %v6541
    %6624 = vmatpush.bf16.msra.mxu0 %v6537
    %6625 = vmatpush.bf16.msra.mxu0 %v6533
    %6626 = vmatpush.bf16.msra.mxu0 %v6529
    %6627 = vmatpush.bf16.msra.mxu0 %v6525
    %6628 = vmatpush.bf16.msra.mxu0 %v6521
    %6629 = vmatmul.bf16.gmra.mxu0 %v6389
    %v6630 = vpop.f32.mrf.mxu0
    %v6631 = vadd.f32 0.0, %v6630
    %v6632 = vpop.f32.mrf.mxu0
    %6633 = vdwg.mxu0
    %v6634 = vadd.f32 %v6385, %v6592
    %v6635 = vadd.f32 %v6386, %v6605
    %v6636 = vadd.f32 %v6387, %v6618
    %v6637 = vadd.f32 %v6388, %v6631
    %v6638 = vxor.u32 %v6634, 2147483648
    %v6639 = vxor.u32 %v6635, 2147483648
    %v6640 = vmul.f32 %v6638, 1.442695
    %v6641 = vpow.pop %v6640
    %v6642 = vmul.f32 %v6639, 1.442695
    %v6643 = vpow.pop %v6642
    %v6644 = vadd.f32 %v6641, 1.0
    %v6645 = vadd.f32 %v6643, 1.0
    %v6646 = vrcp.pop %v6644
    %v6647 = vmul.f32 %v6644, %v6646
    %v6648 = vsub.f32 1.0, %v6647
    %v6649 = vmul.f32 %v6646, %v6648
    %v6650 = vadd.f32 %v6646, %v6649
    %vm6651 = vweird.f32 %v6644
    %vm6652 = vweird.f32 %v6646
    %vm6653 = vmor %vm6651, %vm6652
    %v6654 = vsel %vm6653, %v6646, %v6650
    %v6655 = vand.u32 2147483647, %v6644
    %vm6656 = vcmp.eq.f32.partialorder %v6655, 8.507059e+37
    %v6657 = vand.u32 %v6644, 2147483648
    %v6658 = vor.u32 1.1754944e-38, %v6657
    %v6659 = vsel %vm6656, %v6658, %v6654
    %v6660 = vmul.f32 1.0, %v6659
    %v6661 = vrcp.pop %v6645
    %v6662 = vmul.f32 %v6645, %v6661
    %v6663 = vsub.f32 1.0, %v6662
    %v6664 = vmul.f32 %v6661, %v6663
    %v6665 = vadd.f32 %v6661, %v6664
    %vm6666 = vweird.f32 %v6645
    %vm6667 = vweird.f32 %v6661
    %vm6668 = vmor %vm6666, %vm6667
    %v6669 = vsel %vm6668, %v6661, %v6665
    %v6670 = vand.u32 2147483647, %v6645
    %vm6671 = vcmp.eq.f32.partialorder %v6670, 8.507059e+37
    %v6672 = vand.u32 %v6645, 2147483648
    %v6673 = vor.u32 1.1754944e-38, %v6672
    %v6674 = vsel %vm6671, %v6673, %v6669
    %v6675 = vmul.f32 1.0, %v6674
    %v6676 = vtanh.pop %v6636
    %v6677 = vxor.u32 %v6637, 2147483648
    %v6678 = vmul.f32 %v6677, 1.442695
    %v6679 = vpow.pop %v6678
    %v6680 = vadd.f32 %v6679, 1.0
    %v6681 = vrcp.pop %v6680
    %v6682 = vmul.f32 %v6680, %v6681
    %v6683 = vsub.f32 1.0, %v6682
    %v6684 = vmul.f32 %v6681, %v6683
    %v6685 = vadd.f32 %v6681, %v6684
    %vm6686 = vweird.f32 %v6680
    %vm6687 = vweird.f32 %v6681
    %vm6688 = vmor %vm6686, %vm6687
    %v6689 = vsel %vm6688, %v6681, %v6685
    %v6690 = vand.u32 2147483647, %v6680
    %vm6691 = vcmp.eq.f32.partialorder %v6690, 8.507059e+37
    %v6692 = vand.u32 %v6680, 2147483648
    %v6693 = vor.u32 1.1754944e-38, %v6692
    %v6694 = vsel %vm6691, %v6693, %v6689
    %v6695 = vmul.f32 1.0, %v6694
    %v6696 = vmul.f32 %v6675, %v6379
    %v6697 = vmul.f32 %v6660, %v6676
    %v6698 = vadd.f32 %v6696, %v6697
    %v6699 = vtanh.pop %v6698
    %v6700 = vmul.f32 %v6695, %v6699
    %v6701 = vmax.f32 %v6700, 0.0
    %v6702 = vpack.c.bf16 %v6701, %v6701
    %6703 = vst [vmem:[%s2382] sm:$0xf] %v6702
    %v6704 = vld [vmem:[%s2386] sm:$0xff]
    %v6705 = vld [vmem:[%s2386 + $0x8] sm:$0xff]
    %v6706 = vld [vmem:[%s2386 + $0x10] sm:$0xff]
    %v6707 = vld [vmem:[%s2386 + $0x18] sm:$0xff]
    %v6708 = vpack.c.bf16 %v6700, %v6700
    %v6709 = vld [vmem:[#allocation21] sm:$0xff]
    %v6710 = vld [vmem:[#allocation21 + $0x8] sm:$0xff]
    %v6711 = vld [vmem:[#allocation21 + $0x10] sm:$0xff]
    %v6712 = vld [vmem:[#allocation21 + $0x18] sm:$0xff]
    %v6713 = vld [vmem:[#allocation21 + $0x20] sm:$0xff]
    %v6714 = vld [vmem:[#allocation21 + $0x28] sm:$0xff]
    %v6715 = vld [vmem:[#allocation21 + $0x30] sm:$0xff]
    %v6716 = vld [vmem:[#allocation21 + $0x38] sm:$0xff]
    %v6717 = vld [vmem:[#allocation21 + $0x40] sm:$0xff]
    %v6718 = vld [vmem:[#allocation21 + $0x48] sm:$0xff]
    %v6719 = vld [vmem:[#allocation21 + $0x50] sm:$0xff]
    %v6720 = vld [vmem:[#allocation21 + $0x58] sm:$0xff]
    %v6721 = vld [vmem:[#allocation21 + $0x60] sm:$0xff]
    %v6722 = vld [vmem:[#allocation21 + $0x68] sm:$0xff]
    %v6723 = vld [vmem:[#allocation21 + $0x70] sm:$0xff]
    %v6724 = vld [vmem:[#allocation21 + $0x78] sm:$0xff]
    %v6725 = vld [vmem:[#allocation21 + $0x80] sm:$0xff]
    %v6726 = vld [vmem:[#allocation21 + $0x88] sm:$0xff]
    %v6727 = vld [vmem:[#allocation21 + $0x90] sm:$0xff]
    %v6728 = vld [vmem:[#allocation21 + $0x98] sm:$0xff]
    %v6729 = vld [vmem:[#allocation21 + $0xa0] sm:$0xff]
    %v6730 = vld [vmem:[#allocation21 + $0xa8] sm:$0xff]
    %v6731 = vld [vmem:[#allocation21 + $0xb0] sm:$0xff]
    %v6732 = vld [vmem:[#allocation21 + $0xb8] sm:$0xff]
    %v6733 = vld [vmem:[#allocation21 + $0xc0] sm:$0xff]
    %v6734 = vld [vmem:[#allocation21 + $0xc8] sm:$0xff]
    %v6735 = vld [vmem:[#allocation21 + $0xd0] sm:$0xff]
    %v6736 = vld [vmem:[#allocation21 + $0xd8] sm:$0xff]
    %v6737 = vld [vmem:[#allocation21 + $0xe0] sm:$0xff]
    %v6738 = vld [vmem:[#allocation21 + $0xe8] sm:$0xff]
    %v6739 = vld [vmem:[#allocation21 + $0xf0] sm:$0xff]
    %v6740 = vld [vmem:[#allocation21 + $0xf8] sm:$0xff]
    %v6773 = vunpack.c.l.b16 %v6709
    %v6774 = vunpack.c.h.b16 %v6709
    %v6775 = vunpack.c.l.b16 %v6710
    %v6776 = vunpack.c.h.b16 %v6710
    %v6777 = vunpack.c.l.b16 %v6711
    %v6778 = vunpack.c.h.b16 %v6711
    %v6779 = vunpack.c.l.b16 %v6712
    %v6780 = vunpack.c.h.b16 %v6712
    %v6781 = vunpack.c.l.b16 %v6713
    %v6782 = vunpack.c.h.b16 %v6713
    %v6783 = vunpack.c.l.b16 %v6714
    %v6784 = vunpack.c.h.b16 %v6714
    %v6785 = vunpack.c.l.b16 %v6715
    %v6786 = vunpack.c.h.b16 %v6715
    %v6787 = vunpack.c.l.b16 %v6716
    %v6788 = vunpack.c.h.b16 %v6716
    %v6789 = vunpack.c.l.b16 %v6717
    %v6790 = vunpack.c.h.b16 %v6717
    %v6791 = vunpack.c.l.b16 %v6718
    %v6792 = vunpack.c.h.b16 %v6718
    %v6793 = vunpack.c.l.b16 %v6719
    %v6794 = vunpack.c.h.b16 %v6719
    %v6795 = vunpack.c.l.b16 %v6720
    %v6796 = vunpack.c.h.b16 %v6720
    %v6797 = vunpack.c.l.b16 %v6721
    %v6798 = vunpack.c.h.b16 %v6721
    %v6799 = vunpack.c.l.b16 %v6722
    %v6800 = vunpack.c.h.b16 %v6722
    %v6801 = vunpack.c.l.b16 %v6723
    %v6802 = vunpack.c.h.b16 %v6723
    %v6803 = vunpack.c.l.b16 %v6724
    %v6804 = vunpack.c.h.b16 %v6724
    %v6805 = vunpack.c.l.b16 %v6725
    %v6806 = vunpack.c.h.b16 %v6725
    %v6807 = vunpack.c.l.b16 %v6726
    %v6808 = vunpack.c.h.b16 %v6726
    %v6809 = vunpack.c.l.b16 %v6727
    %v6810 = vunpack.c.h.b16 %v6727
    %v6811 = vunpack.c.l.b16 %v6728
    %v6812 = vunpack.c.h.b16 %v6728
    %v6813 = vunpack.c.l.b16 %v6729
    %v6814 = vunpack.c.h.b16 %v6729
    %v6815 = vunpack.c.l.b16 %v6730
    %v6816 = vunpack.c.h.b16 %v6730
    %v6817 = vunpack.c.l.b16 %v6731
    %v6818 = vunpack.c.h.b16 %v6731
    %v6819 = vunpack.c.l.b16 %v6732
    %v6820 = vunpack.c.h.b16 %v6732
    %v6821 = vunpack.c.l.b16 %v6733
    %v6822 = vunpack.c.h.b16 %v6733
    %v6823 = vunpack.c.l.b16 %v6734
    %v6824 = vunpack.c.h.b16 %v6734
    %v6825 = vunpack.c.l.b16 %v6735
    %v6826 = vunpack.c.h.b16 %v6735
    %v6827 = vunpack.c.l.b16 %v6736
    %v6828 = vunpack.c.h.b16 %v6736
    %v6829 = vunpack.c.l.b16 %v6737
    %v6830 = vunpack.c.h.b16 %v6737
    %v6831 = vunpack.c.l.b16 %v6738
    %v6832 = vunpack.c.h.b16 %v6738
    %v6833 = vunpack.c.l.b16 %v6739
    %v6834 = vunpack.c.h.b16 %v6739
    %v6835 = vunpack.c.l.b16 %v6740
    %v6836 = vunpack.c.h.b16 %v6740
    %v6837 = vpack.c.b16 %v6777, %v6773
    %v6838 = vpack.c.b16 %v6778, %v6774
    %v6839 = vpack.c.b16 %v6779, %v6775
    %v6840 = vpack.c.b16 %v6780, %v6776
    %v6841 = vpack.c.b16 %v6785, %v6781
    %v6842 = vpack.c.b16 %v6786, %v6782
    %v6843 = vpack.c.b16 %v6787, %v6783
    %v6844 = vpack.c.b16 %v6788, %v6784
    %v6845 = vpack.c.b16 %v6793, %v6789
    %v6846 = vpack.c.b16 %v6794, %v6790
    %v6847 = vpack.c.b16 %v6795, %v6791
    %v6848 = vpack.c.b16 %v6796, %v6792
    %v6849 = vpack.c.b16 %v6801, %v6797
    %v6850 = vpack.c.b16 %v6802, %v6798
    %v6851 = vpack.c.b16 %v6803, %v6799
    %v6852 = vpack.c.b16 %v6804, %v6800
    %v6853 = vpack.c.b16 %v6809, %v6805
    %v6854 = vpack.c.b16 %v6810, %v6806
    %v6855 = vpack.c.b16 %v6811, %v6807
    %v6856 = vpack.c.b16 %v6812, %v6808
    %v6857 = vpack.c.b16 %v6817, %v6813
    %v6858 = vpack.c.b16 %v6818, %v6814
    %v6859 = vpack.c.b16 %v6819, %v6815
    %v6860 = vpack.c.b16 %v6820, %v6816
    %v6861 = vpack.c.b16 %v6825, %v6821
    %v6862 = vpack.c.b16 %v6826, %v6822
    %v6863 = vpack.c.b16 %v6827, %v6823
    %v6864 = vpack.c.b16 %v6828, %v6824
    %v6865 = vpack.c.b16 %v6833, %v6829
    %v6866 = vpack.c.b16 %v6834, %v6830
    %v6867 = vpack.c.b16 %v6835, %v6831
    %v6868 = vpack.c.b16 %v6836, %v6832
    %6901 = vmatpush.bf16.msra.mxu0 %v6865
    %6902 = vmatpush.bf16.msra.mxu0 %v6861
    %6903 = vmatpush.bf16.msra.mxu0 %v6857
    %6904 = vmatpush.bf16.msra.mxu0 %v6853
    %6905 = vmatpush.bf16.msra.mxu0 %v6849
    %6906 = vmatpush.bf16.msra.mxu0 %v6845
    %6907 = vmatpush.bf16.msra.mxu0 %v6841
    %6908 = vmatpush.bf16.msra.mxu0 %v6837
    %6909 = vmatmul.bf16.gmra.mxu0 %v6708
    %v6910 = vpop.f32.mrf.mxu0
    %v6911 = vadd.f32 0.0, %v6910
    %v6912 = vpop.f32.mrf.mxu0
    %6913 = vdwg.mxu0
    %6914 = vmatpush.bf16.msra.mxu0 %v6866
    %6915 = vmatpush.bf16.msra.mxu0 %v6862
    %6916 = vmatpush.bf16.msra.mxu0 %v6858
    %6917 = vmatpush.bf16.msra.mxu0 %v6854
    %6918 = vmatpush.bf16.msra.mxu0 %v6850
    %6919 = vmatpush.bf16.msra.mxu0 %v6846
    %6920 = vmatpush.bf16.msra.mxu0 %v6842
    %6921 = vmatpush.bf16.msra.mxu0 %v6838
    %6922 = vmatmul.bf16.gmra.mxu0 %v6708
    %v6923 = vpop.f32.mrf.mxu0
    %v6924 = vadd.f32 0.0, %v6923
    %v6925 = vpop.f32.mrf.mxu0
    %6926 = vdwg.mxu0
    %6927 = vmatpush.bf16.msra.mxu0 %v6867
    %6928 = vmatpush.bf16.msra.mxu0 %v6863
    %6929 = vmatpush.bf16.msra.mxu0 %v6859
    %6930 = vmatpush.bf16.msra.mxu0 %v6855
    %6931 = vmatpush.bf16.msra.mxu0 %v6851
    %6932 = vmatpush.bf16.msra.mxu0 %v6847
    %6933 = vmatpush.bf16.msra.mxu0 %v6843
    %6934 = vmatpush.bf16.msra.mxu0 %v6839
    %6935 = vmatmul.bf16.gmra.mxu0 %v6708
    %v6936 = vpop.f32.mrf.mxu0
    %v6937 = vadd.f32 0.0, %v6936
    %v6938 = vpop.f32.mrf.mxu0
    %6939 = vdwg.mxu0
    %6940 = vmatpush.bf16.msra.mxu0 %v6868
    %6941 = vmatpush.bf16.msra.mxu0 %v6864
    %6942 = vmatpush.bf16.msra.mxu0 %v6860
    %6943 = vmatpush.bf16.msra.mxu0 %v6856
    %6944 = vmatpush.bf16.msra.mxu0 %v6852
    %6945 = vmatpush.bf16.msra.mxu0 %v6848
    %6946 = vmatpush.bf16.msra.mxu0 %v6844
    %6947 = vmatpush.bf16.msra.mxu0 %v6840
    %6948 = vmatmul.bf16.gmra.mxu0 %v6708
    %v6949 = vpop.f32.mrf.mxu0
    %v6950 = vadd.f32 0.0, %v6949
    %v6951 = vpop.f32.mrf.mxu0
    %6952 = vdwg.mxu0
    %v6953 = vadd.f32 %v6704, %v6911
    %v6954 = vadd.f32 %v6705, %v6924
    %v6955 = vadd.f32 %v6706, %v6937
    %v6956 = vadd.f32 %v6707, %v6950
    %v6957 = vxor.u32 %v6953, 2147483648
    %v6958 = vxor.u32 %v6954, 2147483648
    %v6959 = vmul.f32 %v6957, 1.442695
    %v6960 = vpow.pop %v6959
    %v6961 = vmul.f32 %v6958, 1.442695
    %v6962 = vpow.pop %v6961
    %v6963 = vadd.f32 %v6960, 1.0
    %v6964 = vadd.f32 %v6962, 1.0
    %v6965 = vrcp.pop %v6963
    %v6966 = vmul.f32 %v6963, %v6965
    %v6967 = vsub.f32 1.0, %v6966
    %v6968 = vmul.f32 %v6965, %v6967
    %v6969 = vadd.f32 %v6965, %v6968
    %vm6970 = vweird.f32 %v6963
    %vm6971 = vweird.f32 %v6965
    %vm6972 = vmor %vm6970, %vm6971
    %v6973 = vsel %vm6972, %v6965, %v6969
    %v6974 = vand.u32 2147483647, %v6963
    %vm6975 = vcmp.eq.f32.partialorder %v6974, 8.507059e+37
    %v6976 = vand.u32 %v6963, 2147483648
    %v6977 = vor.u32 1.1754944e-38, %v6976
    %v6978 = vsel %vm6975, %v6977, %v6973
    %v6979 = vmul.f32 1.0, %v6978
    %v6980 = vrcp.pop %v6964
    %v6981 = vmul.f32 %v6964, %v6980
    %v6982 = vsub.f32 1.0, %v6981
    %v6983 = vmul.f32 %v6980, %v6982
    %v6984 = vadd.f32 %v6980, %v6983
    %vm6985 = vweird.f32 %v6964
    %vm6986 = vweird.f32 %v6980
    %vm6987 = vmor %vm6985, %vm6986
    %v6988 = vsel %vm6987, %v6980, %v6984
    %v6989 = vand.u32 2147483647, %v6964
    %vm6990 = vcmp.eq.f32.partialorder %v6989, 8.507059e+37
    %v6991 = vand.u32 %v6964, 2147483648
    %v6992 = vor.u32 1.1754944e-38, %v6991
    %v6993 = vsel %vm6990, %v6992, %v6988
    %v6994 = vmul.f32 1.0, %v6993
    %v6995 = vtanh.pop %v6955
    %v6996 = vxor.u32 %v6956, 2147483648
    %v6997 = vmul.f32 %v6996, 1.442695
    %v6998 = vpow.pop %v6997
    %v6999 = vadd.f32 %v6998, 1.0
    %v7000 = vrcp.pop %v6999
    %v7001 = vmul.f32 %v6999, %v7000
    %v7002 = vsub.f32 1.0, %v7001
    %v7003 = vmul.f32 %v7000, %v7002
    %v7004 = vadd.f32 %v7000, %v7003
    %vm7005 = vweird.f32 %v6999
    %vm7006 = vweird.f32 %v7000
    %vm7007 = vmor %vm7005, %vm7006
    %v7008 = vsel %vm7007, %v7000, %v7004
    %v7009 = vand.u32 2147483647, %v6999
    %vm7010 = vcmp.eq.f32.partialorder %v7009, 8.507059e+37
    %v7011 = vand.u32 %v6999, 2147483648
    %v7012 = vor.u32 1.1754944e-38, %v7011
    %v7013 = vsel %vm7010, %v7012, %v7008
    %v7014 = vmul.f32 1.0, %v7013
    %v7015 = vmul.f32 %v6994, %v6698
    %v7016 = vmul.f32 %v6979, %v6995
    %v7017 = vadd.f32 %v7015, %v7016
    %v7018 = vtanh.pop %v7017
    %v7019 = vmul.f32 %v7014, %v7018
    %v7020 = vmax.f32 %v7019, 0.0
    %v7021 = vpack.c.bf16 %v7020, %v7020
    %7022 = vst [vmem:[%s2705] sm:$0xf] %v7021
    %v7023 = vld [vmem:[%s2709] sm:$0xff]
    %v7024 = vld [vmem:[%s2709 + $0x8] sm:$0xff]
    %v7025 = vld [vmem:[%s2709 + $0x10] sm:$0xff]
    %v7026 = vld [vmem:[%s2709 + $0x18] sm:$0xff]
    %v7027 = vpack.c.bf16 %v7019, %v7019
    %v7028 = vld [vmem:[#allocation21] sm:$0xff]
    %v7029 = vld [vmem:[#allocation21 + $0x8] sm:$0xff]
    %v7030 = vld [vmem:[#allocation21 + $0x10] sm:$0xff]
    %v7031 = vld [vmem:[#allocation21 + $0x18] sm:$0xff]
    %v7032 = vld [vmem:[#allocation21 + $0x20] sm:$0xff]
    %v7033 = vld [vmem:[#allocation21 + $0x28] sm:$0xff]
    %v7034 = vld [vmem:[#allocation21 + $0x30] sm:$0xff]
    %v7035 = vld [vmem:[#allocation21 + $0x38] sm:$0xff]
    %v7036 = vld [vmem:[#allocation21 + $0x40] sm:$0xff]
    %v7037 = vld [vmem:[#allocation21 + $0x48] sm:$0xff]
    %v7038 = vld [vmem:[#allocation21 + $0x50] sm:$0xff]
    %v7039 = vld [vmem:[#allocation21 + $0x58] sm:$0xff]
    %v7040 = vld [vmem:[#allocation21 + $0x60] sm:$0xff]
    %v7041 = vld [vmem:[#allocation21 + $0x68] sm:$0xff]
    %v7042 = vld [vmem:[#allocation21 + $0x70] sm:$0xff]
    %v7043 = vld [vmem:[#allocation21 + $0x78] sm:$0xff]
    %v7044 = vld [vmem:[#allocation21 + $0x80] sm:$0xff]
    %v7045 = vld [vmem:[#allocation21 + $0x88] sm:$0xff]
    %v7046 = vld [vmem:[#allocation21 + $0x90] sm:$0xff]
    %v7047 = vld [vmem:[#allocation21 + $0x98] sm:$0xff]
    %v7048 = vld [vmem:[#allocation21 + $0xa0] sm:$0xff]
    %v7049 = vld [vmem:[#allocation21 + $0xa8] sm:$0xff]
    %v7050 = vld [vmem:[#allocation21 + $0xb0] sm:$0xff]
    %v7051 = vld [vmem:[#allocation21 + $0xb8] sm:$0xff]
    %v7052 = vld [vmem:[#allocation21 + $0xc0] sm:$0xff]
    %v7053 = vld [vmem:[#allocation21 + $0xc8] sm:$0xff]
    %v7054 = vld [vmem:[#allocation21 + $0xd0] sm:$0xff]
    %v7055 = vld [vmem:[#allocation21 + $0xd8] sm:$0xff]
    %v7056 = vld [vmem:[#allocation21 + $0xe0] sm:$0xff]
    %v7057 = vld [vmem:[#allocation21 + $0xe8] sm:$0xff]
    %v7058 = vld [vmem:[#allocation21 + $0xf0] sm:$0xff]
    %v7059 = vld [vmem:[#allocation21 + $0xf8] sm:$0xff]
    %v7092 = vunpack.c.l.b16 %v7028
    %v7093 = vunpack.c.h.b16 %v7028
    %v7094 = vunpack.c.l.b16 %v7029
    %v7095 = vunpack.c.h.b16 %v7029
    %v7096 = vunpack.c.l.b16 %v7030
    %v7097 = vunpack.c.h.b16 %v7030
    %v7098 = vunpack.c.l.b16 %v7031
    %v7099 = vunpack.c.h.b16 %v7031
    %v7100 = vunpack.c.l.b16 %v7032
    %v7101 = vunpack.c.h.b16 %v7032
    %v7102 = vunpack.c.l.b16 %v7033
    %v7103 = vunpack.c.h.b16 %v7033
    %v7104 = vunpack.c.l.b16 %v7034
    %v7105 = vunpack.c.h.b16 %v7034
    %v7106 = vunpack.c.l.b16 %v7035
    %v7107 = vunpack.c.h.b16 %v7035
    %v7108 = vunpack.c.l.b16 %v7036
    %v7109 = vunpack.c.h.b16 %v7036
    %v7110 = vunpack.c.l.b16 %v7037
    %v7111 = vunpack.c.h.b16 %v7037
    %v7112 = vunpack.c.l.b16 %v7038
    %v7113 = vunpack.c.h.b16 %v7038
    %v7114 = vunpack.c.l.b16 %v7039
    %v7115 = vunpack.c.h.b16 %v7039
    %v7116 = vunpack.c.l.b16 %v7040
    %v7117 = vunpack.c.h.b16 %v7040
    %v7118 = vunpack.c.l.b16 %v7041
    %v7119 = vunpack.c.h.b16 %v7041
    %v7120 = vunpack.c.l.b16 %v7042
    %v7121 = vunpack.c.h.b16 %v7042
    %v7122 = vunpack.c.l.b16 %v7043
    %v7123 = vunpack.c.h.b16 %v7043
    %v7124 = vunpack.c.l.b16 %v7044
    %v7125 = vunpack.c.h.b16 %v7044
    %v7126 = vunpack.c.l.b16 %v7045
    %v7127 = vunpack.c.h.b16 %v7045
    %v7128 = vunpack.c.l.b16 %v7046
    %v7129 = vunpack.c.h.b16 %v7046
    %v7130 = vunpack.c.l.b16 %v7047
    %v7131 = vunpack.c.h.b16 %v7047
    %v7132 = vunpack.c.l.b16 %v7048
    %v7133 = vunpack.c.h.b16 %v7048
    %v7134 = vunpack.c.l.b16 %v7049
    %v7135 = vunpack.c.h.b16 %v7049
    %v7136 = vunpack.c.l.b16 %v7050
    %v7137 = vunpack.c.h.b16 %v7050
    %v7138 = vunpack.c.l.b16 %v7051
    %v7139 = vunpack.c.h.b16 %v7051
    %v7140 = vunpack.c.l.b16 %v7052
    %v7141 = vunpack.c.h.b16 %v7052
    %v7142 = vunpack.c.l.b16 %v7053
    %v7143 = vunpack.c.h.b16 %v7053
    %v7144 = vunpack.c.l.b16 %v7054
    %v7145 = vunpack.c.h.b16 %v7054
    %v7146 = vunpack.c.l.b16 %v7055
    %v7147 = vunpack.c.h.b16 %v7055
    %v7148 = vunpack.c.l.b16 %v7056
    %v7149 = vunpack.c.h.b16 %v7056
    %v7150 = vunpack.c.l.b16 %v7057
    %v7151 = vunpack.c.h.b16 %v7057
    %v7152 = vunpack.c.l.b16 %v7058
    %v7153 = vunpack.c.h.b16 %v7058
    %v7154 = vunpack.c.l.b16 %v7059
    %v7155 = vunpack.c.h.b16 %v7059
    %v7156 = vpack.c.b16 %v7096, %v7092
    %v7157 = vpack.c.b16 %v7097, %v7093
    %v7158 = vpack.c.b16 %v7098, %v7094
    %v7159 = vpack.c.b16 %v7099, %v7095
    %v7160 = vpack.c.b16 %v7104, %v7100
    %v7161 = vpack.c.b16 %v7105, %v7101
    %v7162 = vpack.c.b16 %v7106, %v7102
    %v7163 = vpack.c.b16 %v7107, %v7103
    %v7164 = vpack.c.b16 %v7112, %v7108
    %v7165 = vpack.c.b16 %v7113, %v7109
    %v7166 = vpack.c.b16 %v7114, %v7110
    %v7167 = vpack.c.b16 %v7115, %v7111
    %v7168 = vpack.c.b16 %v7120, %v7116
    %v7169 = vpack.c.b16 %v7121, %v7117
    %v7170 = vpack.c.b16 %v7122, %v7118
    %v7171 = vpack.c.b16 %v7123, %v7119
    %v7172 = vpack.c.b16 %v7128, %v7124
    %v7173 = vpack.c.b16 %v7129, %v7125
    %v7174 = vpack.c.b16 %v7130, %v7126
    %v7175 = vpack.c.b16 %v7131, %v7127
    %v7176 = vpack.c.b16 %v7136, %v7132
    %v7177 = vpack.c.b16 %v7137, %v7133
    %v7178 = vpack.c.b16 %v7138, %v7134
    %v7179 = vpack.c.b16 %v7139, %v7135
    %v7180 = vpack.c.b16 %v7144, %v7140
    %v7181 = vpack.c.b16 %v7145, %v7141
    %v7182 = vpack.c.b16 %v7146, %v7142
    %v7183 = vpack.c.b16 %v7147, %v7143
    %v7184 = vpack.c.b16 %v7152, %v7148
    %v7185 = vpack.c.b16 %v7153, %v7149
    %v7186 = vpack.c.b16 %v7154, %v7150
    %v7187 = vpack.c.b16 %v7155, %v7151
    %7220 = vmatpush.bf16.msra.mxu0 %v7184
    %7221 = vmatpush.bf16.msra.mxu0 %v7180
    %7222 = vmatpush.bf16.msra.mxu0 %v7176
    %7223 = vmatpush.bf16.msra.mxu0 %v7172
    %7224 = vmatpush.bf16.msra.mxu0 %v7168
    %7225 = vmatpush.bf16.msra.mxu0 %v7164
    %7226 = vmatpush.bf16.msra.mxu0 %v7160
    %7227 = vmatpush.bf16.msra.mxu0 %v7156
    %7228 = vmatmul.bf16.gmra.mxu0 %v7027
    %v7229 = vpop.f32.mrf.mxu0
    %v7230 = vadd.f32 0.0, %v7229
    %v7231 = vpop.f32.mrf.mxu0
    %7232 = vdwg.mxu0
    %7233 = vmatpush.bf16.msra.mxu0 %v7185
    %7234 = vmatpush.bf16.msra.mxu0 %v7181
    %7235 = vmatpush.bf16.msra.mxu0 %v7177
    %7236 = vmatpush.bf16.msra.mxu0 %v7173
    %7237 = vmatpush.bf16.msra.mxu0 %v7169
    %7238 = vmatpush.bf16.msra.mxu0 %v7165
    %7239 = vmatpush.bf16.msra.mxu0 %v7161
    %7240 = vmatpush.bf16.msra.mxu0 %v7157
    %7241 = vmatmul.bf16.gmra.mxu0 %v7027
    %v7242 = vpop.f32.mrf.mxu0
    %v7243 = vadd.f32 0.0, %v7242
    %v7244 = vpop.f32.mrf.mxu0
    %7245 = vdwg.mxu0
    %7246 = vmatpush.bf16.msra.mxu0 %v7186
    %7247 = vmatpush.bf16.msra.mxu0 %v7182
    %7248 = vmatpush.bf16.msra.mxu0 %v7178
    %7249 = vmatpush.bf16.msra.mxu0 %v7174
    %7250 = vmatpush.bf16.msra.mxu0 %v7170
    %7251 = vmatpush.bf16.msra.mxu0 %v7166
    %7252 = vmatpush.bf16.msra.mxu0 %v7162
    %7253 = vmatpush.bf16.msra.mxu0 %v7158
    %7254 = vmatmul.bf16.gmra.mxu0 %v7027
    %v7255 = vpop.f32.mrf.mxu0
    %v7256 = vadd.f32 0.0, %v7255
    %v7257 = vpop.f32.mrf.mxu0
    %7258 = vdwg.mxu0
    %7259 = vmatpush.bf16.msra.mxu0 %v7187
    %7260 = vmatpush.bf16.msra.mxu0 %v7183
    %7261 = vmatpush.bf16.msra.mxu0 %v7179
    %7262 = vmatpush.bf16.msra.mxu0 %v7175
    %7263 = vmatpush.bf16.msra.mxu0 %v7171
    %7264 = vmatpush.bf16.msra.mxu0 %v7167
    %7265 = vmatpush.bf16.msra.mxu0 %v7163
    %7266 = vmatpush.bf16.msra.mxu0 %v7159
    %7267 = vmatmul.bf16.gmra.mxu0 %v7027
    %v7268 = vpop.f32.mrf.mxu0
    %v7269 = vadd.f32 0.0, %v7268
    %v7270 = vpop.f32.mrf.mxu0
    %7271 = vdwg.mxu0
    %v7272 = vadd.f32 %v7023, %v7230
    %v7273 = vadd.f32 %v7024, %v7243
    %v7274 = vadd.f32 %v7025, %v7256
    %v7275 = vadd.f32 %v7026, %v7269
    %v7276 = vxor.u32 %v7272, 2147483648
    %v7277 = vxor.u32 %v7273, 2147483648
    %v7278 = vmul.f32 %v7276, 1.442695
    %v7279 = vpow.pop %v7278
    %v7280 = vmul.f32 %v7277, 1.442695
    %v7281 = vpow.pop %v7280
    %v7282 = vadd.f32 %v7279, 1.0
    %v7283 = vadd.f32 %v7281, 1.0
    %v7284 = vrcp.pop %v7282
    %v7285 = vmul.f32 %v7282, %v7284
    %v7286 = vsub.f32 1.0, %v7285
    %v7287 = vmul.f32 %v7284, %v7286
    %v7288 = vadd.f32 %v7284, %v7287
    %vm7289 = vweird.f32 %v7282
    %vm7290 = vweird.f32 %v7284
    %vm7291 = vmor %vm7289, %vm7290
    %v7292 = vsel %vm7291, %v7284, %v7288
    %v7293 = vand.u32 2147483647, %v7282
    %vm7294 = vcmp.eq.f32.partialorder %v7293, 8.507059e+37
    %v7295 = vand.u32 %v7282, 2147483648
    %v7296 = vor.u32 1.1754944e-38, %v7295
    %v7297 = vsel %vm7294, %v7296, %v7292
    %v7298 = vmul.f32 1.0, %v7297
    %v7299 = vrcp.pop %v7283
    %v7300 = vmul.f32 %v7283, %v7299
    %v7301 = vsub.f32 1.0, %v7300
    %v7302 = vmul.f32 %v7299, %v7301
    %v7303 = vadd.f32 %v7299, %v7302
    %vm7304 = vweird.f32 %v7283
    %vm7305 = vweird.f32 %v7299
    %vm7306 = vmor %vm7304, %vm7305
    %v7307 = vsel %vm7306, %v7299, %v7303
    %v7308 = vand.u32 2147483647, %v7283
    %vm7309 = vcmp.eq.f32.partialorder %v7308, 8.507059e+37
    %v7310 = vand.u32 %v7283, 2147483648
    %v7311 = vor.u32 1.1754944e-38, %v7310
    %v7312 = vsel %vm7309, %v7311, %v7307
    %v7313 = vmul.f32 1.0, %v7312
    %v7314 = vtanh.pop %v7274
    %v7315 = vxor.u32 %v7275, 2147483648
    %v7316 = vmul.f32 %v7315, 1.442695
    %v7317 = vpow.pop %v7316
    %v7318 = vadd.f32 %v7317, 1.0
    %v7319 = vrcp.pop %v7318
    %v7320 = vmul.f32 %v7318, %v7319
    %v7321 = vsub.f32 1.0, %v7320
    %v7322 = vmul.f32 %v7319, %v7321
    %v7323 = vadd.f32 %v7319, %v7322
    %vm7324 = vweird.f32 %v7318
    %vm7325 = vweird.f32 %v7319
    %vm7326 = vmor %vm7324, %vm7325
    %v7327 = vsel %vm7326, %v7319, %v7323
    %v7328 = vand.u32 2147483647, %v7318
    %vm7329 = vcmp.eq.f32.partialorder %v7328, 8.507059e+37
    %v7330 = vand.u32 %v7318, 2147483648
    %v7331 = vor.u32 1.1754944e-38, %v7330
    %v7332 = vsel %vm7329, %v7331, %v7327
    %v7333 = vmul.f32 1.0, %v7332
    %v7334 = vmul.f32 %v7313, %v7017
    %v7335 = vmul.f32 %v7298, %v7314
    %v7336 = vadd.f32 %v7334, %v7335
    %v7337 = vtanh.pop %v7336
    %v7338 = vmul.f32 %v7333, %v7337
    %v7339 = vmax.f32 %v7338, 0.0
    %v7340 = vpack.c.bf16 %v7339, %v7339
    %7341 = vst [vmem:[%s3028] sm:$0xf] %v7340
    %v7342 = vld [vmem:[#allocation5] sm:$0xf]
    %v7343 = vld [vmem:[#allocation5 + $0x4] sm:$0xf]
    %v7344 = vld [vmem:[#allocation5 + $0x8] sm:$0xf]
    %v7345 = vld [vmem:[#allocation5 + $0xc] sm:$0xf]
    %v7346 = vld [vmem:[#allocation5 + $0x10] sm:$0xf]
    %v7347 = vld [vmem:[#allocation5 + $0x14] sm:$0xf]
    %v7348 = vld [vmem:[#allocation5 + $0x18] sm:$0xf]
    %v7349 = vld [vmem:[#allocation5 + $0x1c] sm:$0xf]
    %v7350 = vld [vmem:[#allocation22] sm:$0xff]
    %v7351 = vld [vmem:[#allocation22 + $0x8] sm:$0xff]
    %v7352 = vld [vmem:[#allocation22 + $0x10] sm:$0xff]
    %v7353 = vld [vmem:[#allocation22 + $0x18] sm:$0xff]
    %v7354 = vld [vmem:[#allocation22 + $0x20] sm:$0xff]
    %v7355 = vld [vmem:[#allocation22 + $0x28] sm:$0xff]
    %v7356 = vld [vmem:[#allocation22 + $0x30] sm:$0xff]
    %v7357 = vld [vmem:[#allocation22 + $0x38] sm:$0xff]
    %v7358 = vld [vmem:[#allocation22 + $0x40] sm:$0xff]
    %v7359 = vld [vmem:[#allocation22 + $0x48] sm:$0xff]
    %v7360 = vld [vmem:[#allocation22 + $0x50] sm:$0xff]
    %v7361 = vld [vmem:[#allocation22 + $0x58] sm:$0xff]
    %v7362 = vld [vmem:[#allocation22 + $0x60] sm:$0xff]
    %v7363 = vld [vmem:[#allocation22 + $0x68] sm:$0xff]
    %v7364 = vld [vmem:[#allocation22 + $0x70] sm:$0xff]
    %v7365 = vld [vmem:[#allocation22 + $0x78] sm:$0xff]
    %v7366 = vld [vmem:[%s13] sm:$0x3]
    %v7368 = vperm.slane %v7366, 0
    %v7369 = vperm.slane %v7366, 1
    %v7380 = vunpack.c.l.b16 %v7342
    %v7381 = vunpack.c.l.b16 %v7343
    %v7382 = vunpack.c.l.b16 %v7344
    %v7383 = vunpack.c.l.b16 %v7345
    %v7384 = vunpack.c.l.b16 %v7346
    %v7385 = vunpack.c.l.b16 %v7347
    %v7386 = vunpack.c.l.b16 %v7348
    %v7387 = vunpack.c.l.b16 %v7349
    %v7388 = vpack.c.b16 %v7381, %v7380
    %v7389 = vpack.c.b16 %v7383, %v7382
    %v7390 = vpack.c.b16 %v7385, %v7384
    %v7391 = vpack.c.b16 %v7387, %v7386
    %v7412 = vunpack.c.l.b16 %v7350
    %v7413 = vunpack.c.h.b16 %v7350
    %v7414 = vunpack.c.l.b16 %v7351
    %v7415 = vunpack.c.h.b16 %v7351
    %v7416 = vunpack.c.l.b16 %v7352
    %v7417 = vunpack.c.h.b16 %v7352
    %v7418 = vunpack.c.l.b16 %v7353
    %v7419 = vunpack.c.h.b16 %v7353
    %v7420 = vunpack.c.l.b16 %v7354
    %v7421 = vunpack.c.h.b16 %v7354
    %v7422 = vunpack.c.l.b16 %v7355
    %v7423 = vunpack.c.h.b16 %v7355
    %v7424 = vunpack.c.l.b16 %v7356
    %v7425 = vunpack.c.h.b16 %v7356
    %v7426 = vunpack.c.l.b16 %v7357
    %v7427 = vunpack.c.h.b16 %v7357
    %v7428 = vunpack.c.l.b16 %v7358
    %v7429 = vunpack.c.h.b16 %v7358
    %v7430 = vunpack.c.l.b16 %v7359
    %v7431 = vunpack.c.h.b16 %v7359
    %v7432 = vunpack.c.l.b16 %v7360
    %v7433 = vunpack.c.h.b16 %v7360
    %v7434 = vunpack.c.l.b16 %v7361
    %v7435 = vunpack.c.h.b16 %v7361
    %v7436 = vunpack.c.l.b16 %v7362
    %v7437 = vunpack.c.h.b16 %v7362
    %v7438 = vunpack.c.l.b16 %v7363
    %v7439 = vunpack.c.h.b16 %v7363
    %v7440 = vunpack.c.l.b16 %v7364
    %v7441 = vunpack.c.h.b16 %v7364
    %v7442 = vunpack.c.l.b16 %v7365
    %v7443 = vunpack.c.h.b16 %v7365
    %v7444 = vpack.c.b16 %v7414, %v7412
    %v7445 = vpack.c.b16 %v7415, %v7413
    %v7446 = vpack.c.b16 %v7418, %v7416
    %v7447 = vpack.c.b16 %v7419, %v7417
    %v7448 = vpack.c.b16 %v7422, %v7420
    %v7449 = vpack.c.b16 %v7423, %v7421
    %v7450 = vpack.c.b16 %v7426, %v7424
    %v7451 = vpack.c.b16 %v7427, %v7425
    %v7452 = vpack.c.b16 %v7430, %v7428
    %v7453 = vpack.c.b16 %v7431, %v7429
    %v7454 = vpack.c.b16 %v7434, %v7432
    %v7455 = vpack.c.b16 %v7435, %v7433
    %v7456 = vpack.c.b16 %v7438, %v7436
    %v7457 = vpack.c.b16 %v7439, %v7437
    %v7458 = vpack.c.b16 %v7442, %v7440
    %v7459 = vpack.c.b16 %v7443, %v7441
    %7476 = vmatpush.bf16.msra.mxu0 %v7458
    %7477 = vmatpush.bf16.msra.mxu0 %v7456
    %7478 = vmatpush.bf16.msra.mxu0 %v7454
    %7479 = vmatpush.bf16.msra.mxu0 %v7452
    %7480 = vmatpush.bf16.msra.mxu0 %v7450
    %7481 = vmatpush.bf16.msra.mxu0 %v7448
    %7482 = vmatpush.bf16.msra.mxu0 %v7446
    %7483 = vmatpush.bf16.msra.mxu0 %v7444
    %7484 = vmatmul.bf16.gmra.mxu0 %v7388
    %v7485 = vpop.f32.mrf.mxu0
    %v7486 = vadd.f32 %v7368, %v7485
    %v7487 = vpop.f32.mrf.mxu0
    %v7488 = vadd.f32 %v7368, %v7487
    %7489 = vmatmul.bf16.gmra.mxu0 %v7389
    %v7490 = vpop.f32.mrf.mxu0
    %v7491 = vadd.f32 %v7368, %v7490
    %v7492 = vpop.f32.mrf.mxu0
    %v7493 = vadd.f32 %v7368, %v7492
    %7494 = vmatmul.bf16.gmra.mxu0 %v7390
    %v7495 = vpop.f32.mrf.mxu0
    %v7496 = vadd.f32 %v7368, %v7495
    %v7497 = vpop.f32.mrf.mxu0
    %v7498 = vadd.f32 %v7368, %v7497
    %7499 = vmatmul.bf16.gmra.mxu0 %v7391
    %v7500 = vpop.f32.mrf.mxu0
    %v7501 = vadd.f32 %v7368, %v7500
    %v7502 = vpop.f32.mrf.mxu0
    %v7503 = vadd.f32 %v7368, %v7502
    %7504 = vdwg.mxu0
    %7505 = vmatpush.bf16.msra.mxu0 %v7459
    %7506 = vmatpush.bf16.msra.mxu0 %v7457
    %7507 = vmatpush.bf16.msra.mxu0 %v7455
    %7508 = vmatpush.bf16.msra.mxu0 %v7453
    %7509 = vmatpush.bf16.msra.mxu0 %v7451
    %7510 = vmatpush.bf16.msra.mxu0 %v7449
    %7511 = vmatpush.bf16.msra.mxu0 %v7447
    %7512 = vmatpush.bf16.msra.mxu0 %v7445
    %7513 = vmatmul.bf16.gmra.mxu0 %v7388
    %v7514 = vpop.f32.mrf.mxu0
    %v7515 = vadd.f32 %v7369, %v7514
    %v7516 = vpop.f32.mrf.mxu0
    %v7517 = vadd.f32 %v7369, %v7516
    %7518 = vmatmul.bf16.gmra.mxu0 %v7389
    %v7519 = vpop.f32.mrf.mxu0
    %v7520 = vadd.f32 %v7369, %v7519
    %v7521 = vpop.f32.mrf.mxu0
    %v7522 = vadd.f32 %v7369, %v7521
    %7523 = vmatmul.bf16.gmra.mxu0 %v7390
    %v7524 = vpop.f32.mrf.mxu0
    %v7525 = vadd.f32 %v7369, %v7524
    %v7526 = vpop.f32.mrf.mxu0
    %v7527 = vadd.f32 %v7369, %v7526
    %7528 = vmatmul.bf16.gmra.mxu0 %v7391
    %v7529 = vpop.f32.mrf.mxu0
    %v7530 = vadd.f32 %v7369, %v7529
    %v7531 = vpop.f32.mrf.mxu0
    %v7532 = vadd.f32 %v7369, %v7531
    %7533 = vdwg.mxu0
    %7534 = vst [vmem:[#allocation4] sm:$0xff] %v7486
    %7535 = vst [vmem:[#allocation4 + $0x8] sm:$0xff] %v7515
    %7536 = vst [vmem:[#allocation4 + $0x10] sm:$0xff] %v7488
    %7537 = vst [vmem:[#allocation4 + $0x18] sm:$0xff] %v7517
    %7538 = vst [vmem:[#allocation4 + $0x20] sm:$0xff] %v7491
    %7539 = vst [vmem:[#allocation4 + $0x28] sm:$0xff] %v7520
    %7540 = vst [vmem:[#allocation4 + $0x30] sm:$0xff] %v7493
    %7541 = vst [vmem:[#allocation4 + $0x38] sm:$0xff] %v7522
    %7542 = vst [vmem:[#allocation4 + $0x40] sm:$0xff] %v7496
    %7543 = vst [vmem:[#allocation4 + $0x48] sm:$0xff] %v7525
    %7544 = vst [vmem:[#allocation4 + $0x50] sm:$0xff] %v7498
    %7545 = vst [vmem:[#allocation4 + $0x58] sm:$0xff] %v7527
    %7546 = vst [vmem:[#allocation4 + $0x60] sm:$0xff] %v7501
    %7547 = vst [vmem:[#allocation4 + $0x68] sm:$0xff] %v7530
    %7548 = vst [vmem:[#allocation4 + $0x70] sm:$0xff] %v7503
    %7549 = vst [vmem:[#allocation4 + $0x78] sm:$0xff] %v7532
    %s7550 = smul.addr %s3238, 8
    %s7551 = scalar_lea.vmem [#allocation4], %s7550
    %v7552 = vld [vmem:[%s7551] sm:$0xff]
    %v7553 = vld [vmem:[%s7551 + $0x8] sm:$0xff]
    %v7554 = vld [vmem:[#allocation24] sm:$0xff]
    %v7555 = vld [vmem:[#allocation24 + $0x8] sm:$0xff]
    %v7556 = vld [vmem:[#allocation24 + $0x10] sm:$0xff]
    %v7557 = vld [vmem:[#allocation24 + $0x18] sm:$0xff]
    %v7558 = vld [vmem:[#allocation24 + $0x20] sm:$0xff]
    %v7559 = vld [vmem:[#allocation24 + $0x28] sm:$0xff]
    %v7560 = vld [vmem:[#allocation24 + $0x30] sm:$0xff]
    %v7561 = vld [vmem:[#allocation24 + $0x38] sm:$0xff]
    %v7570 = vunpack.c.l.b16 %v7554
    %v7571 = vunpack.c.h.b16 %v7554
    %v7572 = vunpack.c.l.b16 %v7555
    %v7573 = vunpack.c.h.b16 %v7555
    %v7574 = vunpack.c.l.b16 %v7556
    %v7575 = vunpack.c.h.b16 %v7556
    %v7576 = vunpack.c.l.b16 %v7557
    %v7577 = vunpack.c.h.b16 %v7557
    %v7578 = vunpack.c.l.b16 %v7558
    %v7579 = vunpack.c.h.b16 %v7558
    %v7580 = vunpack.c.l.b16 %v7559
    %v7581 = vunpack.c.h.b16 %v7559
    %v7582 = vunpack.c.l.b16 %v7560
    %v7583 = vunpack.c.h.b16 %v7560
    %v7584 = vunpack.c.l.b16 %v7561
    %v7585 = vunpack.c.h.b16 %v7561
    %v7586 = vpack.c.b16 %v7572, %v7570
    %v7587 = vpack.c.b16 %v7573, %v7571
    %v7588 = vpack.c.b16 %v7576, %v7574
    %v7589 = vpack.c.b16 %v7577, %v7575
    %v7590 = vpack.c.b16 %v7580, %v7578
    %v7591 = vpack.c.b16 %v7581, %v7579
    %v7592 = vpack.c.b16 %v7584, %v7582
    %v7593 = vpack.c.b16 %v7585, %v7583
    %7602 = vmatpush.bf16.msra.mxu0 0
    %7603 = vmatpush.bf16.msra.mxu0 0
    %7604 = vmatpush.bf16.msra.mxu0 0
    %7605 = vmatpush.bf16.msra.mxu0 0
    %7606 = vmatpush.bf16.msra.mxu0 %v7592
    %7607 = vmatpush.bf16.msra.mxu0 %v7590
    %7608 = vmatpush.bf16.msra.mxu0 %v7588
    %7609 = vmatpush.bf16.msra.mxu0 %v7586
    %7610 = vmatmul.bf16.gmra.mxu0 %v3293
    %v7611 = vpop.f32.mrf.mxu0
    %v7612 = vadd.f32 0.0, %v7611
    %v7613 = vpop.f32.mrf.mxu0
    %7614 = vdwg.mxu0
    %7615 = vmatpush.bf16.msra.mxu0 0
    %7616 = vmatpush.bf16.msra.mxu0 0
    %7617 = vmatpush.bf16.msra.mxu0 0
    %7618 = vmatpush.bf16.msra.mxu0 0
    %7619 = vmatpush.bf16.msra.mxu0 %v7593
    %7620 = vmatpush.bf16.msra.mxu0 %v7591
    %7621 = vmatpush.bf16.msra.mxu0 %v7589
    %7622 = vmatpush.bf16.msra.mxu0 %v7587
    %7623 = vmatmul.bf16.gmra.mxu0 %v3293
    %v7624 = vpop.f32.mrf.mxu0
    %v7625 = vadd.f32 0.0, %v7624
    %v7626 = vpop.f32.mrf.mxu0
    %7627 = vdwg.mxu0
    %v7628 = vadd.f32 %v7552, %v7612
    %v7629 = vadd.f32 %v7553, %v7625
    %v7630 = vxor.u32 %v7628, 2147483648
    %v7631 = vmul.f32 %v7630, 1.442695
    %v7632 = vpow.pop %v7631
    %v7633 = vadd.f32 %v7632, 1.0
    %v7634 = vrcp.pop %v7633
    %v7635 = vmul.f32 %v7633, %v7634
    %v7636 = vsub.f32 1.0, %v7635
    %v7637 = vmul.f32 %v7634, %v7636
    %v7638 = vadd.f32 %v7634, %v7637
    %vm7639 = vweird.f32 %v7633
    %vm7640 = vweird.f32 %v7634
    %vm7641 = vmor %vm7639, %vm7640
    %v7642 = vsel %vm7641, %v7634, %v7638
    %v7643 = vand.u32 2147483647, %v7633
    %vm7644 = vcmp.eq.f32.partialorder %v7643, 8.507059e+37
    %v7645 = vand.u32 %v7633, 2147483648
    %v7646 = vor.u32 1.1754944e-38, %v7645
    %v7647 = vsel %vm7644, %v7646, %v7642
    %v7648 = vmul.f32 1.0, %v7647
    %v7649 = vtanh.pop %v7629
    %v7650 = vxor.u32 %v7629, 2147483648
    %v7651 = vmul.f32 %v7650, 1.442695
    %v7652 = vpow.pop %v7651
    %v7653 = vadd.f32 %v7652, 1.0
    %v7654 = vrcp.pop %v7653
    %v7655 = vmul.f32 %v7653, %v7654
    %v7656 = vsub.f32 1.0, %v7655
    %v7657 = vmul.f32 %v7654, %v7656
    %v7658 = vadd.f32 %v7654, %v7657
    %vm7659 = vweird.f32 %v7653
    %vm7660 = vweird.f32 %v7654
    %vm7661 = vmor %vm7659, %vm7660
    %v7662 = vsel %vm7661, %v7654, %v7658
    %v7663 = vand.u32 2147483647, %v7653
    %vm7664 = vcmp.eq.f32.partialorder %v7663, 8.507059e+37
    %v7665 = vand.u32 %v7653, 2147483648
    %v7666 = vor.u32 1.1754944e-38, %v7665
    %v7667 = vsel %vm7664, %v7666, %v7662
    %v7668 = vmul.f32 1.0, %v7667
    %v7669 = vmul.f32 %v7648, 0.0
    %v7670 = vmul.f32 %v7648, %v7649
    %7672 = vrot.lane.b32.xlu0 %v7670, 64
    %v7673 = vpop.permute.xlu0 %7672
    %v7675 = vadd.f32 %v7669, %v7673
    %v7676 = vtanh.pop %v7675
    %v7677 = vmul.f32 %v7668, %v7676
    %v7678 = vld [vmem:[#allocation7] sm:$0xff]
    %7680 = vrot.lane.b32.xlu0 %v7677, 64
    %v7681 = vpop.permute.xlu0 %7680
    %7684 = vrot.lane.b32.xlu0 %v7678, 64
    %v7685 = vpop.permute.xlu0 %7684
    %v7687 = vsel %vm3291, %v7681, %v7685
    %7688 = vst [vmem:[%s14] sm:$0xff] %v7687
    %s7689 = smul.addr %s3397, 8
    %s7690 = scalar_lea.vmem [#allocation4], %s7689
    %v7691 = vld [vmem:[%s7690] sm:$0xff]
    %v7692 = vld [vmem:[%s7690 + $0x8] sm:$0xff]
    %v7693 = vpack.c.bf16 %v7677, %v7677
    %v7694 = vld [vmem:[#allocation24] sm:$0xff]
    %v7695 = vld [vmem:[#allocation24 + $0x8] sm:$0xff]
    %v7696 = vld [vmem:[#allocation24 + $0x10] sm:$0xff]
    %v7697 = vld [vmem:[#allocation24 + $0x18] sm:$0xff]
    %v7698 = vld [vmem:[#allocation24 + $0x20] sm:$0xff]
    %v7699 = vld [vmem:[#allocation24 + $0x28] sm:$0xff]
    %v7700 = vld [vmem:[#allocation24 + $0x30] sm:$0xff]
    %v7701 = vld [vmem:[#allocation24 + $0x38] sm:$0xff]
    %7703 = vrot.lane.b32.xlu0 %v7693, 64
    %v7704 = vpop.permute.xlu0 %7703
    %v7713 = vunpack.c.l.b16 %v7694
    %v7714 = vunpack.c.h.b16 %v7694
    %v7715 = vunpack.c.l.b16 %v7695
    %v7716 = vunpack.c.h.b16 %v7695
    %v7717 = vunpack.c.l.b16 %v7696
    %v7718 = vunpack.c.h.b16 %v7696
    %v7719 = vunpack.c.l.b16 %v7697
    %v7720 = vunpack.c.h.b16 %v7697
    %v7721 = vunpack.c.l.b16 %v7698
    %v7722 = vunpack.c.h.b16 %v7698
    %v7723 = vunpack.c.l.b16 %v7699
    %v7724 = vunpack.c.h.b16 %v7699
    %v7725 = vunpack.c.l.b16 %v7700
    %v7726 = vunpack.c.h.b16 %v7700
    %v7727 = vunpack.c.l.b16 %v7701
    %v7728 = vunpack.c.h.b16 %v7701
    %v7729 = vpack.c.b16 %v7715, %v7713
    %v7730 = vpack.c.b16 %v7716, %v7714
    %v7731 = vpack.c.b16 %v7719, %v7717
    %v7732 = vpack.c.b16 %v7720, %v7718
    %v7733 = vpack.c.b16 %v7723, %v7721
    %v7734 = vpack.c.b16 %v7724, %v7722
    %v7735 = vpack.c.b16 %v7727, %v7725
    %v7736 = vpack.c.b16 %v7728, %v7726
    %v7746 = vsel %vm3291, %v7704, 0
    %7748 = vmatpush.bf16.msra.mxu0 0
    %7749 = vmatpush.bf16.msra.mxu0 0
    %7750 = vmatpush.bf16.msra.mxu0 0
    %7751 = vmatpush.bf16.msra.mxu0 0
    %7752 = vmatpush.bf16.msra.mxu0 %v7735
    %7753 = vmatpush.bf16.msra.mxu0 %v7733
    %7754 = vmatpush.bf16.msra.mxu0 %v7731
    %7755 = vmatpush.bf16.msra.mxu0 %v7729
    %7756 = vmatmul.bf16.gmra.mxu0 %v7746
    %v7757 = vpop.f32.mrf.mxu0
    %v7758 = vadd.f32 0.0, %v7757
    %v7759 = vpop.f32.mrf.mxu0
    %7760 = vdwg.mxu0
    %7761 = vmatpush.bf16.msra.mxu0 0
    %7762 = vmatpush.bf16.msra.mxu0 0
    %7763 = vmatpush.bf16.msra.mxu0 0
    %7764 = vmatpush.bf16.msra.mxu0 0
    %7765 = vmatpush.bf16.msra.mxu0 %v7736
    %7766 = vmatpush.bf16.msra.mxu0 %v7734
    %7767 = vmatpush.bf16.msra.mxu0 %v7732
    %7768 = vmatpush.bf16.msra.mxu0 %v7730
    %7769 = vmatmul.bf16.gmra.mxu0 %v7746
    %v7770 = vpop.f32.mrf.mxu0
    %v7771 = vadd.f32 0.0, %v7770
    %v7772 = vpop.f32.mrf.mxu0
    %7773 = vdwg.mxu0
    %v7774 = vadd.f32 %v7691, %v7758
    %v7775 = vadd.f32 %v7692, %v7771
    %v7776 = vxor.u32 %v7774, 2147483648
    %v7777 = vmul.f32 %v7776, 1.442695
    %v7778 = vpow.pop %v7777
    %v7779 = vadd.f32 %v7778, 1.0
    %v7780 = vrcp.pop %v7779
    %v7781 = vmul.f32 %v7779, %v7780
    %v7782 = vsub.f32 1.0, %v7781
    %v7783 = vmul.f32 %v7780, %v7782
    %v7784 = vadd.f32 %v7780, %v7783
    %vm7785 = vweird.f32 %v7779
    %vm7786 = vweird.f32 %v7780
    %vm7787 = vmor %vm7785, %vm7786
    %v7788 = vsel %vm7787, %v7780, %v7784
    %v7789 = vand.u32 2147483647, %v7779
    %vm7790 = vcmp.eq.f32.partialorder %v7789, 8.507059e+37
    %v7791 = vand.u32 %v7779, 2147483648
    %v7792 = vor.u32 1.1754944e-38, %v7791
    %v7793 = vsel %vm7790, %v7792, %v7788
    %v7794 = vmul.f32 1.0, %v7793
    %v7795 = vtanh.pop %v7775
    %v7796 = vxor.u32 %v7775, 2147483648
    %v7797 = vmul.f32 %v7796, 1.442695
    %v7798 = vpow.pop %v7797
    %v7799 = vadd.f32 %v7798, 1.0
    %v7800 = vrcp.pop %v7799
    %v7801 = vmul.f32 %v7799, %v7800
    %v7802 = vsub.f32 1.0, %v7801
    %v7803 = vmul.f32 %v7800, %v7802
    %v7804 = vadd.f32 %v7800, %v7803
    %vm7805 = vweird.f32 %v7799
    %vm7806 = vweird.f32 %v7800
    %vm7807 = vmor %vm7805, %vm7806
    %v7808 = vsel %vm7807, %v7800, %v7804
    %v7809 = vand.u32 2147483647, %v7799
    %vm7810 = vcmp.eq.f32.partialorder %v7809, 8.507059e+37
    %v7811 = vand.u32 %v7799, 2147483648
    %v7812 = vor.u32 1.1754944e-38, %v7811
    %v7813 = vsel %vm7810, %v7812, %v7808
    %v7814 = vmul.f32 1.0, %v7813
    %v7815 = vmul.f32 %v7794, %v7675
    %v7816 = vmul.f32 %v7794, %v7795
    %7818 = vrot.lane.b32.xlu0 %v7816, 64
    %v7819 = vpop.permute.xlu0 %7818
    %v7821 = vadd.f32 %v7815, %v7819
    %v7822 = vtanh.pop %v7821
    %v7823 = vmul.f32 %v7814, %v7822
    %v7824 = vld [vmem:[%s3537] sm:$0xff]
    %7826 = vrot.lane.b32.xlu0 %v7823, 64
    %v7827 = vpop.permute.xlu0 %7826
    %7830 = vrot.lane.b32.xlu0 %v7824, 64
    %v7831 = vpop.permute.xlu0 %7830
    %v7833 = vsel %vm3291, %v7827, %v7831
    %s7834 = scalar_lea.vmem %s14, 8
    %7835 = vst [vmem:[%s7834] sm:$0xff] %v7833
    %s7836 = smul.addr %s3561, 8
    %s7837 = scalar_lea.vmem [#allocation4], %s7836
    %v7838 = vld [vmem:[%s7837] sm:$0xff]
    %v7839 = vld [vmem:[%s7837 + $0x8] sm:$0xff]
    %v7840 = vpack.c.bf16 %v7823, %v7823
    %v7841 = vld [vmem:[#allocation24] sm:$0xff]
    %v7842 = vld [vmem:[#allocation24 + $0x8] sm:$0xff]
    %v7843 = vld [vmem:[#allocation24 + $0x10] sm:$0xff]
    %v7844 = vld [vmem:[#allocation24 + $0x18] sm:$0xff]
    %v7845 = vld [vmem:[#allocation24 + $0x20] sm:$0xff]
    %v7846 = vld [vmem:[#allocation24 + $0x28] sm:$0xff]
    %v7847 = vld [vmem:[#allocation24 + $0x30] sm:$0xff]
    %v7848 = vld [vmem:[#allocation24 + $0x38] sm:$0xff]
    %7850 = vrot.lane.b32.xlu0 %v7840, 64
    %v7851 = vpop.permute.xlu0 %7850
    %v7860 = vunpack.c.l.b16 %v7841
    %v7861 = vunpack.c.h.b16 %v7841
    %v7862 = vunpack.c.l.b16 %v7842
    %v7863 = vunpack.c.h.b16 %v7842
    %v7864 = vunpack.c.l.b16 %v7843
    %v7865 = vunpack.c.h.b16 %v7843
    %v7866 = vunpack.c.l.b16 %v7844
    %v7867 = vunpack.c.h.b16 %v7844
    %v7868 = vunpack.c.l.b16 %v7845
    %v7869 = vunpack.c.h.b16 %v7845
    %v7870 = vunpack.c.l.b16 %v7846
    %v7871 = vunpack.c.h.b16 %v7846
    %v7872 = vunpack.c.l.b16 %v7847
    %v7873 = vunpack.c.h.b16 %v7847
    %v7874 = vunpack.c.l.b16 %v7848
    %v7875 = vunpack.c.h.b16 %v7848
    %v7876 = vpack.c.b16 %v7862, %v7860
    %v7877 = vpack.c.b16 %v7863, %v7861
    %v7878 = vpack.c.b16 %v7866, %v7864
    %v7879 = vpack.c.b16 %v7867, %v7865
    %v7880 = vpack.c.b16 %v7870, %v7868
    %v7881 = vpack.c.b16 %v7871, %v7869
    %v7882 = vpack.c.b16 %v7874, %v7872
    %v7883 = vpack.c.b16 %v7875, %v7873
    %v7893 = vsel %vm3291, %v7851, 0
    %7895 = vmatpush.bf16.msra.mxu0 0
    %7896 = vmatpush.bf16.msra.mxu0 0
    %7897 = vmatpush.bf16.msra.mxu0 0
    %7898 = vmatpush.bf16.msra.mxu0 0
    %7899 = vmatpush.bf16.msra.mxu0 %v7882
    %7900 = vmatpush.bf16.msra.mxu0 %v7880
    %7901 = vmatpush.bf16.msra.mxu0 %v7878
    %7902 = vmatpush.bf16.msra.mxu0 %v7876
    %7903 = vmatmul.bf16.gmra.mxu0 %v7893
    %v7904 = vpop.f32.mrf.mxu0
    %v7905 = vadd.f32 0.0, %v7904
    %v7906 = vpop.f32.mrf.mxu0
    %7907 = vdwg.mxu0
    %7908 = vmatpush.bf16.msra.mxu0 0
    %7909 = vmatpush.bf16.msra.mxu0 0
    %7910 = vmatpush.bf16.msra.mxu0 0
    %7911 = vmatpush.bf16.msra.mxu0 0
    %7912 = vmatpush.bf16.msra.mxu0 %v7883
    %7913 = vmatpush.bf16.msra.mxu0 %v7881
    %7914 = vmatpush.bf16.msra.mxu0 %v7879
    %7915 = vmatpush.bf16.msra.mxu0 %v7877
    %7916 = vmatmul.bf16.gmra.mxu0 %v7893
    %v7917 = vpop.f32.mrf.mxu0
    %v7918 = vadd.f32 0.0, %v7917
    %v7919 = vpop.f32.mrf.mxu0
    %7920 = vdwg.mxu0
    %v7921 = vadd.f32 %v7838, %v7905
    %v7922 = vadd.f32 %v7839, %v7918
    %v7923 = vxor.u32 %v7921, 2147483648
    %v7924 = vmul.f32 %v7923, 1.442695
    %v7925 = vpow.pop %v7924
    %v7926 = vadd.f32 %v7925, 1.0
    %v7927 = vrcp.pop %v7926
    %v7928 = vmul.f32 %v7926, %v7927
    %v7929 = vsub.f32 1.0, %v7928
    %v7930 = vmul.f32 %v7927, %v7929
    %v7931 = vadd.f32 %v7927, %v7930
    %vm7932 = vweird.f32 %v7926
    %vm7933 = vweird.f32 %v7927
    %vm7934 = vmor %vm7932, %vm7933
    %v7935 = vsel %vm7934, %v7927, %v7931
    %v7936 = vand.u32 2147483647, %v7926
    %vm7937 = vcmp.eq.f32.partialorder %v7936, 8.507059e+37
    %v7938 = vand.u32 %v7926, 2147483648
    %v7939 = vor.u32 1.1754944e-38, %v7938
    %v7940 = vsel %vm7937, %v7939, %v7935
    %v7941 = vmul.f32 1.0, %v7940
    %v7942 = vtanh.pop %v7922
    %v7943 = vxor.u32 %v7922, 2147483648
    %v7944 = vmul.f32 %v7943, 1.442695
    %v7945 = vpow.pop %v7944
    %v7946 = vadd.f32 %v7945, 1.0
    %v7947 = vrcp.pop %v7946
    %v7948 = vmul.f32 %v7946, %v7947
    %v7949 = vsub.f32 1.0, %v7948
    %v7950 = vmul.f32 %v7947, %v7949
    %v7951 = vadd.f32 %v7947, %v7950
    %vm7952 = vweird.f32 %v7946
    %vm7953 = vweird.f32 %v7947
    %vm7954 = vmor %vm7952, %vm7953
    %v7955 = vsel %vm7954, %v7947, %v7951
    %v7956 = vand.u32 2147483647, %v7946
    %vm7957 = vcmp.eq.f32.partialorder %v7956, 8.507059e+37
    %v7958 = vand.u32 %v7946, 2147483648
    %v7959 = vor.u32 1.1754944e-38, %v7958
    %v7960 = vsel %vm7957, %v7959, %v7955
    %v7961 = vmul.f32 1.0, %v7960
    %v7962 = vmul.f32 %v7941, %v7821
    %v7963 = vmul.f32 %v7941, %v7942
    %7965 = vrot.lane.b32.xlu0 %v7963, 64
    %v7966 = vpop.permute.xlu0 %7965
    %v7968 = vadd.f32 %v7962, %v7966
    %v7969 = vtanh.pop %v7968
    %v7970 = vmul.f32 %v7961, %v7969
    %v7971 = vld [vmem:[%s3701] sm:$0xff]
    %7973 = vrot.lane.b32.xlu0 %v7970, 64
    %v7974 = vpop.permute.xlu0 %7973
    %7977 = vrot.lane.b32.xlu0 %v7971, 64
    %v7978 = vpop.permute.xlu0 %7977
    %v7980 = vsel %vm3291, %v7974, %v7978
    %s7981 = scalar_lea.vmem %s14, 16
    %7982 = vst [vmem:[%s7981] sm:$0xff] %v7980
    %s7983 = smul.addr %s3725, 8
    %s7984 = scalar_lea.vmem [#allocation4], %s7983
    %v7985 = vld [vmem:[%s7984] sm:$0xff]
    %v7986 = vld [vmem:[%s7984 + $0x8] sm:$0xff]
    %v7987 = vpack.c.bf16 %v7970, %v7970
    %v7988 = vld [vmem:[#allocation24] sm:$0xff]
    %v7989 = vld [vmem:[#allocation24 + $0x8] sm:$0xff]
    %v7990 = vld [vmem:[#allocation24 + $0x10] sm:$0xff]
    %v7991 = vld [vmem:[#allocation24 + $0x18] sm:$0xff]
    %v7992 = vld [vmem:[#allocation24 + $0x20] sm:$0xff]
    %v7993 = vld [vmem:[#allocation24 + $0x28] sm:$0xff]
    %v7994 = vld [vmem:[#allocation24 + $0x30] sm:$0xff]
    %v7995 = vld [vmem:[#allocation24 + $0x38] sm:$0xff]
    %7997 = vrot.lane.b32.xlu0 %v7987, 64
    %v7998 = vpop.permute.xlu0 %7997
    %v8007 = vunpack.c.l.b16 %v7988
    %v8008 = vunpack.c.h.b16 %v7988
    %v8009 = vunpack.c.l.b16 %v7989
    %v8010 = vunpack.c.h.b16 %v7989
    %v8011 = vunpack.c.l.b16 %v7990
    %v8012 = vunpack.c.h.b16 %v7990
    %v8013 = vunpack.c.l.b16 %v7991
    %v8014 = vunpack.c.h.b16 %v7991
    %v8015 = vunpack.c.l.b16 %v7992
    %v8016 = vunpack.c.h.b16 %v7992
    %v8017 = vunpack.c.l.b16 %v7993
    %v8018 = vunpack.c.h.b16 %v7993
    %v8019 = vunpack.c.l.b16 %v7994
    %v8020 = vunpack.c.h.b16 %v7994
    %v8021 = vunpack.c.l.b16 %v7995
    %v8022 = vunpack.c.h.b16 %v7995
    %v8023 = vpack.c.b16 %v8009, %v8007
    %v8024 = vpack.c.b16 %v8010, %v8008
    %v8025 = vpack.c.b16 %v8013, %v8011
    %v8026 = vpack.c.b16 %v8014, %v8012
    %v8027 = vpack.c.b16 %v8017, %v8015
    %v8028 = vpack.c.b16 %v8018, %v8016
    %v8029 = vpack.c.b16 %v8021, %v8019
    %v8030 = vpack.c.b16 %v8022, %v8020
    %v8040 = vsel %vm3291, %v7998, 0
    %8042 = vmatpush.bf16.msra.mxu0 0
    %8043 = vmatpush.bf16.msra.mxu0 0
    %8044 = vmatpush.bf16.msra.mxu0 0
    %8045 = vmatpush.bf16.msra.mxu0 0
    %8046 = vmatpush.bf16.msra.mxu0 %v8029
    %8047 = vmatpush.bf16.msra.mxu0 %v8027
    %8048 = vmatpush.bf16.msra.mxu0 %v8025
    %8049 = vmatpush.bf16.msra.mxu0 %v8023
    %8050 = vmatmul.bf16.gmra.mxu0 %v8040
    %v8051 = vpop.f32.mrf.mxu0
    %v8052 = vadd.f32 0.0, %v8051
    %v8053 = vpop.f32.mrf.mxu0
    %8054 = vdwg.mxu0
    %8055 = vmatpush.bf16.msra.mxu0 0
    %8056 = vmatpush.bf16.msra.mxu0 0
    %8057 = vmatpush.bf16.msra.mxu0 0
    %8058 = vmatpush.bf16.msra.mxu0 0
    %8059 = vmatpush.bf16.msra.mxu0 %v8030
    %8060 = vmatpush.bf16.msra.mxu0 %v8028
    %8061 = vmatpush.bf16.msra.mxu0 %v8026
    %8062 = vmatpush.bf16.msra.mxu0 %v8024
    %8063 = vmatmul.bf16.gmra.mxu0 %v8040
    %v8064 = vpop.f32.mrf.mxu0
    %v8065 = vadd.f32 0.0, %v8064
    %v8066 = vpop.f32.mrf.mxu0
    %8067 = vdwg.mxu0
    %v8068 = vadd.f32 %v7985, %v8052
    %v8069 = vadd.f32 %v7986, %v8065
    %v8070 = vxor.u32 %v8068, 2147483648
    %v8071 = vmul.f32 %v8070, 1.442695
    %v8072 = vpow.pop %v8071
    %v8073 = vadd.f32 %v8072, 1.0
    %v8074 = vrcp.pop %v8073
    %v8075 = vmul.f32 %v8073, %v8074
    %v8076 = vsub.f32 1.0, %v8075
    %v8077 = vmul.f32 %v8074, %v8076
    %v8078 = vadd.f32 %v8074, %v8077
    %vm8079 = vweird.f32 %v8073
    %vm8080 = vweird.f32 %v8074
    %vm8081 = vmor %vm8079, %vm8080
    %v8082 = vsel %vm8081, %v8074, %v8078
    %v8083 = vand.u32 2147483647, %v8073
    %vm8084 = vcmp.eq.f32.partialorder %v8083, 8.507059e+37
    %v8085 = vand.u32 %v8073, 2147483648
    %v8086 = vor.u32 1.1754944e-38, %v8085
    %v8087 = vsel %vm8084, %v8086, %v8082
    %v8088 = vmul.f32 1.0, %v8087
    %v8089 = vtanh.pop %v8069
    %v8090 = vxor.u32 %v8069, 2147483648
    %v8091 = vmul.f32 %v8090, 1.442695
    %v8092 = vpow.pop %v8091
    %v8093 = vadd.f32 %v8092, 1.0
    %v8094 = vrcp.pop %v8093
    %v8095 = vmul.f32 %v8093, %v8094
    %v8096 = vsub.f32 1.0, %v8095
    %v8097 = vmul.f32 %v8094, %v8096
    %v8098 = vadd.f32 %v8094, %v8097
    %vm8099 = vweird.f32 %v8093
    %vm8100 = vweird.f32 %v8094
    %vm8101 = vmor %vm8099, %vm8100
    %v8102 = vsel %vm8101, %v8094, %v8098
    %v8103 = vand.u32 2147483647, %v8093
    %vm8104 = vcmp.eq.f32.partialorder %v8103, 8.507059e+37
    %v8105 = vand.u32 %v8093, 2147483648
    %v8106 = vor.u32 1.1754944e-38, %v8105
    %v8107 = vsel %vm8104, %v8106, %v8102
    %v8108 = vmul.f32 1.0, %v8107
    %v8109 = vmul.f32 %v8088, %v7968
    %v8110 = vmul.f32 %v8088, %v8089
    %8112 = vrot.lane.b32.xlu0 %v8110, 64
    %v8113 = vpop.permute.xlu0 %8112
    %v8115 = vadd.f32 %v8109, %v8113
    %v8116 = vtanh.pop %v8115
    %v8117 = vmul.f32 %v8108, %v8116
    %v8118 = vld [vmem:[%s3865] sm:$0xff]
    %8120 = vrot.lane.b32.xlu0 %v8117, 64
    %v8121 = vpop.permute.xlu0 %8120
    %8124 = vrot.lane.b32.xlu0 %v8118, 64
    %v8125 = vpop.permute.xlu0 %8124
    %v8127 = vsel %vm3291, %v8121, %v8125
    %s8128 = scalar_lea.vmem %s14, 24
    %8129 = vst [vmem:[%s8128] sm:$0xff] %v8127
    %s8130 = smul.addr %s3889, 8
    %s8131 = scalar_lea.vmem [#allocation4], %s8130
    %v8132 = vld [vmem:[%s8131] sm:$0xff]
    %v8133 = vld [vmem:[%s8131 + $0x8] sm:$0xff]
    %v8134 = vpack.c.bf16 %v8117, %v8117
    %v8135 = vld [vmem:[#allocation24] sm:$0xff]
    %v8136 = vld [vmem:[#allocation24 + $0x8] sm:$0xff]
    %v8137 = vld [vmem:[#allocation24 + $0x10] sm:$0xff]
    %v8138 = vld [vmem:[#allocation24 + $0x18] sm:$0xff]
    %v8139 = vld [vmem:[#allocation24 + $0x20] sm:$0xff]
    %v8140 = vld [vmem:[#allocation24 + $0x28] sm:$0xff]
    %v8141 = vld [vmem:[#allocation24 + $0x30] sm:$0xff]
    %v8142 = vld [vmem:[#allocation24 + $0x38] sm:$0xff]
    %8144 = vrot.lane.b32.xlu0 %v8134, 64
    %v8145 = vpop.permute.xlu0 %8144
    %v8154 = vunpack.c.l.b16 %v8135
    %v8155 = vunpack.c.h.b16 %v8135
    %v8156 = vunpack.c.l.b16 %v8136
    %v8157 = vunpack.c.h.b16 %v8136
    %v8158 = vunpack.c.l.b16 %v8137
    %v8159 = vunpack.c.h.b16 %v8137
    %v8160 = vunpack.c.l.b16 %v8138
    %v8161 = vunpack.c.h.b16 %v8138
    %v8162 = vunpack.c.l.b16 %v8139
    %v8163 = vunpack.c.h.b16 %v8139
    %v8164 = vunpack.c.l.b16 %v8140
    %v8165 = vunpack.c.h.b16 %v8140
    %v8166 = vunpack.c.l.b16 %v8141
    %v8167 = vunpack.c.h.b16 %v8141
    %v8168 = vunpack.c.l.b16 %v8142
    %v8169 = vunpack.c.h.b16 %v8142
    %v8170 = vpack.c.b16 %v8156, %v8154
    %v8171 = vpack.c.b16 %v8157, %v8155
    %v8172 = vpack.c.b16 %v8160, %v8158
    %v8173 = vpack.c.b16 %v8161, %v8159
    %v8174 = vpack.c.b16 %v8164, %v8162
    %v8175 = vpack.c.b16 %v8165, %v8163
    %v8176 = vpack.c.b16 %v8168, %v8166
    %v8177 = vpack.c.b16 %v8169, %v8167
    %v8187 = vsel %vm3291, %v8145, 0
    %8189 = vmatpush.bf16.msra.mxu0 0
    %8190 = vmatpush.bf16.msra.mxu0 0
    %8191 = vmatpush.bf16.msra.mxu0 0
    %8192 = vmatpush.bf16.msra.mxu0 0
    %8193 = vmatpush.bf16.msra.mxu0 %v8176
    %8194 = vmatpush.bf16.msra.mxu0 %v8174
    %8195 = vmatpush.bf16.msra.mxu0 %v8172
    %8196 = vmatpush.bf16.msra.mxu0 %v8170
    %8197 = vmatmul.bf16.gmra.mxu0 %v8187
    %v8198 = vpop.f32.mrf.mxu0
    %v8199 = vadd.f32 0.0, %v8198
    %v8200 = vpop.f32.mrf.mxu0
    %8201 = vdwg.mxu0
    %8202 = vmatpush.bf16.msra.mxu0 0
    %8203 = vmatpush.bf16.msra.mxu0 0
    %8204 = vmatpush.bf16.msra.mxu0 0
    %8205 = vmatpush.bf16.msra.mxu0 0
    %8206 = vmatpush.bf16.msra.mxu0 %v8177
    %8207 = vmatpush.bf16.msra.mxu0 %v8175
    %8208 = vmatpush.bf16.msra.mxu0 %v8173
    %8209 = vmatpush.bf16.msra.mxu0 %v8171
    %8210 = vmatmul.bf16.gmra.mxu0 %v8187
    %v8211 = vpop.f32.mrf.mxu0
    %v8212 = vadd.f32 0.0, %v8211
    %v8213 = vpop.f32.mrf.mxu0
    %8214 = vdwg.mxu0
    %v8215 = vadd.f32 %v8132, %v8199
    %v8216 = vadd.f32 %v8133, %v8212
    %v8217 = vxor.u32 %v8215, 2147483648
    %v8218 = vmul.f32 %v8217, 1.442695
    %v8219 = vpow.pop %v8218
    %v8220 = vadd.f32 %v8219, 1.0
    %v8221 = vrcp.pop %v8220
    %v8222 = vmul.f32 %v8220, %v8221
    %v8223 = vsub.f32 1.0, %v8222
    %v8224 = vmul.f32 %v8221, %v8223
    %v8225 = vadd.f32 %v8221, %v8224
    %vm8226 = vweird.f32 %v8220
    %vm8227 = vweird.f32 %v8221
    %vm8228 = vmor %vm8226, %vm8227
    %v8229 = vsel %vm8228, %v8221, %v8225
    %v8230 = vand.u32 2147483647, %v8220
    %vm8231 = vcmp.eq.f32.partialorder %v8230, 8.507059e+37
    %v8232 = vand.u32 %v8220, 2147483648
    %v8233 = vor.u32 1.1754944e-38, %v8232
    %v8234 = vsel %vm8231, %v8233, %v8229
    %v8235 = vmul.f32 1.0, %v8234
    %v8236 = vtanh.pop %v8216
    %v8237 = vxor.u32 %v8216, 2147483648
    %v8238 = vmul.f32 %v8237, 1.442695
    %v8239 = vpow.pop %v8238
    %v8240 = vadd.f32 %v8239, 1.0
    %v8241 = vrcp.pop %v8240
    %v8242 = vmul.f32 %v8240, %v8241
    %v8243 = vsub.f32 1.0, %v8242
    %v8244 = vmul.f32 %v8241, %v8243
    %v8245 = vadd.f32 %v8241, %v8244
    %vm8246 = vweird.f32 %v8240
    %vm8247 = vweird.f32 %v8241
    %vm8248 = vmor %vm8246, %vm8247
    %v8249 = vsel %vm8248, %v8241, %v8245
    %v8250 = vand.u32 2147483647, %v8240
    %vm8251 = vcmp.eq.f32.partialorder %v8250, 8.507059e+37
    %v8252 = vand.u32 %v8240, 2147483648
    %v8253 = vor.u32 1.1754944e-38, %v8252
    %v8254 = vsel %vm8251, %v8253, %v8249
    %v8255 = vmul.f32 1.0, %v8254
    %v8256 = vmul.f32 %v8235, %v8115
    %v8257 = vmul.f32 %v8235, %v8236
    %8259 = vrot.lane.b32.xlu0 %v8257, 64
    %v8260 = vpop.permute.xlu0 %8259
    %v8262 = vadd.f32 %v8256, %v8260
    %v8263 = vtanh.pop %v8262
    %v8264 = vmul.f32 %v8255, %v8263
    %v8265 = vld [vmem:[%s4029] sm:$0xff]
    %8267 = vrot.lane.b32.xlu0 %v8264, 64
    %v8268 = vpop.permute.xlu0 %8267
    %8271 = vrot.lane.b32.xlu0 %v8265, 64
    %v8272 = vpop.permute.xlu0 %8271
    %v8274 = vsel %vm3291, %v8268, %v8272
    %s8275 = scalar_lea.vmem %s14, 32
    %8276 = vst [vmem:[%s8275] sm:$0xff] %v8274
    %s8277 = smul.addr %s4053, 8
    %s8278 = scalar_lea.vmem [#allocation4], %s8277
    %v8279 = vld [vmem:[%s8278] sm:$0xff]
    %v8280 = vld [vmem:[%s8278 + $0x8] sm:$0xff]
    %v8281 = vpack.c.bf16 %v8264, %v8264
    %v8282 = vld [vmem:[#allocation24] sm:$0xff]
    %v8283 = vld [vmem:[#allocation24 + $0x8] sm:$0xff]
    %v8284 = vld [vmem:[#allocation24 + $0x10] sm:$0xff]
    %v8285 = vld [vmem:[#allocation24 + $0x18] sm:$0xff]
    %v8286 = vld [vmem:[#allocation24 + $0x20] sm:$0xff]
    %v8287 = vld [vmem:[#allocation24 + $0x28] sm:$0xff]
    %v8288 = vld [vmem:[#allocation24 + $0x30] sm:$0xff]
    %v8289 = vld [vmem:[#allocation24 + $0x38] sm:$0xff]
    %8291 = vrot.lane.b32.xlu0 %v8281, 64
    %v8292 = vpop.permute.xlu0 %8291
    %v8301 = vunpack.c.l.b16 %v8282
    %v8302 = vunpack.c.h.b16 %v8282
    %v8303 = vunpack.c.l.b16 %v8283
    %v8304 = vunpack.c.h.b16 %v8283
    %v8305 = vunpack.c.l.b16 %v8284
    %v8306 = vunpack.c.h.b16 %v8284
    %v8307 = vunpack.c.l.b16 %v8285
    %v8308 = vunpack.c.h.b16 %v8285
    %v8309 = vunpack.c.l.b16 %v8286
    %v8310 = vunpack.c.h.b16 %v8286
    %v8311 = vunpack.c.l.b16 %v8287
    %v8312 = vunpack.c.h.b16 %v8287
    %v8313 = vunpack.c.l.b16 %v8288
    %v8314 = vunpack.c.h.b16 %v8288
    %v8315 = vunpack.c.l.b16 %v8289
    %v8316 = vunpack.c.h.b16 %v8289
    %v8317 = vpack.c.b16 %v8303, %v8301
    %v8318 = vpack.c.b16 %v8304, %v8302
    %v8319 = vpack.c.b16 %v8307, %v8305
    %v8320 = vpack.c.b16 %v8308, %v8306
    %v8321 = vpack.c.b16 %v8311, %v8309
    %v8322 = vpack.c.b16 %v8312, %v8310
    %v8323 = vpack.c.b16 %v8315, %v8313
    %v8324 = vpack.c.b16 %v8316, %v8314
    %v8334 = vsel %vm3291, %v8292, 0
    %8336 = vmatpush.bf16.msra.mxu0 0
    %8337 = vmatpush.bf16.msra.mxu0 0
    %8338 = vmatpush.bf16.msra.mxu0 0
    %8339 = vmatpush.bf16.msra.mxu0 0
    %8340 = vmatpush.bf16.msra.mxu0 %v8323
    %8341 = vmatpush.bf16.msra.mxu0 %v8321
    %8342 = vmatpush.bf16.msra.mxu0 %v8319
    %8343 = vmatpush.bf16.msra.mxu0 %v8317
    %8344 = vmatmul.bf16.gmra.mxu0 %v8334
    %v8345 = vpop.f32.mrf.mxu0
    %v8346 = vadd.f32 0.0, %v8345
    %v8347 = vpop.f32.mrf.mxu0
    %8348 = vdwg.mxu0
    %8349 = vmatpush.bf16.msra.mxu0 0
    %8350 = vmatpush.bf16.msra.mxu0 0
    %8351 = vmatpush.bf16.msra.mxu0 0
    %8352 = vmatpush.bf16.msra.mxu0 0
    %8353 = vmatpush.bf16.msra.mxu0 %v8324
    %8354 = vmatpush.bf16.msra.mxu0 %v8322
    %8355 = vmatpush.bf16.msra.mxu0 %v8320
    %8356 = vmatpush.bf16.msra.mxu0 %v8318
    %8357 = vmatmul.bf16.gmra.mxu0 %v8334
    %v8358 = vpop.f32.mrf.mxu0
    %v8359 = vadd.f32 0.0, %v8358
    %v8360 = vpop.f32.mrf.mxu0
    %8361 = vdwg.mxu0
    %v8362 = vadd.f32 %v8279, %v8346
    %v8363 = vadd.f32 %v8280, %v8359
    %v8364 = vxor.u32 %v8362, 2147483648
    %v8365 = vmul.f32 %v8364, 1.442695
    %v8366 = vpow.pop %v8365
    %v8367 = vadd.f32 %v8366, 1.0
    %v8368 = vrcp.pop %v8367
    %v8369 = vmul.f32 %v8367, %v8368
    %v8370 = vsub.f32 1.0, %v8369
    %v8371 = vmul.f32 %v8368, %v8370
    %v8372 = vadd.f32 %v8368, %v8371
    %vm8373 = vweird.f32 %v8367
    %vm8374 = vweird.f32 %v8368
    %vm8375 = vmor %vm8373, %vm8374
    %v8376 = vsel %vm8375, %v8368, %v8372
    %v8377 = vand.u32 2147483647, %v8367
    %vm8378 = vcmp.eq.f32.partialorder %v8377, 8.507059e+37
    %v8379 = vand.u32 %v8367, 2147483648
    %v8380 = vor.u32 1.1754944e-38, %v8379
    %v8381 = vsel %vm8378, %v8380, %v8376
    %v8382 = vmul.f32 1.0, %v8381
    %v8383 = vtanh.pop %v8363
    %v8384 = vxor.u32 %v8363, 2147483648
    %v8385 = vmul.f32 %v8384, 1.442695
    %v8386 = vpow.pop %v8385
    %v8387 = vadd.f32 %v8386, 1.0
    %v8388 = vrcp.pop %v8387
    %v8389 = vmul.f32 %v8387, %v8388
    %v8390 = vsub.f32 1.0, %v8389
    %v8391 = vmul.f32 %v8388, %v8390
    %v8392 = vadd.f32 %v8388, %v8391
    %vm8393 = vweird.f32 %v8387
    %vm8394 = vweird.f32 %v8388
    %vm8395 = vmor %vm8393, %vm8394
    %v8396 = vsel %vm8395, %v8388, %v8392
    %v8397 = vand.u32 2147483647, %v8387
    %vm8398 = vcmp.eq.f32.partialorder %v8397, 8.507059e+37
    %v8399 = vand.u32 %v8387, 2147483648
    %v8400 = vor.u32 1.1754944e-38, %v8399
    %v8401 = vsel %vm8398, %v8400, %v8396
    %v8402 = vmul.f32 1.0, %v8401
    %v8403 = vmul.f32 %v8382, %v8262
    %v8404 = vmul.f32 %v8382, %v8383
    %8406 = vrot.lane.b32.xlu0 %v8404, 64
    %v8407 = vpop.permute.xlu0 %8406
    %v8409 = vadd.f32 %v8403, %v8407
    %v8410 = vtanh.pop %v8409
    %v8411 = vmul.f32 %v8402, %v8410
    %v8412 = vld [vmem:[%s4193] sm:$0xff]
    %8414 = vrot.lane.b32.xlu0 %v8411, 64
    %v8415 = vpop.permute.xlu0 %8414
    %8418 = vrot.lane.b32.xlu0 %v8412, 64
    %v8419 = vpop.permute.xlu0 %8418
    %v8421 = vsel %vm3291, %v8415, %v8419
    %s8422 = scalar_lea.vmem %s14, 40
    %8423 = vst [vmem:[%s8422] sm:$0xff] %v8421
    %s8424 = smul.addr %s4217, 8
    %s8425 = scalar_lea.vmem [#allocation4], %s8424
    %v8426 = vld [vmem:[%s8425] sm:$0xff]
    %v8427 = vld [vmem:[%s8425 + $0x8] sm:$0xff]
    %v8428 = vpack.c.bf16 %v8411, %v8411
    %v8429 = vld [vmem:[#allocation24] sm:$0xff]
    %v8430 = vld [vmem:[#allocation24 + $0x8] sm:$0xff]
    %v8431 = vld [vmem:[#allocation24 + $0x10] sm:$0xff]
    %v8432 = vld [vmem:[#allocation24 + $0x18] sm:$0xff]
    %v8433 = vld [vmem:[#allocation24 + $0x20] sm:$0xff]
    %v8434 = vld [vmem:[#allocation24 + $0x28] sm:$0xff]
    %v8435 = vld [vmem:[#allocation24 + $0x30] sm:$0xff]
    %v8436 = vld [vmem:[#allocation24 + $0x38] sm:$0xff]
    %8438 = vrot.lane.b32.xlu0 %v8428, 64
    %v8439 = vpop.permute.xlu0 %8438
    %v8448 = vunpack.c.l.b16 %v8429
    %v8449 = vunpack.c.h.b16 %v8429
    %v8450 = vunpack.c.l.b16 %v8430
    %v8451 = vunpack.c.h.b16 %v8430
    %v8452 = vunpack.c.l.b16 %v8431
    %v8453 = vunpack.c.h.b16 %v8431
    %v8454 = vunpack.c.l.b16 %v8432
    %v8455 = vunpack.c.h.b16 %v8432
    %v8456 = vunpack.c.l.b16 %v8433
    %v8457 = vunpack.c.h.b16 %v8433
    %v8458 = vunpack.c.l.b16 %v8434
    %v8459 = vunpack.c.h.b16 %v8434
    %v8460 = vunpack.c.l.b16 %v8435
    %v8461 = vunpack.c.h.b16 %v8435
    %v8462 = vunpack.c.l.b16 %v8436
    %v8463 = vunpack.c.h.b16 %v8436
    %v8464 = vpack.c.b16 %v8450, %v8448
    %v8465 = vpack.c.b16 %v8451, %v8449
    %v8466 = vpack.c.b16 %v8454, %v8452
    %v8467 = vpack.c.b16 %v8455, %v8453
    %v8468 = vpack.c.b16 %v8458, %v8456
    %v8469 = vpack.c.b16 %v8459, %v8457
    %v8470 = vpack.c.b16 %v8462, %v8460
    %v8471 = vpack.c.b16 %v8463, %v8461
    %v8481 = vsel %vm3291, %v8439, 0
    %8483 = vmatpush.bf16.msra.mxu0 0
    %8484 = vmatpush.bf16.msra.mxu0 0
    %8485 = vmatpush.bf16.msra.mxu0 0
    %8486 = vmatpush.bf16.msra.mxu0 0
    %8487 = vmatpush.bf16.msra.mxu0 %v8470
    %8488 = vmatpush.bf16.msra.mxu0 %v8468
    %8489 = vmatpush.bf16.msra.mxu0 %v8466
    %8490 = vmatpush.bf16.msra.mxu0 %v8464
    %8491 = vmatmul.bf16.gmra.mxu0 %v8481
    %v8492 = vpop.f32.mrf.mxu0
    %v8493 = vadd.f32 0.0, %v8492
    %v8494 = vpop.f32.mrf.mxu0
    %8495 = vdwg.mxu0
    %8496 = vmatpush.bf16.msra.mxu0 0
    %8497 = vmatpush.bf16.msra.mxu0 0
    %8498 = vmatpush.bf16.msra.mxu0 0
    %8499 = vmatpush.bf16.msra.mxu0 0
    %8500 = vmatpush.bf16.msra.mxu0 %v8471
    %8501 = vmatpush.bf16.msra.mxu0 %v8469
    %8502 = vmatpush.bf16.msra.mxu0 %v8467
    %8503 = vmatpush.bf16.msra.mxu0 %v8465
    %8504 = vmatmul.bf16.gmra.mxu0 %v8481
    %v8505 = vpop.f32.mrf.mxu0
    %v8506 = vadd.f32 0.0, %v8505
    %v8507 = vpop.f32.mrf.mxu0
    %8508 = vdwg.mxu0
    %v8509 = vadd.f32 %v8426, %v8493
    %v8510 = vadd.f32 %v8427, %v8506
    %v8511 = vxor.u32 %v8509, 2147483648
    %v8512 = vmul.f32 %v8511, 1.442695
    %v8513 = vpow.pop %v8512
    %v8514 = vadd.f32 %v8513, 1.0
    %v8515 = vrcp.pop %v8514
    %v8516 = vmul.f32 %v8514, %v8515
    %v8517 = vsub.f32 1.0, %v8516
    %v8518 = vmul.f32 %v8515, %v8517
    %v8519 = vadd.f32 %v8515, %v8518
    %vm8520 = vweird.f32 %v8514
    %vm8521 = vweird.f32 %v8515
    %vm8522 = vmor %vm8520, %vm8521
    %v8523 = vsel %vm8522, %v8515, %v8519
    %v8524 = vand.u32 2147483647, %v8514
    %vm8525 = vcmp.eq.f32.partialorder %v8524, 8.507059e+37
    %v8526 = vand.u32 %v8514, 2147483648
    %v8527 = vor.u32 1.1754944e-38, %v8526
    %v8528 = vsel %vm8525, %v8527, %v8523
    %v8529 = vmul.f32 1.0, %v8528
    %v8530 = vtanh.pop %v8510
    %v8531 = vxor.u32 %v8510, 2147483648
    %v8532 = vmul.f32 %v8531, 1.442695
    %v8533 = vpow.pop %v8532
    %v8534 = vadd.f32 %v8533, 1.0
    %v8535 = vrcp.pop %v8534
    %v8536 = vmul.f32 %v8534, %v8535
    %v8537 = vsub.f32 1.0, %v8536
    %v8538 = vmul.f32 %v8535, %v8537
    %v8539 = vadd.f32 %v8535, %v8538
    %vm8540 = vweird.f32 %v8534
    %vm8541 = vweird.f32 %v8535
    %vm8542 = vmor %vm8540, %vm8541
    %v8543 = vsel %vm8542, %v8535, %v8539
    %v8544 = vand.u32 2147483647, %v8534
    %vm8545 = vcmp.eq.f32.partialorder %v8544, 8.507059e+37
    %v8546 = vand.u32 %v8534, 2147483648
    %v8547 = vor.u32 1.1754944e-38, %v8546
    %v8548 = vsel %vm8545, %v8547, %v8543
    %v8549 = vmul.f32 1.0, %v8548
    %v8550 = vmul.f32 %v8529, %v8409
    %v8551 = vmul.f32 %v8529, %v8530
    %8553 = vrot.lane.b32.xlu0 %v8551, 64
    %v8554 = vpop.permute.xlu0 %8553
    %v8556 = vadd.f32 %v8550, %v8554
    %v8557 = vtanh.pop %v8556
    %v8558 = vmul.f32 %v8549, %v8557
    %v8559 = vld [vmem:[%s4357] sm:$0xff]
    %8561 = vrot.lane.b32.xlu0 %v8558, 64
    %v8562 = vpop.permute.xlu0 %8561
    %8565 = vrot.lane.b32.xlu0 %v8559, 64
    %v8566 = vpop.permute.xlu0 %8565
    %v8568 = vsel %vm3291, %v8562, %v8566
    %s8569 = scalar_lea.vmem %s14, 48
    %8570 = vst [vmem:[%s8569] sm:$0xff] %v8568
    %s8571 = smul.addr %s4381, 8
    %s8572 = scalar_lea.vmem [#allocation4], %s8571
    %v8573 = vld [vmem:[%s8572] sm:$0xff]
    %v8574 = vld [vmem:[%s8572 + $0x8] sm:$0xff]
    %v8575 = vpack.c.bf16 %v8558, %v8558
    %v8576 = vld [vmem:[#allocation24] sm:$0xff]
    %v8577 = vld [vmem:[#allocation24 + $0x8] sm:$0xff]
    %v8578 = vld [vmem:[#allocation24 + $0x10] sm:$0xff]
    %v8579 = vld [vmem:[#allocation24 + $0x18] sm:$0xff]
    %v8580 = vld [vmem:[#allocation24 + $0x20] sm:$0xff]
    %v8581 = vld [vmem:[#allocation24 + $0x28] sm:$0xff]
    %v8582 = vld [vmem:[#allocation24 + $0x30] sm:$0xff]
    %v8583 = vld [vmem:[#allocation24 + $0x38] sm:$0xff]
    %8585 = vrot.lane.b32.xlu0 %v8575, 64
    %v8586 = vpop.permute.xlu0 %8585
    %v8595 = vunpack.c.l.b16 %v8576
    %v8596 = vunpack.c.h.b16 %v8576
    %v8597 = vunpack.c.l.b16 %v8577
    %v8598 = vunpack.c.h.b16 %v8577
    %v8599 = vunpack.c.l.b16 %v8578
    %v8600 = vunpack.c.h.b16 %v8578
    %v8601 = vunpack.c.l.b16 %v8579
    %v8602 = vunpack.c.h.b16 %v8579
    %v8603 = vunpack.c.l.b16 %v8580
    %v8604 = vunpack.c.h.b16 %v8580
    %v8605 = vunpack.c.l.b16 %v8581
    %v8606 = vunpack.c.h.b16 %v8581
    %v8607 = vunpack.c.l.b16 %v8582
    %v8608 = vunpack.c.h.b16 %v8582
    %v8609 = vunpack.c.l.b16 %v8583
    %v8610 = vunpack.c.h.b16 %v8583
    %v8611 = vpack.c.b16 %v8597, %v8595
    %v8612 = vpack.c.b16 %v8598, %v8596
    %v8613 = vpack.c.b16 %v8601, %v8599
    %v8614 = vpack.c.b16 %v8602, %v8600
    %v8615 = vpack.c.b16 %v8605, %v8603
    %v8616 = vpack.c.b16 %v8606, %v8604
    %v8617 = vpack.c.b16 %v8609, %v8607
    %v8618 = vpack.c.b16 %v8610, %v8608
    %v8628 = vsel %vm3291, %v8586, 0
    %8630 = vmatpush.bf16.msra.mxu0 0
    %8631 = vmatpush.bf16.msra.mxu0 0
    %8632 = vmatpush.bf16.msra.mxu0 0
    %8633 = vmatpush.bf16.msra.mxu0 0
    %8634 = vmatpush.bf16.msra.mxu0 %v8617
    %8635 = vmatpush.bf16.msra.mxu0 %v8615
    %8636 = vmatpush.bf16.msra.mxu0 %v8613
    %8637 = vmatpush.bf16.msra.mxu0 %v8611
    %8638 = vmatmul.bf16.gmra.mxu0 %v8628
    %v8639 = vpop.f32.mrf.mxu0
    %v8640 = vadd.f32 0.0, %v8639
    %v8641 = vpop.f32.mrf.mxu0
    %8642 = vdwg.mxu0
    %8643 = vmatpush.bf16.msra.mxu0 0
    %8644 = vmatpush.bf16.msra.mxu0 0
    %8645 = vmatpush.bf16.msra.mxu0 0
    %8646 = vmatpush.bf16.msra.mxu0 0
    %8647 = vmatpush.bf16.msra.mxu0 %v8618
    %8648 = vmatpush.bf16.msra.mxu0 %v8616
    %8649 = vmatpush.bf16.msra.mxu0 %v8614
    %8650 = vmatpush.bf16.msra.mxu0 %v8612
    %8651 = vmatmul.bf16.gmra.mxu0 %v8628
    %v8652 = vpop.f32.mrf.mxu0
    %v8653 = vadd.f32 0.0, %v8652
    %v8654 = vpop.f32.mrf.mxu0
    %8655 = vdwg.mxu0
    %v8656 = vadd.f32 %v8573, %v8640
    %v8657 = vadd.f32 %v8574, %v8653
    %v8658 = vxor.u32 %v8656, 2147483648
    %v8659 = vmul.f32 %v8658, 1.442695
    %v8660 = vpow.pop %v8659
    %v8661 = vadd.f32 %v8660, 1.0
    %v8662 = vrcp.pop %v8661
    %v8663 = vmul.f32 %v8661, %v8662
    %v8664 = vsub.f32 1.0, %v8663
    %v8665 = vmul.f32 %v8662, %v8664
    %v8666 = vadd.f32 %v8662, %v8665
    %vm8667 = vweird.f32 %v8661
    %vm8668 = vweird.f32 %v8662
    %vm8669 = vmor %vm8667, %vm8668
    %v8670 = vsel %vm8669, %v8662, %v8666
    %v8671 = vand.u32 2147483647, %v8661
    %vm8672 = vcmp.eq.f32.partialorder %v8671, 8.507059e+37
    %v8673 = vand.u32 %v8661, 2147483648
    %v8674 = vor.u32 1.1754944e-38, %v8673
    %v8675 = vsel %vm8672, %v8674, %v8670
    %v8676 = vmul.f32 1.0, %v8675
    %v8677 = vtanh.pop %v8657
    %v8678 = vxor.u32 %v8657, 2147483648
    %v8679 = vmul.f32 %v8678, 1.442695
    %v8680 = vpow.pop %v8679
    %v8681 = vadd.f32 %v8680, 1.0
    %v8682 = vrcp.pop %v8681
    %v8683 = vmul.f32 %v8681, %v8682
    %v8684 = vsub.f32 1.0, %v8683
    %v8685 = vmul.f32 %v8682, %v8684
    %v8686 = vadd.f32 %v8682, %v8685
    %vm8687 = vweird.f32 %v8681
    %vm8688 = vweird.f32 %v8682
    %vm8689 = vmor %vm8687, %vm8688
    %v8690 = vsel %vm8689, %v8682, %v8686
    %v8691 = vand.u32 2147483647, %v8681
    %vm8692 = vcmp.eq.f32.partialorder %v8691, 8.507059e+37
    %v8693 = vand.u32 %v8681, 2147483648
    %v8694 = vor.u32 1.1754944e-38, %v8693
    %v8695 = vsel %vm8692, %v8694, %v8690
    %v8696 = vmul.f32 1.0, %v8695
    %v8697 = vmul.f32 %v8676, %v8556
    %v8698 = vmul.f32 %v8676, %v8677
    %8700 = vrot.lane.b32.xlu0 %v8698, 64
    %v8701 = vpop.permute.xlu0 %8700
    %v8703 = vadd.f32 %v8697, %v8701
    %v8704 = vtanh.pop %v8703
    %v8705 = vmul.f32 %v8696, %v8704
    %v8706 = vld [vmem:[%s4521] sm:$0xff]
    %8708 = vrot.lane.b32.xlu0 %v8705, 64
    %v8709 = vpop.permute.xlu0 %8708
    %8712 = vrot.lane.b32.xlu0 %v8706, 64
    %v8713 = vpop.permute.xlu0 %8712
    %v8715 = vsel %vm3291, %v8709, %v8713
    %s8716 = scalar_lea.vmem %s14, 56
    %8717 = vst [vmem:[%s8716] sm:$0xff] %v8715
    // Predicated region
    $region102: #{seqvae_forward.1} parent=1 // pred_check
      _
    $region103: #{seqvae_forward.1} parent=1 // pred_check_branch
      %8719 = sbr.rel (0) target = $region105
    $region104: #{seqvae_forward.1} parent=1 // pred_region
      _
    $region105: #{seqvae_forward.1} parent=1 // pred_fallthru
      _
    // Predicated region
    $region106: #{seqvae_forward.1} parent=1 // pred_check
      _
    $region107: #{seqvae_forward.1} parent=1 // pred_check_branch
      %8721 = sbr.rel (0) target = $region109
    $region108: #{seqvae_forward.1} parent=1 // pred_region
      _
    $region109: #{seqvae_forward.1} parent=1 // pred_fallthru
      _
    %8722 = vsyncpa [#allocation9], 1
    %8723 = vsyncpa [#allocation11], 1
    %8724 = vsyncpa [#allocation14], 1
    %8725 = vsyncpa [#allocation17], 1
    %8726 = vsyncpa [#allocation20], 1
    %8727 = vsyncpa [#allocation23], 1

</llo_original>
